<compile_context>
chip_gen: v6e
topology: v6e:2x2x1
jax: 0.10.0
libtpu: 0.0.40
codegen_flags: <defaults>
</compile_context>

<pallas_src>
import jax
import jax.numpy as jnp
from jax import lax
from jax.experimental import pallas as pl
from jax.experimental.pallas import tpu as pltpu


_VMEM = pl.BlockSpec(memory_space=pltpu.MemorySpace.VMEM)

# Column layout of the single packed weight buffer (32, 768).  The big blocks
# start on 128-lane boundaries so their in-kernel loads are lane-aligned.
_GP = 16                                   # im2col sublane pitch per 3x3 tap
_W1_COL, _B1_COL = 0, 9                    # conv1: (9, 9 taps)   + (9,)  bias
_W2_COL, _B2_COL = 128, 128 + 9 * _GP      # conv2: (15, 144)     + (15,) bias
_W3_COL, _B3_COL = 384, 384 + 9 * _GP      # conv3: (32, 144)     + (32,) bias
_L1_COL, _LB1_COL = 640, 672               # lin1 : (32, 32)      + (32,) bias
_L2_COL, _LB2_COL = 704, 736               # lin2 : (1, 32)       + (1,)  bias
_WPACK_SHAPE = (32, 768)


# ----------------------------------------------------------------------------
# Fused forward builder
# ----------------------------------------------------------------------------
def make_value_net_forward(state_size):
    S = state_size
    C1, C2, C3 = 9, 15, 32

    # ---- static geometry in the flattened (C, row*stride + col) layout ------
    WR1 = S                                   # conv1 row stride
    H1 = W1 = S - 2
    L1 = (H1 - 1) * WR1 + W1                  # last valid conv1 flat index + 1
    LA1 = L1 - 2                              # width after in-row (dx) max
    HP1, WP1 = H1 // 3, W1 // 3
    CW1 = 3 * (WP1 - 1) + 1                   # per-row compaction read width

    WR2 = WP1
    H2 = W2 = HP1 - 2
    L2 = (H2 - 1) * WR2 + W2
    LA2 = L2 - 2
    HP2, WP2 = H2 // 3, W2 // 3
    CW2 = 3 * (WP2 - 1) + 1

    WR3 = WP2
    H3 = W3 = HP2 - 2
    L3 = (H3 - 1) * WR3 + W3
    HP3, WP3 = H3 // 3, W3 // 3

    # MLP head assumes the final feature map is 1x1 (flatten_size == 32),
    # which is what the module implies for state_size = 53.
    assert HP3 == 1 and WP3 == 1, "final feature map must be 1x1"
    # garbage-column safety: pooling only ever reads in-row columns 0..CW-1 of
    # the row-max buffers, all of which must be valid conv columns.
    assert CW1 <= W1 - 2 and CW2 <= W2 - 2
    # slice-bound safety for the fused pooling / im2col reads
    assert 3 * (HP1 - 1) * WR1 + 2 * WR1 + CW1 <= LA1
    assert 3 * (HP2 - 1) * WR2 + 2 * WR2 + CW2 <= LA2
    assert (2 * WR2 + 2) + L2 <= HP1 * WP1
    assert (2 * WR3 + 2) + L3 <= HP2 * WP2

    CH = 512                                  # conv1 lane chunk (~10 live vregs)
    n_chunks = (LA1 + CH - 1) // CH

    def kernel(x_ref, wp_ref, o_ref, rm1_s, p1_s, im2_s, p2_s, im3_s):
        f32 = jnp.float32

        # Zero the im2col scratches once so (zero weight pad) x (stale VMEM)
        # can never inject NaN/Inf through the fused matmuls.
        im2_s[...] = jnp.zeros_like(im2_s)
        im3_s[...] = jnp.zeros_like(im3_s)

        # ---- conv1 (Cin=1, VPU) fused with the in-row (dx) max of pool #1 ---
        # Chunked along lanes so the accumulator never spills.
        w1blk = wp_ref[0:C1, _W1_COL:_W1_COL + 16]            # taps 0..8 + bias
        b1 = w1blk[:, _B1_COL:_B1_COL + 1]                    # (C1, 1)
        for c in range(n_chunks):
            s = c * CH
            w = min(CH, LA1 - s)
            cw = w + 2                                        # conv lanes needed
            acc = jnp.zeros((C1, cw), f32)
            for t in range(9):
                off = (t // 3) * WR1 + (t % 3)
                xs = x_ref[0:1, s + off:s + off + cw]         # (1, cw)
                acc = acc + w1blk[:, t:t + 1] * xs            # VPU MAC
            acc = acc + b1
            rm1_s[:, s:s + w] = jnp.maximum(
                jnp.maximum(acc[:, 0:w], acc[:, 1:1 + w]), acc[:, 2:2 + w])

        # ---- pool #1: dy-max fused with stride-3 compaction ------------------
        # (the full-width 9-window max buffer is never materialized)
        sel1 = (lax.broadcasted_iota(jnp.int32, (CW1, WP1), 0)
                == 3 * lax.broadcasted_iota(jnp.int32, (CW1, WP1), 1)).astype(f32)
        for i in range(HP1):
            base = 3 * i * WR1
            dm = jnp.maximum(
                jnp.maximum(rm1_s[:, base:base + CW1],
                            rm1_s[:, base + WR1:base + WR1 + CW1]),
                rm1_s[:, base + 2 * WR1:base + 2 * WR1 + CW1])
            p1_s[:, i * WP1:(i + 1) * WP1] = jnp.dot(
                dm, sel1, preferred_element_type=f32)

        # ---- conv2: im2col stack (16-row pitch per tap) + ONE MXU matmul -----
        for t in range(9):
            off = (t // 3) * WR2 + (t % 3)
            im2_s[_GP * t:_GP * t + C1, :] = p1_s[:, off:off + L2]
        w2p = wp_ref[0:C2, _W2_COL:_W2_COL + 9 * _GP]          # (C2, 144)
        b2 = wp_ref[0:C2, _B2_COL:_B2_COL + 1]
        a2 = jnp.dot(w2p, im2_s[...], preferred_element_type=f32) + b2  # (C2, L2)

        # ---- pool #2: fully in vregs (a2 is only ~4 vregs) --------------------
        rm2 = jnp.maximum(jnp.maximum(a2[:, 0:LA2], a2[:, 1:1 + LA2]),
                          a2[:, 2:2 + LA2])
        sel2 = (lax.broadcasted_iota(jnp.int32, (CW2, WP2), 0)
                == 3 * lax.broadcasted_iota(jnp.int32, (CW2, WP2), 1)).astype(f32)
        for i in range(HP2):
            base = 3 * i * WR2
            dm = jnp.maximum(
                jnp.maximum(rm2[:, base:base + CW2],
                            rm2[:, base + WR2:base + WR2 + CW2]),
                rm2[:, base + 2 * WR2:base + 2 * WR2 + CW2])
            p2_s[:, i * WP2:(i + 1) * WP2] = jnp.dot(
                dm, sel2, preferred_element_type=f32)

        # ---- conv3: im2col stack + ONE MXU matmul -----------------------------
        for t in range(9):
            off = (t // 3) * WR3 + (t % 3)
            im3_s[_GP * t:_GP * t + C2, :] = p2_s[:, off:off + L3]
        w3p = wp_ref[0:C3, _W3_COL:_W3_COL + 9 * _GP]          # (C3, 144)
        b3 = wp_ref[0:C3, _B3_COL:_B3_COL + 1]
        a3 = jnp.dot(w3p, im3_s[...], preferred_element_type=f32) + b3  # (C3, L3)

        # ---- pool #3: 3x3 -> 1x1 global max -----------------------------------
        m = a3[:, 0:1]
        for dy in range(3):
            for dx in range(3):
                if dy == 0 and dx == 0:
                    continue
                j = dy * WR3 + dx
                m = jnp.maximum(m, a3[:, j:j + 1])             # (C3, 1)

        # ---- MLP head: two tiny MXU dots in (C, 1) layout ---------------------
        # flatten order = channel major, matching torch x.reshape(-1)
        lw1t = wp_ref[0:32, _L1_COL:_L1_COL + 32]              # (32, 32) = W1
        lb1 = wp_ref[0:32, _LB1_COL:_LB1_COL + 1]              # (32, 1)
        h = jnp.maximum(jnp.dot(lw1t, m, preferred_element_type=f32) + lb1, 0.0)
        lw2t = wp_ref[0:1, _L2_COL:_L2_COL + 32]               # (1, 32) = W2
        lb2 = wp_ref[0:1, _LB2_COL:_LB2_COL + 1]               # (1, 1)
        o = jnp.dot(lw2t, h, preferred_element_type=f32) + lb2
        o_ref[...] = jnp.maximum(o, 0.0)

    fused = pl.pallas_call(
        kernel,
        out_shape=jax.ShapeDtypeStruct((1, 1), jnp.float32),
        in_specs=[_VMEM, _VMEM],
        out_specs=_VMEM,
        scratch_shapes=[
            pltpu.VMEM((C1, LA1), jnp.float32),          # conv1 in-row (dx) max
            pltpu.VMEM((C1, HP1 * WP1), jnp.float32),    # pooled map #1
            pltpu.VMEM((9 * _GP, L2), jnp.float32),      # conv2 im2col
            pltpu.VMEM((C2, HP2 * WP2), jnp.float32),    # pooled map #2
            pltpu.VMEM((9 * _GP, L3), jnp.float32),      # conv3 im2col
        ],
    )

    # ---- one-time weight packing (hoisted out of the per-call path) ----------
    def prepare_params(p):
        f32 = jnp.float32
        w1c = p["cw1"].reshape(9, C1).T.astype(f32)                    # (C1, 9)
        w2 = jnp.transpose(p["cw2"].reshape(9, C1, C2), (2, 0, 1))     # (C2, 9, C1)
        w2p = jnp.pad(w2, ((0, 0), (0, 0), (0, _GP - C1))).reshape(C2, 9 * _GP)
        w3 = jnp.transpose(p["cw3"].reshape(9, C2, C3), (2, 0, 1))     # (C3, 9, C2)
        w3p = jnp.pad(w3, ((0, 0), (0, 0), (0, _GP - C2))).reshape(C3, 9 * _GP)

        Wp = jnp.zeros(_WPACK_SHAPE, f32)
        Wp = Wp.at[0:C1, _W1_COL:_W1_COL + 9].set(w1c)
        Wp = Wp.at[0:C1, _B1_COL].set(p["cb1"].astype(f32))
        Wp = Wp.at[0:C2, _W2_COL:_W2_COL + 9 * _GP].set(w2p)
        Wp = Wp.at[0:C2, _B2_COL].set(p["cb2"].astype(f32))
        Wp = Wp.at[0:C3, _W3_COL:_W3_COL + 9 * _GP].set(w3p)
        Wp = Wp.at[0:C3, _B3_COL].set(p["cb3"].astype(f32))
        Wp = Wp.at[0:32, _L1_COL:_L1_COL + 32].set(p["lw1"].T.astype(f32))
        Wp = Wp.at[0:32, _LB1_COL].set(p["lb1"].astype(f32))
        Wp = Wp.at[0, _L2_COL:_L2_COL + 32].set(p["lw2"][:, 0].astype(f32))
        Wp = Wp.at[0, _LB2_COL].set(p["lb2"][0].astype(f32))
        return Wp

    @jax.jit
    def forward(x_nchw, wpacked):
        # x_nchw: (1, 1, S, S) float32 (PyTorch NCHW convention, batch must be 1)
        x_flat = x_nchw.reshape(1, S * S).astype(jnp.float32)
        return fused(x_flat, wpacked).reshape(1)

    return forward, prepare_params


# ----------------------------------------------------------------------------
# Pure-JAX reference (for correctness check)
# ----------------------------------------------------------------------------
def reference_forward(x_nchw, p):
    y = jnp.transpose(x_nchw, (0, 2, 3, 1))          # NHWC
    for w, b in [(p["cw1"], p["cb1"]), (p["cw2"], p["cb2"]), (p["cw3"], p["cb3"])]:
        y = lax.conv_general_dilated(
            y, w, (1, 1), "VALID", dimension_numbers=("NHWC", "HWIO", "NHWC")
        ) + b
        y = lax.reduce_window(
            y, -jnp.inf, lax.max, (1, 3, 3, 1), (1, 3, 3, 1), "VALID"
        )
    flat = jnp.transpose(y[0], (2, 0, 1)).reshape(1, -1)
    h = jax.nn.relu(flat @ p["lw1"] + p["lb1"][None, :])
    o = jax.nn.relu(h @ p["lw2"] + p["lb2"][None, :])
    return o.reshape(1)


# ----------------------------------------------------------------------------
# Deterministic parameter init (xavier_uniform weights, small uniform biases)
# ----------------------------------------------------------------------------
def _xavier(key, shape, fan_in, fan_out):
    bound = (6.0 / (fan_in + fan_out)) ** 0.5
    return jax.random.uniform(key, shape, jnp.float32, -bound, bound)


def init_params(key, flatten_size):
    ks = jax.random.split(key, 10)
    p = {}
    # conv weights stored as (kh, kw, Cin, Cout)
    p["cw1"] = _xavier(ks[0], (3, 3, 1, 9), 1 * 9, 9 * 9)
    p["cb1"] = jax.random.uniform(ks[1], (9,), jnp.float32, -0.1, 0.1)
    p["cw2"] = _xavier(ks[2], (3, 3, 9, 15), 9 * 9, 15 * 9)
    p["cb2"] = jax.random.uniform(ks[3], (15,), jnp.float32, -0.1, 0.1)
    p["cw3"] = _xavier(ks[4], (3, 3, 15, 32), 15 * 9, 32 * 9)
    p["cb3"] = jax.random.uniform(ks[5], (32,), jnp.float32, -0.1, 0.1)
    # linear weights stored as (in, out)
    p["lw1"] = _xavier(ks[6], (flatten_size, 32), flatten_size, 32)
    p["lb1"] = jax.random.uniform(ks[7], (32,), jnp.float32, -0.1, 0.1)
    p["lw2"] = _xavier(ks[8], (32, 1), 32, 1)
    p["lb2"] = jax.random.uniform(ks[9], (1,), jnp.float32, -0.1, 0.1)
    return p


if __name__ == "__main__":
    # state_size = 53: 53 ->conv 51 ->pool 17 ->conv 15 ->pool 5 ->conv 3 ->pool 1
    # flatten_size = 32 * 1 * 1 = 32
    STATE = 53
    FLATTEN = 32

    key = jax.random.PRNGKey(0)
    kp, kx = jax.random.split(key)
    params = init_params(kp, FLATTEN)
    x = jax.random.normal(kx, (1, 1, STATE, STATE), jnp.float32)  # NCHW, batch=1

    forward, prepare_params = make_value_net_forward(STATE)
    wpacked = jax.block_until_ready(prepare_params(params))       # one-time packing

    out = jax.block_until_ready(forward(x, wpacked))

    ref = reference_forward(x, params)
    assert out.shape == (1,)
    assert jnp.allclose(out, ref, atol=3e-3, rtol=3e-3), (out, ref)

    print("KERNEL_OK")
</pallas_src>

<mosaic_0001>
module attributes {stable_mosaic.version = 11 : i64} {
  func.func @kernel(%arg0: memref<1x2809xf32, #tpu.memory_space<vmem>>, %arg1: memref<32x768xf32, #tpu.memory_space<vmem>>, %arg2: memref<1x1xf32, #tpu.memory_space<vmem>>, %arg3: memref<9x2699xf32, #tpu.memory_space<vmem>>, %arg4: memref<9x289xf32, #tpu.memory_space<vmem>>, %arg5: memref<144x253xf32, #tpu.memory_space<vmem>>, %arg6: memref<15x25xf32, #tpu.memory_space<vmem>>, %arg7: memref<144x13xf32, #tpu.memory_space<vmem>>) attributes {dimension_semantics = [], scalar_prefetch = 0 : i64, scratch_operands = 5 : i64, tpu.core_type = #tpu.core_type<tc>} {
    %cst = arith.constant 0.000000e+00 : f32
    %0 = vector.broadcast %cst : f32 to vector<144x253xf32>
    %c0 = arith.constant 0 : index
    %c0_0 = arith.constant 0 : index
    %1 = vector.load %arg5[%c0, %c0_0] : memref<144x253xf32, #tpu.memory_space<vmem>>, vector<144x253xf32>
    tpu.vector_store %arg5[%c0, %c0_0], %0 {strides = array<i32>} : memref<144x253xf32, #tpu.memory_space<vmem>>, vector<144x253xf32>,
    %cst_1 = arith.constant 0.000000e+00 : f32
    %2 = vector.broadcast %cst_1 : f32 to vector<144x13xf32>
    %c0_2 = arith.constant 0 : index
    %c0_3 = arith.constant 0 : index
    %3 = vector.load %arg7[%c0_2, %c0_3] : memref<144x13xf32, #tpu.memory_space<vmem>>, vector<144x13xf32>
    tpu.vector_store %arg7[%c0_2, %c0_3], %2 {strides = array<i32>} : memref<144x13xf32, #tpu.memory_space<vmem>>, vector<144x13xf32>,
    %c0_4 = arith.constant 0 : index
    %c0_5 = arith.constant 0 : index
    %4 = vector.load %arg1[%c0_4, %c0_5] : memref<32x768xf32, #tpu.memory_space<vmem>>, vector<9x16xf32>
    %5 = vector.extract_strided_slice %4 {offsets = [0, 9], sizes = [9, 1], strides = [1, 1]} : vector<9x16xf32> to vector<9x1xf32>
    %cst_6 = arith.constant 0.000000e+00 : f32
    %6 = vector.broadcast %cst_6 : f32 to vector<9x514xf32>
    %c0_7 = arith.constant 0 : index
    %c0_8 = arith.constant 0 : index
    %7 = vector.load %arg0[%c0_7, %c0_8] : memref<1x2809xf32, #tpu.memory_space<vmem>>, vector<1x514xf32>
    %8 = vector.extract_strided_slice %4 {offsets = [0, 0], sizes = [9, 1], strides = [1, 1]} : vector<9x16xf32> to vector<9x1xf32>
    %9 = vector.broadcast %8 : vector<9x1xf32> to vector<9x514xf32>
    %10 = vector.broadcast %7 : vector<1x514xf32> to vector<9x514xf32>
    %11 = arith.mulf %9, %10 : vector<9x514xf32>
    %12 = arith.addf %6, %11 : vector<9x514xf32>
    %c0_9 = arith.constant 0 : index
    %c1 = arith.constant 1 : index
    %13 = vector.load %arg0[%c0_9, %c1] : memref<1x2809xf32, #tpu.memory_space<vmem>>, vector<1x514xf32>
    %14 = vector.extract_strided_slice %4 {offsets = [0, 1], sizes = [9, 1], strides = [1, 1]} : vector<9x16xf32> to vector<9x1xf32>
    %15 = vector.broadcast %14 : vector<9x1xf32> to vector<9x514xf32>
    %16 = vector.broadcast %13 : vector<1x514xf32> to vector<9x514xf32>
    %17 = arith.mulf %15, %16 : vector<9x514xf32>
    %18 = arith.addf %12, %17 : vector<9x514xf32>
    %c0_10 = arith.constant 0 : index
    %c2 = arith.constant 2 : index
    %19 = vector.load %arg0[%c0_10, %c2] : memref<1x2809xf32, #tpu.memory_space<vmem>>, vector<1x514xf32>
    %20 = vector.extract_strided_slice %4 {offsets = [0, 2], sizes = [9, 1], strides = [1, 1]} : vector<9x16xf32> to vector<9x1xf32>
    %21 = vector.broadcast %20 : vector<9x1xf32> to vector<9x514xf32>
    %22 = vector.broadcast %19 : vector<1x514xf32> to vector<9x514xf32>
    %23 = arith.mulf %21, %22 : vector<9x514xf32>
    %24 = arith.addf %18, %23 : vector<9x514xf32>
    %c0_11 = arith.constant 0 : index
    %c53 = arith.constant 53 : index
    %25 = vector.load %arg0[%c0_11, %c53] : memref<1x2809xf32, #tpu.memory_space<vmem>>, vector<1x514xf32>
    %26 = vector.extract_strided_slice %4 {offsets = [0, 3], sizes = [9, 1], strides = [1, 1]} : vector<9x16xf32> to vector<9x1xf32>
    %27 = vector.broadcast %26 : vector<9x1xf32> to vector<9x514xf32>
    %28 = vector.broadcast %25 : vector<1x514xf32> to vector<9x514xf32>
    %29 = arith.mulf %27, %28 : vector<9x514xf32>
    %30 = arith.addf %24, %29 : vector<9x514xf32>
    %c0_12 = arith.constant 0 : index
    %c54 = arith.constant 54 : index
    %31 = vector.load %arg0[%c0_12, %c54] : memref<1x2809xf32, #tpu.memory_space<vmem>>, vector<1x514xf32>
    %32 = vector.extract_strided_slice %4 {offsets = [0, 4], sizes = [9, 1], strides = [1, 1]} : vector<9x16xf32> to vector<9x1xf32>
    %33 = vector.broadcast %32 : vector<9x1xf32> to vector<9x514xf32>
    %34 = vector.broadcast %31 : vector<1x514xf32> to vector<9x514xf32>
    %35 = arith.mulf %33, %34 : vector<9x514xf32>
    %36 = arith.addf %30, %35 : vector<9x514xf32>
    %c0_13 = arith.constant 0 : index
    %c55 = arith.constant 55 : index
    %37 = vector.load %arg0[%c0_13, %c55] : memref<1x2809xf32, #tpu.memory_space<vmem>>, vector<1x514xf32>
    %38 = vector.extract_strided_slice %4 {offsets = [0, 5], sizes = [9, 1], strides = [1, 1]} : vector<9x16xf32> to vector<9x1xf32>
    %39 = vector.broadcast %38 : vector<9x1xf32> to vector<9x514xf32>
    %40 = vector.broadcast %37 : vector<1x514xf32> to vector<9x514xf32>
    %41 = arith.mulf %39, %40 : vector<9x514xf32>
    %42 = arith.addf %36, %41 : vector<9x514xf32>
    %c0_14 = arith.constant 0 : index
    %c106 = arith.constant 106 : index
    %43 = vector.load %arg0[%c0_14, %c106] : memref<1x2809xf32, #tpu.memory_space<vmem>>, vector<1x514xf32>
    %44 = vector.extract_strided_slice %4 {offsets = [0, 6], sizes = [9, 1], strides = [1, 1]} : vector<9x16xf32> to vector<9x1xf32>
    %45 = vector.broadcast %44 : vector<9x1xf32> to vector<9x514xf32>
    %46 = vector.broadcast %43 : vector<1x514xf32> to vector<9x514xf32>
    %47 = arith.mulf %45, %46 : vector<9x514xf32>
    %48 = arith.addf %42, %47 : vector<9x514xf32>
    %c0_15 = arith.constant 0 : index
    %c107 = arith.constant 107 : index
    %49 = vector.load %arg0[%c0_15, %c107] : memref<1x2809xf32, #tpu.memory_space<vmem>>, vector<1x514xf32>
    %50 = vector.extract_strided_slice %4 {offsets = [0, 7], sizes = [9, 1], strides = [1, 1]} : vector<9x16xf32> to vector<9x1xf32>
    %51 = vector.broadcast %50 : vector<9x1xf32> to vector<9x514xf32>
    %52 = vector.broadcast %49 : vector<1x514xf32> to vector<9x514xf32>
    %53 = arith.mulf %51, %52 : vector<9x514xf32>
    %54 = arith.addf %48, %53 : vector<9x514xf32>
    %c0_16 = arith.constant 0 : index
    %c108 = arith.constant 108 : index
    %55 = vector.load %arg0[%c0_16, %c108] : memref<1x2809xf32, #tpu.memory_space<vmem>>, vector<1x514xf32>
    %56 = vector.extract_strided_slice %4 {offsets = [0, 8], sizes = [9, 1], strides = [1, 1]} : vector<9x16xf32> to vector<9x1xf32>
    %57 = vector.broadcast %56 : vector<9x1xf32> to vector<9x514xf32>
    %58 = vector.broadcast %55 : vector<1x514xf32> to vector<9x514xf32>
    %59 = arith.mulf %57, %58 : vector<9x514xf32>
    %60 = arith.addf %54, %59 : vector<9x514xf32>
    %61 = vector.broadcast %5 : vector<9x1xf32> to vector<9x514xf32>
    %62 = arith.addf %60, %61 : vector<9x514xf32>
    %63 = vector.extract_strided_slice %62 {offsets = [0, 0], sizes = [9, 512], strides = [1, 1]} : vector<9x514xf32> to vector<9x512xf32>
    %64 = vector.extract_strided_slice %62 {offsets = [0, 1], sizes = [9, 512], strides = [1, 1]} : vector<9x514xf32> to vector<9x512xf32>
    %65 = arith.maximumf %63, %64 : vector<9x512xf32>
    %66 = vector.extract_strided_slice %62 {offsets = [0, 2], sizes = [9, 512], strides = [1, 1]} : vector<9x514xf32> to vector<9x512xf32>
    %67 = arith.maximumf %65, %66 : vector<9x512xf32>
    %c0_17 = arith.constant 0 : index
    %c0_18 = arith.constant 0 : index
    %68 = vector.load %arg3[%c0_17, %c0_18] : memref<9x2699xf32, #tpu.memory_space<vmem>>, vector<9x512xf32>
    tpu.vector_store %arg3[%c0_17, %c0_18], %67 {strides = array<i32>} : memref<9x2699xf32, #tpu.memory_space<vmem>>, vector<9x512xf32>,
    %cst_19 = arith.constant 0.000000e+00 : f32
    %69 = vector.broadcast %cst_19 : f32 to vector<9x514xf32>
    %c0_20 = arith.constant 0 : index
    %c512 = arith.constant 512 : index
    %70 = vector.load %arg0[%c0_20, %c512] : memref<1x2809xf32, #tpu.memory_space<vmem>>, vector<1x514xf32>
    %71 = vector.extract_strided_slice %4 {offsets = [0, 0], sizes = [9, 1], strides = [1, 1]} : vector<9x16xf32> to vector<9x1xf32>
    %72 = vector.broadcast %71 : vector<9x1xf32> to vector<9x514xf32>
    %73 = vector.broadcast %70 : vector<1x514xf32> to vector<9x514xf32>
    %74 = arith.mulf %72, %73 : vector<9x514xf32>
    %75 = arith.addf %69, %74 : vector<9x514xf32>
    %c0_21 = arith.constant 0 : index
    %c513 = arith.constant 513 : index
    %76 = vector.load %arg0[%c0_21, %c513] : memref<1x2809xf32, #tpu.memory_space<vmem>>, vector<1x514xf32>
    %77 = vector.extract_strided_slice %4 {offsets = [0, 1], sizes = [9, 1], strides = [1, 1]} : vector<9x16xf32> to vector<9x1xf32>
    %78 = vector.broadcast %77 : vector<9x1xf32> to vector<9x514xf32>
    %79 = vector.broadcast %76 : vector<1x514xf32> to vector<9x514xf32>
    %80 = arith.mulf %78, %79 : vector<9x514xf32>
    %81 = arith.addf %75, %80 : vector<9x514xf32>
    %c0_22 = arith.constant 0 : index
    %c514 = arith.constant 514 : index
    %82 = vector.load %arg0[%c0_22, %c514] : memref<1x2809xf32, #tpu.memory_space<vmem>>, vector<1x514xf32>
    %83 = vector.extract_strided_slice %4 {offsets = [0, 2], sizes = [9, 1], strides = [1, 1]} : vector<9x16xf32> to vector<9x1xf32>
    %84 = vector.broadcast %83 : vector<9x1xf32> to vector<9x514xf32>
    %85 = vector.broadcast %82 : vector<1x514xf32> to vector<9x514xf32>
    %86 = arith.mulf %84, %85 : vector<9x514xf32>
    %87 = arith.addf %81, %86 : vector<9x514xf32>
    %c0_23 = arith.constant 0 : index
    %c565 = arith.constant 565 : index
    %88 = vector.load %arg0[%c0_23, %c565] : memref<1x2809xf32, #tpu.memory_space<vmem>>, vector<1x514xf32>
    %89 = vector.extract_strided_slice %4 {offsets = [0, 3], sizes = [9, 1], strides = [1, 1]} : vector<9x16xf32> to vector<9x1xf32>
    %90 = vector.broadcast %89 : vector<9x1xf32> to vector<9x514xf32>
    %91 = vector.broadcast %88 : vector<1x514xf32> to vector<9x514xf32>
    %92 = arith.mulf %90, %91 : vector<9x514xf32>
    %93 = arith.addf %87, %92 : vector<9x514xf32>
    %c0_24 = arith.constant 0 : index
    %c566 = arith.constant 566 : index
    %94 = vector.load %arg0[%c0_24, %c566] : memref<1x2809xf32, #tpu.memory_space<vmem>>, vector<1x514xf32>
    %95 = vector.extract_strided_slice %4 {offsets = [0, 4], sizes = [9, 1], strides = [1, 1]} : vector<9x16xf32> to vector<9x1xf32>
    %96 = vector.broadcast %95 : vector<9x1xf32> to vector<9x514xf32>
    %97 = vector.broadcast %94 : vector<1x514xf32> to vector<9x514xf32>
    %98 = arith.mulf %96, %97 : vector<9x514xf32>
    %99 = arith.addf %93, %98 : vector<9x514xf32>
    %c0_25 = arith.constant 0 : index
    %c567 = arith.constant 567 : index
    %100 = vector.load %arg0[%c0_25, %c567] : memref<1x2809xf32, #tpu.memory_space<vmem>>, vector<1x514xf32>
    %101 = vector.extract_strided_slice %4 {offsets = [0, 5], sizes = [9, 1], strides = [1, 1]} : vector<9x16xf32> to vector<9x1xf32>
    %102 = vector.broadcast %101 : vector<9x1xf32> to vector<9x514xf32>
    %103 = vector.broadcast %100 : vector<1x514xf32> to vector<9x514xf32>
    %104 = arith.mulf %102, %103 : vector<9x514xf32>
    %105 = arith.addf %99, %104 : vector<9x514xf32>
    %c0_26 = arith.constant 0 : index
    %c618 = arith.constant 618 : index
    %106 = vector.load %arg0[%c0_26, %c618] : memref<1x2809xf32, #tpu.memory_space<vmem>>, vector<1x514xf32>
    %107 = vector.extract_strided_slice %4 {offsets = [0, 6], sizes = [9, 1], strides = [1, 1]} : vector<9x16xf32> to vector<9x1xf32>
    %108 = vector.broadcast %107 : vector<9x1xf32> to vector<9x514xf32>
    %109 = vector.broadcast %106 : vector<1x514xf32> to vector<9x514xf32>
    %110 = arith.mulf %108, %109 : vector<9x514xf32>
    %111 = arith.addf %105, %110 : vector<9x514xf32>
    %c0_27 = arith.constant 0 : index
    %c619 = arith.constant 619 : index
    %112 = vector.load %arg0[%c0_27, %c619] : memref<1x2809xf32, #tpu.memory_space<vmem>>, vector<1x514xf32>
    %113 = vector.extract_strided_slice %4 {offsets = [0, 7], sizes = [9, 1], strides = [1, 1]} : vector<9x16xf32> to vector<9x1xf32>
    %114 = vector.broadcast %113 : vector<9x1xf32> to vector<9x514xf32>
    %115 = vector.broadcast %112 : vector<1x514xf32> to vector<9x514xf32>
    %116 = arith.mulf %114, %115 : vector<9x514xf32>
    %117 = arith.addf %111, %116 : vector<9x514xf32>
    %c0_28 = arith.constant 0 : index
    %c620 = arith.constant 620 : index
    %118 = vector.load %arg0[%c0_28, %c620] : memref<1x2809xf32, #tpu.memory_space<vmem>>, vector<1x514xf32>
    %119 = vector.extract_strided_slice %4 {offsets = [0, 8], sizes = [9, 1], strides = [1, 1]} : vector<9x16xf32> to vector<9x1xf32>
    %120 = vector.broadcast %119 : vector<9x1xf32> to vector<9x514xf32>
    %121 = vector.broadcast %118 : vector<1x514xf32> to vector<9x514xf32>
    %122 = arith.mulf %120, %121 : vector<9x514xf32>
    %123 = arith.addf %117, %122 : vector<9x514xf32>
    %124 = vector.broadcast %5 : vector<9x1xf32> to vector<9x514xf32>
    %125 = arith.addf %123, %124 : vector<9x514xf32>
    %126 = vector.extract_strided_slice %125 {offsets = [0, 0], sizes = [9, 512], strides = [1, 1]} : vector<9x514xf32> to vector<9x512xf32>
    %127 = vector.extract_strided_slice %125 {offsets = [0, 1], sizes = [9, 512], strides = [1, 1]} : vector<9x514xf32> to vector<9x512xf32>
    %128 = arith.maximumf %126, %127 : vector<9x512xf32>
    %129 = vector.extract_strided_slice %125 {offsets = [0, 2], sizes = [9, 512], strides = [1, 1]} : vector<9x514xf32> to vector<9x512xf32>
    %130 = arith.maximumf %128, %129 : vector<9x512xf32>
    %c0_29 = arith.constant 0 : index
    %c512_30 = arith.constant 512 : index
    %131 = vector.load %arg3[%c0_29, %c512_30] : memref<9x2699xf32, #tpu.memory_space<vmem>>, vector<9x512xf32>
    tpu.vector_store %arg3[%c0_29, %c512_30], %130 {strides = array<i32>} : memref<9x2699xf32, #tpu.memory_space<vmem>>, vector<9x512xf32>,
    %cst_31 = arith.constant 0.000000e+00 : f32
    %132 = vector.broadcast %cst_31 : f32 to vector<9x514xf32>
    %c0_32 = arith.constant 0 : index
    %c1024 = arith.constant 1024 : index
    %133 = vector.load %arg0[%c0_32, %c1024] : memref<1x2809xf32, #tpu.memory_space<vmem>>, vector<1x514xf32>
    %134 = vector.extract_strided_slice %4 {offsets = [0, 0], sizes = [9, 1], strides = [1, 1]} : vector<9x16xf32> to vector<9x1xf32>
    %135 = vector.broadcast %134 : vector<9x1xf32> to vector<9x514xf32>
    %136 = vector.broadcast %133 : vector<1x514xf32> to vector<9x514xf32>
    %137 = arith.mulf %135, %136 : vector<9x514xf32>
    %138 = arith.addf %132, %137 : vector<9x514xf32>
    %c0_33 = arith.constant 0 : index
    %c1025 = arith.constant 1025 : index
    %139 = vector.load %arg0[%c0_33, %c1025] : memref<1x2809xf32, #tpu.memory_space<vmem>>, vector<1x514xf32>
    %140 = vector.extract_strided_slice %4 {offsets = [0, 1], sizes = [9, 1], strides = [1, 1]} : vector<9x16xf32> to vector<9x1xf32>
    %141 = vector.broadcast %140 : vector<9x1xf32> to vector<9x514xf32>
    %142 = vector.broadcast %139 : vector<1x514xf32> to vector<9x514xf32>
    %143 = arith.mulf %141, %142 : vector<9x514xf32>
    %144 = arith.addf %138, %143 : vector<9x514xf32>
    %c0_34 = arith.constant 0 : index
    %c1026 = arith.constant 1026 : index
    %145 = vector.load %arg0[%c0_34, %c1026] : memref<1x2809xf32, #tpu.memory_space<vmem>>, vector<1x514xf32>
    %146 = vector.extract_strided_slice %4 {offsets = [0, 2], sizes = [9, 1], strides = [1, 1]} : vector<9x16xf32> to vector<9x1xf32>
    %147 = vector.broadcast %146 : vector<9x1xf32> to vector<9x514xf32>
    %148 = vector.broadcast %145 : vector<1x514xf32> to vector<9x514xf32>
    %149 = arith.mulf %147, %148 : vector<9x514xf32>
    %150 = arith.addf %144, %149 : vector<9x514xf32>
    %c0_35 = arith.constant 0 : index
    %c1077 = arith.constant 1077 : index
    %151 = vector.load %arg0[%c0_35, %c1077] : memref<1x2809xf32, #tpu.memory_space<vmem>>, vector<1x514xf32>
    %152 = vector.extract_strided_slice %4 {offsets = [0, 3], sizes = [9, 1], strides = [1, 1]} : vector<9x16xf32> to vector<9x1xf32>
    %153 = vector.broadcast %152 : vector<9x1xf32> to vector<9x514xf32>
    %154 = vector.broadcast %151 : vector<1x514xf32> to vector<9x514xf32>
    %155 = arith.mulf %153, %154 : vector<9x514xf32>
    %156 = arith.addf %150, %155 : vector<9x514xf32>
    %c0_36 = arith.constant 0 : index
    %c1078 = arith.constant 1078 : index
    %157 = vector.load %arg0[%c0_36, %c1078] : memref<1x2809xf32, #tpu.memory_space<vmem>>, vector<1x514xf32>
    %158 = vector.extract_strided_slice %4 {offsets = [0, 4], sizes = [9, 1], strides = [1, 1]} : vector<9x16xf32> to vector<9x1xf32>
    %159 = vector.broadcast %158 : vector<9x1xf32> to vector<9x514xf32>
    %160 = vector.broadcast %157 : vector<1x514xf32> to vector<9x514xf32>
    %161 = arith.mulf %159, %160 : vector<9x514xf32>
    %162 = arith.addf %156, %161 : vector<9x514xf32>
    %c0_37 = arith.constant 0 : index
    %c1079 = arith.constant 1079 : index
    %163 = vector.load %arg0[%c0_37, %c1079] : memref<1x2809xf32, #tpu.memory_space<vmem>>, vector<1x514xf32>
    %164 = vector.extract_strided_slice %4 {offsets = [0, 5], sizes = [9, 1], strides = [1, 1]} : vector<9x16xf32> to vector<9x1xf32>
    %165 = vector.broadcast %164 : vector<9x1xf32> to vector<9x514xf32>
    %166 = vector.broadcast %163 : vector<1x514xf32> to vector<9x514xf32>
    %167 = arith.mulf %165, %166 : vector<9x514xf32>
    %168 = arith.addf %162, %167 : vector<9x514xf32>
    %c0_38 = arith.constant 0 : index
    %c1130 = arith.constant 1130 : index
    %169 = vector.load %arg0[%c0_38, %c1130] : memref<1x2809xf32, #tpu.memory_space<vmem>>, vector<1x514xf32>
    %170 = vector.extract_strided_slice %4 {offsets = [0, 6], sizes = [9, 1], strides = [1, 1]} : vector<9x16xf32> to vector<9x1xf32>
    %171 = vector.broadcast %170 : vector<9x1xf32> to vector<9x514xf32>
    %172 = vector.broadcast %169 : vector<1x514xf32> to vector<9x514xf32>
    %173 = arith.mulf %171, %172 : vector<9x514xf32>
    %174 = arith.addf %168, %173 : vector<9x514xf32>
    %c0_39 = arith.constant 0 : index
    %c1131 = arith.constant 1131 : index
    %175 = vector.load %arg0[%c0_39, %c1131] : memref<1x2809xf32, #tpu.memory_space<vmem>>, vector<1x514xf32>
    %176 = vector.extract_strided_slice %4 {offsets = [0, 7], sizes = [9, 1], strides = [1, 1]} : vector<9x16xf32> to vector<9x1xf32>
    %177 = vector.broadcast %176 : vector<9x1xf32> to vector<9x514xf32>
    %178 = vector.broadcast %175 : vector<1x514xf32> to vector<9x514xf32>
    %179 = arith.mulf %177, %178 : vector<9x514xf32>
    %180 = arith.addf %174, %179 : vector<9x514xf32>
    %c0_40 = arith.constant 0 : index
    %c1132 = arith.constant 1132 : index
    %181 = vector.load %arg0[%c0_40, %c1132] : memref<1x2809xf32, #tpu.memory_space<vmem>>, vector<1x514xf32>
    %182 = vector.extract_strided_slice %4 {offsets = [0, 8], sizes = [9, 1], strides = [1, 1]} : vector<9x16xf32> to vector<9x1xf32>
    %183 = vector.broadcast %182 : vector<9x1xf32> to vector<9x514xf32>
    %184 = vector.broadcast %181 : vector<1x514xf32> to vector<9x514xf32>
    %185 = arith.mulf %183, %184 : vector<9x514xf32>
    %186 = arith.addf %180, %185 : vector<9x514xf32>
    %187 = vector.broadcast %5 : vector<9x1xf32> to vector<9x514xf32>
    %188 = arith.addf %186, %187 : vector<9x514xf32>
    %189 = vector.extract_strided_slice %188 {offsets = [0, 0], sizes = [9, 512], strides = [1, 1]} : vector<9x514xf32> to vector<9x512xf32>
    %190 = vector.extract_strided_slice %188 {offsets = [0, 1], sizes = [9, 512], strides = [1, 1]} : vector<9x514xf32> to vector<9x512xf32>
    %191 = arith.maximumf %189, %190 : vector<9x512xf32>
    %192 = vector.extract_strided_slice %188 {offsets = [0, 2], sizes = [9, 512], strides = [1, 1]} : vector<9x514xf32> to vector<9x512xf32>
    %193 = arith.maximumf %191, %192 : vector<9x512xf32>
    %c0_41 = arith.constant 0 : index
    %c1024_42 = arith.constant 1024 : index
    %194 = vector.load %arg3[%c0_41, %c1024_42] : memref<9x2699xf32, #tpu.memory_space<vmem>>, vector<9x512xf32>
    tpu.vector_store %arg3[%c0_41, %c1024_42], %193 {strides = array<i32>} : memref<9x2699xf32, #tpu.memory_space<vmem>>, vector<9x512xf32>,
    %cst_43 = arith.constant 0.000000e+00 : f32
    %195 = vector.broadcast %cst_43 : f32 to vector<9x514xf32>
    %c0_44 = arith.constant 0 : index
    %c1536 = arith.constant 1536 : index
    %196 = vector.load %arg0[%c0_44, %c1536] : memref<1x2809xf32, #tpu.memory_space<vmem>>, vector<1x514xf32>
    %197 = vector.extract_strided_slice %4 {offsets = [0, 0], sizes = [9, 1], strides = [1, 1]} : vector<9x16xf32> to vector<9x1xf32>
    %198 = vector.broadcast %197 : vector<9x1xf32> to vector<9x514xf32>
    %199 = vector.broadcast %196 : vector<1x514xf32> to vector<9x514xf32>
    %200 = arith.mulf %198, %199 : vector<9x514xf32>
    %201 = arith.addf %195, %200 : vector<9x514xf32>
    %c0_45 = arith.constant 0 : index
    %c1537 = arith.constant 1537 : index
    %202 = vector.load %arg0[%c0_45, %c1537] : memref<1x2809xf32, #tpu.memory_space<vmem>>, vector<1x514xf32>
    %203 = vector.extract_strided_slice %4 {offsets = [0, 1], sizes = [9, 1], strides = [1, 1]} : vector<9x16xf32> to vector<9x1xf32>
    %204 = vector.broadcast %203 : vector<9x1xf32> to vector<9x514xf32>
    %205 = vector.broadcast %202 : vector<1x514xf32> to vector<9x514xf32>
    %206 = arith.mulf %204, %205 : vector<9x514xf32>
    %207 = arith.addf %201, %206 : vector<9x514xf32>
    %c0_46 = arith.constant 0 : index
    %c1538 = arith.constant 1538 : index
    %208 = vector.load %arg0[%c0_46, %c1538] : memref<1x2809xf32, #tpu.memory_space<vmem>>, vector<1x514xf32>
    %209 = vector.extract_strided_slice %4 {offsets = [0, 2], sizes = [9, 1], strides = [1, 1]} : vector<9x16xf32> to vector<9x1xf32>
    %210 = vector.broadcast %209 : vector<9x1xf32> to vector<9x514xf32>
    %211 = vector.broadcast %208 : vector<1x514xf32> to vector<9x514xf32>
    %212 = arith.mulf %210, %211 : vector<9x514xf32>
    %213 = arith.addf %207, %212 : vector<9x514xf32>
    %c0_47 = arith.constant 0 : index
    %c1589 = arith.constant 1589 : index
    %214 = vector.load %arg0[%c0_47, %c1589] : memref<1x2809xf32, #tpu.memory_space<vmem>>, vector<1x514xf32>
    %215 = vector.extract_strided_slice %4 {offsets = [0, 3], sizes = [9, 1], strides = [1, 1]} : vector<9x16xf32> to vector<9x1xf32>
    %216 = vector.broadcast %215 : vector<9x1xf32> to vector<9x514xf32>
    %217 = vector.broadcast %214 : vector<1x514xf32> to vector<9x514xf32>
    %218 = arith.mulf %216, %217 : vector<9x514xf32>
    %219 = arith.addf %213, %218 : vector<9x514xf32>
    %c0_48 = arith.constant 0 : index
    %c1590 = arith.constant 1590 : index
    %220 = vector.load %arg0[%c0_48, %c1590] : memref<1x2809xf32, #tpu.memory_space<vmem>>, vector<1x514xf32>
    %221 = vector.extract_strided_slice %4 {offsets = [0, 4], sizes = [9, 1], strides = [1, 1]} : vector<9x16xf32> to vector<9x1xf32>
    %222 = vector.broadcast %221 : vector<9x1xf32> to vector<9x514xf32>
    %223 = vector.broadcast %220 : vector<1x514xf32> to vector<9x514xf32>
    %224 = arith.mulf %222, %223 : vector<9x514xf32>
    %225 = arith.addf %219, %224 : vector<9x514xf32>
    %c0_49 = arith.constant 0 : index
    %c1591 = arith.constant 1591 : index
    %226 = vector.load %arg0[%c0_49, %c1591] : memref<1x2809xf32, #tpu.memory_space<vmem>>, vector<1x514xf32>
    %227 = vector.extract_strided_slice %4 {offsets = [0, 5], sizes = [9, 1], strides = [1, 1]} : vector<9x16xf32> to vector<9x1xf32>
    %228 = vector.broadcast %227 : vector<9x1xf32> to vector<9x514xf32>
    %229 = vector.broadcast %226 : vector<1x514xf32> to vector<9x514xf32>
    %230 = arith.mulf %228, %229 : vector<9x514xf32>
    %231 = arith.addf %225, %230 : vector<9x514xf32>
    %c0_50 = arith.constant 0 : index
    %c1642 = arith.constant 1642 : index
    %232 = vector.load %arg0[%c0_50, %c1642] : memref<1x2809xf32, #tpu.memory_space<vmem>>, vector<1x514xf32>
    %233 = vector.extract_strided_slice %4 {offsets = [0, 6], sizes = [9, 1], strides = [1, 1]} : vector<9x16xf32> to vector<9x1xf32>
    %234 = vector.broadcast %233 : vector<9x1xf32> to vector<9x514xf32>
    %235 = vector.broadcast %232 : vector<1x514xf32> to vector<9x514xf32>
    %236 = arith.mulf %234, %235 : vector<9x514xf32>
    %237 = arith.addf %231, %236 : vector<9x514xf32>
    %c0_51 = arith.constant 0 : index
    %c1643 = arith.constant 1643 : index
    %238 = vector.load %arg0[%c0_51, %c1643] : memref<1x2809xf32, #tpu.memory_space<vmem>>, vector<1x514xf32>
    %239 = vector.extract_strided_slice %4 {offsets = [0, 7], sizes = [9, 1], strides = [1, 1]} : vector<9x16xf32> to vector<9x1xf32>
    %240 = vector.broadcast %239 : vector<9x1xf32> to vector<9x514xf32>
    %241 = vector.broadcast %238 : vector<1x514xf32> to vector<9x514xf32>
    %242 = arith.mulf %240, %241 : vector<9x514xf32>
    %243 = arith.addf %237, %242 : vector<9x514xf32>
    %c0_52 = arith.constant 0 : index
    %c1644 = arith.constant 1644 : index
    %244 = vector.load %arg0[%c0_52, %c1644] : memref<1x2809xf32, #tpu.memory_space<vmem>>, vector<1x514xf32>
    %245 = vector.extract_strided_slice %4 {offsets = [0, 8], sizes = [9, 1], strides = [1, 1]} : vector<9x16xf32> to vector<9x1xf32>
    %246 = vector.broadcast %245 : vector<9x1xf32> to vector<9x514xf32>
    %247 = vector.broadcast %244 : vector<1x514xf32> to vector<9x514xf32>
    %248 = arith.mulf %246, %247 : vector<9x514xf32>
    %249 = arith.addf %243, %248 : vector<9x514xf32>
    %250 = vector.broadcast %5 : vector<9x1xf32> to vector<9x514xf32>
    %251 = arith.addf %249, %250 : vector<9x514xf32>
    %252 = vector.extract_strided_slice %251 {offsets = [0, 0], sizes = [9, 512], strides = [1, 1]} : vector<9x514xf32> to vector<9x512xf32>
    %253 = vector.extract_strided_slice %251 {offsets = [0, 1], sizes = [9, 512], strides = [1, 1]} : vector<9x514xf32> to vector<9x512xf32>
    %254 = arith.maximumf %252, %253 : vector<9x512xf32>
    %255 = vector.extract_strided_slice %251 {offsets = [0, 2], sizes = [9, 512], strides = [1, 1]} : vector<9x514xf32> to vector<9x512xf32>
    %256 = arith.maximumf %254, %255 : vector<9x512xf32>
    %c0_53 = arith.constant 0 : index
    %c1536_54 = arith.constant 1536 : index
    %257 = vector.load %arg3[%c0_53, %c1536_54] : memref<9x2699xf32, #tpu.memory_space<vmem>>, vector<9x512xf32>
    tpu.vector_store %arg3[%c0_53, %c1536_54], %256 {strides = array<i32>} : memref<9x2699xf32, #tpu.memory_space<vmem>>, vector<9x512xf32>,
    %cst_55 = arith.constant 0.000000e+00 : f32
    %258 = vector.broadcast %cst_55 : f32 to vector<9x514xf32>
    %c0_56 = arith.constant 0 : index
    %c2048 = arith.constant 2048 : index
    %259 = vector.load %arg0[%c0_56, %c2048] : memref<1x2809xf32, #tpu.memory_space<vmem>>, vector<1x514xf32>
    %260 = vector.extract_strided_slice %4 {offsets = [0, 0], sizes = [9, 1], strides = [1, 1]} : vector<9x16xf32> to vector<9x1xf32>
    %261 = vector.broadcast %260 : vector<9x1xf32> to vector<9x514xf32>
    %262 = vector.broadcast %259 : vector<1x514xf32> to vector<9x514xf32>
    %263 = arith.mulf %261, %262 : vector<9x514xf32>
    %264 = arith.addf %258, %263 : vector<9x514xf32>
    %c0_57 = arith.constant 0 : index
    %c2049 = arith.constant 2049 : index
    %265 = vector.load %arg0[%c0_57, %c2049] : memref<1x2809xf32, #tpu.memory_space<vmem>>, vector<1x514xf32>
    %266 = vector.extract_strided_slice %4 {offsets = [0, 1], sizes = [9, 1], strides = [1, 1]} : vector<9x16xf32> to vector<9x1xf32>
    %267 = vector.broadcast %266 : vector<9x1xf32> to vector<9x514xf32>
    %268 = vector.broadcast %265 : vector<1x514xf32> to vector<9x514xf32>
    %269 = arith.mulf %267, %268 : vector<9x514xf32>
    %270 = arith.addf %264, %269 : vector<9x514xf32>
    %c0_58 = arith.constant 0 : index
    %c2050 = arith.constant 2050 : index
    %271 = vector.load %arg0[%c0_58, %c2050] : memref<1x2809xf32, #tpu.memory_space<vmem>>, vector<1x514xf32>
    %272 = vector.extract_strided_slice %4 {offsets = [0, 2], sizes = [9, 1], strides = [1, 1]} : vector<9x16xf32> to vector<9x1xf32>
    %273 = vector.broadcast %272 : vector<9x1xf32> to vector<9x514xf32>
    %274 = vector.broadcast %271 : vector<1x514xf32> to vector<9x514xf32>
    %275 = arith.mulf %273, %274 : vector<9x514xf32>
    %276 = arith.addf %270, %275 : vector<9x514xf32>
    %c0_59 = arith.constant 0 : index
    %c2101 = arith.constant 2101 : index
    %277 = vector.load %arg0[%c0_59, %c2101] : memref<1x2809xf32, #tpu.memory_space<vmem>>, vector<1x514xf32>
    %278 = vector.extract_strided_slice %4 {offsets = [0, 3], sizes = [9, 1], strides = [1, 1]} : vector<9x16xf32> to vector<9x1xf32>
    %279 = vector.broadcast %278 : vector<9x1xf32> to vector<9x514xf32>
    %280 = vector.broadcast %277 : vector<1x514xf32> to vector<9x514xf32>
    %281 = arith.mulf %279, %280 : vector<9x514xf32>
    %282 = arith.addf %276, %281 : vector<9x514xf32>
    %c0_60 = arith.constant 0 : index
    %c2102 = arith.constant 2102 : index
    %283 = vector.load %arg0[%c0_60, %c2102] : memref<1x2809xf32, #tpu.memory_space<vmem>>, vector<1x514xf32>
    %284 = vector.extract_strided_slice %4 {offsets = [0, 4], sizes = [9, 1], strides = [1, 1]} : vector<9x16xf32> to vector<9x1xf32>
    %285 = vector.broadcast %284 : vector<9x1xf32> to vector<9x514xf32>
    %286 = vector.broadcast %283 : vector<1x514xf32> to vector<9x514xf32>
    %287 = arith.mulf %285, %286 : vector<9x514xf32>
    %288 = arith.addf %282, %287 : vector<9x514xf32>
    %c0_61 = arith.constant 0 : index
    %c2103 = arith.constant 2103 : index
    %289 = vector.load %arg0[%c0_61, %c2103] : memref<1x2809xf32, #tpu.memory_space<vmem>>, vector<1x514xf32>
    %290 = vector.extract_strided_slice %4 {offsets = [0, 5], sizes = [9, 1], strides = [1, 1]} : vector<9x16xf32> to vector<9x1xf32>
    %291 = vector.broadcast %290 : vector<9x1xf32> to vector<9x514xf32>
    %292 = vector.broadcast %289 : vector<1x514xf32> to vector<9x514xf32>
    %293 = arith.mulf %291, %292 : vector<9x514xf32>
    %294 = arith.addf %288, %293 : vector<9x514xf32>
    %c0_62 = arith.constant 0 : index
    %c2154 = arith.constant 2154 : index
    %295 = vector.load %arg0[%c0_62, %c2154] : memref<1x2809xf32, #tpu.memory_space<vmem>>, vector<1x514xf32>
    %296 = vector.extract_strided_slice %4 {offsets = [0, 6], sizes = [9, 1], strides = [1, 1]} : vector<9x16xf32> to vector<9x1xf32>
    %297 = vector.broadcast %296 : vector<9x1xf32> to vector<9x514xf32>
    %298 = vector.broadcast %295 : vector<1x514xf32> to vector<9x514xf32>
    %299 = arith.mulf %297, %298 : vector<9x514xf32>
    %300 = arith.addf %294, %299 : vector<9x514xf32>
    %c0_63 = arith.constant 0 : index
    %c2155 = arith.constant 2155 : index
    %301 = vector.load %arg0[%c0_63, %c2155] : memref<1x2809xf32, #tpu.memory_space<vmem>>, vector<1x514xf32>
    %302 = vector.extract_strided_slice %4 {offsets = [0, 7], sizes = [9, 1], strides = [1, 1]} : vector<9x16xf32> to vector<9x1xf32>
    %303 = vector.broadcast %302 : vector<9x1xf32> to vector<9x514xf32>
    %304 = vector.broadcast %301 : vector<1x514xf32> to vector<9x514xf32>
    %305 = arith.mulf %303, %304 : vector<9x514xf32>
    %306 = arith.addf %300, %305 : vector<9x514xf32>
    %c0_64 = arith.constant 0 : index
    %c2156 = arith.constant 2156 : index
    %307 = vector.load %arg0[%c0_64, %c2156] : memref<1x2809xf32, #tpu.memory_space<vmem>>, vector<1x514xf32>
    %308 = vector.extract_strided_slice %4 {offsets = [0, 8], sizes = [9, 1], strides = [1, 1]} : vector<9x16xf32> to vector<9x1xf32>
    %309 = vector.broadcast %308 : vector<9x1xf32> to vector<9x514xf32>
    %310 = vector.broadcast %307 : vector<1x514xf32> to vector<9x514xf32>
    %311 = arith.mulf %309, %310 : vector<9x514xf32>
    %312 = arith.addf %306, %311 : vector<9x514xf32>
    %313 = vector.broadcast %5 : vector<9x1xf32> to vector<9x514xf32>
    %314 = arith.addf %312, %313 : vector<9x514xf32>
    %315 = vector.extract_strided_slice %314 {offsets = [0, 0], sizes = [9, 512], strides = [1, 1]} : vector<9x514xf32> to vector<9x512xf32>
    %316 = vector.extract_strided_slice %314 {offsets = [0, 1], sizes = [9, 512], strides = [1, 1]} : vector<9x514xf32> to vector<9x512xf32>
    %317 = arith.maximumf %315, %316 : vector<9x512xf32>
    %318 = vector.extract_strided_slice %314 {offsets = [0, 2], sizes = [9, 512], strides = [1, 1]} : vector<9x514xf32> to vector<9x512xf32>
    %319 = arith.maximumf %317, %318 : vector<9x512xf32>
    %c0_65 = arith.constant 0 : index
    %c2048_66 = arith.constant 2048 : index
    %320 = vector.load %arg3[%c0_65, %c2048_66] : memref<9x2699xf32, #tpu.memory_space<vmem>>, vector<9x512xf32>
    tpu.vector_store %arg3[%c0_65, %c2048_66], %319 {strides = array<i32>} : memref<9x2699xf32, #tpu.memory_space<vmem>>, vector<9x512xf32>,
    %cst_67 = arith.constant 0.000000e+00 : f32
    %321 = vector.broadcast %cst_67 : f32 to vector<9x141xf32>
    %c0_68 = arith.constant 0 : index
    %c2560 = arith.constant 2560 : index
    %322 = vector.load %arg0[%c0_68, %c2560] : memref<1x2809xf32, #tpu.memory_space<vmem>>, vector<1x141xf32>
    %323 = vector.extract_strided_slice %4 {offsets = [0, 0], sizes = [9, 1], strides = [1, 1]} : vector<9x16xf32> to vector<9x1xf32>
    %324 = vector.broadcast %323 : vector<9x1xf32> to vector<9x141xf32>
    %325 = vector.broadcast %322 : vector<1x141xf32> to vector<9x141xf32>
    %326 = arith.mulf %324, %325 : vector<9x141xf32>
    %327 = arith.addf %321, %326 : vector<9x141xf32>
    %c0_69 = arith.constant 0 : index
    %c2561 = arith.constant 2561 : index
    %328 = vector.load %arg0[%c0_69, %c2561] : memref<1x2809xf32, #tpu.memory_space<vmem>>, vector<1x141xf32>
    %329 = vector.extract_strided_slice %4 {offsets = [0, 1], sizes = [9, 1], strides = [1, 1]} : vector<9x16xf32> to vector<9x1xf32>
    %330 = vector.broadcast %329 : vector<9x1xf32> to vector<9x141xf32>
    %331 = vector.broadcast %328 : vector<1x141xf32> to vector<9x141xf32>
    %332 = arith.mulf %330, %331 : vector<9x141xf32>
    %333 = arith.addf %327, %332 : vector<9x141xf32>
    %c0_70 = arith.constant 0 : index
    %c2562 = arith.constant 2562 : index
    %334 = vector.load %arg0[%c0_70, %c2562] : memref<1x2809xf32, #tpu.memory_space<vmem>>, vector<1x141xf32>
    %335 = vector.extract_strided_slice %4 {offsets = [0, 2], sizes = [9, 1], strides = [1, 1]} : vector<9x16xf32> to vector<9x1xf32>
    %336 = vector.broadcast %335 : vector<9x1xf32> to vector<9x141xf32>
    %337 = vector.broadcast %334 : vector<1x141xf32> to vector<9x141xf32>
    %338 = arith.mulf %336, %337 : vector<9x141xf32>
    %339 = arith.addf %333, %338 : vector<9x141xf32>
    %c0_71 = arith.constant 0 : index
    %c2613 = arith.constant 2613 : index
    %340 = vector.load %arg0[%c0_71, %c2613] : memref<1x2809xf32, #tpu.memory_space<vmem>>, vector<1x141xf32>
    %341 = vector.extract_strided_slice %4 {offsets = [0, 3], sizes = [9, 1], strides = [1, 1]} : vector<9x16xf32> to vector<9x1xf32>
    %342 = vector.broadcast %341 : vector<9x1xf32> to vector<9x141xf32>
    %343 = vector.broadcast %340 : vector<1x141xf32> to vector<9x141xf32>
    %344 = arith.mulf %342, %343 : vector<9x141xf32>
    %345 = arith.addf %339, %344 : vector<9x141xf32>
    %c0_72 = arith.constant 0 : index
    %c2614 = arith.constant 2614 : index
    %346 = vector.load %arg0[%c0_72, %c2614] : memref<1x2809xf32, #tpu.memory_space<vmem>>, vector<1x141xf32>
    %347 = vector.extract_strided_slice %4 {offsets = [0, 4], sizes = [9, 1], strides = [1, 1]} : vector<9x16xf32> to vector<9x1xf32>
    %348 = vector.broadcast %347 : vector<9x1xf32> to vector<9x141xf32>
    %349 = vector.broadcast %346 : vector<1x141xf32> to vector<9x141xf32>
    %350 = arith.mulf %348, %349 : vector<9x141xf32>
    %351 = arith.addf %345, %350 : vector<9x141xf32>
    %c0_73 = arith.constant 0 : index
    %c2615 = arith.constant 2615 : index
    %352 = vector.load %arg0[%c0_73, %c2615] : memref<1x2809xf32, #tpu.memory_space<vmem>>, vector<1x141xf32>
    %353 = vector.extract_strided_slice %4 {offsets = [0, 5], sizes = [9, 1], strides = [1, 1]} : vector<9x16xf32> to vector<9x1xf32>
    %354 = vector.broadcast %353 : vector<9x1xf32> to vector<9x141xf32>
    %355 = vector.broadcast %352 : vector<1x141xf32> to vector<9x141xf32>
    %356 = arith.mulf %354, %355 : vector<9x141xf32>
    %357 = arith.addf %351, %356 : vector<9x141xf32>
    %c0_74 = arith.constant 0 : index
    %c2666 = arith.constant 2666 : index
    %358 = vector.load %arg0[%c0_74, %c2666] : memref<1x2809xf32, #tpu.memory_space<vmem>>, vector<1x141xf32>
    %359 = vector.extract_strided_slice %4 {offsets = [0, 6], sizes = [9, 1], strides = [1, 1]} : vector<9x16xf32> to vector<9x1xf32>
    %360 = vector.broadcast %359 : vector<9x1xf32> to vector<9x141xf32>
    %361 = vector.broadcast %358 : vector<1x141xf32> to vector<9x141xf32>
    %362 = arith.mulf %360, %361 : vector<9x141xf32>
    %363 = arith.addf %357, %362 : vector<9x141xf32>
    %c0_75 = arith.constant 0 : index
    %c2667 = arith.constant 2667 : index
    %364 = vector.load %arg0[%c0_75, %c2667] : memref<1x2809xf32, #tpu.memory_space<vmem>>, vector<1x141xf32>
    %365 = vector.extract_strided_slice %4 {offsets = [0, 7], sizes = [9, 1], strides = [1, 1]} : vector<9x16xf32> to vector<9x1xf32>
    %366 = vector.broadcast %365 : vector<9x1xf32> to vector<9x141xf32>
    %367 = vector.broadcast %364 : vector<1x141xf32> to vector<9x141xf32>
    %368 = arith.mulf %366, %367 : vector<9x141xf32>
    %369 = arith.addf %363, %368 : vector<9x141xf32>
    %c0_76 = arith.constant 0 : index
    %c2668 = arith.constant 2668 : index
    %370 = vector.load %arg0[%c0_76, %c2668] : memref<1x2809xf32, #tpu.memory_space<vmem>>, vector<1x141xf32>
    %371 = vector.extract_strided_slice %4 {offsets = [0, 8], sizes = [9, 1], strides = [1, 1]} : vector<9x16xf32> to vector<9x1xf32>
    %372 = vector.broadcast %371 : vector<9x1xf32> to vector<9x141xf32>
    %373 = vector.broadcast %370 : vector<1x141xf32> to vector<9x141xf32>
    %374 = arith.mulf %372, %373 : vector<9x141xf32>
    %375 = arith.addf %369, %374 : vector<9x141xf32>
    %376 = vector.broadcast %5 : vector<9x1xf32> to vector<9x141xf32>
    %377 = arith.addf %375, %376 : vector<9x141xf32>
    %378 = vector.extract_strided_slice %377 {offsets = [0, 0], sizes = [9, 139], strides = [1, 1]} : vector<9x141xf32> to vector<9x139xf32>
    %379 = vector.extract_strided_slice %377 {offsets = [0, 1], sizes = [9, 139], strides = [1, 1]} : vector<9x141xf32> to vector<9x139xf32>
    %380 = arith.maximumf %378, %379 : vector<9x139xf32>
    %381 = vector.extract_strided_slice %377 {offsets = [0, 2], sizes = [9, 139], strides = [1, 1]} : vector<9x141xf32> to vector<9x139xf32>
    %382 = arith.maximumf %380, %381 : vector<9x139xf32>
    %c0_77 = arith.constant 0 : index
    %c2560_78 = arith.constant 2560 : index
    %383 = vector.load %arg3[%c0_77, %c2560_78] : memref<9x2699xf32, #tpu.memory_space<vmem>>, vector<9x139xf32>
    tpu.vector_store %arg3[%c0_77, %c2560_78], %382 {strides = array<i32>} : memref<9x2699xf32, #tpu.memory_space<vmem>>, vector<9x139xf32>,
    %384 = tpu.iota {dimensions = array<i32: 0>} : vector<49x17xi32>
    %385 = tpu.iota {dimensions = array<i32: 1>} : vector<49x17xi32>
    %c3_i32 = arith.constant 3 : i32
    %386 = vector.broadcast %c3_i32 : i32 to vector<49x17xi32>
    %387 = arith.muli %386, %385 : vector<49x17xi32>
    %388 = arith.cmpi eq, %384, %387 : vector<49x17xi32>
    %389 = arith.extui %388 : vector<49x17xi1> to vector<49x17xi32>
    %390 = arith.sitofp %389 : vector<49x17xi32> to vector<49x17xf32>
    %c0_79 = arith.constant 0 : index
    %c0_80 = arith.constant 0 : index
    %391 = vector.load %arg3[%c0_79, %c0_80] : memref<9x2699xf32, #tpu.memory_space<vmem>>, vector<9x49xf32>
    %c0_81 = arith.constant 0 : index
    %c53_82 = arith.constant 53 : index
    %392 = vector.load %arg3[%c0_81, %c53_82] : memref<9x2699xf32, #tpu.memory_space<vmem>>, vector<9x49xf32>
    %393 = arith.maximumf %391, %392 : vector<9x49xf32>
    %c0_83 = arith.constant 0 : index
    %c106_84 = arith.constant 106 : index
    %394 = vector.load %arg3[%c0_83, %c106_84] : memref<9x2699xf32, #tpu.memory_space<vmem>>, vector<9x49xf32>
    %395 = arith.maximumf %393, %394 : vector<9x49xf32>
    %cst_85 = arith.constant dense<0.000000e+00> : vector<9x17xf32>
    %396 = tpu.matmul %395, %390, %cst_85 {dimension_numbers = #tpu.dot_dimension_numbers<[1], [0], [0], [1], [0, 0, 1, 1], [], []>} : vector<9x49xf32>, vector<49x17xf32>, vector<9x17xf32> -> vector<9x17xf32>
    %c0_86 = arith.constant 0 : index
    %c0_87 = arith.constant 0 : index
    %397 = vector.load %arg4[%c0_86, %c0_87] : memref<9x289xf32, #tpu.memory_space<vmem>>, vector<9x17xf32>
    tpu.vector_store %arg4[%c0_86, %c0_87], %396 {strides = array<i32>} : memref<9x289xf32, #tpu.memory_space<vmem>>, vector<9x17xf32>,
    %c0_88 = arith.constant 0 : index
    %c159 = arith.constant 159 : index
    %398 = vector.load %arg3[%c0_88, %c159] : memref<9x2699xf32, #tpu.memory_space<vmem>>, vector<9x49xf32>
    %c0_89 = arith.constant 0 : index
    %c212 = arith.constant 212 : index
    %399 = vector.load %arg3[%c0_89, %c212] : memref<9x2699xf32, #tpu.memory_space<vmem>>, vector<9x49xf32>
    %400 = arith.maximumf %398, %399 : vector<9x49xf32>
    %c0_90 = arith.constant 0 : index
    %c265 = arith.constant 265 : index
    %401 = vector.load %arg3[%c0_90, %c265] : memref<9x2699xf32, #tpu.memory_space<vmem>>, vector<9x49xf32>
    %402 = arith.maximumf %400, %401 : vector<9x49xf32>
    %cst_91 = arith.constant dense<0.000000e+00> : vector<9x17xf32>
    %403 = tpu.matmul %402, %390, %cst_91 {dimension_numbers = #tpu.dot_dimension_numbers<[1], [0], [0], [1], [0, 0, 1, 1], [], []>} : vector<9x49xf32>, vector<49x17xf32>, vector<9x17xf32> -> vector<9x17xf32>
    %c0_92 = arith.constant 0 : index
    %c17 = arith.constant 17 : index
    %404 = vector.load %arg4[%c0_92, %c17] : memref<9x289xf32, #tpu.memory_space<vmem>>, vector<9x17xf32>
    tpu.vector_store %arg4[%c0_92, %c17], %403 {strides = array<i32>} : memref<9x289xf32, #tpu.memory_space<vmem>>, vector<9x17xf32>,
    %c0_93 = arith.constant 0 : index
    %c318 = arith.constant 318 : index
    %405 = vector.load %arg3[%c0_93, %c318] : memref<9x2699xf32, #tpu.memory_space<vmem>>, vector<9x49xf32>
    %c0_94 = arith.constant 0 : index
    %c371 = arith.constant 371 : index
    %406 = vector.load %arg3[%c0_94, %c371] : memref<9x2699xf32, #tpu.memory_space<vmem>>, vector<9x49xf32>
    %407 = arith.maximumf %405, %406 : vector<9x49xf32>
    %c0_95 = arith.constant 0 : index
    %c424 = arith.constant 424 : index
    %408 = vector.load %arg3[%c0_95, %c424] : memref<9x2699xf32, #tpu.memory_space<vmem>>, vector<9x49xf32>
    %409 = arith.maximumf %407, %408 : vector<9x49xf32>
    %cst_96 = arith.constant dense<0.000000e+00> : vector<9x17xf32>
    %410 = tpu.matmul %409, %390, %cst_96 {dimension_numbers = #tpu.dot_dimension_numbers<[1], [0], [0], [1], [0, 0, 1, 1], [], []>} : vector<9x49xf32>, vector<49x17xf32>, vector<9x17xf32> -> vector<9x17xf32>
    %c0_97 = arith.constant 0 : index
    %c34 = arith.constant 34 : index
    %411 = vector.load %arg4[%c0_97, %c34] : memref<9x289xf32, #tpu.memory_space<vmem>>, vector<9x17xf32>
    tpu.vector_store %arg4[%c0_97, %c34], %410 {strides = array<i32>} : memref<9x289xf32, #tpu.memory_space<vmem>>, vector<9x17xf32>,
    %c0_98 = arith.constant 0 : index
    %c477 = arith.constant 477 : index
    %412 = vector.load %arg3[%c0_98, %c477] : memref<9x2699xf32, #tpu.memory_space<vmem>>, vector<9x49xf32>
    %c0_99 = arith.constant 0 : index
    %c530 = arith.constant 530 : index
    %413 = vector.load %arg3[%c0_99, %c530] : memref<9x2699xf32, #tpu.memory_space<vmem>>, vector<9x49xf32>
    %414 = arith.maximumf %412, %413 : vector<9x49xf32>
    %c0_100 = arith.constant 0 : index
    %c583 = arith.constant 583 : index
    %415 = vector.load %arg3[%c0_100, %c583] : memref<9x2699xf32, #tpu.memory_space<vmem>>, vector<9x49xf32>
    %416 = arith.maximumf %414, %415 : vector<9x49xf32>
    %cst_101 = arith.constant dense<0.000000e+00> : vector<9x17xf32>
    %417 = tpu.matmul %416, %390, %cst_101 {dimension_numbers = #tpu.dot_dimension_numbers<[1], [0], [0], [1], [0, 0, 1, 1], [], []>} : vector<9x49xf32>, vector<49x17xf32>, vector<9x17xf32> -> vector<9x17xf32>
    %c0_102 = arith.constant 0 : index
    %c51 = arith.constant 51 : index
    %418 = vector.load %arg4[%c0_102, %c51] : memref<9x289xf32, #tpu.memory_space<vmem>>, vector<9x17xf32>
    tpu.vector_store %arg4[%c0_102, %c51], %417 {strides = array<i32>} : memref<9x289xf32, #tpu.memory_space<vmem>>, vector<9x17xf32>,
    %c0_103 = arith.constant 0 : index
    %c636 = arith.constant 636 : index
    %419 = vector.load %arg3[%c0_103, %c636] : memref<9x2699xf32, #tpu.memory_space<vmem>>, vector<9x49xf32>
    %c0_104 = arith.constant 0 : index
    %c689 = arith.constant 689 : index
    %420 = vector.load %arg3[%c0_104, %c689] : memref<9x2699xf32, #tpu.memory_space<vmem>>, vector<9x49xf32>
    %421 = arith.maximumf %419, %420 : vector<9x49xf32>
    %c0_105 = arith.constant 0 : index
    %c742 = arith.constant 742 : index
    %422 = vector.load %arg3[%c0_105, %c742] : memref<9x2699xf32, #tpu.memory_space<vmem>>, vector<9x49xf32>
    %423 = arith.maximumf %421, %422 : vector<9x49xf32>
    %cst_106 = arith.constant dense<0.000000e+00> : vector<9x17xf32>
    %424 = tpu.matmul %423, %390, %cst_106 {dimension_numbers = #tpu.dot_dimension_numbers<[1], [0], [0], [1], [0, 0, 1, 1], [], []>} : vector<9x49xf32>, vector<49x17xf32>, vector<9x17xf32> -> vector<9x17xf32>
    %c0_107 = arith.constant 0 : index
    %c68 = arith.constant 68 : index
    %425 = vector.load %arg4[%c0_107, %c68] : memref<9x289xf32, #tpu.memory_space<vmem>>, vector<9x17xf32>
    tpu.vector_store %arg4[%c0_107, %c68], %424 {strides = array<i32>} : memref<9x289xf32, #tpu.memory_space<vmem>>, vector<9x17xf32>,
    %c0_108 = arith.constant 0 : index
    %c795 = arith.constant 795 : index
    %426 = vector.load %arg3[%c0_108, %c795] : memref<9x2699xf32, #tpu.memory_space<vmem>>, vector<9x49xf32>
    %c0_109 = arith.constant 0 : index
    %c848 = arith.constant 848 : index
    %427 = vector.load %arg3[%c0_109, %c848] : memref<9x2699xf32, #tpu.memory_space<vmem>>, vector<9x49xf32>
    %428 = arith.maximumf %426, %427 : vector<9x49xf32>
    %c0_110 = arith.constant 0 : index
    %c901 = arith.constant 901 : index
    %429 = vector.load %arg3[%c0_110, %c901] : memref<9x2699xf32, #tpu.memory_space<vmem>>, vector<9x49xf32>
    %430 = arith.maximumf %428, %429 : vector<9x49xf32>
    %cst_111 = arith.constant dense<0.000000e+00> : vector<9x17xf32>
    %431 = tpu.matmul %430, %390, %cst_111 {dimension_numbers = #tpu.dot_dimension_numbers<[1], [0], [0], [1], [0, 0, 1, 1], [], []>} : vector<9x49xf32>, vector<49x17xf32>, vector<9x17xf32> -> vector<9x17xf32>
    %c0_112 = arith.constant 0 : index
    %c85 = arith.constant 85 : index
    %432 = vector.load %arg4[%c0_112, %c85] : memref<9x289xf32, #tpu.memory_space<vmem>>, vector<9x17xf32>
    tpu.vector_store %arg4[%c0_112, %c85], %431 {strides = array<i32>} : memref<9x289xf32, #tpu.memory_space<vmem>>, vector<9x17xf32>,
    %c0_113 = arith.constant 0 : index
    %c954 = arith.constant 954 : index
    %433 = vector.load %arg3[%c0_113, %c954] : memref<9x2699xf32, #tpu.memory_space<vmem>>, vector<9x49xf32>
    %c0_114 = arith.constant 0 : index
    %c1007 = arith.constant 1007 : index
    %434 = vector.load %arg3[%c0_114, %c1007] : memref<9x2699xf32, #tpu.memory_space<vmem>>, vector<9x49xf32>
    %435 = arith.maximumf %433, %434 : vector<9x49xf32>
    %c0_115 = arith.constant 0 : index
    %c1060 = arith.constant 1060 : index
    %436 = vector.load %arg3[%c0_115, %c1060] : memref<9x2699xf32, #tpu.memory_space<vmem>>, vector<9x49xf32>
    %437 = arith.maximumf %435, %436 : vector<9x49xf32>
    %cst_116 = arith.constant dense<0.000000e+00> : vector<9x17xf32>
    %438 = tpu.matmul %437, %390, %cst_116 {dimension_numbers = #tpu.dot_dimension_numbers<[1], [0], [0], [1], [0, 0, 1, 1], [], []>} : vector<9x49xf32>, vector<49x17xf32>, vector<9x17xf32> -> vector<9x17xf32>
    %c0_117 = arith.constant 0 : index
    %c102 = arith.constant 102 : index
    %439 = vector.load %arg4[%c0_117, %c102] : memref<9x289xf32, #tpu.memory_space<vmem>>, vector<9x17xf32>
    tpu.vector_store %arg4[%c0_117, %c102], %438 {strides = array<i32>} : memref<9x289xf32, #tpu.memory_space<vmem>>, vector<9x17xf32>,
    %c0_118 = arith.constant 0 : index
    %c1113 = arith.constant 1113 : index
    %440 = vector.load %arg3[%c0_118, %c1113] : memref<9x2699xf32, #tpu.memory_space<vmem>>, vector<9x49xf32>
    %c0_119 = arith.constant 0 : index
    %c1166 = arith.constant 1166 : index
    %441 = vector.load %arg3[%c0_119, %c1166] : memref<9x2699xf32, #tpu.memory_space<vmem>>, vector<9x49xf32>
    %442 = arith.maximumf %440, %441 : vector<9x49xf32>
    %c0_120 = arith.constant 0 : index
    %c1219 = arith.constant 1219 : index
    %443 = vector.load %arg3[%c0_120, %c1219] : memref<9x2699xf32, #tpu.memory_space<vmem>>, vector<9x49xf32>
    %444 = arith.maximumf %442, %443 : vector<9x49xf32>
    %cst_121 = arith.constant dense<0.000000e+00> : vector<9x17xf32>
    %445 = tpu.matmul %444, %390, %cst_121 {dimension_numbers = #tpu.dot_dimension_numbers<[1], [0], [0], [1], [0, 0, 1, 1], [], []>} : vector<9x49xf32>, vector<49x17xf32>, vector<9x17xf32> -> vector<9x17xf32>
    %c0_122 = arith.constant 0 : index
    %c119 = arith.constant 119 : index
    %446 = vector.load %arg4[%c0_122, %c119] : memref<9x289xf32, #tpu.memory_space<vmem>>, vector<9x17xf32>
    tpu.vector_store %arg4[%c0_122, %c119], %445 {strides = array<i32>} : memref<9x289xf32, #tpu.memory_space<vmem>>, vector<9x17xf32>,
    %c0_123 = arith.constant 0 : index
    %c1272 = arith.constant 1272 : index
    %447 = vector.load %arg3[%c0_123, %c1272] : memref<9x2699xf32, #tpu.memory_space<vmem>>, vector<9x49xf32>
    %c0_124 = arith.constant 0 : index
    %c1325 = arith.constant 1325 : index
    %448 = vector.load %arg3[%c0_124, %c1325] : memref<9x2699xf32, #tpu.memory_space<vmem>>, vector<9x49xf32>
    %449 = arith.maximumf %447, %448 : vector<9x49xf32>
    %c0_125 = arith.constant 0 : index
    %c1378 = arith.constant 1378 : index
    %450 = vector.load %arg3[%c0_125, %c1378] : memref<9x2699xf32, #tpu.memory_space<vmem>>, vector<9x49xf32>
    %451 = arith.maximumf %449, %450 : vector<9x49xf32>
    %cst_126 = arith.constant dense<0.000000e+00> : vector<9x17xf32>
    %452 = tpu.matmul %451, %390, %cst_126 {dimension_numbers = #tpu.dot_dimension_numbers<[1], [0], [0], [1], [0, 0, 1, 1], [], []>} : vector<9x49xf32>, vector<49x17xf32>, vector<9x17xf32> -> vector<9x17xf32>
    %c0_127 = arith.constant 0 : index
    %c136 = arith.constant 136 : index
    %453 = vector.load %arg4[%c0_127, %c136] : memref<9x289xf32, #tpu.memory_space<vmem>>, vector<9x17xf32>
    tpu.vector_store %arg4[%c0_127, %c136], %452 {strides = array<i32>} : memref<9x289xf32, #tpu.memory_space<vmem>>, vector<9x17xf32>,
    %c0_128 = arith.constant 0 : index
    %c1431 = arith.constant 1431 : index
    %454 = vector.load %arg3[%c0_128, %c1431] : memref<9x2699xf32, #tpu.memory_space<vmem>>, vector<9x49xf32>
    %c0_129 = arith.constant 0 : index
    %c1484 = arith.constant 1484 : index
    %455 = vector.load %arg3[%c0_129, %c1484] : memref<9x2699xf32, #tpu.memory_space<vmem>>, vector<9x49xf32>
    %456 = arith.maximumf %454, %455 : vector<9x49xf32>
    %c0_130 = arith.constant 0 : index
    %c1537_131 = arith.constant 1537 : index
    %457 = vector.load %arg3[%c0_130, %c1537_131] : memref<9x2699xf32, #tpu.memory_space<vmem>>, vector<9x49xf32>
    %458 = arith.maximumf %456, %457 : vector<9x49xf32>
    %cst_132 = arith.constant dense<0.000000e+00> : vector<9x17xf32>
    %459 = tpu.matmul %458, %390, %cst_132 {dimension_numbers = #tpu.dot_dimension_numbers<[1], [0], [0], [1], [0, 0, 1, 1], [], []>} : vector<9x49xf32>, vector<49x17xf32>, vector<9x17xf32> -> vector<9x17xf32>
    %c0_133 = arith.constant 0 : index
    %c153 = arith.constant 153 : index
    %460 = vector.load %arg4[%c0_133, %c153] : memref<9x289xf32, #tpu.memory_space<vmem>>, vector<9x17xf32>
    tpu.vector_store %arg4[%c0_133, %c153], %459 {strides = array<i32>} : memref<9x289xf32, #tpu.memory_space<vmem>>, vector<9x17xf32>,
    %c0_134 = arith.constant 0 : index
    %c1590_135 = arith.constant 1590 : index
    %461 = vector.load %arg3[%c0_134, %c1590_135] : memref<9x2699xf32, #tpu.memory_space<vmem>>, vector<9x49xf32>
    %c0_136 = arith.constant 0 : index
    %c1643_137 = arith.constant 1643 : index
    %462 = vector.load %arg3[%c0_136, %c1643_137] : memref<9x2699xf32, #tpu.memory_space<vmem>>, vector<9x49xf32>
    %463 = arith.maximumf %461, %462 : vector<9x49xf32>
    %c0_138 = arith.constant 0 : index
    %c1696 = arith.constant 1696 : index
    %464 = vector.load %arg3[%c0_138, %c1696] : memref<9x2699xf32, #tpu.memory_space<vmem>>, vector<9x49xf32>
    %465 = arith.maximumf %463, %464 : vector<9x49xf32>
    %cst_139 = arith.constant dense<0.000000e+00> : vector<9x17xf32>
    %466 = tpu.matmul %465, %390, %cst_139 {dimension_numbers = #tpu.dot_dimension_numbers<[1], [0], [0], [1], [0, 0, 1, 1], [], []>} : vector<9x49xf32>, vector<49x17xf32>, vector<9x17xf32> -> vector<9x17xf32>
    %c0_140 = arith.constant 0 : index
    %c170 = arith.constant 170 : index
    %467 = vector.load %arg4[%c0_140, %c170] : memref<9x289xf32, #tpu.memory_space<vmem>>, vector<9x17xf32>
    tpu.vector_store %arg4[%c0_140, %c170], %466 {strides = array<i32>} : memref<9x289xf32, #tpu.memory_space<vmem>>, vector<9x17xf32>,
    %c0_141 = arith.constant 0 : index
    %c1749 = arith.constant 1749 : index
    %468 = vector.load %arg3[%c0_141, %c1749] : memref<9x2699xf32, #tpu.memory_space<vmem>>, vector<9x49xf32>
    %c0_142 = arith.constant 0 : index
    %c1802 = arith.constant 1802 : index
    %469 = vector.load %arg3[%c0_142, %c1802] : memref<9x2699xf32, #tpu.memory_space<vmem>>, vector<9x49xf32>
    %470 = arith.maximumf %468, %469 : vector<9x49xf32>
    %c0_143 = arith.constant 0 : index
    %c1855 = arith.constant 1855 : index
    %471 = vector.load %arg3[%c0_143, %c1855] : memref<9x2699xf32, #tpu.memory_space<vmem>>, vector<9x49xf32>
    %472 = arith.maximumf %470, %471 : vector<9x49xf32>
    %cst_144 = arith.constant dense<0.000000e+00> : vector<9x17xf32>
    %473 = tpu.matmul %472, %390, %cst_144 {dimension_numbers = #tpu.dot_dimension_numbers<[1], [0], [0], [1], [0, 0, 1, 1], [], []>} : vector<9x49xf32>, vector<49x17xf32>, vector<9x17xf32> -> vector<9x17xf32>
    %c0_145 = arith.constant 0 : index
    %c187 = arith.constant 187 : index
    %474 = vector.load %arg4[%c0_145, %c187] : memref<9x289xf32, #tpu.memory_space<vmem>>, vector<9x17xf32>
    tpu.vector_store %arg4[%c0_145, %c187], %473 {strides = array<i32>} : memref<9x289xf32, #tpu.memory_space<vmem>>, vector<9x17xf32>,
    %c0_146 = arith.constant 0 : index
    %c1908 = arith.constant 1908 : index
    %475 = vector.load %arg3[%c0_146, %c1908] : memref<9x2699xf32, #tpu.memory_space<vmem>>, vector<9x49xf32>
    %c0_147 = arith.constant 0 : index
    %c1961 = arith.constant 1961 : index
    %476 = vector.load %arg3[%c0_147, %c1961] : memref<9x2699xf32, #tpu.memory_space<vmem>>, vector<9x49xf32>
    %477 = arith.maximumf %475, %476 : vector<9x49xf32>
    %c0_148 = arith.constant 0 : index
    %c2014 = arith.constant 2014 : index
    %478 = vector.load %arg3[%c0_148, %c2014] : memref<9x2699xf32, #tpu.memory_space<vmem>>, vector<9x49xf32>
    %479 = arith.maximumf %477, %478 : vector<9x49xf32>
    %cst_149 = arith.constant dense<0.000000e+00> : vector<9x17xf32>
    %480 = tpu.matmul %479, %390, %cst_149 {dimension_numbers = #tpu.dot_dimension_numbers<[1], [0], [0], [1], [0, 0, 1, 1], [], []>} : vector<9x49xf32>, vector<49x17xf32>, vector<9x17xf32> -> vector<9x17xf32>
    %c0_150 = arith.constant 0 : index
    %c204 = arith.constant 204 : index
    %481 = vector.load %arg4[%c0_150, %c204] : memref<9x289xf32, #tpu.memory_space<vmem>>, vector<9x17xf32>
    tpu.vector_store %arg4[%c0_150, %c204], %480 {strides = array<i32>} : memref<9x289xf32, #tpu.memory_space<vmem>>, vector<9x17xf32>,
    %c0_151 = arith.constant 0 : index
    %c2067 = arith.constant 2067 : index
    %482 = vector.load %arg3[%c0_151, %c2067] : memref<9x2699xf32, #tpu.memory_space<vmem>>, vector<9x49xf32>
    %c0_152 = arith.constant 0 : index
    %c2120 = arith.constant 2120 : index
    %483 = vector.load %arg3[%c0_152, %c2120] : memref<9x2699xf32, #tpu.memory_space<vmem>>, vector<9x49xf32>
    %484 = arith.maximumf %482, %483 : vector<9x49xf32>
    %c0_153 = arith.constant 0 : index
    %c2173 = arith.constant 2173 : index
    %485 = vector.load %arg3[%c0_153, %c2173] : memref<9x2699xf32, #tpu.memory_space<vmem>>, vector<9x49xf32>
    %486 = arith.maximumf %484, %485 : vector<9x49xf32>
    %cst_154 = arith.constant dense<0.000000e+00> : vector<9x17xf32>
    %487 = tpu.matmul %486, %390, %cst_154 {dimension_numbers = #tpu.dot_dimension_numbers<[1], [0], [0], [1], [0, 0, 1, 1], [], []>} : vector<9x49xf32>, vector<49x17xf32>, vector<9x17xf32> -> vector<9x17xf32>
    %c0_155 = arith.constant 0 : index
    %c221 = arith.constant 221 : index
    %488 = vector.load %arg4[%c0_155, %c221] : memref<9x289xf32, #tpu.memory_space<vmem>>, vector<9x17xf32>
    tpu.vector_store %arg4[%c0_155, %c221], %487 {strides = array<i32>} : memref<9x289xf32, #tpu.memory_space<vmem>>, vector<9x17xf32>,
    %c0_156 = arith.constant 0 : index
    %c2226 = arith.constant 2226 : index
    %489 = vector.load %arg3[%c0_156, %c2226] : memref<9x2699xf32, #tpu.memory_space<vmem>>, vector<9x49xf32>
    %c0_157 = arith.constant 0 : index
    %c2279 = arith.constant 2279 : index
    %490 = vector.load %arg3[%c0_157, %c2279] : memref<9x2699xf32, #tpu.memory_space<vmem>>, vector<9x49xf32>
    %491 = arith.maximumf %489, %490 : vector<9x49xf32>
    %c0_158 = arith.constant 0 : index
    %c2332 = arith.constant 2332 : index
    %492 = vector.load %arg3[%c0_158, %c2332] : memref<9x2699xf32, #tpu.memory_space<vmem>>, vector<9x49xf32>
    %493 = arith.maximumf %491, %492 : vector<9x49xf32>
    %cst_159 = arith.constant dense<0.000000e+00> : vector<9x17xf32>
    %494 = tpu.matmul %493, %390, %cst_159 {dimension_numbers = #tpu.dot_dimension_numbers<[1], [0], [0], [1], [0, 0, 1, 1], [], []>} : vector<9x49xf32>, vector<49x17xf32>, vector<9x17xf32> -> vector<9x17xf32>
    %c0_160 = arith.constant 0 : index
    %c238 = arith.constant 238 : index
    %495 = vector.load %arg4[%c0_160, %c238] : memref<9x289xf32, #tpu.memory_space<vmem>>, vector<9x17xf32>
    tpu.vector_store %arg4[%c0_160, %c238], %494 {strides = array<i32>} : memref<9x289xf32, #tpu.memory_space<vmem>>, vector<9x17xf32>,
    %c0_161 = arith.constant 0 : index
    %c2385 = arith.constant 2385 : index
    %496 = vector.load %arg3[%c0_161, %c2385] : memref<9x2699xf32, #tpu.memory_space<vmem>>, vector<9x49xf32>
    %c0_162 = arith.constant 0 : index
    %c2438 = arith.constant 2438 : index
    %497 = vector.load %arg3[%c0_162, %c2438] : memref<9x2699xf32, #tpu.memory_space<vmem>>, vector<9x49xf32>
    %498 = arith.maximumf %496, %497 : vector<9x49xf32>
    %c0_163 = arith.constant 0 : index
    %c2491 = arith.constant 2491 : index
    %499 = vector.load %arg3[%c0_163, %c2491] : memref<9x2699xf32, #tpu.memory_space<vmem>>, vector<9x49xf32>
    %500 = arith.maximumf %498, %499 : vector<9x49xf32>
    %cst_164 = arith.constant dense<0.000000e+00> : vector<9x17xf32>
    %501 = tpu.matmul %500, %390, %cst_164 {dimension_numbers = #tpu.dot_dimension_numbers<[1], [0], [0], [1], [0, 0, 1, 1], [], []>} : vector<9x49xf32>, vector<49x17xf32>, vector<9x17xf32> -> vector<9x17xf32>
    %c0_165 = arith.constant 0 : index
    %c255 = arith.constant 255 : index
    %502 = vector.load %arg4[%c0_165, %c255] : memref<9x289xf32, #tpu.memory_space<vmem>>, vector<9x17xf32>
    tpu.vector_store %arg4[%c0_165, %c255], %501 {strides = array<i32>} : memref<9x289xf32, #tpu.memory_space<vmem>>, vector<9x17xf32>,
    %c0_166 = arith.constant 0 : index
    %c2544 = arith.constant 2544 : index
    %503 = vector.load %arg3[%c0_166, %c2544] : memref<9x2699xf32, #tpu.memory_space<vmem>>, vector<9x49xf32>
    %c0_167 = arith.constant 0 : index
    %c2597 = arith.constant 2597 : index
    %504 = vector.load %arg3[%c0_167, %c2597] : memref<9x2699xf32, #tpu.memory_space<vmem>>, vector<9x49xf32>
    %505 = arith.maximumf %503, %504 : vector<9x49xf32>
    %c0_168 = arith.constant 0 : index
    %c2650 = arith.constant 2650 : index
    %506 = vector.load %arg3[%c0_168, %c2650] : memref<9x2699xf32, #tpu.memory_space<vmem>>, vector<9x49xf32>
    %507 = arith.maximumf %505, %506 : vector<9x49xf32>
    %cst_169 = arith.constant dense<0.000000e+00> : vector<9x17xf32>
    %508 = tpu.matmul %507, %390, %cst_169 {dimension_numbers = #tpu.dot_dimension_numbers<[1], [0], [0], [1], [0, 0, 1, 1], [], []>} : vector<9x49xf32>, vector<49x17xf32>, vector<9x17xf32> -> vector<9x17xf32>
    %c0_170 = arith.constant 0 : index
    %c272 = arith.constant 272 : index
    %509 = vector.load %arg4[%c0_170, %c272] : memref<9x289xf32, #tpu.memory_space<vmem>>, vector<9x17xf32>
    tpu.vector_store %arg4[%c0_170, %c272], %508 {strides = array<i32>} : memref<9x289xf32, #tpu.memory_space<vmem>>, vector<9x17xf32>,
    %c0_171 = arith.constant 0 : index
    %c0_172 = arith.constant 0 : index
    %510 = vector.load %arg4[%c0_171, %c0_172] : memref<9x289xf32, #tpu.memory_space<vmem>>, vector<9x253xf32>
    %c0_173 = arith.constant 0 : index
    %c0_174 = arith.constant 0 : index
    %511 = vector.load %arg5[%c0_173, %c0_174] : memref<144x253xf32, #tpu.memory_space<vmem>>, vector<9x253xf32>
    tpu.vector_store %arg5[%c0_173, %c0_174], %510 {strides = array<i32>} : memref<144x253xf32, #tpu.memory_space<vmem>>, vector<9x253xf32>,
    %c0_175 = arith.constant 0 : index
    %c1_176 = arith.constant 1 : index
    %512 = vector.load %arg4[%c0_175, %c1_176] : memref<9x289xf32, #tpu.memory_space<vmem>>, vector<9x253xf32>
    %c16 = arith.constant 16 : index
    %c0_177 = arith.constant 0 : index
    %513 = vector.load %arg5[%c16, %c0_177] : memref<144x253xf32, #tpu.memory_space<vmem>>, vector<9x253xf32>
    tpu.vector_store %arg5[%c16, %c0_177], %512 {strides = array<i32>} : memref<144x253xf32, #tpu.memory_space<vmem>>, vector<9x253xf32>,
    %c0_178 = arith.constant 0 : index
    %c2_179 = arith.constant 2 : index
    %514 = vector.load %arg4[%c0_178, %c2_179] : memref<9x289xf32, #tpu.memory_space<vmem>>, vector<9x253xf32>
    %c32 = arith.constant 32 : index
    %c0_180 = arith.constant 0 : index
    %515 = vector.load %arg5[%c32, %c0_180] : memref<144x253xf32, #tpu.memory_space<vmem>>, vector<9x253xf32>
    tpu.vector_store %arg5[%c32, %c0_180], %514 {strides = array<i32>} : memref<144x253xf32, #tpu.memory_space<vmem>>, vector<9x253xf32>,
    %c0_181 = arith.constant 0 : index
    %c17_182 = arith.constant 17 : index
    %516 = vector.load %arg4[%c0_181, %c17_182] : memref<9x289xf32, #tpu.memory_space<vmem>>, vector<9x253xf32>
    %c48 = arith.constant 48 : index
    %c0_183 = arith.constant 0 : index
    %517 = vector.load %arg5[%c48, %c0_183] : memref<144x253xf32, #tpu.memory_space<vmem>>, vector<9x253xf32>
    tpu.vector_store %arg5[%c48, %c0_183], %516 {strides = array<i32>} : memref<144x253xf32, #tpu.memory_space<vmem>>, vector<9x253xf32>,
    %c0_184 = arith.constant 0 : index
    %c18 = arith.constant 18 : index
    %518 = vector.load %arg4[%c0_184, %c18] : memref<9x289xf32, #tpu.memory_space<vmem>>, vector<9x253xf32>
    %c64 = arith.constant 64 : index
    %c0_185 = arith.constant 0 : index
    %519 = vector.load %arg5[%c64, %c0_185] : memref<144x253xf32, #tpu.memory_space<vmem>>, vector<9x253xf32>
    tpu.vector_store %arg5[%c64, %c0_185], %518 {strides = array<i32>} : memref<144x253xf32, #tpu.memory_space<vmem>>, vector<9x253xf32>,
    %c0_186 = arith.constant 0 : index
    %c19 = arith.constant 19 : index
    %520 = vector.load %arg4[%c0_186, %c19] : memref<9x289xf32, #tpu.memory_space<vmem>>, vector<9x253xf32>
    %c80 = arith.constant 80 : index
    %c0_187 = arith.constant 0 : index
    %521 = vector.load %arg5[%c80, %c0_187] : memref<144x253xf32, #tpu.memory_space<vmem>>, vector<9x253xf32>
    tpu.vector_store %arg5[%c80, %c0_187], %520 {strides = array<i32>} : memref<144x253xf32, #tpu.memory_space<vmem>>, vector<9x253xf32>,
    %c0_188 = arith.constant 0 : index
    %c34_189 = arith.constant 34 : index
    %522 = vector.load %arg4[%c0_188, %c34_189] : memref<9x289xf32, #tpu.memory_space<vmem>>, vector<9x253xf32>
    %c96 = arith.constant 96 : index
    %c0_190 = arith.constant 0 : index
    %523 = vector.load %arg5[%c96, %c0_190] : memref<144x253xf32, #tpu.memory_space<vmem>>, vector<9x253xf32>
    tpu.vector_store %arg5[%c96, %c0_190], %522 {strides = array<i32>} : memref<144x253xf32, #tpu.memory_space<vmem>>, vector<9x253xf32>,
    %c0_191 = arith.constant 0 : index
    %c35 = arith.constant 35 : index
    %524 = vector.load %arg4[%c0_191, %c35] : memref<9x289xf32, #tpu.memory_space<vmem>>, vector<9x253xf32>
    %c112 = arith.constant 112 : index
    %c0_192 = arith.constant 0 : index
    %525 = vector.load %arg5[%c112, %c0_192] : memref<144x253xf32, #tpu.memory_space<vmem>>, vector<9x253xf32>
    tpu.vector_store %arg5[%c112, %c0_192], %524 {strides = array<i32>} : memref<144x253xf32, #tpu.memory_space<vmem>>, vector<9x253xf32>,
    %c0_193 = arith.constant 0 : index
    %c36 = arith.constant 36 : index
    %526 = vector.load %arg4[%c0_193, %c36] : memref<9x289xf32, #tpu.memory_space<vmem>>, vector<9x253xf32>
    %c128 = arith.constant 128 : index
    %c0_194 = arith.constant 0 : index
    %527 = vector.load %arg5[%c128, %c0_194] : memref<144x253xf32, #tpu.memory_space<vmem>>, vector<9x253xf32>
    tpu.vector_store %arg5[%c128, %c0_194], %526 {strides = array<i32>} : memref<144x253xf32, #tpu.memory_space<vmem>>, vector<9x253xf32>,
    %c0_195 = arith.constant 0 : index
    %c128_196 = arith.constant 128 : index
    %528 = vector.load %arg1[%c0_195, %c128_196] : memref<32x768xf32, #tpu.memory_space<vmem>>, vector<15x144xf32>
    %c0_197 = arith.constant 0 : index
    %c272_198 = arith.constant 272 : index
    %529 = vector.load %arg1[%c0_197, %c272_198] : memref<32x768xf32, #tpu.memory_space<vmem>>, vector<15x1xf32>
    %c0_199 = arith.constant 0 : index
    %c0_200 = arith.constant 0 : index
    %530 = vector.load %arg5[%c0_199, %c0_200] : memref<144x253xf32, #tpu.memory_space<vmem>>, vector<144x253xf32>
    %cst_201 = arith.constant dense<0.000000e+00> : vector<15x253xf32>
    %531 = tpu.matmul %528, %530, %cst_201 {dimension_numbers = #tpu.dot_dimension_numbers<[1], [0], [0], [1], [0, 0, 1, 1], [], []>} : vector<15x144xf32>, vector<144x253xf32>, vector<15x253xf32> -> vector<15x253xf32>
    %532 = vector.broadcast %529 : vector<15x1xf32> to vector<15x253xf32>
    %533 = arith.addf %531, %532 : vector<15x253xf32>
    %534 = vector.extract_strided_slice %533 {offsets = [0, 0], sizes = [15, 251], strides = [1, 1]} : vector<15x253xf32> to vector<15x251xf32>
    %535 = vector.extract_strided_slice %533 {offsets = [0, 1], sizes = [15, 251], strides = [1, 1]} : vector<15x253xf32> to vector<15x251xf32>
    %536 = arith.maximumf %534, %535 : vector<15x251xf32>
    %537 = vector.extract_strided_slice %533 {offsets = [0, 2], sizes = [15, 251], strides = [1, 1]} : vector<15x253xf32> to vector<15x251xf32>
    %538 = arith.maximumf %536, %537 : vector<15x251xf32>
    %539 = tpu.iota {dimensions = array<i32: 0>} : vector<13x5xi32>
    %540 = tpu.iota {dimensions = array<i32: 1>} : vector<13x5xi32>
    %c3_i32_202 = arith.constant 3 : i32
    %541 = vector.broadcast %c3_i32_202 : i32 to vector<13x5xi32>
    %542 = arith.muli %541, %540 : vector<13x5xi32>
    %543 = arith.cmpi eq, %539, %542 : vector<13x5xi32>
    %544 = arith.extui %543 : vector<13x5xi1> to vector<13x5xi32>
    %545 = arith.sitofp %544 : vector<13x5xi32> to vector<13x5xf32>
    %546 = vector.extract_strided_slice %538 {offsets = [0, 0], sizes = [15, 13], strides = [1, 1]} : vector<15x251xf32> to vector<15x13xf32>
    %547 = vector.extract_strided_slice %538 {offsets = [0, 17], sizes = [15, 13], strides = [1, 1]} : vector<15x251xf32> to vector<15x13xf32>
    %548 = arith.maximumf %546, %547 : vector<15x13xf32>
    %549 = vector.extract_strided_slice %538 {offsets = [0, 34], sizes = [15, 13], strides = [1, 1]} : vector<15x251xf32> to vector<15x13xf32>
    %550 = arith.maximumf %548, %549 : vector<15x13xf32>
    %cst_203 = arith.constant dense<0.000000e+00> : vector<15x5xf32>
    %551 = tpu.matmul %550, %545, %cst_203 {dimension_numbers = #tpu.dot_dimension_numbers<[1], [0], [0], [1], [0, 0, 1, 1], [], []>} : vector<15x13xf32>, vector<13x5xf32>, vector<15x5xf32> -> vector<15x5xf32>
    %c0_204 = arith.constant 0 : index
    %c0_205 = arith.constant 0 : index
    %552 = vector.load %arg6[%c0_204, %c0_205] : memref<15x25xf32, #tpu.memory_space<vmem>>, vector<15x5xf32>
    tpu.vector_store %arg6[%c0_204, %c0_205], %551 {strides = array<i32>} : memref<15x25xf32, #tpu.memory_space<vmem>>, vector<15x5xf32>,
    %553 = vector.extract_strided_slice %538 {offsets = [0, 51], sizes = [15, 13], strides = [1, 1]} : vector<15x251xf32> to vector<15x13xf32>
    %554 = vector.extract_strided_slice %538 {offsets = [0, 68], sizes = [15, 13], strides = [1, 1]} : vector<15x251xf32> to vector<15x13xf32>
    %555 = arith.maximumf %553, %554 : vector<15x13xf32>
    %556 = vector.extract_strided_slice %538 {offsets = [0, 85], sizes = [15, 13], strides = [1, 1]} : vector<15x251xf32> to vector<15x13xf32>
    %557 = arith.maximumf %555, %556 : vector<15x13xf32>
    %cst_206 = arith.constant dense<0.000000e+00> : vector<15x5xf32>
    %558 = tpu.matmul %557, %545, %cst_206 {dimension_numbers = #tpu.dot_dimension_numbers<[1], [0], [0], [1], [0, 0, 1, 1], [], []>} : vector<15x13xf32>, vector<13x5xf32>, vector<15x5xf32> -> vector<15x5xf32>
    %c0_207 = arith.constant 0 : index
    %c5 = arith.constant 5 : index
    %559 = vector.load %arg6[%c0_207, %c5] : memref<15x25xf32, #tpu.memory_space<vmem>>, vector<15x5xf32>
    tpu.vector_store %arg6[%c0_207, %c5], %558 {strides = array<i32>} : memref<15x25xf32, #tpu.memory_space<vmem>>, vector<15x5xf32>,
    %560 = vector.extract_strided_slice %538 {offsets = [0, 102], sizes = [15, 13], strides = [1, 1]} : vector<15x251xf32> to vector<15x13xf32>
    %561 = vector.extract_strided_slice %538 {offsets = [0, 119], sizes = [15, 13], strides = [1, 1]} : vector<15x251xf32> to vector<15x13xf32>
    %562 = arith.maximumf %560, %561 : vector<15x13xf32>
    %563 = vector.extract_strided_slice %538 {offsets = [0, 136], sizes = [15, 13], strides = [1, 1]} : vector<15x251xf32> to vector<15x13xf32>
    %564 = arith.maximumf %562, %563 : vector<15x13xf32>
    %cst_208 = arith.constant dense<0.000000e+00> : vector<15x5xf32>
    %565 = tpu.matmul %564, %545, %cst_208 {dimension_numbers = #tpu.dot_dimension_numbers<[1], [0], [0], [1], [0, 0, 1, 1], [], []>} : vector<15x13xf32>, vector<13x5xf32>, vector<15x5xf32> -> vector<15x5xf32>
    %c0_209 = arith.constant 0 : index
    %c10 = arith.constant 10 : index
    %566 = vector.load %arg6[%c0_209, %c10] : memref<15x25xf32, #tpu.memory_space<vmem>>, vector<15x5xf32>
    tpu.vector_store %arg6[%c0_209, %c10], %565 {strides = array<i32>} : memref<15x25xf32, #tpu.memory_space<vmem>>, vector<15x5xf32>,
    %567 = vector.extract_strided_slice %538 {offsets = [0, 153], sizes = [15, 13], strides = [1, 1]} : vector<15x251xf32> to vector<15x13xf32>
    %568 = vector.extract_strided_slice %538 {offsets = [0, 170], sizes = [15, 13], strides = [1, 1]} : vector<15x251xf32> to vector<15x13xf32>
    %569 = arith.maximumf %567, %568 : vector<15x13xf32>
    %570 = vector.extract_strided_slice %538 {offsets = [0, 187], sizes = [15, 13], strides = [1, 1]} : vector<15x251xf32> to vector<15x13xf32>
    %571 = arith.maximumf %569, %570 : vector<15x13xf32>
    %cst_210 = arith.constant dense<0.000000e+00> : vector<15x5xf32>
    %572 = tpu.matmul %571, %545, %cst_210 {dimension_numbers = #tpu.dot_dimension_numbers<[1], [0], [0], [1], [0, 0, 1, 1], [], []>} : vector<15x13xf32>, vector<13x5xf32>, vector<15x5xf32> -> vector<15x5xf32>
    %c0_211 = arith.constant 0 : index
    %c15 = arith.constant 15 : index
    %573 = vector.load %arg6[%c0_211, %c15] : memref<15x25xf32, #tpu.memory_space<vmem>>, vector<15x5xf32>
    tpu.vector_store %arg6[%c0_211, %c15], %572 {strides = array<i32>} : memref<15x25xf32, #tpu.memory_space<vmem>>, vector<15x5xf32>,
    %574 = vector.extract_strided_slice %538 {offsets = [0, 204], sizes = [15, 13], strides = [1, 1]} : vector<15x251xf32> to vector<15x13xf32>
    %575 = vector.extract_strided_slice %538 {offsets = [0, 221], sizes = [15, 13], strides = [1, 1]} : vector<15x251xf32> to vector<15x13xf32>
    %576 = arith.maximumf %574, %575 : vector<15x13xf32>
    %577 = vector.extract_strided_slice %538 {offsets = [0, 238], sizes = [15, 13], strides = [1, 1]} : vector<15x251xf32> to vector<15x13xf32>
    %578 = arith.maximumf %576, %577 : vector<15x13xf32>
    %cst_212 = arith.constant dense<0.000000e+00> : vector<15x5xf32>
    %579 = tpu.matmul %578, %545, %cst_212 {dimension_numbers = #tpu.dot_dimension_numbers<[1], [0], [0], [1], [0, 0, 1, 1], [], []>} : vector<15x13xf32>, vector<13x5xf32>, vector<15x5xf32> -> vector<15x5xf32>
    %c0_213 = arith.constant 0 : index
    %c20 = arith.constant 20 : index
    %580 = vector.load %arg6[%c0_213, %c20] : memref<15x25xf32, #tpu.memory_space<vmem>>, vector<15x5xf32>
    tpu.vector_store %arg6[%c0_213, %c20], %579 {strides = array<i32>} : memref<15x25xf32, #tpu.memory_space<vmem>>, vector<15x5xf32>,
    %c0_214 = arith.constant 0 : index
    %c0_215 = arith.constant 0 : index
    %581 = vector.load %arg6[%c0_214, %c0_215] : memref<15x25xf32, #tpu.memory_space<vmem>>, vector<15x13xf32>
    %c0_216 = arith.constant 0 : index
    %c0_217 = arith.constant 0 : index
    %582 = vector.load %arg7[%c0_216, %c0_217] : memref<144x13xf32, #tpu.memory_space<vmem>>, vector<15x13xf32>
    tpu.vector_store %arg7[%c0_216, %c0_217], %581 {strides = array<i32>} : memref<144x13xf32, #tpu.memory_space<vmem>>, vector<15x13xf32>,
    %c0_218 = arith.constant 0 : index
    %c1_219 = arith.constant 1 : index
    %583 = vector.load %arg6[%c0_218, %c1_219] : memref<15x25xf32, #tpu.memory_space<vmem>>, vector<15x13xf32>
    %c16_220 = arith.constant 16 : index
    %c0_221 = arith.constant 0 : index
    %584 = vector.load %arg7[%c16_220, %c0_221] : memref<144x13xf32, #tpu.memory_space<vmem>>, vector<15x13xf32>
    tpu.vector_store %arg7[%c16_220, %c0_221], %583 {strides = array<i32>} : memref<144x13xf32, #tpu.memory_space<vmem>>, vector<15x13xf32>,
    %c0_222 = arith.constant 0 : index
    %c2_223 = arith.constant 2 : index
    %585 = vector.load %arg6[%c0_222, %c2_223] : memref<15x25xf32, #tpu.memory_space<vmem>>, vector<15x13xf32>
    %c32_224 = arith.constant 32 : index
    %c0_225 = arith.constant 0 : index
    %586 = vector.load %arg7[%c32_224, %c0_225] : memref<144x13xf32, #tpu.memory_space<vmem>>, vector<15x13xf32>
    tpu.vector_store %arg7[%c32_224, %c0_225], %585 {strides = array<i32>} : memref<144x13xf32, #tpu.memory_space<vmem>>, vector<15x13xf32>,
    %c0_226 = arith.constant 0 : index
    %c5_227 = arith.constant 5 : index
    %587 = vector.load %arg6[%c0_226, %c5_227] : memref<15x25xf32, #tpu.memory_space<vmem>>, vector<15x13xf32>
    %c48_228 = arith.constant 48 : index
    %c0_229 = arith.constant 0 : index
    %588 = vector.load %arg7[%c48_228, %c0_229] : memref<144x13xf32, #tpu.memory_space<vmem>>, vector<15x13xf32>
    tpu.vector_store %arg7[%c48_228, %c0_229], %587 {strides = array<i32>} : memref<144x13xf32, #tpu.memory_space<vmem>>, vector<15x13xf32>,
    %c0_230 = arith.constant 0 : index
    %c6 = arith.constant 6 : index
    %589 = vector.load %arg6[%c0_230, %c6] : memref<15x25xf32, #tpu.memory_space<vmem>>, vector<15x13xf32>
    %c64_231 = arith.constant 64 : index
    %c0_232 = arith.constant 0 : index
    %590 = vector.load %arg7[%c64_231, %c0_232] : memref<144x13xf32, #tpu.memory_space<vmem>>, vector<15x13xf32>
    tpu.vector_store %arg7[%c64_231, %c0_232], %589 {strides = array<i32>} : memref<144x13xf32, #tpu.memory_space<vmem>>, vector<15x13xf32>,
    %c0_233 = arith.constant 0 : index
    %c7 = arith.constant 7 : index
    %591 = vector.load %arg6[%c0_233, %c7] : memref<15x25xf32, #tpu.memory_space<vmem>>, vector<15x13xf32>
    %c80_234 = arith.constant 80 : index
    %c0_235 = arith.constant 0 : index
    %592 = vector.load %arg7[%c80_234, %c0_235] : memref<144x13xf32, #tpu.memory_space<vmem>>, vector<15x13xf32>
    tpu.vector_store %arg7[%c80_234, %c0_235], %591 {strides = array<i32>} : memref<144x13xf32, #tpu.memory_space<vmem>>, vector<15x13xf32>,
    %c0_236 = arith.constant 0 : index
    %c10_237 = arith.constant 10 : index
    %593 = vector.load %arg6[%c0_236, %c10_237] : memref<15x25xf32, #tpu.memory_space<vmem>>, vector<15x13xf32>
    %c96_238 = arith.constant 96 : index
    %c0_239 = arith.constant 0 : index
    %594 = vector.load %arg7[%c96_238, %c0_239] : memref<144x13xf32, #tpu.memory_space<vmem>>, vector<15x13xf32>
    tpu.vector_store %arg7[%c96_238, %c0_239], %593 {strides = array<i32>} : memref<144x13xf32, #tpu.memory_space<vmem>>, vector<15x13xf32>,
    %c0_240 = arith.constant 0 : index
    %c11 = arith.constant 11 : index
    %595 = vector.load %arg6[%c0_240, %c11] : memref<15x25xf32, #tpu.memory_space<vmem>>, vector<15x13xf32>
    %c112_241 = arith.constant 112 : index
    %c0_242 = arith.constant 0 : index
    %596 = vector.load %arg7[%c112_241, %c0_242] : memref<144x13xf32, #tpu.memory_space<vmem>>, vector<15x13xf32>
    tpu.vector_store %arg7[%c112_241, %c0_242], %595 {strides = array<i32>} : memref<144x13xf32, #tpu.memory_space<vmem>>, vector<15x13xf32>,
    %c0_243 = arith.constant 0 : index
    %c12 = arith.constant 12 : index
    %597 = vector.load %arg6[%c0_243, %c12] : memref<15x25xf32, #tpu.memory_space<vmem>>, vector<15x13xf32>
    %c128_244 = arith.constant 128 : index
    %c0_245 = arith.constant 0 : index
    %598 = vector.load %arg7[%c128_244, %c0_245] : memref<144x13xf32, #tpu.memory_space<vmem>>, vector<15x13xf32>
    tpu.vector_store %arg7[%c128_244, %c0_245], %597 {strides = array<i32>} : memref<144x13xf32, #tpu.memory_space<vmem>>, vector<15x13xf32>,
    %c0_246 = arith.constant 0 : index
    %c384 = arith.constant 384 : index
    %599 = vector.load %arg1[%c0_246, %c384] : memref<32x768xf32, #tpu.memory_space<vmem>>, vector<32x144xf32>
    %c0_247 = arith.constant 0 : index
    %c528 = arith.constant 528 : index
    %600 = vector.load %arg1[%c0_247, %c528] : memref<32x768xf32, #tpu.memory_space<vmem>>, vector<32x1xf32>
    %c0_248 = arith.constant 0 : index
    %c0_249 = arith.constant 0 : index
    %601 = vector.load %arg7[%c0_248, %c0_249] : memref<144x13xf32, #tpu.memory_space<vmem>>, vector<144x13xf32>
    %cst_250 = arith.constant dense<0.000000e+00> : vector<32x13xf32>
    %602 = tpu.matmul %599, %601, %cst_250 {dimension_numbers = #tpu.dot_dimension_numbers<[1], [0], [0], [1], [0, 0, 1, 1], [], []>} : vector<32x144xf32>, vector<144x13xf32>, vector<32x13xf32> -> vector<32x13xf32>
    %603 = vector.broadcast %600 : vector<32x1xf32> to vector<32x13xf32>
    %604 = arith.addf %602, %603 : vector<32x13xf32>
    %605 = vector.extract_strided_slice %604 {offsets = [0, 0], sizes = [32, 1], strides = [1, 1]} : vector<32x13xf32> to vector<32x1xf32>
    %606 = vector.extract_strided_slice %604 {offsets = [0, 1], sizes = [32, 1], strides = [1, 1]} : vector<32x13xf32> to vector<32x1xf32>
    %607 = arith.maximumf %605, %606 : vector<32x1xf32>
    %608 = vector.extract_strided_slice %604 {offsets = [0, 2], sizes = [32, 1], strides = [1, 1]} : vector<32x13xf32> to vector<32x1xf32>
    %609 = arith.maximumf %607, %608 : vector<32x1xf32>
    %610 = vector.extract_strided_slice %604 {offsets = [0, 5], sizes = [32, 1], strides = [1, 1]} : vector<32x13xf32> to vector<32x1xf32>
    %611 = arith.maximumf %609, %610 : vector<32x1xf32>
    %612 = vector.extract_strided_slice %604 {offsets = [0, 6], sizes = [32, 1], strides = [1, 1]} : vector<32x13xf32> to vector<32x1xf32>
    %613 = arith.maximumf %611, %612 : vector<32x1xf32>
    %614 = vector.extract_strided_slice %604 {offsets = [0, 7], sizes = [32, 1], strides = [1, 1]} : vector<32x13xf32> to vector<32x1xf32>
    %615 = arith.maximumf %613, %614 : vector<32x1xf32>
    %616 = vector.extract_strided_slice %604 {offsets = [0, 10], sizes = [32, 1], strides = [1, 1]} : vector<32x13xf32> to vector<32x1xf32>
    %617 = arith.maximumf %615, %616 : vector<32x1xf32>
    %618 = vector.extract_strided_slice %604 {offsets = [0, 11], sizes = [32, 1], strides = [1, 1]} : vector<32x13xf32> to vector<32x1xf32>
    %619 = arith.maximumf %617, %618 : vector<32x1xf32>
    %620 = vector.extract_strided_slice %604 {offsets = [0, 12], sizes = [32, 1], strides = [1, 1]} : vector<32x13xf32> to vector<32x1xf32>
    %621 = arith.maximumf %619, %620 : vector<32x1xf32>
    %c0_251 = arith.constant 0 : index
    %c640 = arith.constant 640 : index
    %622 = vector.load %arg1[%c0_251, %c640] : memref<32x768xf32, #tpu.memory_space<vmem>>, vector<32x32xf32>
    %c0_252 = arith.constant 0 : index
    %c672 = arith.constant 672 : index
    %623 = vector.load %arg1[%c0_252, %c672] : memref<32x768xf32, #tpu.memory_space<vmem>>, vector<32x1xf32>
    %cst_253 = arith.constant dense<0.000000e+00> : vector<32x1xf32>
    %624 = tpu.matmul %622, %621, %cst_253 {dimension_numbers = #tpu.dot_dimension_numbers<[1], [0], [0], [1], [0, 0, 1, 1], [], []>} : vector<32x32xf32>, vector<32x1xf32>, vector<32x1xf32> -> vector<32x1xf32>
    %625 = arith.addf %624, %623 : vector<32x1xf32>
    %cst_254 = arith.constant 0.000000e+00 : f32
    %626 = vector.broadcast %cst_254 : f32 to vector<32x1xf32>
    %627 = arith.maximumf %625, %626 : vector<32x1xf32>
    %c0_255 = arith.constant 0 : index
    %c704 = arith.constant 704 : index
    %628 = vector.load %arg1[%c0_255, %c704] : memref<32x768xf32, #tpu.memory_space<vmem>>, vector<1x32xf32>
    %c0_256 = arith.constant 0 : index
    %c736 = arith.constant 736 : index
    %629 = vector.load %arg1[%c0_256, %c736] : memref<32x768xf32, #tpu.memory_space<vmem>>, vector<1x1xf32>
    %cst_257 = arith.constant dense<0.000000e+00> : vector<1x1xf32>
    %630 = tpu.matmul %628, %627, %cst_257 {dimension_numbers = #tpu.dot_dimension_numbers<[1], [0], [0], [1], [0, 0, 1, 1], [], []>} : vector<1x32xf32>, vector<32x1xf32>, vector<1x1xf32> -> vector<1x1xf32>
    %631 = arith.addf %630, %629 : vector<1x1xf32>
    %cst_258 = arith.constant 0.000000e+00 : f32
    %632 = vector.broadcast %cst_258 : f32 to vector<1x1xf32>
    %633 = arith.maximumf %631, %632 : vector<1x1xf32>
    %c0_259 = arith.constant 0 : index
    %c0_260 = arith.constant 0 : index
    %634 = vector.load %arg2[%c0_259, %c0_260] : memref<1x1xf32, #tpu.memory_space<vmem>>, vector<1x1xf32>
    tpu.vector_store %arg2[%c0_259, %c0_260], %633 {strides = array<i32>} : memref<1x1xf32, #tpu.memory_space<vmem>>, vector<1x1xf32>,
    return
  }
}

</mosaic_0001>

<llo_original>
// kernel: forward.1
$region0: #{forward.1}
  #allocation0 [shape = 'u32[]', space=smem, size = 0x4, offset = 0x4, fixed_abs, tag = 'smem constant byte address 0x4 - core index']
  #allocation1 [shape = 'u32[144,128]{1,0:T(1,128)}', space=vmem, size = 0x12000, scoped, tag = 'internal scratch']
  #allocation2 [shape = 'f32[9,2699]{1,0:T(8,128)}', space=vmem, size = 0x2c000, scoped, tag = 'scratch operand']
  #allocation3 [shape = 'f32[9,289]{1,0:T(8,128)}', space=vmem, size = 0x6000, scoped, tag = 'scratch operand']
  #allocation4 [shape = 'f32[144,253]{1,0:T(8,128)}', space=vmem, size = 0x24000, scoped, tag = 'scratch operand']
  #allocation5 [shape = 'f32[15,25]{1,0:T(8,128)}', space=vmem, size = 0x2000, scoped, tag = 'scratch operand']
  #allocation6 [shape = 'f32[144,13]{1,0:T(8,128)}', space=vmem, size = 0x12000, scoped, tag = 'scratch operand']
  %s0 = inlined_call_operand.vmem [shape: f32[1,2809], index: 0, kind: input, shape index: {}]
  %s1 = inlined_call_operand.hbm [shape: f32[32,768], index: 1, kind: input, shape index: {}]
  %s2 = inlined_call_operand.hbm [shape: f32[1,1], index: 2, kind: output, shape index: {}]
  %s3 = sld [smem:[#allocation0]]
  $region22: #{forward.1} parent=0
    _
  %s5 = ssub.s32 1, %s3
  %s6 = scalar_select 0, %s5, %s3
  $region1: #{forward.1} parent=0
    #allocation7 [shape = 'u8[98304]{0}', space=vmem, size = 0x18000, scoped, tag = 'input window, operand 1, single buffered']
    #allocation8 [shape = 's32[1]{0}', space=sflag, size = 0x4, scoped, tag = 'scoped memory for forward.1']
    #allocation9 [shape = 's32[1]{0}', space=sflag, size = 0x4, scoped, tag = 'scoped memory for forward.1']
    #allocation10 [shape = 'u8[512]{0}', space=vmem, size = 0x400, scoped, tag = 'output window, operand 0, single buffered']
    %7 = vsyncpa [#allocation8], 0
    %8 = vsyncpa [#allocation9], 0
    // Predicated region
    $region2: #{forward.1} parent=1 // pred_check
      _
    $region3: #{forward.1} parent=1 // pred_check_branch
      %10 = sbr.rel (0) target = $region5
    $region4: #{forward.1} parent=1 // pred_region
      _
    $region5: #{forward.1} parent=1 // pred_fallthru
      _
    // Predicated region
    $region6: #{forward.1} parent=1 // pred_check
      _
    $region7: #{forward.1} parent=1 // pred_check_branch
      %12 = sbr.rel (0) target = $region9
    $region8: #{forward.1} parent=1 // pred_region
      %s14 = ssub.s32 3072, 3072
      %15 = vsyncadd [#allocation8], %s14
      %s16 = sshll.u32 [#allocation7], 4
      %s17 = int_to_ptr.vmem [resolvable:$true] %s16
      %22 = dma.hbm_to_vmem [thread:$0]  %s1, 3072, %s17, [#allocation8], 768, 768, 48
    $region9: #{forward.1} parent=1 // pred_fallthru
      _
    // Predicated region
    $region10: #{forward.1} parent=1 // pred_check
      _
    $region11: #{forward.1} parent=1 // pred_check_branch
      %24 = sbr.rel (0) target = $region13
    $region12: #{forward.1} parent=1 // pred_region
      %25 = dma.done [#allocation8], 3072
    $region13: #{forward.1} parent=1 // pred_fallthru
      _
    %26 = vst [vmem:[#allocation4] sm:$0xff] 0.0
    %vm27 = vcmask 1022976
    %28 = vst.msk [vmem:[#allocation4 + $0x8] sm:$0xff] %vm27, 0.0
    %29 = vst [vmem:[#allocation4 + $0x10] sm:$0xff] 0.0
    %30 = vst.msk [vmem:[#allocation4 + $0x18] sm:$0xff] %vm27, 0.0
    %31 = vst [vmem:[#allocation4 + $0x20] sm:$0xff] 0.0
    %32 = vst.msk [vmem:[#allocation4 + $0x28] sm:$0xff] %vm27, 0.0
    %33 = vst [vmem:[#allocation4 + $0x30] sm:$0xff] 0.0
    %34 = vst.msk [vmem:[#allocation4 + $0x38] sm:$0xff] %vm27, 0.0
    %35 = vst [vmem:[#allocation4 + $0x40] sm:$0xff] 0.0
    %36 = vst.msk [vmem:[#allocation4 + $0x48] sm:$0xff] %vm27, 0.0
    %37 = vst [vmem:[#allocation4 + $0x50] sm:$0xff] 0.0
    %38 = vst.msk [vmem:[#allocation4 + $0x58] sm:$0xff] %vm27, 0.0
    %39 = vst [vmem:[#allocation4 + $0x60] sm:$0xff] 0.0
    %40 = vst.msk [vmem:[#allocation4 + $0x68] sm:$0xff] %vm27, 0.0
    %41 = vst [vmem:[#allocation4 + $0x70] sm:$0xff] 0.0
    %42 = vst.msk [vmem:[#allocation4 + $0x78] sm:$0xff] %vm27, 0.0
    %43 = vst [vmem:[#allocation4 + $0x80] sm:$0xff] 0.0
    %44 = vst.msk [vmem:[#allocation4 + $0x88] sm:$0xff] %vm27, 0.0
    %45 = vst [vmem:[#allocation4 + $0x90] sm:$0xff] 0.0
    %46 = vst.msk [vmem:[#allocation4 + $0x98] sm:$0xff] %vm27, 0.0
    %47 = vst [vmem:[#allocation4 + $0xa0] sm:$0xff] 0.0
    %48 = vst.msk [vmem:[#allocation4 + $0xa8] sm:$0xff] %vm27, 0.0
    %49 = vst [vmem:[#allocation4 + $0xb0] sm:$0xff] 0.0
    %50 = vst.msk [vmem:[#allocation4 + $0xb8] sm:$0xff] %vm27, 0.0
    %51 = vst [vmem:[#allocation4 + $0xc0] sm:$0xff] 0.0
    %52 = vst.msk [vmem:[#allocation4 + $0xc8] sm:$0xff] %vm27, 0.0
    %53 = vst [vmem:[#allocation4 + $0xd0] sm:$0xff] 0.0
    %54 = vst.msk [vmem:[#allocation4 + $0xd8] sm:$0xff] %vm27, 0.0
    %55 = vst [vmem:[#allocation4 + $0xe0] sm:$0xff] 0.0
    %56 = vst.msk [vmem:[#allocation4 + $0xe8] sm:$0xff] %vm27, 0.0
    %57 = vst [vmem:[#allocation4 + $0xf0] sm:$0xff] 0.0
    %58 = vst.msk [vmem:[#allocation4 + $0xf8] sm:$0xff] %vm27, 0.0
    %59 = vst [vmem:[#allocation4 + $0x100] sm:$0xff] 0.0
    %60 = vst.msk [vmem:[#allocation4 + $0x108] sm:$0xff] %vm27, 0.0
    %61 = vst [vmem:[#allocation4 + $0x110] sm:$0xff] 0.0
    %62 = vst.msk [vmem:[#allocation4 + $0x118] sm:$0xff] %vm27, 0.0
    %vm63 = vcmask 105472
    %64 = vst.msk [vmem:[#allocation6] sm:$0xff] %vm63, 0.0
    %65 = vst.msk [vmem:[#allocation6 + $0x8] sm:$0xff] %vm63, 0.0
    %66 = vst.msk [vmem:[#allocation6 + $0x10] sm:$0xff] %vm63, 0.0
    %67 = vst.msk [vmem:[#allocation6 + $0x18] sm:$0xff] %vm63, 0.0
    %68 = vst.msk [vmem:[#allocation6 + $0x20] sm:$0xff] %vm63, 0.0
    %69 = vst.msk [vmem:[#allocation6 + $0x28] sm:$0xff] %vm63, 0.0
    %70 = vst.msk [vmem:[#allocation6 + $0x30] sm:$0xff] %vm63, 0.0
    %71 = vst.msk [vmem:[#allocation6 + $0x38] sm:$0xff] %vm63, 0.0
    %72 = vst.msk [vmem:[#allocation6 + $0x40] sm:$0xff] %vm63, 0.0
    %73 = vst.msk [vmem:[#allocation6 + $0x48] sm:$0xff] %vm63, 0.0
    %74 = vst.msk [vmem:[#allocation6 + $0x50] sm:$0xff] %vm63, 0.0
    %75 = vst.msk [vmem:[#allocation6 + $0x58] sm:$0xff] %vm63, 0.0
    %76 = vst.msk [vmem:[#allocation6 + $0x60] sm:$0xff] %vm63, 0.0
    %77 = vst.msk [vmem:[#allocation6 + $0x68] sm:$0xff] %vm63, 0.0
    %78 = vst.msk [vmem:[#allocation6 + $0x70] sm:$0xff] %vm63, 0.0
    %79 = vst.msk [vmem:[#allocation6 + $0x78] sm:$0xff] %vm63, 0.0
    %80 = vst.msk [vmem:[#allocation6 + $0x80] sm:$0xff] %vm63, 0.0
    %81 = vst.msk [vmem:[#allocation6 + $0x88] sm:$0xff] %vm63, 0.0
    %v82 = vld [vmem:[#allocation7] sm:$0xff]
    %v83 = vld [vmem:[#allocation7 + $0x30] sm:$0x1]
    %v84 = vld [vmem:[%s0] sm:$0x1f]
    %86 = vset.pattern.permute.xlu0 0
    %87 = vperm.xlu0 %86, %v82
    %v88 = vpop.permute.xlu0 %87
    %91 = vset.pattern.permute.xlu0 0
    %92 = vperm.xlu0 %91, %v83
    %v93 = vpop.permute.xlu0 %92
    %v96 = vlaneseq
    %v97 = vshrl.u32 %v96, 7
    %v98 = vsub.s32 0, %v97
    %v99 = vrot.slane %v84, %v98
    %v100 = vlaneseq
    %v101 = vshrl.u32 %v100, 7
    %v102 = vsub.s32 1, %v101
    %v103 = vrot.slane %v84, %v102
    %v104 = vlaneseq
    %v105 = vshrl.u32 %v104, 7
    %v106 = vsub.s32 2, %v105
    %v107 = vrot.slane %v84, %v106
    %v108 = vlaneseq
    %v109 = vshrl.u32 %v108, 7
    %v110 = vsub.s32 3, %v109
    %v111 = vrot.slane %v84, %v110
    %v112 = vlaneseq
    %v113 = vshrl.u32 %v112, 7
    %v114 = vsub.s32 4, %v113
    %v115 = vrot.slane %v84, %v114
    %v121 = vmul.f32 %v88, %v99
    %v122 = vmul.f32 %v88, %v103
    %v123 = vmul.f32 %v88, %v107
    %v124 = vmul.f32 %v88, %v111
    %v125 = vmul.f32 %v88, %v115
    %v126 = vmul.f32 %v93, %v99
    %v127 = vmul.f32 %v93, %v103
    %v128 = vmul.f32 %v93, %v107
    %v129 = vmul.f32 %v93, %v111
    %v130 = vmul.f32 %v93, %v115
    %v131 = vadd.f32 %v121, 0.0
    %v132 = vadd.f32 %v122, 0.0
    %v133 = vadd.f32 %v123, 0.0
    %v134 = vadd.f32 %v124, 0.0
    %v135 = vadd.f32 %v125, 0.0
    %v136 = vadd.f32 %v126, 0.0
    %v137 = vadd.f32 %v127, 0.0
    %v138 = vadd.f32 %v128, 0.0
    %v139 = vadd.f32 %v129, 0.0
    %v140 = vadd.f32 %v130, 0.0
    %141 = vset.pattern.permute.xlu0 1
    %142 = vperm.xlu0 %141, %v82
    %v143 = vpop.permute.xlu0 %142
    %145 = vset.pattern.permute.xlu0 1
    %146 = vperm.xlu0 %145, %v83
    %v147 = vpop.permute.xlu0 %146
    %v149 = vmul.f32 %v143, %v99
    %v150 = vmul.f32 %v143, %v103
    %v151 = vmul.f32 %v143, %v107
    %v152 = vmul.f32 %v143, %v111
    %v153 = vmul.f32 %v143, %v115
    %v154 = vmul.f32 %v147, %v99
    %v155 = vmul.f32 %v147, %v103
    %v156 = vmul.f32 %v147, %v107
    %v157 = vmul.f32 %v147, %v111
    %v158 = vmul.f32 %v147, %v115
    %169 = vrot.lane.b32.xlu0 %v149, 127
    %v170 = vpop.permute.xlu0 %169
    %171 = vrot.lane.b32.xlu0 %v150, 127
    %v172 = vpop.permute.xlu0 %171
    %173 = vrot.lane.b32.xlu0 %v151, 127
    %v174 = vpop.permute.xlu0 %173
    %175 = vrot.lane.b32.xlu0 %v152, 127
    %v176 = vpop.permute.xlu0 %175
    %177 = vrot.lane.b32.xlu0 %v153, 127
    %v178 = vpop.permute.xlu0 %177
    %179 = vrot.lane.b32.xlu0 %v154, 127
    %v180 = vpop.permute.xlu0 %179
    %181 = vrot.lane.b32.xlu0 %v155, 127
    %v182 = vpop.permute.xlu0 %181
    %183 = vrot.lane.b32.xlu0 %v156, 127
    %v184 = vpop.permute.xlu0 %183
    %185 = vrot.lane.b32.xlu0 %v157, 127
    %v186 = vpop.permute.xlu0 %185
    %187 = vrot.lane.b32.xlu0 %v158, 127
    %v188 = vpop.permute.xlu0 %187
    %vm189 = vcmask 1039360
    %v190 = vsel %vm189, %v170, %v172
    %v191 = vsel %vm189, %v172, %v174
    %v192 = vsel %vm189, %v174, %v176
    %v193 = vsel %vm189, %v176, %v178
    %v194 = vsel %vm189, %v180, %v182
    %v195 = vsel %vm189, %v182, %v184
    %v196 = vsel %vm189, %v184, %v186
    %v197 = vsel %vm189, %v186, %v188
    %v208 = vadd.f32 %v131, %v190
    %v209 = vadd.f32 %v132, %v191
    %v210 = vadd.f32 %v133, %v192
    %v211 = vadd.f32 %v134, %v193
    %v212 = vadd.f32 %v135, %v178
    %v213 = vadd.f32 %v136, %v194
    %v214 = vadd.f32 %v137, %v195
    %v215 = vadd.f32 %v138, %v196
    %v216 = vadd.f32 %v139, %v197
    %v217 = vadd.f32 %v140, %v188
    %218 = vset.pattern.permute.xlu0 2
    %219 = vperm.xlu0 %218, %v82
    %v220 = vpop.permute.xlu0 %219
    %222 = vset.pattern.permute.xlu0 2
    %223 = vperm.xlu0 %222, %v83
    %v224 = vpop.permute.xlu0 %223
    %v226 = vmul.f32 %v220, %v99
    %v227 = vmul.f32 %v220, %v103
    %v228 = vmul.f32 %v220, %v107
    %v229 = vmul.f32 %v220, %v111
    %v230 = vmul.f32 %v220, %v115
    %v231 = vmul.f32 %v224, %v99
    %v232 = vmul.f32 %v224, %v103
    %v233 = vmul.f32 %v224, %v107
    %v234 = vmul.f32 %v224, %v111
    %v235 = vmul.f32 %v224, %v115
    %246 = vrot.lane.b32.xlu0 %v226, 126
    %v247 = vpop.permute.xlu0 %246
    %248 = vrot.lane.b32.xlu0 %v227, 126
    %v249 = vpop.permute.xlu0 %248
    %250 = vrot.lane.b32.xlu0 %v228, 126
    %v251 = vpop.permute.xlu0 %250
    %252 = vrot.lane.b32.xlu0 %v229, 126
    %v253 = vpop.permute.xlu0 %252
    %254 = vrot.lane.b32.xlu0 %v230, 126
    %v255 = vpop.permute.xlu0 %254
    %256 = vrot.lane.b32.xlu0 %v231, 126
    %v257 = vpop.permute.xlu0 %256
    %258 = vrot.lane.b32.xlu0 %v232, 126
    %v259 = vpop.permute.xlu0 %258
    %260 = vrot.lane.b32.xlu0 %v233, 126
    %v261 = vpop.permute.xlu0 %260
    %262 = vrot.lane.b32.xlu0 %v234, 126
    %v263 = vpop.permute.xlu0 %262
    %264 = vrot.lane.b32.xlu0 %v235, 126
    %v265 = vpop.permute.xlu0 %264
    %vm266 = vcmask 1031168
    %v267 = vsel %vm266, %v247, %v249
    %v268 = vsel %vm266, %v249, %v251
    %v269 = vsel %vm266, %v251, %v253
    %v270 = vsel %vm266, %v253, %v255
    %v271 = vsel %vm266, %v257, %v259
    %v272 = vsel %vm266, %v259, %v261
    %v273 = vsel %vm266, %v261, %v263
    %v274 = vsel %vm266, %v263, %v265
    %v285 = vadd.f32 %v208, %v267
    %v286 = vadd.f32 %v209, %v268
    %v287 = vadd.f32 %v210, %v269
    %v288 = vadd.f32 %v211, %v270
    %v289 = vadd.f32 %v212, %v255
    %v290 = vadd.f32 %v213, %v271
    %v291 = vadd.f32 %v214, %v272
    %v292 = vadd.f32 %v215, %v273
    %v293 = vadd.f32 %v216, %v274
    %v294 = vadd.f32 %v217, %v265
    %295 = vset.pattern.permute.xlu0 3
    %296 = vperm.xlu0 %295, %v82
    %v297 = vpop.permute.xlu0 %296
    %299 = vset.pattern.permute.xlu0 3
    %300 = vperm.xlu0 %299, %v83
    %v301 = vpop.permute.xlu0 %300
    %v303 = vmul.f32 %v297, %v99
    %v304 = vmul.f32 %v297, %v103
    %v305 = vmul.f32 %v297, %v107
    %v306 = vmul.f32 %v297, %v111
    %v307 = vmul.f32 %v297, %v115
    %v308 = vmul.f32 %v301, %v99
    %v309 = vmul.f32 %v301, %v103
    %v310 = vmul.f32 %v301, %v107
    %v311 = vmul.f32 %v301, %v111
    %v312 = vmul.f32 %v301, %v115
    %323 = vrot.lane.b32.xlu0 %v303, 75
    %v324 = vpop.permute.xlu0 %323
    %325 = vrot.lane.b32.xlu0 %v304, 75
    %v326 = vpop.permute.xlu0 %325
    %327 = vrot.lane.b32.xlu0 %v305, 75
    %v328 = vpop.permute.xlu0 %327
    %329 = vrot.lane.b32.xlu0 %v306, 75
    %v330 = vpop.permute.xlu0 %329
    %331 = vrot.lane.b32.xlu0 %v307, 75
    %v332 = vpop.permute.xlu0 %331
    %333 = vrot.lane.b32.xlu0 %v308, 75
    %v334 = vpop.permute.xlu0 %333
    %335 = vrot.lane.b32.xlu0 %v309, 75
    %v336 = vpop.permute.xlu0 %335
    %337 = vrot.lane.b32.xlu0 %v310, 75
    %v338 = vpop.permute.xlu0 %337
    %339 = vrot.lane.b32.xlu0 %v311, 75
    %v340 = vpop.permute.xlu0 %339
    %341 = vrot.lane.b32.xlu0 %v312, 75
    %v342 = vpop.permute.xlu0 %341
    %vm343 = vcmask 613376
    %v344 = vsel %vm343, %v324, %v326
    %v345 = vsel %vm343, %v326, %v328
    %v346 = vsel %vm343, %v328, %v330
    %v347 = vsel %vm343, %v330, %v332
    %v348 = vsel %vm343, %v334, %v336
    %v349 = vsel %vm343, %v336, %v338
    %v350 = vsel %vm343, %v338, %v340
    %v351 = vsel %vm343, %v340, %v342
    %v362 = vadd.f32 %v285, %v344
    %v363 = vadd.f32 %v286, %v345
    %v364 = vadd.f32 %v287, %v346
    %v365 = vadd.f32 %v288, %v347
    %v366 = vadd.f32 %v289, %v332
    %v367 = vadd.f32 %v290, %v348
    %v368 = vadd.f32 %v291, %v349
    %v369 = vadd.f32 %v292, %v350
    %v370 = vadd.f32 %v293, %v351
    %v371 = vadd.f32 %v294, %v342
    %372 = vset.pattern.permute.xlu0 4
    %373 = vperm.xlu0 %372, %v82
    %v374 = vpop.permute.xlu0 %373
    %376 = vset.pattern.permute.xlu0 4
    %377 = vperm.xlu0 %376, %v83
    %v378 = vpop.permute.xlu0 %377
    %v380 = vmul.f32 %v374, %v99
    %v381 = vmul.f32 %v374, %v103
    %v382 = vmul.f32 %v374, %v107
    %v383 = vmul.f32 %v374, %v111
    %v384 = vmul.f32 %v374, %v115
    %v385 = vmul.f32 %v378, %v99
    %v386 = vmul.f32 %v378, %v103
    %v387 = vmul.f32 %v378, %v107
    %v388 = vmul.f32 %v378, %v111
    %v389 = vmul.f32 %v378, %v115
    %400 = vrot.lane.b32.xlu0 %v380, 74
    %v401 = vpop.permute.xlu0 %400
    %402 = vrot.lane.b32.xlu0 %v381, 74
    %v403 = vpop.permute.xlu0 %402
    %404 = vrot.lane.b32.xlu0 %v382, 74
    %v405 = vpop.permute.xlu0 %404
    %406 = vrot.lane.b32.xlu0 %v383, 74
    %v407 = vpop.permute.xlu0 %406
    %408 = vrot.lane.b32.xlu0 %v384, 74
    %v409 = vpop.permute.xlu0 %408
    %410 = vrot.lane.b32.xlu0 %v385, 74
    %v411 = vpop.permute.xlu0 %410
    %412 = vrot.lane.b32.xlu0 %v386, 74
    %v413 = vpop.permute.xlu0 %412
    %414 = vrot.lane.b32.xlu0 %v387, 74
    %v415 = vpop.permute.xlu0 %414
    %416 = vrot.lane.b32.xlu0 %v388, 74
    %v417 = vpop.permute.xlu0 %416
    %418 = vrot.lane.b32.xlu0 %v389, 74
    %v419 = vpop.permute.xlu0 %418
    %vm420 = vcmask 605184
    %v421 = vsel %vm420, %v401, %v403
    %v422 = vsel %vm420, %v403, %v405
    %v423 = vsel %vm420, %v405, %v407
    %v424 = vsel %vm420, %v407, %v409
    %v425 = vsel %vm420, %v411, %v413
    %v426 = vsel %vm420, %v413, %v415
    %v427 = vsel %vm420, %v415, %v417
    %v428 = vsel %vm420, %v417, %v419
    %v439 = vadd.f32 %v362, %v421
    %v440 = vadd.f32 %v363, %v422
    %v441 = vadd.f32 %v364, %v423
    %v442 = vadd.f32 %v365, %v424
    %v443 = vadd.f32 %v366, %v409
    %v444 = vadd.f32 %v367, %v425
    %v445 = vadd.f32 %v368, %v426
    %v446 = vadd.f32 %v369, %v427
    %v447 = vadd.f32 %v370, %v428
    %v448 = vadd.f32 %v371, %v419
    %449 = vset.pattern.permute.xlu0 5
    %450 = vperm.xlu0 %449, %v82
    %v451 = vpop.permute.xlu0 %450
    %453 = vset.pattern.permute.xlu0 5
    %454 = vperm.xlu0 %453, %v83
    %v455 = vpop.permute.xlu0 %454
    %v457 = vmul.f32 %v451, %v99
    %v458 = vmul.f32 %v451, %v103
    %v459 = vmul.f32 %v451, %v107
    %v460 = vmul.f32 %v451, %v111
    %v461 = vmul.f32 %v451, %v115
    %v462 = vmul.f32 %v455, %v99
    %v463 = vmul.f32 %v455, %v103
    %v464 = vmul.f32 %v455, %v107
    %v465 = vmul.f32 %v455, %v111
    %v466 = vmul.f32 %v455, %v115
    %477 = vrot.lane.b32.xlu0 %v457, 73
    %v478 = vpop.permute.xlu0 %477
    %479 = vrot.lane.b32.xlu0 %v458, 73
    %v480 = vpop.permute.xlu0 %479
    %481 = vrot.lane.b32.xlu0 %v459, 73
    %v482 = vpop.permute.xlu0 %481
    %483 = vrot.lane.b32.xlu0 %v460, 73
    %v484 = vpop.permute.xlu0 %483
    %485 = vrot.lane.b32.xlu0 %v461, 73
    %v486 = vpop.permute.xlu0 %485
    %487 = vrot.lane.b32.xlu0 %v462, 73
    %v488 = vpop.permute.xlu0 %487
    %489 = vrot.lane.b32.xlu0 %v463, 73
    %v490 = vpop.permute.xlu0 %489
    %491 = vrot.lane.b32.xlu0 %v464, 73
    %v492 = vpop.permute.xlu0 %491
    %493 = vrot.lane.b32.xlu0 %v465, 73
    %v494 = vpop.permute.xlu0 %493
    %495 = vrot.lane.b32.xlu0 %v466, 73
    %v496 = vpop.permute.xlu0 %495
    %vm497 = vcmask 596992
    %v498 = vsel %vm497, %v478, %v480
    %v499 = vsel %vm497, %v480, %v482
    %v500 = vsel %vm497, %v482, %v484
    %v501 = vsel %vm497, %v484, %v486
    %v502 = vsel %vm497, %v488, %v490
    %v503 = vsel %vm497, %v490, %v492
    %v504 = vsel %vm497, %v492, %v494
    %v505 = vsel %vm497, %v494, %v496
    %v516 = vadd.f32 %v439, %v498
    %v517 = vadd.f32 %v440, %v499
    %v518 = vadd.f32 %v441, %v500
    %v519 = vadd.f32 %v442, %v501
    %v520 = vadd.f32 %v443, %v486
    %v521 = vadd.f32 %v444, %v502
    %v522 = vadd.f32 %v445, %v503
    %v523 = vadd.f32 %v446, %v504
    %v524 = vadd.f32 %v447, %v505
    %v525 = vadd.f32 %v448, %v496
    %526 = vset.pattern.permute.xlu0 6
    %527 = vperm.xlu0 %526, %v82
    %v528 = vpop.permute.xlu0 %527
    %530 = vset.pattern.permute.xlu0 6
    %531 = vperm.xlu0 %530, %v83
    %v532 = vpop.permute.xlu0 %531
    %v534 = vmul.f32 %v528, %v99
    %v535 = vmul.f32 %v528, %v103
    %v536 = vmul.f32 %v528, %v107
    %v537 = vmul.f32 %v528, %v111
    %v538 = vmul.f32 %v528, %v115
    %v539 = vmul.f32 %v532, %v99
    %v540 = vmul.f32 %v532, %v103
    %v541 = vmul.f32 %v532, %v107
    %v542 = vmul.f32 %v532, %v111
    %v543 = vmul.f32 %v532, %v115
    %554 = vrot.lane.b32.xlu0 %v534, 22
    %v555 = vpop.permute.xlu0 %554
    %556 = vrot.lane.b32.xlu0 %v535, 22
    %v557 = vpop.permute.xlu0 %556
    %558 = vrot.lane.b32.xlu0 %v536, 22
    %v559 = vpop.permute.xlu0 %558
    %560 = vrot.lane.b32.xlu0 %v537, 22
    %v561 = vpop.permute.xlu0 %560
    %562 = vrot.lane.b32.xlu0 %v538, 22
    %v563 = vpop.permute.xlu0 %562
    %564 = vrot.lane.b32.xlu0 %v539, 22
    %v565 = vpop.permute.xlu0 %564
    %566 = vrot.lane.b32.xlu0 %v540, 22
    %v567 = vpop.permute.xlu0 %566
    %568 = vrot.lane.b32.xlu0 %v541, 22
    %v569 = vpop.permute.xlu0 %568
    %570 = vrot.lane.b32.xlu0 %v542, 22
    %v571 = vpop.permute.xlu0 %570
    %572 = vrot.lane.b32.xlu0 %v543, 22
    %v573 = vpop.permute.xlu0 %572
    %vm574 = vcmask 179200
    %v575 = vsel %vm574, %v555, %v557
    %v576 = vsel %vm574, %v557, %v559
    %v577 = vsel %vm574, %v559, %v561
    %v578 = vsel %vm574, %v561, %v563
    %v579 = vsel %vm574, %v565, %v567
    %v580 = vsel %vm574, %v567, %v569
    %v581 = vsel %vm574, %v569, %v571
    %v582 = vsel %vm574, %v571, %v573
    %v593 = vadd.f32 %v516, %v575
    %v594 = vadd.f32 %v517, %v576
    %v595 = vadd.f32 %v518, %v577
    %v596 = vadd.f32 %v519, %v578
    %v597 = vadd.f32 %v520, %v563
    %v598 = vadd.f32 %v521, %v579
    %v599 = vadd.f32 %v522, %v580
    %v600 = vadd.f32 %v523, %v581
    %v601 = vadd.f32 %v524, %v582
    %v602 = vadd.f32 %v525, %v573
    %603 = vset.pattern.permute.xlu0 7
    %604 = vperm.xlu0 %603, %v82
    %v605 = vpop.permute.xlu0 %604
    %607 = vset.pattern.permute.xlu0 7
    %608 = vperm.xlu0 %607, %v83
    %v609 = vpop.permute.xlu0 %608
    %v611 = vmul.f32 %v605, %v99
    %v612 = vmul.f32 %v605, %v103
    %v613 = vmul.f32 %v605, %v107
    %v614 = vmul.f32 %v605, %v111
    %v615 = vmul.f32 %v605, %v115
    %v616 = vmul.f32 %v609, %v99
    %v617 = vmul.f32 %v609, %v103
    %v618 = vmul.f32 %v609, %v107
    %v619 = vmul.f32 %v609, %v111
    %v620 = vmul.f32 %v609, %v115
    %631 = vrot.lane.b32.xlu0 %v611, 21
    %v632 = vpop.permute.xlu0 %631
    %633 = vrot.lane.b32.xlu0 %v612, 21
    %v634 = vpop.permute.xlu0 %633
    %635 = vrot.lane.b32.xlu0 %v613, 21
    %v636 = vpop.permute.xlu0 %635
    %637 = vrot.lane.b32.xlu0 %v614, 21
    %v638 = vpop.permute.xlu0 %637
    %639 = vrot.lane.b32.xlu0 %v615, 21
    %v640 = vpop.permute.xlu0 %639
    %641 = vrot.lane.b32.xlu0 %v616, 21
    %v642 = vpop.permute.xlu0 %641
    %643 = vrot.lane.b32.xlu0 %v617, 21
    %v644 = vpop.permute.xlu0 %643
    %645 = vrot.lane.b32.xlu0 %v618, 21
    %v646 = vpop.permute.xlu0 %645
    %647 = vrot.lane.b32.xlu0 %v619, 21
    %v648 = vpop.permute.xlu0 %647
    %649 = vrot.lane.b32.xlu0 %v620, 21
    %v650 = vpop.permute.xlu0 %649
    %vm651 = vcmask 171008
    %v652 = vsel %vm651, %v632, %v634
    %v653 = vsel %vm651, %v634, %v636
    %v654 = vsel %vm651, %v636, %v638
    %v655 = vsel %vm651, %v638, %v640
    %v656 = vsel %vm651, %v642, %v644
    %v657 = vsel %vm651, %v644, %v646
    %v658 = vsel %vm651, %v646, %v648
    %v659 = vsel %vm651, %v648, %v650
    %v670 = vadd.f32 %v593, %v652
    %v671 = vadd.f32 %v594, %v653
    %v672 = vadd.f32 %v595, %v654
    %v673 = vadd.f32 %v596, %v655
    %v674 = vadd.f32 %v597, %v640
    %v675 = vadd.f32 %v598, %v656
    %v676 = vadd.f32 %v599, %v657
    %v677 = vadd.f32 %v600, %v658
    %v678 = vadd.f32 %v601, %v659
    %v679 = vadd.f32 %v602, %v650
    %680 = vset.pattern.permute.xlu0 8
    %681 = vperm.xlu0 %680, %v82
    %v682 = vpop.permute.xlu0 %681
    %684 = vset.pattern.permute.xlu0 8
    %685 = vperm.xlu0 %684, %v83
    %v686 = vpop.permute.xlu0 %685
    %v688 = vmul.f32 %v682, %v99
    %v689 = vmul.f32 %v682, %v103
    %v690 = vmul.f32 %v682, %v107
    %v691 = vmul.f32 %v682, %v111
    %v692 = vmul.f32 %v682, %v115
    %v693 = vmul.f32 %v686, %v99
    %v694 = vmul.f32 %v686, %v103
    %v695 = vmul.f32 %v686, %v107
    %v696 = vmul.f32 %v686, %v111
    %v697 = vmul.f32 %v686, %v115
    %708 = vrot.lane.b32.xlu0 %v688, 20
    %v709 = vpop.permute.xlu0 %708
    %710 = vrot.lane.b32.xlu0 %v689, 20
    %v711 = vpop.permute.xlu0 %710
    %712 = vrot.lane.b32.xlu0 %v690, 20
    %v713 = vpop.permute.xlu0 %712
    %714 = vrot.lane.b32.xlu0 %v691, 20
    %v715 = vpop.permute.xlu0 %714
    %716 = vrot.lane.b32.xlu0 %v692, 20
    %v717 = vpop.permute.xlu0 %716
    %718 = vrot.lane.b32.xlu0 %v693, 20
    %v719 = vpop.permute.xlu0 %718
    %720 = vrot.lane.b32.xlu0 %v694, 20
    %v721 = vpop.permute.xlu0 %720
    %722 = vrot.lane.b32.xlu0 %v695, 20
    %v723 = vpop.permute.xlu0 %722
    %724 = vrot.lane.b32.xlu0 %v696, 20
    %v725 = vpop.permute.xlu0 %724
    %726 = vrot.lane.b32.xlu0 %v697, 20
    %v727 = vpop.permute.xlu0 %726
    %vm728 = vcmask 162816
    %v729 = vsel %vm728, %v709, %v711
    %v730 = vsel %vm728, %v711, %v713
    %v731 = vsel %vm728, %v713, %v715
    %v732 = vsel %vm728, %v715, %v717
    %v733 = vsel %vm728, %v719, %v721
    %v734 = vsel %vm728, %v721, %v723
    %v735 = vsel %vm728, %v723, %v725
    %v736 = vsel %vm728, %v725, %v727
    %v747 = vadd.f32 %v670, %v729
    %v748 = vadd.f32 %v671, %v730
    %v749 = vadd.f32 %v672, %v731
    %v750 = vadd.f32 %v673, %v732
    %v751 = vadd.f32 %v674, %v717
    %v752 = vadd.f32 %v675, %v733
    %v753 = vadd.f32 %v676, %v734
    %v754 = vadd.f32 %v677, %v735
    %v755 = vadd.f32 %v678, %v736
    %v756 = vadd.f32 %v679, %v727
    %757 = vset.pattern.permute.xlu0 9
    %758 = vperm.xlu0 %757, %v82
    %v759 = vpop.permute.xlu0 %758
    %761 = vset.pattern.permute.xlu0 9
    %762 = vperm.xlu0 %761, %v83
    %v763 = vpop.permute.xlu0 %762
    %v765 = vadd.f32 %v747, %v759
    %v766 = vadd.f32 %v748, %v759
    %v767 = vadd.f32 %v749, %v759
    %v768 = vadd.f32 %v750, %v759
    %v769 = vadd.f32 %v751, %v759
    %v770 = vadd.f32 %v752, %v763
    %v771 = vadd.f32 %v753, %v763
    %v772 = vadd.f32 %v754, %v763
    %v773 = vadd.f32 %v755, %v763
    %v774 = vadd.f32 %v756, %v763
    %785 = vrot.lane.b32.xlu0 %v765, 127
    %v786 = vpop.permute.xlu0 %785
    %787 = vrot.lane.b32.xlu0 %v766, 127
    %v788 = vpop.permute.xlu0 %787
    %789 = vrot.lane.b32.xlu0 %v767, 127
    %v790 = vpop.permute.xlu0 %789
    %791 = vrot.lane.b32.xlu0 %v768, 127
    %v792 = vpop.permute.xlu0 %791
    %793 = vrot.lane.b32.xlu0 %v769, 127
    %v794 = vpop.permute.xlu0 %793
    %795 = vrot.lane.b32.xlu0 %v770, 127
    %v796 = vpop.permute.xlu0 %795
    %797 = vrot.lane.b32.xlu0 %v771, 127
    %v798 = vpop.permute.xlu0 %797
    %799 = vrot.lane.b32.xlu0 %v772, 127
    %v800 = vpop.permute.xlu0 %799
    %801 = vrot.lane.b32.xlu0 %v773, 127
    %v802 = vpop.permute.xlu0 %801
    %803 = vrot.lane.b32.xlu0 %v774, 127
    %v804 = vpop.permute.xlu0 %803
    %v805 = vsel %vm189, %v786, %v788
    %v806 = vsel %vm189, %v788, %v790
    %v807 = vsel %vm189, %v790, %v792
    %v808 = vsel %vm189, %v792, %v794
    %v809 = vsel %vm189, %v796, %v798
    %v810 = vsel %vm189, %v798, %v800
    %v811 = vsel %vm189, %v800, %v802
    %v812 = vsel %vm189, %v802, %v804
    %v821 = vmax.f32 %v765, %v805
    %v822 = vmax.f32 %v766, %v806
    %v823 = vmax.f32 %v767, %v807
    %v824 = vmax.f32 %v768, %v808
    %v825 = vmax.f32 %v770, %v809
    %v826 = vmax.f32 %v771, %v810
    %v827 = vmax.f32 %v772, %v811
    %v828 = vmax.f32 %v773, %v812
    %829 = vrot.lane.b32.xlu0 %v765, 126
    %v830 = vpop.permute.xlu0 %829
    %831 = vrot.lane.b32.xlu0 %v766, 126
    %v832 = vpop.permute.xlu0 %831
    %833 = vrot.lane.b32.xlu0 %v767, 126
    %v834 = vpop.permute.xlu0 %833
    %835 = vrot.lane.b32.xlu0 %v768, 126
    %v836 = vpop.permute.xlu0 %835
    %837 = vrot.lane.b32.xlu0 %v769, 126
    %v838 = vpop.permute.xlu0 %837
    %839 = vrot.lane.b32.xlu0 %v770, 126
    %v840 = vpop.permute.xlu0 %839
    %841 = vrot.lane.b32.xlu0 %v771, 126
    %v842 = vpop.permute.xlu0 %841
    %843 = vrot.lane.b32.xlu0 %v772, 126
    %v844 = vpop.permute.xlu0 %843
    %845 = vrot.lane.b32.xlu0 %v773, 126
    %v846 = vpop.permute.xlu0 %845
    %847 = vrot.lane.b32.xlu0 %v774, 126
    %v848 = vpop.permute.xlu0 %847
    %v849 = vsel %vm266, %v830, %v832
    %v850 = vsel %vm266, %v832, %v834
    %v851 = vsel %vm266, %v834, %v836
    %v852 = vsel %vm266, %v836, %v838
    %v853 = vsel %vm266, %v840, %v842
    %v854 = vsel %vm266, %v842, %v844
    %v855 = vsel %vm266, %v844, %v846
    %v856 = vsel %vm266, %v846, %v848
    %v865 = vmax.f32 %v821, %v849
    %v866 = vmax.f32 %v822, %v850
    %v867 = vmax.f32 %v823, %v851
    %v868 = vmax.f32 %v824, %v852
    %v869 = vmax.f32 %v825, %v853
    %v870 = vmax.f32 %v826, %v854
    %v871 = vmax.f32 %v827, %v855
    %v872 = vmax.f32 %v828, %v856
    %873 = vst [vmem:[#allocation2] sm:$0xff] %v865
    %874 = vst [vmem:[#allocation2 + $0x8] sm:$0xff] %v866
    %875 = vst [vmem:[#allocation2 + $0x10] sm:$0xff] %v867
    %876 = vst [vmem:[#allocation2 + $0x18] sm:$0xff] %v868
    %877 = vst [vmem:[#allocation2 + $0xb0] sm:$0x1] %v869
    %878 = vst [vmem:[#allocation2 + $0xb8] sm:$0x1] %v870
    %879 = vst [vmem:[#allocation2 + $0xc0] sm:$0x1] %v871
    %880 = vst [vmem:[#allocation2 + $0xc8] sm:$0x1] %v872
    %v881 = vld [vmem:[%s0 + $0x4] sm:$0x1f]
    %v883 = vlaneseq
    %v884 = vshrl.u32 %v883, 7
    %v885 = vsub.s32 0, %v884
    %v886 = vrot.slane %v881, %v885
    %v887 = vlaneseq
    %v888 = vshrl.u32 %v887, 7
    %v889 = vsub.s32 1, %v888
    %v890 = vrot.slane %v881, %v889
    %v891 = vlaneseq
    %v892 = vshrl.u32 %v891, 7
    %v893 = vsub.s32 2, %v892
    %v894 = vrot.slane %v881, %v893
    %v895 = vlaneseq
    %v896 = vshrl.u32 %v895, 7
    %v897 = vsub.s32 3, %v896
    %v898 = vrot.slane %v881, %v897
    %v899 = vlaneseq
    %v900 = vshrl.u32 %v899, 7
    %v901 = vsub.s32 4, %v900
    %v902 = vrot.slane %v881, %v901
    %v908 = vmul.f32 %v88, %v886
    %v909 = vmul.f32 %v88, %v890
    %v910 = vmul.f32 %v88, %v894
    %v911 = vmul.f32 %v88, %v898
    %v912 = vmul.f32 %v88, %v902
    %v913 = vmul.f32 %v93, %v886
    %v914 = vmul.f32 %v93, %v890
    %v915 = vmul.f32 %v93, %v894
    %v916 = vmul.f32 %v93, %v898
    %v917 = vmul.f32 %v93, %v902
    %v918 = vadd.f32 %v908, 0.0
    %v919 = vadd.f32 %v909, 0.0
    %v920 = vadd.f32 %v910, 0.0
    %v921 = vadd.f32 %v911, 0.0
    %v922 = vadd.f32 %v912, 0.0
    %v923 = vadd.f32 %v913, 0.0
    %v924 = vadd.f32 %v914, 0.0
    %v925 = vadd.f32 %v915, 0.0
    %v926 = vadd.f32 %v916, 0.0
    %v927 = vadd.f32 %v917, 0.0
    %v928 = vmul.f32 %v143, %v886
    %v929 = vmul.f32 %v143, %v890
    %v930 = vmul.f32 %v143, %v894
    %v931 = vmul.f32 %v143, %v898
    %v932 = vmul.f32 %v143, %v902
    %v933 = vmul.f32 %v147, %v886
    %v934 = vmul.f32 %v147, %v890
    %v935 = vmul.f32 %v147, %v894
    %v936 = vmul.f32 %v147, %v898
    %v937 = vmul.f32 %v147, %v902
    %948 = vrot.lane.b32.xlu0 %v928, 127
    %v949 = vpop.permute.xlu0 %948
    %950 = vrot.lane.b32.xlu0 %v929, 127
    %v951 = vpop.permute.xlu0 %950
    %952 = vrot.lane.b32.xlu0 %v930, 127
    %v953 = vpop.permute.xlu0 %952
    %954 = vrot.lane.b32.xlu0 %v931, 127
    %v955 = vpop.permute.xlu0 %954
    %956 = vrot.lane.b32.xlu0 %v932, 127
    %v957 = vpop.permute.xlu0 %956
    %958 = vrot.lane.b32.xlu0 %v933, 127
    %v959 = vpop.permute.xlu0 %958
    %960 = vrot.lane.b32.xlu0 %v934, 127
    %v961 = vpop.permute.xlu0 %960
    %962 = vrot.lane.b32.xlu0 %v935, 127
    %v963 = vpop.permute.xlu0 %962
    %964 = vrot.lane.b32.xlu0 %v936, 127
    %v965 = vpop.permute.xlu0 %964
    %966 = vrot.lane.b32.xlu0 %v937, 127
    %v967 = vpop.permute.xlu0 %966
    %v968 = vsel %vm189, %v949, %v951
    %v969 = vsel %vm189, %v951, %v953
    %v970 = vsel %vm189, %v953, %v955
    %v971 = vsel %vm189, %v955, %v957
    %v972 = vsel %vm189, %v959, %v961
    %v973 = vsel %vm189, %v961, %v963
    %v974 = vsel %vm189, %v963, %v965
    %v975 = vsel %vm189, %v965, %v967
    %v986 = vadd.f32 %v918, %v968
    %v987 = vadd.f32 %v919, %v969
    %v988 = vadd.f32 %v920, %v970
    %v989 = vadd.f32 %v921, %v971
    %v990 = vadd.f32 %v922, %v957
    %v991 = vadd.f32 %v923, %v972
    %v992 = vadd.f32 %v924, %v973
    %v993 = vadd.f32 %v925, %v974
    %v994 = vadd.f32 %v926, %v975
    %v995 = vadd.f32 %v927, %v967
    %v996 = vmul.f32 %v220, %v886
    %v997 = vmul.f32 %v220, %v890
    %v998 = vmul.f32 %v220, %v894
    %v999 = vmul.f32 %v220, %v898
    %v1000 = vmul.f32 %v220, %v902
    %v1001 = vmul.f32 %v224, %v886
    %v1002 = vmul.f32 %v224, %v890
    %v1003 = vmul.f32 %v224, %v894
    %v1004 = vmul.f32 %v224, %v898
    %v1005 = vmul.f32 %v224, %v902
    %1016 = vrot.lane.b32.xlu0 %v996, 126
    %v1017 = vpop.permute.xlu0 %1016
    %1018 = vrot.lane.b32.xlu0 %v997, 126
    %v1019 = vpop.permute.xlu0 %1018
    %1020 = vrot.lane.b32.xlu0 %v998, 126
    %v1021 = vpop.permute.xlu0 %1020
    %1022 = vrot.lane.b32.xlu0 %v999, 126
    %v1023 = vpop.permute.xlu0 %1022
    %1024 = vrot.lane.b32.xlu0 %v1000, 126
    %v1025 = vpop.permute.xlu0 %1024
    %1026 = vrot.lane.b32.xlu0 %v1001, 126
    %v1027 = vpop.permute.xlu0 %1026
    %1028 = vrot.lane.b32.xlu0 %v1002, 126
    %v1029 = vpop.permute.xlu0 %1028
    %1030 = vrot.lane.b32.xlu0 %v1003, 126
    %v1031 = vpop.permute.xlu0 %1030
    %1032 = vrot.lane.b32.xlu0 %v1004, 126
    %v1033 = vpop.permute.xlu0 %1032
    %1034 = vrot.lane.b32.xlu0 %v1005, 126
    %v1035 = vpop.permute.xlu0 %1034
    %v1036 = vsel %vm266, %v1017, %v1019
    %v1037 = vsel %vm266, %v1019, %v1021
    %v1038 = vsel %vm266, %v1021, %v1023
    %v1039 = vsel %vm266, %v1023, %v1025
    %v1040 = vsel %vm266, %v1027, %v1029
    %v1041 = vsel %vm266, %v1029, %v1031
    %v1042 = vsel %vm266, %v1031, %v1033
    %v1043 = vsel %vm266, %v1033, %v1035
    %v1054 = vadd.f32 %v986, %v1036
    %v1055 = vadd.f32 %v987, %v1037
    %v1056 = vadd.f32 %v988, %v1038
    %v1057 = vadd.f32 %v989, %v1039
    %v1058 = vadd.f32 %v990, %v1025
    %v1059 = vadd.f32 %v991, %v1040
    %v1060 = vadd.f32 %v992, %v1041
    %v1061 = vadd.f32 %v993, %v1042
    %v1062 = vadd.f32 %v994, %v1043
    %v1063 = vadd.f32 %v995, %v1035
    %v1064 = vmul.f32 %v297, %v886
    %v1065 = vmul.f32 %v297, %v890
    %v1066 = vmul.f32 %v297, %v894
    %v1067 = vmul.f32 %v297, %v898
    %v1068 = vmul.f32 %v297, %v902
    %v1069 = vmul.f32 %v301, %v886
    %v1070 = vmul.f32 %v301, %v890
    %v1071 = vmul.f32 %v301, %v894
    %v1072 = vmul.f32 %v301, %v898
    %v1073 = vmul.f32 %v301, %v902
    %1084 = vrot.lane.b32.xlu0 %v1064, 75
    %v1085 = vpop.permute.xlu0 %1084
    %1086 = vrot.lane.b32.xlu0 %v1065, 75
    %v1087 = vpop.permute.xlu0 %1086
    %1088 = vrot.lane.b32.xlu0 %v1066, 75
    %v1089 = vpop.permute.xlu0 %1088
    %1090 = vrot.lane.b32.xlu0 %v1067, 75
    %v1091 = vpop.permute.xlu0 %1090
    %1092 = vrot.lane.b32.xlu0 %v1068, 75
    %v1093 = vpop.permute.xlu0 %1092
    %1094 = vrot.lane.b32.xlu0 %v1069, 75
    %v1095 = vpop.permute.xlu0 %1094
    %1096 = vrot.lane.b32.xlu0 %v1070, 75
    %v1097 = vpop.permute.xlu0 %1096
    %1098 = vrot.lane.b32.xlu0 %v1071, 75
    %v1099 = vpop.permute.xlu0 %1098
    %1100 = vrot.lane.b32.xlu0 %v1072, 75
    %v1101 = vpop.permute.xlu0 %1100
    %1102 = vrot.lane.b32.xlu0 %v1073, 75
    %v1103 = vpop.permute.xlu0 %1102
    %v1104 = vsel %vm343, %v1085, %v1087
    %v1105 = vsel %vm343, %v1087, %v1089
    %v1106 = vsel %vm343, %v1089, %v1091
    %v1107 = vsel %vm343, %v1091, %v1093
    %v1108 = vsel %vm343, %v1095, %v1097
    %v1109 = vsel %vm343, %v1097, %v1099
    %v1110 = vsel %vm343, %v1099, %v1101
    %v1111 = vsel %vm343, %v1101, %v1103
    %v1122 = vadd.f32 %v1054, %v1104
    %v1123 = vadd.f32 %v1055, %v1105
    %v1124 = vadd.f32 %v1056, %v1106
    %v1125 = vadd.f32 %v1057, %v1107
    %v1126 = vadd.f32 %v1058, %v1093
    %v1127 = vadd.f32 %v1059, %v1108
    %v1128 = vadd.f32 %v1060, %v1109
    %v1129 = vadd.f32 %v1061, %v1110
    %v1130 = vadd.f32 %v1062, %v1111
    %v1131 = vadd.f32 %v1063, %v1103
    %v1132 = vmul.f32 %v374, %v886
    %v1133 = vmul.f32 %v374, %v890
    %v1134 = vmul.f32 %v374, %v894
    %v1135 = vmul.f32 %v374, %v898
    %v1136 = vmul.f32 %v374, %v902
    %v1137 = vmul.f32 %v378, %v886
    %v1138 = vmul.f32 %v378, %v890
    %v1139 = vmul.f32 %v378, %v894
    %v1140 = vmul.f32 %v378, %v898
    %v1141 = vmul.f32 %v378, %v902
    %1152 = vrot.lane.b32.xlu0 %v1132, 74
    %v1153 = vpop.permute.xlu0 %1152
    %1154 = vrot.lane.b32.xlu0 %v1133, 74
    %v1155 = vpop.permute.xlu0 %1154
    %1156 = vrot.lane.b32.xlu0 %v1134, 74
    %v1157 = vpop.permute.xlu0 %1156
    %1158 = vrot.lane.b32.xlu0 %v1135, 74
    %v1159 = vpop.permute.xlu0 %1158
    %1160 = vrot.lane.b32.xlu0 %v1136, 74
    %v1161 = vpop.permute.xlu0 %1160
    %1162 = vrot.lane.b32.xlu0 %v1137, 74
    %v1163 = vpop.permute.xlu0 %1162
    %1164 = vrot.lane.b32.xlu0 %v1138, 74
    %v1165 = vpop.permute.xlu0 %1164
    %1166 = vrot.lane.b32.xlu0 %v1139, 74
    %v1167 = vpop.permute.xlu0 %1166
    %1168 = vrot.lane.b32.xlu0 %v1140, 74
    %v1169 = vpop.permute.xlu0 %1168
    %1170 = vrot.lane.b32.xlu0 %v1141, 74
    %v1171 = vpop.permute.xlu0 %1170
    %v1172 = vsel %vm420, %v1153, %v1155
    %v1173 = vsel %vm420, %v1155, %v1157
    %v1174 = vsel %vm420, %v1157, %v1159
    %v1175 = vsel %vm420, %v1159, %v1161
    %v1176 = vsel %vm420, %v1163, %v1165
    %v1177 = vsel %vm420, %v1165, %v1167
    %v1178 = vsel %vm420, %v1167, %v1169
    %v1179 = vsel %vm420, %v1169, %v1171
    %v1190 = vadd.f32 %v1122, %v1172
    %v1191 = vadd.f32 %v1123, %v1173
    %v1192 = vadd.f32 %v1124, %v1174
    %v1193 = vadd.f32 %v1125, %v1175
    %v1194 = vadd.f32 %v1126, %v1161
    %v1195 = vadd.f32 %v1127, %v1176
    %v1196 = vadd.f32 %v1128, %v1177
    %v1197 = vadd.f32 %v1129, %v1178
    %v1198 = vadd.f32 %v1130, %v1179
    %v1199 = vadd.f32 %v1131, %v1171
    %v1200 = vmul.f32 %v451, %v886
    %v1201 = vmul.f32 %v451, %v890
    %v1202 = vmul.f32 %v451, %v894
    %v1203 = vmul.f32 %v451, %v898
    %v1204 = vmul.f32 %v451, %v902
    %v1205 = vmul.f32 %v455, %v886
    %v1206 = vmul.f32 %v455, %v890
    %v1207 = vmul.f32 %v455, %v894
    %v1208 = vmul.f32 %v455, %v898
    %v1209 = vmul.f32 %v455, %v902
    %1220 = vrot.lane.b32.xlu0 %v1200, 73
    %v1221 = vpop.permute.xlu0 %1220
    %1222 = vrot.lane.b32.xlu0 %v1201, 73
    %v1223 = vpop.permute.xlu0 %1222
    %1224 = vrot.lane.b32.xlu0 %v1202, 73
    %v1225 = vpop.permute.xlu0 %1224
    %1226 = vrot.lane.b32.xlu0 %v1203, 73
    %v1227 = vpop.permute.xlu0 %1226
    %1228 = vrot.lane.b32.xlu0 %v1204, 73
    %v1229 = vpop.permute.xlu0 %1228
    %1230 = vrot.lane.b32.xlu0 %v1205, 73
    %v1231 = vpop.permute.xlu0 %1230
    %1232 = vrot.lane.b32.xlu0 %v1206, 73
    %v1233 = vpop.permute.xlu0 %1232
    %1234 = vrot.lane.b32.xlu0 %v1207, 73
    %v1235 = vpop.permute.xlu0 %1234
    %1236 = vrot.lane.b32.xlu0 %v1208, 73
    %v1237 = vpop.permute.xlu0 %1236
    %1238 = vrot.lane.b32.xlu0 %v1209, 73
    %v1239 = vpop.permute.xlu0 %1238
    %v1240 = vsel %vm497, %v1221, %v1223
    %v1241 = vsel %vm497, %v1223, %v1225
    %v1242 = vsel %vm497, %v1225, %v1227
    %v1243 = vsel %vm497, %v1227, %v1229
    %v1244 = vsel %vm497, %v1231, %v1233
    %v1245 = vsel %vm497, %v1233, %v1235
    %v1246 = vsel %vm497, %v1235, %v1237
    %v1247 = vsel %vm497, %v1237, %v1239
    %v1258 = vadd.f32 %v1190, %v1240
    %v1259 = vadd.f32 %v1191, %v1241
    %v1260 = vadd.f32 %v1192, %v1242
    %v1261 = vadd.f32 %v1193, %v1243
    %v1262 = vadd.f32 %v1194, %v1229
    %v1263 = vadd.f32 %v1195, %v1244
    %v1264 = vadd.f32 %v1196, %v1245
    %v1265 = vadd.f32 %v1197, %v1246
    %v1266 = vadd.f32 %v1198, %v1247
    %v1267 = vadd.f32 %v1199, %v1239
    %v1268 = vmul.f32 %v528, %v886
    %v1269 = vmul.f32 %v528, %v890
    %v1270 = vmul.f32 %v528, %v894
    %v1271 = vmul.f32 %v528, %v898
    %v1272 = vmul.f32 %v528, %v902
    %v1273 = vmul.f32 %v532, %v886
    %v1274 = vmul.f32 %v532, %v890
    %v1275 = vmul.f32 %v532, %v894
    %v1276 = vmul.f32 %v532, %v898
    %v1277 = vmul.f32 %v532, %v902
    %1288 = vrot.lane.b32.xlu0 %v1268, 22
    %v1289 = vpop.permute.xlu0 %1288
    %1290 = vrot.lane.b32.xlu0 %v1269, 22
    %v1291 = vpop.permute.xlu0 %1290
    %1292 = vrot.lane.b32.xlu0 %v1270, 22
    %v1293 = vpop.permute.xlu0 %1292
    %1294 = vrot.lane.b32.xlu0 %v1271, 22
    %v1295 = vpop.permute.xlu0 %1294
    %1296 = vrot.lane.b32.xlu0 %v1272, 22
    %v1297 = vpop.permute.xlu0 %1296
    %1298 = vrot.lane.b32.xlu0 %v1273, 22
    %v1299 = vpop.permute.xlu0 %1298
    %1300 = vrot.lane.b32.xlu0 %v1274, 22
    %v1301 = vpop.permute.xlu0 %1300
    %1302 = vrot.lane.b32.xlu0 %v1275, 22
    %v1303 = vpop.permute.xlu0 %1302
    %1304 = vrot.lane.b32.xlu0 %v1276, 22
    %v1305 = vpop.permute.xlu0 %1304
    %1306 = vrot.lane.b32.xlu0 %v1277, 22
    %v1307 = vpop.permute.xlu0 %1306
    %v1308 = vsel %vm574, %v1289, %v1291
    %v1309 = vsel %vm574, %v1291, %v1293
    %v1310 = vsel %vm574, %v1293, %v1295
    %v1311 = vsel %vm574, %v1295, %v1297
    %v1312 = vsel %vm574, %v1299, %v1301
    %v1313 = vsel %vm574, %v1301, %v1303
    %v1314 = vsel %vm574, %v1303, %v1305
    %v1315 = vsel %vm574, %v1305, %v1307
    %v1326 = vadd.f32 %v1258, %v1308
    %v1327 = vadd.f32 %v1259, %v1309
    %v1328 = vadd.f32 %v1260, %v1310
    %v1329 = vadd.f32 %v1261, %v1311
    %v1330 = vadd.f32 %v1262, %v1297
    %v1331 = vadd.f32 %v1263, %v1312
    %v1332 = vadd.f32 %v1264, %v1313
    %v1333 = vadd.f32 %v1265, %v1314
    %v1334 = vadd.f32 %v1266, %v1315
    %v1335 = vadd.f32 %v1267, %v1307
    %v1336 = vmul.f32 %v605, %v886
    %v1337 = vmul.f32 %v605, %v890
    %v1338 = vmul.f32 %v605, %v894
    %v1339 = vmul.f32 %v605, %v898
    %v1340 = vmul.f32 %v605, %v902
    %v1341 = vmul.f32 %v609, %v886
    %v1342 = vmul.f32 %v609, %v890
    %v1343 = vmul.f32 %v609, %v894
    %v1344 = vmul.f32 %v609, %v898
    %v1345 = vmul.f32 %v609, %v902
    %1356 = vrot.lane.b32.xlu0 %v1336, 21
    %v1357 = vpop.permute.xlu0 %1356
    %1358 = vrot.lane.b32.xlu0 %v1337, 21
    %v1359 = vpop.permute.xlu0 %1358
    %1360 = vrot.lane.b32.xlu0 %v1338, 21
    %v1361 = vpop.permute.xlu0 %1360
    %1362 = vrot.lane.b32.xlu0 %v1339, 21
    %v1363 = vpop.permute.xlu0 %1362
    %1364 = vrot.lane.b32.xlu0 %v1340, 21
    %v1365 = vpop.permute.xlu0 %1364
    %1366 = vrot.lane.b32.xlu0 %v1341, 21
    %v1367 = vpop.permute.xlu0 %1366
    %1368 = vrot.lane.b32.xlu0 %v1342, 21
    %v1369 = vpop.permute.xlu0 %1368
    %1370 = vrot.lane.b32.xlu0 %v1343, 21
    %v1371 = vpop.permute.xlu0 %1370
    %1372 = vrot.lane.b32.xlu0 %v1344, 21
    %v1373 = vpop.permute.xlu0 %1372
    %1374 = vrot.lane.b32.xlu0 %v1345, 21
    %v1375 = vpop.permute.xlu0 %1374
    %v1376 = vsel %vm651, %v1357, %v1359
    %v1377 = vsel %vm651, %v1359, %v1361
    %v1378 = vsel %vm651, %v1361, %v1363
    %v1379 = vsel %vm651, %v1363, %v1365
    %v1380 = vsel %vm651, %v1367, %v1369
    %v1381 = vsel %vm651, %v1369, %v1371
    %v1382 = vsel %vm651, %v1371, %v1373
    %v1383 = vsel %vm651, %v1373, %v1375
    %v1394 = vadd.f32 %v1326, %v1376
    %v1395 = vadd.f32 %v1327, %v1377
    %v1396 = vadd.f32 %v1328, %v1378
    %v1397 = vadd.f32 %v1329, %v1379
    %v1398 = vadd.f32 %v1330, %v1365
    %v1399 = vadd.f32 %v1331, %v1380
    %v1400 = vadd.f32 %v1332, %v1381
    %v1401 = vadd.f32 %v1333, %v1382
    %v1402 = vadd.f32 %v1334, %v1383
    %v1403 = vadd.f32 %v1335, %v1375
    %v1404 = vmul.f32 %v682, %v886
    %v1405 = vmul.f32 %v682, %v890
    %v1406 = vmul.f32 %v682, %v894
    %v1407 = vmul.f32 %v682, %v898
    %v1408 = vmul.f32 %v682, %v902
    %v1409 = vmul.f32 %v686, %v886
    %v1410 = vmul.f32 %v686, %v890
    %v1411 = vmul.f32 %v686, %v894
    %v1412 = vmul.f32 %v686, %v898
    %v1413 = vmul.f32 %v686, %v902
    %1424 = vrot.lane.b32.xlu0 %v1404, 20
    %v1425 = vpop.permute.xlu0 %1424
    %1426 = vrot.lane.b32.xlu0 %v1405, 20
    %v1427 = vpop.permute.xlu0 %1426
    %1428 = vrot.lane.b32.xlu0 %v1406, 20
    %v1429 = vpop.permute.xlu0 %1428
    %1430 = vrot.lane.b32.xlu0 %v1407, 20
    %v1431 = vpop.permute.xlu0 %1430
    %1432 = vrot.lane.b32.xlu0 %v1408, 20
    %v1433 = vpop.permute.xlu0 %1432
    %1434 = vrot.lane.b32.xlu0 %v1409, 20
    %v1435 = vpop.permute.xlu0 %1434
    %1436 = vrot.lane.b32.xlu0 %v1410, 20
    %v1437 = vpop.permute.xlu0 %1436
    %1438 = vrot.lane.b32.xlu0 %v1411, 20
    %v1439 = vpop.permute.xlu0 %1438
    %1440 = vrot.lane.b32.xlu0 %v1412, 20
    %v1441 = vpop.permute.xlu0 %1440
    %1442 = vrot.lane.b32.xlu0 %v1413, 20
    %v1443 = vpop.permute.xlu0 %1442
    %v1444 = vsel %vm728, %v1425, %v1427
    %v1445 = vsel %vm728, %v1427, %v1429
    %v1446 = vsel %vm728, %v1429, %v1431
    %v1447 = vsel %vm728, %v1431, %v1433
    %v1448 = vsel %vm728, %v1435, %v1437
    %v1449 = vsel %vm728, %v1437, %v1439
    %v1450 = vsel %vm728, %v1439, %v1441
    %v1451 = vsel %vm728, %v1441, %v1443
    %v1462 = vadd.f32 %v1394, %v1444
    %v1463 = vadd.f32 %v1395, %v1445
    %v1464 = vadd.f32 %v1396, %v1446
    %v1465 = vadd.f32 %v1397, %v1447
    %v1466 = vadd.f32 %v1398, %v1433
    %v1467 = vadd.f32 %v1399, %v1448
    %v1468 = vadd.f32 %v1400, %v1449
    %v1469 = vadd.f32 %v1401, %v1450
    %v1470 = vadd.f32 %v1402, %v1451
    %v1471 = vadd.f32 %v1403, %v1443
    %v1472 = vadd.f32 %v1462, %v759
    %v1473 = vadd.f32 %v1463, %v759
    %v1474 = vadd.f32 %v1464, %v759
    %v1475 = vadd.f32 %v1465, %v759
    %v1476 = vadd.f32 %v1466, %v759
    %v1477 = vadd.f32 %v1467, %v763
    %v1478 = vadd.f32 %v1468, %v763
    %v1479 = vadd.f32 %v1469, %v763
    %v1480 = vadd.f32 %v1470, %v763
    %v1481 = vadd.f32 %v1471, %v763
    %1492 = vrot.lane.b32.xlu0 %v1472, 127
    %v1493 = vpop.permute.xlu0 %1492
    %1494 = vrot.lane.b32.xlu0 %v1473, 127
    %v1495 = vpop.permute.xlu0 %1494
    %1496 = vrot.lane.b32.xlu0 %v1474, 127
    %v1497 = vpop.permute.xlu0 %1496
    %1498 = vrot.lane.b32.xlu0 %v1475, 127
    %v1499 = vpop.permute.xlu0 %1498
    %1500 = vrot.lane.b32.xlu0 %v1476, 127
    %v1501 = vpop.permute.xlu0 %1500
    %1502 = vrot.lane.b32.xlu0 %v1477, 127
    %v1503 = vpop.permute.xlu0 %1502
    %1504 = vrot.lane.b32.xlu0 %v1478, 127
    %v1505 = vpop.permute.xlu0 %1504
    %1506 = vrot.lane.b32.xlu0 %v1479, 127
    %v1507 = vpop.permute.xlu0 %1506
    %1508 = vrot.lane.b32.xlu0 %v1480, 127
    %v1509 = vpop.permute.xlu0 %1508
    %1510 = vrot.lane.b32.xlu0 %v1481, 127
    %v1511 = vpop.permute.xlu0 %1510
    %v1512 = vsel %vm189, %v1493, %v1495
    %v1513 = vsel %vm189, %v1495, %v1497
    %v1514 = vsel %vm189, %v1497, %v1499
    %v1515 = vsel %vm189, %v1499, %v1501
    %v1516 = vsel %vm189, %v1503, %v1505
    %v1517 = vsel %vm189, %v1505, %v1507
    %v1518 = vsel %vm189, %v1507, %v1509
    %v1519 = vsel %vm189, %v1509, %v1511
    %v1528 = vmax.f32 %v1472, %v1512
    %v1529 = vmax.f32 %v1473, %v1513
    %v1530 = vmax.f32 %v1474, %v1514
    %v1531 = vmax.f32 %v1475, %v1515
    %v1532 = vmax.f32 %v1477, %v1516
    %v1533 = vmax.f32 %v1478, %v1517
    %v1534 = vmax.f32 %v1479, %v1518
    %v1535 = vmax.f32 %v1480, %v1519
    %1536 = vrot.lane.b32.xlu0 %v1472, 126
    %v1537 = vpop.permute.xlu0 %1536
    %1538 = vrot.lane.b32.xlu0 %v1473, 126
    %v1539 = vpop.permute.xlu0 %1538
    %1540 = vrot.lane.b32.xlu0 %v1474, 126
    %v1541 = vpop.permute.xlu0 %1540
    %1542 = vrot.lane.b32.xlu0 %v1475, 126
    %v1543 = vpop.permute.xlu0 %1542
    %1544 = vrot.lane.b32.xlu0 %v1476, 126
    %v1545 = vpop.permute.xlu0 %1544
    %1546 = vrot.lane.b32.xlu0 %v1477, 126
    %v1547 = vpop.permute.xlu0 %1546
    %1548 = vrot.lane.b32.xlu0 %v1478, 126
    %v1549 = vpop.permute.xlu0 %1548
    %1550 = vrot.lane.b32.xlu0 %v1479, 126
    %v1551 = vpop.permute.xlu0 %1550
    %1552 = vrot.lane.b32.xlu0 %v1480, 126
    %v1553 = vpop.permute.xlu0 %1552
    %1554 = vrot.lane.b32.xlu0 %v1481, 126
    %v1555 = vpop.permute.xlu0 %1554
    %v1556 = vsel %vm266, %v1537, %v1539
    %v1557 = vsel %vm266, %v1539, %v1541
    %v1558 = vsel %vm266, %v1541, %v1543
    %v1559 = vsel %vm266, %v1543, %v1545
    %v1560 = vsel %vm266, %v1547, %v1549
    %v1561 = vsel %vm266, %v1549, %v1551
    %v1562 = vsel %vm266, %v1551, %v1553
    %v1563 = vsel %vm266, %v1553, %v1555
    %v1572 = vmax.f32 %v1528, %v1556
    %v1573 = vmax.f32 %v1529, %v1557
    %v1574 = vmax.f32 %v1530, %v1558
    %v1575 = vmax.f32 %v1531, %v1559
    %v1576 = vmax.f32 %v1532, %v1560
    %v1577 = vmax.f32 %v1533, %v1561
    %v1578 = vmax.f32 %v1534, %v1562
    %v1579 = vmax.f32 %v1535, %v1563
    %1580 = vst [vmem:[#allocation2 + $0x20] sm:$0xff] %v1572
    %1581 = vst [vmem:[#allocation2 + $0x28] sm:$0xff] %v1573
    %1582 = vst [vmem:[#allocation2 + $0x30] sm:$0xff] %v1574
    %1583 = vst [vmem:[#allocation2 + $0x38] sm:$0xff] %v1575
    %1584 = vst [vmem:[#allocation2 + $0xd0] sm:$0x1] %v1576
    %1585 = vst [vmem:[#allocation2 + $0xd8] sm:$0x1] %v1577
    %1586 = vst [vmem:[#allocation2 + $0xe0] sm:$0x1] %v1578
    %1587 = vst [vmem:[#allocation2 + $0xe8] sm:$0x1] %v1579
    %v1588 = vld [vmem:[%s0 + $0x8] sm:$0x1f]
    %v1590 = vlaneseq
    %v1591 = vshrl.u32 %v1590, 7
    %v1592 = vsub.s32 0, %v1591
    %v1593 = vrot.slane %v1588, %v1592
    %v1594 = vlaneseq
    %v1595 = vshrl.u32 %v1594, 7
    %v1596 = vsub.s32 1, %v1595
    %v1597 = vrot.slane %v1588, %v1596
    %v1598 = vlaneseq
    %v1599 = vshrl.u32 %v1598, 7
    %v1600 = vsub.s32 2, %v1599
    %v1601 = vrot.slane %v1588, %v1600
    %v1602 = vlaneseq
    %v1603 = vshrl.u32 %v1602, 7
    %v1604 = vsub.s32 3, %v1603
    %v1605 = vrot.slane %v1588, %v1604
    %v1606 = vlaneseq
    %v1607 = vshrl.u32 %v1606, 7
    %v1608 = vsub.s32 4, %v1607
    %v1609 = vrot.slane %v1588, %v1608
    %v1615 = vmul.f32 %v88, %v1593
    %v1616 = vmul.f32 %v88, %v1597
    %v1617 = vmul.f32 %v88, %v1601
    %v1618 = vmul.f32 %v88, %v1605
    %v1619 = vmul.f32 %v88, %v1609
    %v1620 = vmul.f32 %v93, %v1593
    %v1621 = vmul.f32 %v93, %v1597
    %v1622 = vmul.f32 %v93, %v1601
    %v1623 = vmul.f32 %v93, %v1605
    %v1624 = vmul.f32 %v93, %v1609
    %v1625 = vadd.f32 %v1615, 0.0
    %v1626 = vadd.f32 %v1616, 0.0
    %v1627 = vadd.f32 %v1617, 0.0
    %v1628 = vadd.f32 %v1618, 0.0
    %v1629 = vadd.f32 %v1619, 0.0
    %v1630 = vadd.f32 %v1620, 0.0
    %v1631 = vadd.f32 %v1621, 0.0
    %v1632 = vadd.f32 %v1622, 0.0
    %v1633 = vadd.f32 %v1623, 0.0
    %v1634 = vadd.f32 %v1624, 0.0
    %v1635 = vmul.f32 %v143, %v1593
    %v1636 = vmul.f32 %v143, %v1597
    %v1637 = vmul.f32 %v143, %v1601
    %v1638 = vmul.f32 %v143, %v1605
    %v1639 = vmul.f32 %v143, %v1609
    %v1640 = vmul.f32 %v147, %v1593
    %v1641 = vmul.f32 %v147, %v1597
    %v1642 = vmul.f32 %v147, %v1601
    %v1643 = vmul.f32 %v147, %v1605
    %v1644 = vmul.f32 %v147, %v1609
    %1655 = vrot.lane.b32.xlu0 %v1635, 127
    %v1656 = vpop.permute.xlu0 %1655
    %1657 = vrot.lane.b32.xlu0 %v1636, 127
    %v1658 = vpop.permute.xlu0 %1657
    %1659 = vrot.lane.b32.xlu0 %v1637, 127
    %v1660 = vpop.permute.xlu0 %1659
    %1661 = vrot.lane.b32.xlu0 %v1638, 127
    %v1662 = vpop.permute.xlu0 %1661
    %1663 = vrot.lane.b32.xlu0 %v1639, 127
    %v1664 = vpop.permute.xlu0 %1663
    %1665 = vrot.lane.b32.xlu0 %v1640, 127
    %v1666 = vpop.permute.xlu0 %1665
    %1667 = vrot.lane.b32.xlu0 %v1641, 127
    %v1668 = vpop.permute.xlu0 %1667
    %1669 = vrot.lane.b32.xlu0 %v1642, 127
    %v1670 = vpop.permute.xlu0 %1669
    %1671 = vrot.lane.b32.xlu0 %v1643, 127
    %v1672 = vpop.permute.xlu0 %1671
    %1673 = vrot.lane.b32.xlu0 %v1644, 127
    %v1674 = vpop.permute.xlu0 %1673
    %v1675 = vsel %vm189, %v1656, %v1658
    %v1676 = vsel %vm189, %v1658, %v1660
    %v1677 = vsel %vm189, %v1660, %v1662
    %v1678 = vsel %vm189, %v1662, %v1664
    %v1679 = vsel %vm189, %v1666, %v1668
    %v1680 = vsel %vm189, %v1668, %v1670
    %v1681 = vsel %vm189, %v1670, %v1672
    %v1682 = vsel %vm189, %v1672, %v1674
    %v1693 = vadd.f32 %v1625, %v1675
    %v1694 = vadd.f32 %v1626, %v1676
    %v1695 = vadd.f32 %v1627, %v1677
    %v1696 = vadd.f32 %v1628, %v1678
    %v1697 = vadd.f32 %v1629, %v1664
    %v1698 = vadd.f32 %v1630, %v1679
    %v1699 = vadd.f32 %v1631, %v1680
    %v1700 = vadd.f32 %v1632, %v1681
    %v1701 = vadd.f32 %v1633, %v1682
    %v1702 = vadd.f32 %v1634, %v1674
    %v1703 = vmul.f32 %v220, %v1593
    %v1704 = vmul.f32 %v220, %v1597
    %v1705 = vmul.f32 %v220, %v1601
    %v1706 = vmul.f32 %v220, %v1605
    %v1707 = vmul.f32 %v220, %v1609
    %v1708 = vmul.f32 %v224, %v1593
    %v1709 = vmul.f32 %v224, %v1597
    %v1710 = vmul.f32 %v224, %v1601
    %v1711 = vmul.f32 %v224, %v1605
    %v1712 = vmul.f32 %v224, %v1609
    %1723 = vrot.lane.b32.xlu0 %v1703, 126
    %v1724 = vpop.permute.xlu0 %1723
    %1725 = vrot.lane.b32.xlu0 %v1704, 126
    %v1726 = vpop.permute.xlu0 %1725
    %1727 = vrot.lane.b32.xlu0 %v1705, 126
    %v1728 = vpop.permute.xlu0 %1727
    %1729 = vrot.lane.b32.xlu0 %v1706, 126
    %v1730 = vpop.permute.xlu0 %1729
    %1731 = vrot.lane.b32.xlu0 %v1707, 126
    %v1732 = vpop.permute.xlu0 %1731
    %1733 = vrot.lane.b32.xlu0 %v1708, 126
    %v1734 = vpop.permute.xlu0 %1733
    %1735 = vrot.lane.b32.xlu0 %v1709, 126
    %v1736 = vpop.permute.xlu0 %1735
    %1737 = vrot.lane.b32.xlu0 %v1710, 126
    %v1738 = vpop.permute.xlu0 %1737
    %1739 = vrot.lane.b32.xlu0 %v1711, 126
    %v1740 = vpop.permute.xlu0 %1739
    %1741 = vrot.lane.b32.xlu0 %v1712, 126
    %v1742 = vpop.permute.xlu0 %1741
    %v1743 = vsel %vm266, %v1724, %v1726
    %v1744 = vsel %vm266, %v1726, %v1728
    %v1745 = vsel %vm266, %v1728, %v1730
    %v1746 = vsel %vm266, %v1730, %v1732
    %v1747 = vsel %vm266, %v1734, %v1736
    %v1748 = vsel %vm266, %v1736, %v1738
    %v1749 = vsel %vm266, %v1738, %v1740
    %v1750 = vsel %vm266, %v1740, %v1742
    %v1761 = vadd.f32 %v1693, %v1743
    %v1762 = vadd.f32 %v1694, %v1744
    %v1763 = vadd.f32 %v1695, %v1745
    %v1764 = vadd.f32 %v1696, %v1746
    %v1765 = vadd.f32 %v1697, %v1732
    %v1766 = vadd.f32 %v1698, %v1747
    %v1767 = vadd.f32 %v1699, %v1748
    %v1768 = vadd.f32 %v1700, %v1749
    %v1769 = vadd.f32 %v1701, %v1750
    %v1770 = vadd.f32 %v1702, %v1742
    %v1771 = vmul.f32 %v297, %v1593
    %v1772 = vmul.f32 %v297, %v1597
    %v1773 = vmul.f32 %v297, %v1601
    %v1774 = vmul.f32 %v297, %v1605
    %v1775 = vmul.f32 %v297, %v1609
    %v1776 = vmul.f32 %v301, %v1593
    %v1777 = vmul.f32 %v301, %v1597
    %v1778 = vmul.f32 %v301, %v1601
    %v1779 = vmul.f32 %v301, %v1605
    %v1780 = vmul.f32 %v301, %v1609
    %1791 = vrot.lane.b32.xlu0 %v1771, 75
    %v1792 = vpop.permute.xlu0 %1791
    %1793 = vrot.lane.b32.xlu0 %v1772, 75
    %v1794 = vpop.permute.xlu0 %1793
    %1795 = vrot.lane.b32.xlu0 %v1773, 75
    %v1796 = vpop.permute.xlu0 %1795
    %1797 = vrot.lane.b32.xlu0 %v1774, 75
    %v1798 = vpop.permute.xlu0 %1797
    %1799 = vrot.lane.b32.xlu0 %v1775, 75
    %v1800 = vpop.permute.xlu0 %1799
    %1801 = vrot.lane.b32.xlu0 %v1776, 75
    %v1802 = vpop.permute.xlu0 %1801
    %1803 = vrot.lane.b32.xlu0 %v1777, 75
    %v1804 = vpop.permute.xlu0 %1803
    %1805 = vrot.lane.b32.xlu0 %v1778, 75
    %v1806 = vpop.permute.xlu0 %1805
    %1807 = vrot.lane.b32.xlu0 %v1779, 75
    %v1808 = vpop.permute.xlu0 %1807
    %1809 = vrot.lane.b32.xlu0 %v1780, 75
    %v1810 = vpop.permute.xlu0 %1809
    %v1811 = vsel %vm343, %v1792, %v1794
    %v1812 = vsel %vm343, %v1794, %v1796
    %v1813 = vsel %vm343, %v1796, %v1798
    %v1814 = vsel %vm343, %v1798, %v1800
    %v1815 = vsel %vm343, %v1802, %v1804
    %v1816 = vsel %vm343, %v1804, %v1806
    %v1817 = vsel %vm343, %v1806, %v1808
    %v1818 = vsel %vm343, %v1808, %v1810
    %v1829 = vadd.f32 %v1761, %v1811
    %v1830 = vadd.f32 %v1762, %v1812
    %v1831 = vadd.f32 %v1763, %v1813
    %v1832 = vadd.f32 %v1764, %v1814
    %v1833 = vadd.f32 %v1765, %v1800
    %v1834 = vadd.f32 %v1766, %v1815
    %v1835 = vadd.f32 %v1767, %v1816
    %v1836 = vadd.f32 %v1768, %v1817
    %v1837 = vadd.f32 %v1769, %v1818
    %v1838 = vadd.f32 %v1770, %v1810
    %v1839 = vmul.f32 %v374, %v1593
    %v1840 = vmul.f32 %v374, %v1597
    %v1841 = vmul.f32 %v374, %v1601
    %v1842 = vmul.f32 %v374, %v1605
    %v1843 = vmul.f32 %v374, %v1609
    %v1844 = vmul.f32 %v378, %v1593
    %v1845 = vmul.f32 %v378, %v1597
    %v1846 = vmul.f32 %v378, %v1601
    %v1847 = vmul.f32 %v378, %v1605
    %v1848 = vmul.f32 %v378, %v1609
    %1859 = vrot.lane.b32.xlu0 %v1839, 74
    %v1860 = vpop.permute.xlu0 %1859
    %1861 = vrot.lane.b32.xlu0 %v1840, 74
    %v1862 = vpop.permute.xlu0 %1861
    %1863 = vrot.lane.b32.xlu0 %v1841, 74
    %v1864 = vpop.permute.xlu0 %1863
    %1865 = vrot.lane.b32.xlu0 %v1842, 74
    %v1866 = vpop.permute.xlu0 %1865
    %1867 = vrot.lane.b32.xlu0 %v1843, 74
    %v1868 = vpop.permute.xlu0 %1867
    %1869 = vrot.lane.b32.xlu0 %v1844, 74
    %v1870 = vpop.permute.xlu0 %1869
    %1871 = vrot.lane.b32.xlu0 %v1845, 74
    %v1872 = vpop.permute.xlu0 %1871
    %1873 = vrot.lane.b32.xlu0 %v1846, 74
    %v1874 = vpop.permute.xlu0 %1873
    %1875 = vrot.lane.b32.xlu0 %v1847, 74
    %v1876 = vpop.permute.xlu0 %1875
    %1877 = vrot.lane.b32.xlu0 %v1848, 74
    %v1878 = vpop.permute.xlu0 %1877
    %v1879 = vsel %vm420, %v1860, %v1862
    %v1880 = vsel %vm420, %v1862, %v1864
    %v1881 = vsel %vm420, %v1864, %v1866
    %v1882 = vsel %vm420, %v1866, %v1868
    %v1883 = vsel %vm420, %v1870, %v1872
    %v1884 = vsel %vm420, %v1872, %v1874
    %v1885 = vsel %vm420, %v1874, %v1876
    %v1886 = vsel %vm420, %v1876, %v1878
    %v1897 = vadd.f32 %v1829, %v1879
    %v1898 = vadd.f32 %v1830, %v1880
    %v1899 = vadd.f32 %v1831, %v1881
    %v1900 = vadd.f32 %v1832, %v1882
    %v1901 = vadd.f32 %v1833, %v1868
    %v1902 = vadd.f32 %v1834, %v1883
    %v1903 = vadd.f32 %v1835, %v1884
    %v1904 = vadd.f32 %v1836, %v1885
    %v1905 = vadd.f32 %v1837, %v1886
    %v1906 = vadd.f32 %v1838, %v1878
    %v1907 = vmul.f32 %v451, %v1593
    %v1908 = vmul.f32 %v451, %v1597
    %v1909 = vmul.f32 %v451, %v1601
    %v1910 = vmul.f32 %v451, %v1605
    %v1911 = vmul.f32 %v451, %v1609
    %v1912 = vmul.f32 %v455, %v1593
    %v1913 = vmul.f32 %v455, %v1597
    %v1914 = vmul.f32 %v455, %v1601
    %v1915 = vmul.f32 %v455, %v1605
    %v1916 = vmul.f32 %v455, %v1609
    %1927 = vrot.lane.b32.xlu0 %v1907, 73
    %v1928 = vpop.permute.xlu0 %1927
    %1929 = vrot.lane.b32.xlu0 %v1908, 73
    %v1930 = vpop.permute.xlu0 %1929
    %1931 = vrot.lane.b32.xlu0 %v1909, 73
    %v1932 = vpop.permute.xlu0 %1931
    %1933 = vrot.lane.b32.xlu0 %v1910, 73
    %v1934 = vpop.permute.xlu0 %1933
    %1935 = vrot.lane.b32.xlu0 %v1911, 73
    %v1936 = vpop.permute.xlu0 %1935
    %1937 = vrot.lane.b32.xlu0 %v1912, 73
    %v1938 = vpop.permute.xlu0 %1937
    %1939 = vrot.lane.b32.xlu0 %v1913, 73
    %v1940 = vpop.permute.xlu0 %1939
    %1941 = vrot.lane.b32.xlu0 %v1914, 73
    %v1942 = vpop.permute.xlu0 %1941
    %1943 = vrot.lane.b32.xlu0 %v1915, 73
    %v1944 = vpop.permute.xlu0 %1943
    %1945 = vrot.lane.b32.xlu0 %v1916, 73
    %v1946 = vpop.permute.xlu0 %1945
    %v1947 = vsel %vm497, %v1928, %v1930
    %v1948 = vsel %vm497, %v1930, %v1932
    %v1949 = vsel %vm497, %v1932, %v1934
    %v1950 = vsel %vm497, %v1934, %v1936
    %v1951 = vsel %vm497, %v1938, %v1940
    %v1952 = vsel %vm497, %v1940, %v1942
    %v1953 = vsel %vm497, %v1942, %v1944
    %v1954 = vsel %vm497, %v1944, %v1946
    %v1965 = vadd.f32 %v1897, %v1947
    %v1966 = vadd.f32 %v1898, %v1948
    %v1967 = vadd.f32 %v1899, %v1949
    %v1968 = vadd.f32 %v1900, %v1950
    %v1969 = vadd.f32 %v1901, %v1936
    %v1970 = vadd.f32 %v1902, %v1951
    %v1971 = vadd.f32 %v1903, %v1952
    %v1972 = vadd.f32 %v1904, %v1953
    %v1973 = vadd.f32 %v1905, %v1954
    %v1974 = vadd.f32 %v1906, %v1946
    %v1975 = vmul.f32 %v528, %v1593
    %v1976 = vmul.f32 %v528, %v1597
    %v1977 = vmul.f32 %v528, %v1601
    %v1978 = vmul.f32 %v528, %v1605
    %v1979 = vmul.f32 %v528, %v1609
    %v1980 = vmul.f32 %v532, %v1593
    %v1981 = vmul.f32 %v532, %v1597
    %v1982 = vmul.f32 %v532, %v1601
    %v1983 = vmul.f32 %v532, %v1605
    %v1984 = vmul.f32 %v532, %v1609
    %1995 = vrot.lane.b32.xlu0 %v1975, 22
    %v1996 = vpop.permute.xlu0 %1995
    %1997 = vrot.lane.b32.xlu0 %v1976, 22
    %v1998 = vpop.permute.xlu0 %1997
    %1999 = vrot.lane.b32.xlu0 %v1977, 22
    %v2000 = vpop.permute.xlu0 %1999
    %2001 = vrot.lane.b32.xlu0 %v1978, 22
    %v2002 = vpop.permute.xlu0 %2001
    %2003 = vrot.lane.b32.xlu0 %v1979, 22
    %v2004 = vpop.permute.xlu0 %2003
    %2005 = vrot.lane.b32.xlu0 %v1980, 22
    %v2006 = vpop.permute.xlu0 %2005
    %2007 = vrot.lane.b32.xlu0 %v1981, 22
    %v2008 = vpop.permute.xlu0 %2007
    %2009 = vrot.lane.b32.xlu0 %v1982, 22
    %v2010 = vpop.permute.xlu0 %2009
    %2011 = vrot.lane.b32.xlu0 %v1983, 22
    %v2012 = vpop.permute.xlu0 %2011
    %2013 = vrot.lane.b32.xlu0 %v1984, 22
    %v2014 = vpop.permute.xlu0 %2013
    %v2015 = vsel %vm574, %v1996, %v1998
    %v2016 = vsel %vm574, %v1998, %v2000
    %v2017 = vsel %vm574, %v2000, %v2002
    %v2018 = vsel %vm574, %v2002, %v2004
    %v2019 = vsel %vm574, %v2006, %v2008
    %v2020 = vsel %vm574, %v2008, %v2010
    %v2021 = vsel %vm574, %v2010, %v2012
    %v2022 = vsel %vm574, %v2012, %v2014
    %v2033 = vadd.f32 %v1965, %v2015
    %v2034 = vadd.f32 %v1966, %v2016
    %v2035 = vadd.f32 %v1967, %v2017
    %v2036 = vadd.f32 %v1968, %v2018
    %v2037 = vadd.f32 %v1969, %v2004
    %v2038 = vadd.f32 %v1970, %v2019
    %v2039 = vadd.f32 %v1971, %v2020
    %v2040 = vadd.f32 %v1972, %v2021
    %v2041 = vadd.f32 %v1973, %v2022
    %v2042 = vadd.f32 %v1974, %v2014
    %v2043 = vmul.f32 %v605, %v1593
    %v2044 = vmul.f32 %v605, %v1597
    %v2045 = vmul.f32 %v605, %v1601
    %v2046 = vmul.f32 %v605, %v1605
    %v2047 = vmul.f32 %v605, %v1609
    %v2048 = vmul.f32 %v609, %v1593
    %v2049 = vmul.f32 %v609, %v1597
    %v2050 = vmul.f32 %v609, %v1601
    %v2051 = vmul.f32 %v609, %v1605
    %v2052 = vmul.f32 %v609, %v1609
    %2063 = vrot.lane.b32.xlu0 %v2043, 21
    %v2064 = vpop.permute.xlu0 %2063
    %2065 = vrot.lane.b32.xlu0 %v2044, 21
    %v2066 = vpop.permute.xlu0 %2065
    %2067 = vrot.lane.b32.xlu0 %v2045, 21
    %v2068 = vpop.permute.xlu0 %2067
    %2069 = vrot.lane.b32.xlu0 %v2046, 21
    %v2070 = vpop.permute.xlu0 %2069
    %2071 = vrot.lane.b32.xlu0 %v2047, 21
    %v2072 = vpop.permute.xlu0 %2071
    %2073 = vrot.lane.b32.xlu0 %v2048, 21
    %v2074 = vpop.permute.xlu0 %2073
    %2075 = vrot.lane.b32.xlu0 %v2049, 21
    %v2076 = vpop.permute.xlu0 %2075
    %2077 = vrot.lane.b32.xlu0 %v2050, 21
    %v2078 = vpop.permute.xlu0 %2077
    %2079 = vrot.lane.b32.xlu0 %v2051, 21
    %v2080 = vpop.permute.xlu0 %2079
    %2081 = vrot.lane.b32.xlu0 %v2052, 21
    %v2082 = vpop.permute.xlu0 %2081
    %v2083 = vsel %vm651, %v2064, %v2066
    %v2084 = vsel %vm651, %v2066, %v2068
    %v2085 = vsel %vm651, %v2068, %v2070
    %v2086 = vsel %vm651, %v2070, %v2072
    %v2087 = vsel %vm651, %v2074, %v2076
    %v2088 = vsel %vm651, %v2076, %v2078
    %v2089 = vsel %vm651, %v2078, %v2080
    %v2090 = vsel %vm651, %v2080, %v2082
    %v2101 = vadd.f32 %v2033, %v2083
    %v2102 = vadd.f32 %v2034, %v2084
    %v2103 = vadd.f32 %v2035, %v2085
    %v2104 = vadd.f32 %v2036, %v2086
    %v2105 = vadd.f32 %v2037, %v2072
    %v2106 = vadd.f32 %v2038, %v2087
    %v2107 = vadd.f32 %v2039, %v2088
    %v2108 = vadd.f32 %v2040, %v2089
    %v2109 = vadd.f32 %v2041, %v2090
    %v2110 = vadd.f32 %v2042, %v2082
    %v2111 = vmul.f32 %v682, %v1593
    %v2112 = vmul.f32 %v682, %v1597
    %v2113 = vmul.f32 %v682, %v1601
    %v2114 = vmul.f32 %v682, %v1605
    %v2115 = vmul.f32 %v682, %v1609
    %v2116 = vmul.f32 %v686, %v1593
    %v2117 = vmul.f32 %v686, %v1597
    %v2118 = vmul.f32 %v686, %v1601
    %v2119 = vmul.f32 %v686, %v1605
    %v2120 = vmul.f32 %v686, %v1609
    %2131 = vrot.lane.b32.xlu0 %v2111, 20
    %v2132 = vpop.permute.xlu0 %2131
    %2133 = vrot.lane.b32.xlu0 %v2112, 20
    %v2134 = vpop.permute.xlu0 %2133
    %2135 = vrot.lane.b32.xlu0 %v2113, 20
    %v2136 = vpop.permute.xlu0 %2135
    %2137 = vrot.lane.b32.xlu0 %v2114, 20
    %v2138 = vpop.permute.xlu0 %2137
    %2139 = vrot.lane.b32.xlu0 %v2115, 20
    %v2140 = vpop.permute.xlu0 %2139
    %2141 = vrot.lane.b32.xlu0 %v2116, 20
    %v2142 = vpop.permute.xlu0 %2141
    %2143 = vrot.lane.b32.xlu0 %v2117, 20
    %v2144 = vpop.permute.xlu0 %2143
    %2145 = vrot.lane.b32.xlu0 %v2118, 20
    %v2146 = vpop.permute.xlu0 %2145
    %2147 = vrot.lane.b32.xlu0 %v2119, 20
    %v2148 = vpop.permute.xlu0 %2147
    %2149 = vrot.lane.b32.xlu0 %v2120, 20
    %v2150 = vpop.permute.xlu0 %2149
    %v2151 = vsel %vm728, %v2132, %v2134
    %v2152 = vsel %vm728, %v2134, %v2136
    %v2153 = vsel %vm728, %v2136, %v2138
    %v2154 = vsel %vm728, %v2138, %v2140
    %v2155 = vsel %vm728, %v2142, %v2144
    %v2156 = vsel %vm728, %v2144, %v2146
    %v2157 = vsel %vm728, %v2146, %v2148
    %v2158 = vsel %vm728, %v2148, %v2150
    %v2169 = vadd.f32 %v2101, %v2151
    %v2170 = vadd.f32 %v2102, %v2152
    %v2171 = vadd.f32 %v2103, %v2153
    %v2172 = vadd.f32 %v2104, %v2154
    %v2173 = vadd.f32 %v2105, %v2140
    %v2174 = vadd.f32 %v2106, %v2155
    %v2175 = vadd.f32 %v2107, %v2156
    %v2176 = vadd.f32 %v2108, %v2157
    %v2177 = vadd.f32 %v2109, %v2158
    %v2178 = vadd.f32 %v2110, %v2150
    %v2179 = vadd.f32 %v2169, %v759
    %v2180 = vadd.f32 %v2170, %v759
    %v2181 = vadd.f32 %v2171, %v759
    %v2182 = vadd.f32 %v2172, %v759
    %v2183 = vadd.f32 %v2173, %v759
    %v2184 = vadd.f32 %v2174, %v763
    %v2185 = vadd.f32 %v2175, %v763
    %v2186 = vadd.f32 %v2176, %v763
    %v2187 = vadd.f32 %v2177, %v763
    %v2188 = vadd.f32 %v2178, %v763
    %2199 = vrot.lane.b32.xlu0 %v2179, 127
    %v2200 = vpop.permute.xlu0 %2199
    %2201 = vrot.lane.b32.xlu0 %v2180, 127
    %v2202 = vpop.permute.xlu0 %2201
    %2203 = vrot.lane.b32.xlu0 %v2181, 127
    %v2204 = vpop.permute.xlu0 %2203
    %2205 = vrot.lane.b32.xlu0 %v2182, 127
    %v2206 = vpop.permute.xlu0 %2205
    %2207 = vrot.lane.b32.xlu0 %v2183, 127
    %v2208 = vpop.permute.xlu0 %2207
    %2209 = vrot.lane.b32.xlu0 %v2184, 127
    %v2210 = vpop.permute.xlu0 %2209
    %2211 = vrot.lane.b32.xlu0 %v2185, 127
    %v2212 = vpop.permute.xlu0 %2211
    %2213 = vrot.lane.b32.xlu0 %v2186, 127
    %v2214 = vpop.permute.xlu0 %2213
    %2215 = vrot.lane.b32.xlu0 %v2187, 127
    %v2216 = vpop.permute.xlu0 %2215
    %2217 = vrot.lane.b32.xlu0 %v2188, 127
    %v2218 = vpop.permute.xlu0 %2217
    %v2219 = vsel %vm189, %v2200, %v2202
    %v2220 = vsel %vm189, %v2202, %v2204
    %v2221 = vsel %vm189, %v2204, %v2206
    %v2222 = vsel %vm189, %v2206, %v2208
    %v2223 = vsel %vm189, %v2210, %v2212
    %v2224 = vsel %vm189, %v2212, %v2214
    %v2225 = vsel %vm189, %v2214, %v2216
    %v2226 = vsel %vm189, %v2216, %v2218
    %v2235 = vmax.f32 %v2179, %v2219
    %v2236 = vmax.f32 %v2180, %v2220
    %v2237 = vmax.f32 %v2181, %v2221
    %v2238 = vmax.f32 %v2182, %v2222
    %v2239 = vmax.f32 %v2184, %v2223
    %v2240 = vmax.f32 %v2185, %v2224
    %v2241 = vmax.f32 %v2186, %v2225
    %v2242 = vmax.f32 %v2187, %v2226
    %2243 = vrot.lane.b32.xlu0 %v2179, 126
    %v2244 = vpop.permute.xlu0 %2243
    %2245 = vrot.lane.b32.xlu0 %v2180, 126
    %v2246 = vpop.permute.xlu0 %2245
    %2247 = vrot.lane.b32.xlu0 %v2181, 126
    %v2248 = vpop.permute.xlu0 %2247
    %2249 = vrot.lane.b32.xlu0 %v2182, 126
    %v2250 = vpop.permute.xlu0 %2249
    %2251 = vrot.lane.b32.xlu0 %v2183, 126
    %v2252 = vpop.permute.xlu0 %2251
    %2253 = vrot.lane.b32.xlu0 %v2184, 126
    %v2254 = vpop.permute.xlu0 %2253
    %2255 = vrot.lane.b32.xlu0 %v2185, 126
    %v2256 = vpop.permute.xlu0 %2255
    %2257 = vrot.lane.b32.xlu0 %v2186, 126
    %v2258 = vpop.permute.xlu0 %2257
    %2259 = vrot.lane.b32.xlu0 %v2187, 126
    %v2260 = vpop.permute.xlu0 %2259
    %2261 = vrot.lane.b32.xlu0 %v2188, 126
    %v2262 = vpop.permute.xlu0 %2261
    %v2263 = vsel %vm266, %v2244, %v2246
    %v2264 = vsel %vm266, %v2246, %v2248
    %v2265 = vsel %vm266, %v2248, %v2250
    %v2266 = vsel %vm266, %v2250, %v2252
    %v2267 = vsel %vm266, %v2254, %v2256
    %v2268 = vsel %vm266, %v2256, %v2258
    %v2269 = vsel %vm266, %v2258, %v2260
    %v2270 = vsel %vm266, %v2260, %v2262
    %v2279 = vmax.f32 %v2235, %v2263
    %v2280 = vmax.f32 %v2236, %v2264
    %v2281 = vmax.f32 %v2237, %v2265
    %v2282 = vmax.f32 %v2238, %v2266
    %v2283 = vmax.f32 %v2239, %v2267
    %v2284 = vmax.f32 %v2240, %v2268
    %v2285 = vmax.f32 %v2241, %v2269
    %v2286 = vmax.f32 %v2242, %v2270
    %2287 = vst [vmem:[#allocation2 + $0x40] sm:$0xff] %v2279
    %2288 = vst [vmem:[#allocation2 + $0x48] sm:$0xff] %v2280
    %2289 = vst [vmem:[#allocation2 + $0x50] sm:$0xff] %v2281
    %2290 = vst [vmem:[#allocation2 + $0x58] sm:$0xff] %v2282
    %2291 = vst [vmem:[#allocation2 + $0xf0] sm:$0x1] %v2283
    %2292 = vst [vmem:[#allocation2 + $0xf8] sm:$0x1] %v2284
    %2293 = vst [vmem:[#allocation2 + $0x100] sm:$0x1] %v2285
    %2294 = vst [vmem:[#allocation2 + $0x108] sm:$0x1] %v2286
    %v2295 = vld [vmem:[%s0 + $0xc] sm:$0x1f]
    %v2297 = vlaneseq
    %v2298 = vshrl.u32 %v2297, 7
    %v2299 = vsub.s32 0, %v2298
    %v2300 = vrot.slane %v2295, %v2299
    %v2301 = vlaneseq
    %v2302 = vshrl.u32 %v2301, 7
    %v2303 = vsub.s32 1, %v2302
    %v2304 = vrot.slane %v2295, %v2303
    %v2305 = vlaneseq
    %v2306 = vshrl.u32 %v2305, 7
    %v2307 = vsub.s32 2, %v2306
    %v2308 = vrot.slane %v2295, %v2307
    %v2309 = vlaneseq
    %v2310 = vshrl.u32 %v2309, 7
    %v2311 = vsub.s32 3, %v2310
    %v2312 = vrot.slane %v2295, %v2311
    %v2313 = vlaneseq
    %v2314 = vshrl.u32 %v2313, 7
    %v2315 = vsub.s32 4, %v2314
    %v2316 = vrot.slane %v2295, %v2315
    %v2322 = vmul.f32 %v88, %v2300
    %v2323 = vmul.f32 %v88, %v2304
    %v2324 = vmul.f32 %v88, %v2308
    %v2325 = vmul.f32 %v88, %v2312
    %v2326 = vmul.f32 %v88, %v2316
    %v2327 = vmul.f32 %v93, %v2300
    %v2328 = vmul.f32 %v93, %v2304
    %v2329 = vmul.f32 %v93, %v2308
    %v2330 = vmul.f32 %v93, %v2312
    %v2331 = vmul.f32 %v93, %v2316
    %v2332 = vadd.f32 %v2322, 0.0
    %v2333 = vadd.f32 %v2323, 0.0
    %v2334 = vadd.f32 %v2324, 0.0
    %v2335 = vadd.f32 %v2325, 0.0
    %v2336 = vadd.f32 %v2326, 0.0
    %v2337 = vadd.f32 %v2327, 0.0
    %v2338 = vadd.f32 %v2328, 0.0
    %v2339 = vadd.f32 %v2329, 0.0
    %v2340 = vadd.f32 %v2330, 0.0
    %v2341 = vadd.f32 %v2331, 0.0
    %v2342 = vmul.f32 %v143, %v2300
    %v2343 = vmul.f32 %v143, %v2304
    %v2344 = vmul.f32 %v143, %v2308
    %v2345 = vmul.f32 %v143, %v2312
    %v2346 = vmul.f32 %v143, %v2316
    %v2347 = vmul.f32 %v147, %v2300
    %v2348 = vmul.f32 %v147, %v2304
    %v2349 = vmul.f32 %v147, %v2308
    %v2350 = vmul.f32 %v147, %v2312
    %v2351 = vmul.f32 %v147, %v2316
    %2362 = vrot.lane.b32.xlu0 %v2342, 127
    %v2363 = vpop.permute.xlu0 %2362
    %2364 = vrot.lane.b32.xlu0 %v2343, 127
    %v2365 = vpop.permute.xlu0 %2364
    %2366 = vrot.lane.b32.xlu0 %v2344, 127
    %v2367 = vpop.permute.xlu0 %2366
    %2368 = vrot.lane.b32.xlu0 %v2345, 127
    %v2369 = vpop.permute.xlu0 %2368
    %2370 = vrot.lane.b32.xlu0 %v2346, 127
    %v2371 = vpop.permute.xlu0 %2370
    %2372 = vrot.lane.b32.xlu0 %v2347, 127
    %v2373 = vpop.permute.xlu0 %2372
    %2374 = vrot.lane.b32.xlu0 %v2348, 127
    %v2375 = vpop.permute.xlu0 %2374
    %2376 = vrot.lane.b32.xlu0 %v2349, 127
    %v2377 = vpop.permute.xlu0 %2376
    %2378 = vrot.lane.b32.xlu0 %v2350, 127
    %v2379 = vpop.permute.xlu0 %2378
    %2380 = vrot.lane.b32.xlu0 %v2351, 127
    %v2381 = vpop.permute.xlu0 %2380
    %v2382 = vsel %vm189, %v2363, %v2365
    %v2383 = vsel %vm189, %v2365, %v2367
    %v2384 = vsel %vm189, %v2367, %v2369
    %v2385 = vsel %vm189, %v2369, %v2371
    %v2386 = vsel %vm189, %v2373, %v2375
    %v2387 = vsel %vm189, %v2375, %v2377
    %v2388 = vsel %vm189, %v2377, %v2379
    %v2389 = vsel %vm189, %v2379, %v2381
    %v2400 = vadd.f32 %v2332, %v2382
    %v2401 = vadd.f32 %v2333, %v2383
    %v2402 = vadd.f32 %v2334, %v2384
    %v2403 = vadd.f32 %v2335, %v2385
    %v2404 = vadd.f32 %v2336, %v2371
    %v2405 = vadd.f32 %v2337, %v2386
    %v2406 = vadd.f32 %v2338, %v2387
    %v2407 = vadd.f32 %v2339, %v2388
    %v2408 = vadd.f32 %v2340, %v2389
    %v2409 = vadd.f32 %v2341, %v2381
    %v2410 = vmul.f32 %v220, %v2300
    %v2411 = vmul.f32 %v220, %v2304
    %v2412 = vmul.f32 %v220, %v2308
    %v2413 = vmul.f32 %v220, %v2312
    %v2414 = vmul.f32 %v220, %v2316
    %v2415 = vmul.f32 %v224, %v2300
    %v2416 = vmul.f32 %v224, %v2304
    %v2417 = vmul.f32 %v224, %v2308
    %v2418 = vmul.f32 %v224, %v2312
    %v2419 = vmul.f32 %v224, %v2316
    %2430 = vrot.lane.b32.xlu0 %v2410, 126
    %v2431 = vpop.permute.xlu0 %2430
    %2432 = vrot.lane.b32.xlu0 %v2411, 126
    %v2433 = vpop.permute.xlu0 %2432
    %2434 = vrot.lane.b32.xlu0 %v2412, 126
    %v2435 = vpop.permute.xlu0 %2434
    %2436 = vrot.lane.b32.xlu0 %v2413, 126
    %v2437 = vpop.permute.xlu0 %2436
    %2438 = vrot.lane.b32.xlu0 %v2414, 126
    %v2439 = vpop.permute.xlu0 %2438
    %2440 = vrot.lane.b32.xlu0 %v2415, 126
    %v2441 = vpop.permute.xlu0 %2440
    %2442 = vrot.lane.b32.xlu0 %v2416, 126
    %v2443 = vpop.permute.xlu0 %2442
    %2444 = vrot.lane.b32.xlu0 %v2417, 126
    %v2445 = vpop.permute.xlu0 %2444
    %2446 = vrot.lane.b32.xlu0 %v2418, 126
    %v2447 = vpop.permute.xlu0 %2446
    %2448 = vrot.lane.b32.xlu0 %v2419, 126
    %v2449 = vpop.permute.xlu0 %2448
    %v2450 = vsel %vm266, %v2431, %v2433
    %v2451 = vsel %vm266, %v2433, %v2435
    %v2452 = vsel %vm266, %v2435, %v2437
    %v2453 = vsel %vm266, %v2437, %v2439
    %v2454 = vsel %vm266, %v2441, %v2443
    %v2455 = vsel %vm266, %v2443, %v2445
    %v2456 = vsel %vm266, %v2445, %v2447
    %v2457 = vsel %vm266, %v2447, %v2449
    %v2468 = vadd.f32 %v2400, %v2450
    %v2469 = vadd.f32 %v2401, %v2451
    %v2470 = vadd.f32 %v2402, %v2452
    %v2471 = vadd.f32 %v2403, %v2453
    %v2472 = vadd.f32 %v2404, %v2439
    %v2473 = vadd.f32 %v2405, %v2454
    %v2474 = vadd.f32 %v2406, %v2455
    %v2475 = vadd.f32 %v2407, %v2456
    %v2476 = vadd.f32 %v2408, %v2457
    %v2477 = vadd.f32 %v2409, %v2449
    %v2478 = vmul.f32 %v297, %v2300
    %v2479 = vmul.f32 %v297, %v2304
    %v2480 = vmul.f32 %v297, %v2308
    %v2481 = vmul.f32 %v297, %v2312
    %v2482 = vmul.f32 %v297, %v2316
    %v2483 = vmul.f32 %v301, %v2300
    %v2484 = vmul.f32 %v301, %v2304
    %v2485 = vmul.f32 %v301, %v2308
    %v2486 = vmul.f32 %v301, %v2312
    %v2487 = vmul.f32 %v301, %v2316
    %2498 = vrot.lane.b32.xlu0 %v2478, 75
    %v2499 = vpop.permute.xlu0 %2498
    %2500 = vrot.lane.b32.xlu0 %v2479, 75
    %v2501 = vpop.permute.xlu0 %2500
    %2502 = vrot.lane.b32.xlu0 %v2480, 75
    %v2503 = vpop.permute.xlu0 %2502
    %2504 = vrot.lane.b32.xlu0 %v2481, 75
    %v2505 = vpop.permute.xlu0 %2504
    %2506 = vrot.lane.b32.xlu0 %v2482, 75
    %v2507 = vpop.permute.xlu0 %2506
    %2508 = vrot.lane.b32.xlu0 %v2483, 75
    %v2509 = vpop.permute.xlu0 %2508
    %2510 = vrot.lane.b32.xlu0 %v2484, 75
    %v2511 = vpop.permute.xlu0 %2510
    %2512 = vrot.lane.b32.xlu0 %v2485, 75
    %v2513 = vpop.permute.xlu0 %2512
    %2514 = vrot.lane.b32.xlu0 %v2486, 75
    %v2515 = vpop.permute.xlu0 %2514
    %2516 = vrot.lane.b32.xlu0 %v2487, 75
    %v2517 = vpop.permute.xlu0 %2516
    %v2518 = vsel %vm343, %v2499, %v2501
    %v2519 = vsel %vm343, %v2501, %v2503
    %v2520 = vsel %vm343, %v2503, %v2505
    %v2521 = vsel %vm343, %v2505, %v2507
    %v2522 = vsel %vm343, %v2509, %v2511
    %v2523 = vsel %vm343, %v2511, %v2513
    %v2524 = vsel %vm343, %v2513, %v2515
    %v2525 = vsel %vm343, %v2515, %v2517
    %v2536 = vadd.f32 %v2468, %v2518
    %v2537 = vadd.f32 %v2469, %v2519
    %v2538 = vadd.f32 %v2470, %v2520
    %v2539 = vadd.f32 %v2471, %v2521
    %v2540 = vadd.f32 %v2472, %v2507
    %v2541 = vadd.f32 %v2473, %v2522
    %v2542 = vadd.f32 %v2474, %v2523
    %v2543 = vadd.f32 %v2475, %v2524
    %v2544 = vadd.f32 %v2476, %v2525
    %v2545 = vadd.f32 %v2477, %v2517
    %v2546 = vmul.f32 %v374, %v2300
    %v2547 = vmul.f32 %v374, %v2304
    %v2548 = vmul.f32 %v374, %v2308
    %v2549 = vmul.f32 %v374, %v2312
    %v2550 = vmul.f32 %v374, %v2316
    %v2551 = vmul.f32 %v378, %v2300
    %v2552 = vmul.f32 %v378, %v2304
    %v2553 = vmul.f32 %v378, %v2308
    %v2554 = vmul.f32 %v378, %v2312
    %v2555 = vmul.f32 %v378, %v2316
    %2566 = vrot.lane.b32.xlu0 %v2546, 74
    %v2567 = vpop.permute.xlu0 %2566
    %2568 = vrot.lane.b32.xlu0 %v2547, 74
    %v2569 = vpop.permute.xlu0 %2568
    %2570 = vrot.lane.b32.xlu0 %v2548, 74
    %v2571 = vpop.permute.xlu0 %2570
    %2572 = vrot.lane.b32.xlu0 %v2549, 74
    %v2573 = vpop.permute.xlu0 %2572
    %2574 = vrot.lane.b32.xlu0 %v2550, 74
    %v2575 = vpop.permute.xlu0 %2574
    %2576 = vrot.lane.b32.xlu0 %v2551, 74
    %v2577 = vpop.permute.xlu0 %2576
    %2578 = vrot.lane.b32.xlu0 %v2552, 74
    %v2579 = vpop.permute.xlu0 %2578
    %2580 = vrot.lane.b32.xlu0 %v2553, 74
    %v2581 = vpop.permute.xlu0 %2580
    %2582 = vrot.lane.b32.xlu0 %v2554, 74
    %v2583 = vpop.permute.xlu0 %2582
    %2584 = vrot.lane.b32.xlu0 %v2555, 74
    %v2585 = vpop.permute.xlu0 %2584
    %v2586 = vsel %vm420, %v2567, %v2569
    %v2587 = vsel %vm420, %v2569, %v2571
    %v2588 = vsel %vm420, %v2571, %v2573
    %v2589 = vsel %vm420, %v2573, %v2575
    %v2590 = vsel %vm420, %v2577, %v2579
    %v2591 = vsel %vm420, %v2579, %v2581
    %v2592 = vsel %vm420, %v2581, %v2583
    %v2593 = vsel %vm420, %v2583, %v2585
    %v2604 = vadd.f32 %v2536, %v2586
    %v2605 = vadd.f32 %v2537, %v2587
    %v2606 = vadd.f32 %v2538, %v2588
    %v2607 = vadd.f32 %v2539, %v2589
    %v2608 = vadd.f32 %v2540, %v2575
    %v2609 = vadd.f32 %v2541, %v2590
    %v2610 = vadd.f32 %v2542, %v2591
    %v2611 = vadd.f32 %v2543, %v2592
    %v2612 = vadd.f32 %v2544, %v2593
    %v2613 = vadd.f32 %v2545, %v2585
    %v2614 = vmul.f32 %v451, %v2300
    %v2615 = vmul.f32 %v451, %v2304
    %v2616 = vmul.f32 %v451, %v2308
    %v2617 = vmul.f32 %v451, %v2312
    %v2618 = vmul.f32 %v451, %v2316
    %v2619 = vmul.f32 %v455, %v2300
    %v2620 = vmul.f32 %v455, %v2304
    %v2621 = vmul.f32 %v455, %v2308
    %v2622 = vmul.f32 %v455, %v2312
    %v2623 = vmul.f32 %v455, %v2316
    %2634 = vrot.lane.b32.xlu0 %v2614, 73
    %v2635 = vpop.permute.xlu0 %2634
    %2636 = vrot.lane.b32.xlu0 %v2615, 73
    %v2637 = vpop.permute.xlu0 %2636
    %2638 = vrot.lane.b32.xlu0 %v2616, 73
    %v2639 = vpop.permute.xlu0 %2638
    %2640 = vrot.lane.b32.xlu0 %v2617, 73
    %v2641 = vpop.permute.xlu0 %2640
    %2642 = vrot.lane.b32.xlu0 %v2618, 73
    %v2643 = vpop.permute.xlu0 %2642
    %2644 = vrot.lane.b32.xlu0 %v2619, 73
    %v2645 = vpop.permute.xlu0 %2644
    %2646 = vrot.lane.b32.xlu0 %v2620, 73
    %v2647 = vpop.permute.xlu0 %2646
    %2648 = vrot.lane.b32.xlu0 %v2621, 73
    %v2649 = vpop.permute.xlu0 %2648
    %2650 = vrot.lane.b32.xlu0 %v2622, 73
    %v2651 = vpop.permute.xlu0 %2650
    %2652 = vrot.lane.b32.xlu0 %v2623, 73
    %v2653 = vpop.permute.xlu0 %2652
    %v2654 = vsel %vm497, %v2635, %v2637
    %v2655 = vsel %vm497, %v2637, %v2639
    %v2656 = vsel %vm497, %v2639, %v2641
    %v2657 = vsel %vm497, %v2641, %v2643
    %v2658 = vsel %vm497, %v2645, %v2647
    %v2659 = vsel %vm497, %v2647, %v2649
    %v2660 = vsel %vm497, %v2649, %v2651
    %v2661 = vsel %vm497, %v2651, %v2653
    %v2672 = vadd.f32 %v2604, %v2654
    %v2673 = vadd.f32 %v2605, %v2655
    %v2674 = vadd.f32 %v2606, %v2656
    %v2675 = vadd.f32 %v2607, %v2657
    %v2676 = vadd.f32 %v2608, %v2643
    %v2677 = vadd.f32 %v2609, %v2658
    %v2678 = vadd.f32 %v2610, %v2659
    %v2679 = vadd.f32 %v2611, %v2660
    %v2680 = vadd.f32 %v2612, %v2661
    %v2681 = vadd.f32 %v2613, %v2653
    %v2682 = vmul.f32 %v528, %v2300
    %v2683 = vmul.f32 %v528, %v2304
    %v2684 = vmul.f32 %v528, %v2308
    %v2685 = vmul.f32 %v528, %v2312
    %v2686 = vmul.f32 %v528, %v2316
    %v2687 = vmul.f32 %v532, %v2300
    %v2688 = vmul.f32 %v532, %v2304
    %v2689 = vmul.f32 %v532, %v2308
    %v2690 = vmul.f32 %v532, %v2312
    %v2691 = vmul.f32 %v532, %v2316
    %2702 = vrot.lane.b32.xlu0 %v2682, 22
    %v2703 = vpop.permute.xlu0 %2702
    %2704 = vrot.lane.b32.xlu0 %v2683, 22
    %v2705 = vpop.permute.xlu0 %2704
    %2706 = vrot.lane.b32.xlu0 %v2684, 22
    %v2707 = vpop.permute.xlu0 %2706
    %2708 = vrot.lane.b32.xlu0 %v2685, 22
    %v2709 = vpop.permute.xlu0 %2708
    %2710 = vrot.lane.b32.xlu0 %v2686, 22
    %v2711 = vpop.permute.xlu0 %2710
    %2712 = vrot.lane.b32.xlu0 %v2687, 22
    %v2713 = vpop.permute.xlu0 %2712
    %2714 = vrot.lane.b32.xlu0 %v2688, 22
    %v2715 = vpop.permute.xlu0 %2714
    %2716 = vrot.lane.b32.xlu0 %v2689, 22
    %v2717 = vpop.permute.xlu0 %2716
    %2718 = vrot.lane.b32.xlu0 %v2690, 22
    %v2719 = vpop.permute.xlu0 %2718
    %2720 = vrot.lane.b32.xlu0 %v2691, 22
    %v2721 = vpop.permute.xlu0 %2720
    %v2722 = vsel %vm574, %v2703, %v2705
    %v2723 = vsel %vm574, %v2705, %v2707
    %v2724 = vsel %vm574, %v2707, %v2709
    %v2725 = vsel %vm574, %v2709, %v2711
    %v2726 = vsel %vm574, %v2713, %v2715
    %v2727 = vsel %vm574, %v2715, %v2717
    %v2728 = vsel %vm574, %v2717, %v2719
    %v2729 = vsel %vm574, %v2719, %v2721
    %v2740 = vadd.f32 %v2672, %v2722
    %v2741 = vadd.f32 %v2673, %v2723
    %v2742 = vadd.f32 %v2674, %v2724
    %v2743 = vadd.f32 %v2675, %v2725
    %v2744 = vadd.f32 %v2676, %v2711
    %v2745 = vadd.f32 %v2677, %v2726
    %v2746 = vadd.f32 %v2678, %v2727
    %v2747 = vadd.f32 %v2679, %v2728
    %v2748 = vadd.f32 %v2680, %v2729
    %v2749 = vadd.f32 %v2681, %v2721
    %v2750 = vmul.f32 %v605, %v2300
    %v2751 = vmul.f32 %v605, %v2304
    %v2752 = vmul.f32 %v605, %v2308
    %v2753 = vmul.f32 %v605, %v2312
    %v2754 = vmul.f32 %v605, %v2316
    %v2755 = vmul.f32 %v609, %v2300
    %v2756 = vmul.f32 %v609, %v2304
    %v2757 = vmul.f32 %v609, %v2308
    %v2758 = vmul.f32 %v609, %v2312
    %v2759 = vmul.f32 %v609, %v2316
    %2770 = vrot.lane.b32.xlu0 %v2750, 21
    %v2771 = vpop.permute.xlu0 %2770
    %2772 = vrot.lane.b32.xlu0 %v2751, 21
    %v2773 = vpop.permute.xlu0 %2772
    %2774 = vrot.lane.b32.xlu0 %v2752, 21
    %v2775 = vpop.permute.xlu0 %2774
    %2776 = vrot.lane.b32.xlu0 %v2753, 21
    %v2777 = vpop.permute.xlu0 %2776
    %2778 = vrot.lane.b32.xlu0 %v2754, 21
    %v2779 = vpop.permute.xlu0 %2778
    %2780 = vrot.lane.b32.xlu0 %v2755, 21
    %v2781 = vpop.permute.xlu0 %2780
    %2782 = vrot.lane.b32.xlu0 %v2756, 21
    %v2783 = vpop.permute.xlu0 %2782
    %2784 = vrot.lane.b32.xlu0 %v2757, 21
    %v2785 = vpop.permute.xlu0 %2784
    %2786 = vrot.lane.b32.xlu0 %v2758, 21
    %v2787 = vpop.permute.xlu0 %2786
    %2788 = vrot.lane.b32.xlu0 %v2759, 21
    %v2789 = vpop.permute.xlu0 %2788
    %v2790 = vsel %vm651, %v2771, %v2773
    %v2791 = vsel %vm651, %v2773, %v2775
    %v2792 = vsel %vm651, %v2775, %v2777
    %v2793 = vsel %vm651, %v2777, %v2779
    %v2794 = vsel %vm651, %v2781, %v2783
    %v2795 = vsel %vm651, %v2783, %v2785
    %v2796 = vsel %vm651, %v2785, %v2787
    %v2797 = vsel %vm651, %v2787, %v2789
    %v2808 = vadd.f32 %v2740, %v2790
    %v2809 = vadd.f32 %v2741, %v2791
    %v2810 = vadd.f32 %v2742, %v2792
    %v2811 = vadd.f32 %v2743, %v2793
    %v2812 = vadd.f32 %v2744, %v2779
    %v2813 = vadd.f32 %v2745, %v2794
    %v2814 = vadd.f32 %v2746, %v2795
    %v2815 = vadd.f32 %v2747, %v2796
    %v2816 = vadd.f32 %v2748, %v2797
    %v2817 = vadd.f32 %v2749, %v2789
    %v2818 = vmul.f32 %v682, %v2300
    %v2819 = vmul.f32 %v682, %v2304
    %v2820 = vmul.f32 %v682, %v2308
    %v2821 = vmul.f32 %v682, %v2312
    %v2822 = vmul.f32 %v682, %v2316
    %v2823 = vmul.f32 %v686, %v2300
    %v2824 = vmul.f32 %v686, %v2304
    %v2825 = vmul.f32 %v686, %v2308
    %v2826 = vmul.f32 %v686, %v2312
    %v2827 = vmul.f32 %v686, %v2316
    %2838 = vrot.lane.b32.xlu0 %v2818, 20
    %v2839 = vpop.permute.xlu0 %2838
    %2840 = vrot.lane.b32.xlu0 %v2819, 20
    %v2841 = vpop.permute.xlu0 %2840
    %2842 = vrot.lane.b32.xlu0 %v2820, 20
    %v2843 = vpop.permute.xlu0 %2842
    %2844 = vrot.lane.b32.xlu0 %v2821, 20
    %v2845 = vpop.permute.xlu0 %2844
    %2846 = vrot.lane.b32.xlu0 %v2822, 20
    %v2847 = vpop.permute.xlu0 %2846
    %2848 = vrot.lane.b32.xlu0 %v2823, 20
    %v2849 = vpop.permute.xlu0 %2848
    %2850 = vrot.lane.b32.xlu0 %v2824, 20
    %v2851 = vpop.permute.xlu0 %2850
    %2852 = vrot.lane.b32.xlu0 %v2825, 20
    %v2853 = vpop.permute.xlu0 %2852
    %2854 = vrot.lane.b32.xlu0 %v2826, 20
    %v2855 = vpop.permute.xlu0 %2854
    %2856 = vrot.lane.b32.xlu0 %v2827, 20
    %v2857 = vpop.permute.xlu0 %2856
    %v2858 = vsel %vm728, %v2839, %v2841
    %v2859 = vsel %vm728, %v2841, %v2843
    %v2860 = vsel %vm728, %v2843, %v2845
    %v2861 = vsel %vm728, %v2845, %v2847
    %v2862 = vsel %vm728, %v2849, %v2851
    %v2863 = vsel %vm728, %v2851, %v2853
    %v2864 = vsel %vm728, %v2853, %v2855
    %v2865 = vsel %vm728, %v2855, %v2857
    %v2876 = vadd.f32 %v2808, %v2858
    %v2877 = vadd.f32 %v2809, %v2859
    %v2878 = vadd.f32 %v2810, %v2860
    %v2879 = vadd.f32 %v2811, %v2861
    %v2880 = vadd.f32 %v2812, %v2847
    %v2881 = vadd.f32 %v2813, %v2862
    %v2882 = vadd.f32 %v2814, %v2863
    %v2883 = vadd.f32 %v2815, %v2864
    %v2884 = vadd.f32 %v2816, %v2865
    %v2885 = vadd.f32 %v2817, %v2857
    %v2886 = vadd.f32 %v2876, %v759
    %v2887 = vadd.f32 %v2877, %v759
    %v2888 = vadd.f32 %v2878, %v759
    %v2889 = vadd.f32 %v2879, %v759
    %v2890 = vadd.f32 %v2880, %v759
    %v2891 = vadd.f32 %v2881, %v763
    %v2892 = vadd.f32 %v2882, %v763
    %v2893 = vadd.f32 %v2883, %v763
    %v2894 = vadd.f32 %v2884, %v763
    %v2895 = vadd.f32 %v2885, %v763
    %2906 = vrot.lane.b32.xlu0 %v2886, 127
    %v2907 = vpop.permute.xlu0 %2906
    %2908 = vrot.lane.b32.xlu0 %v2887, 127
    %v2909 = vpop.permute.xlu0 %2908
    %2910 = vrot.lane.b32.xlu0 %v2888, 127
    %v2911 = vpop.permute.xlu0 %2910
    %2912 = vrot.lane.b32.xlu0 %v2889, 127
    %v2913 = vpop.permute.xlu0 %2912
    %2914 = vrot.lane.b32.xlu0 %v2890, 127
    %v2915 = vpop.permute.xlu0 %2914
    %2916 = vrot.lane.b32.xlu0 %v2891, 127
    %v2917 = vpop.permute.xlu0 %2916
    %2918 = vrot.lane.b32.xlu0 %v2892, 127
    %v2919 = vpop.permute.xlu0 %2918
    %2920 = vrot.lane.b32.xlu0 %v2893, 127
    %v2921 = vpop.permute.xlu0 %2920
    %2922 = vrot.lane.b32.xlu0 %v2894, 127
    %v2923 = vpop.permute.xlu0 %2922
    %2924 = vrot.lane.b32.xlu0 %v2895, 127
    %v2925 = vpop.permute.xlu0 %2924
    %v2926 = vsel %vm189, %v2907, %v2909
    %v2927 = vsel %vm189, %v2909, %v2911
    %v2928 = vsel %vm189, %v2911, %v2913
    %v2929 = vsel %vm189, %v2913, %v2915
    %v2930 = vsel %vm189, %v2917, %v2919
    %v2931 = vsel %vm189, %v2919, %v2921
    %v2932 = vsel %vm189, %v2921, %v2923
    %v2933 = vsel %vm189, %v2923, %v2925
    %v2942 = vmax.f32 %v2886, %v2926
    %v2943 = vmax.f32 %v2887, %v2927
    %v2944 = vmax.f32 %v2888, %v2928
    %v2945 = vmax.f32 %v2889, %v2929
    %v2946 = vmax.f32 %v2891, %v2930
    %v2947 = vmax.f32 %v2892, %v2931
    %v2948 = vmax.f32 %v2893, %v2932
    %v2949 = vmax.f32 %v2894, %v2933
    %2950 = vrot.lane.b32.xlu0 %v2886, 126
    %v2951 = vpop.permute.xlu0 %2950
    %2952 = vrot.lane.b32.xlu0 %v2887, 126
    %v2953 = vpop.permute.xlu0 %2952
    %2954 = vrot.lane.b32.xlu0 %v2888, 126
    %v2955 = vpop.permute.xlu0 %2954
    %2956 = vrot.lane.b32.xlu0 %v2889, 126
    %v2957 = vpop.permute.xlu0 %2956
    %2958 = vrot.lane.b32.xlu0 %v2890, 126
    %v2959 = vpop.permute.xlu0 %2958
    %2960 = vrot.lane.b32.xlu0 %v2891, 126
    %v2961 = vpop.permute.xlu0 %2960
    %2962 = vrot.lane.b32.xlu0 %v2892, 126
    %v2963 = vpop.permute.xlu0 %2962
    %2964 = vrot.lane.b32.xlu0 %v2893, 126
    %v2965 = vpop.permute.xlu0 %2964
    %2966 = vrot.lane.b32.xlu0 %v2894, 126
    %v2967 = vpop.permute.xlu0 %2966
    %2968 = vrot.lane.b32.xlu0 %v2895, 126
    %v2969 = vpop.permute.xlu0 %2968
    %v2970 = vsel %vm266, %v2951, %v2953
    %v2971 = vsel %vm266, %v2953, %v2955
    %v2972 = vsel %vm266, %v2955, %v2957
    %v2973 = vsel %vm266, %v2957, %v2959
    %v2974 = vsel %vm266, %v2961, %v2963
    %v2975 = vsel %vm266, %v2963, %v2965
    %v2976 = vsel %vm266, %v2965, %v2967
    %v2977 = vsel %vm266, %v2967, %v2969
    %v2986 = vmax.f32 %v2942, %v2970
    %v2987 = vmax.f32 %v2943, %v2971
    %v2988 = vmax.f32 %v2944, %v2972
    %v2989 = vmax.f32 %v2945, %v2973
    %v2990 = vmax.f32 %v2946, %v2974
    %v2991 = vmax.f32 %v2947, %v2975
    %v2992 = vmax.f32 %v2948, %v2976
    %v2993 = vmax.f32 %v2949, %v2977
    %2994 = vst [vmem:[#allocation2 + $0x60] sm:$0xff] %v2986
    %2995 = vst [vmem:[#allocation2 + $0x68] sm:$0xff] %v2987
    %2996 = vst [vmem:[#allocation2 + $0x70] sm:$0xff] %v2988
    %2997 = vst [vmem:[#allocation2 + $0x78] sm:$0xff] %v2989
    %2998 = vst [vmem:[#allocation2 + $0x110] sm:$0x1] %v2990
    %2999 = vst [vmem:[#allocation2 + $0x118] sm:$0x1] %v2991
    %3000 = vst [vmem:[#allocation2 + $0x120] sm:$0x1] %v2992
    %3001 = vst [vmem:[#allocation2 + $0x128] sm:$0x1] %v2993
    %v3002 = vld [vmem:[%s0 + $0x10] sm:$0x1f]
    %v3004 = vlaneseq
    %v3005 = vshrl.u32 %v3004, 7
    %v3006 = vsub.s32 0, %v3005
    %v3007 = vrot.slane %v3002, %v3006
    %v3008 = vlaneseq
    %v3009 = vshrl.u32 %v3008, 7
    %v3010 = vsub.s32 1, %v3009
    %v3011 = vrot.slane %v3002, %v3010
    %v3012 = vlaneseq
    %v3013 = vshrl.u32 %v3012, 7
    %v3014 = vsub.s32 2, %v3013
    %v3015 = vrot.slane %v3002, %v3014
    %v3016 = vlaneseq
    %v3017 = vshrl.u32 %v3016, 7
    %v3018 = vsub.s32 3, %v3017
    %v3019 = vrot.slane %v3002, %v3018
    %v3020 = vlaneseq
    %v3021 = vshrl.u32 %v3020, 7
    %v3022 = vsub.s32 4, %v3021
    %v3023 = vrot.slane %v3002, %v3022
    %v3029 = vmul.f32 %v88, %v3007
    %v3030 = vmul.f32 %v88, %v3011
    %v3031 = vmul.f32 %v88, %v3015
    %v3032 = vmul.f32 %v88, %v3019
    %v3033 = vmul.f32 %v88, %v3023
    %v3034 = vmul.f32 %v93, %v3007
    %v3035 = vmul.f32 %v93, %v3011
    %v3036 = vmul.f32 %v93, %v3015
    %v3037 = vmul.f32 %v93, %v3019
    %v3038 = vmul.f32 %v93, %v3023
    %v3039 = vadd.f32 %v3029, 0.0
    %v3040 = vadd.f32 %v3030, 0.0
    %v3041 = vadd.f32 %v3031, 0.0
    %v3042 = vadd.f32 %v3032, 0.0
    %v3043 = vadd.f32 %v3033, 0.0
    %v3044 = vadd.f32 %v3034, 0.0
    %v3045 = vadd.f32 %v3035, 0.0
    %v3046 = vadd.f32 %v3036, 0.0
    %v3047 = vadd.f32 %v3037, 0.0
    %v3048 = vadd.f32 %v3038, 0.0
    %v3049 = vmul.f32 %v143, %v3007
    %v3050 = vmul.f32 %v143, %v3011
    %v3051 = vmul.f32 %v143, %v3015
    %v3052 = vmul.f32 %v143, %v3019
    %v3053 = vmul.f32 %v143, %v3023
    %v3054 = vmul.f32 %v147, %v3007
    %v3055 = vmul.f32 %v147, %v3011
    %v3056 = vmul.f32 %v147, %v3015
    %v3057 = vmul.f32 %v147, %v3019
    %v3058 = vmul.f32 %v147, %v3023
    %3069 = vrot.lane.b32.xlu0 %v3049, 127
    %v3070 = vpop.permute.xlu0 %3069
    %3071 = vrot.lane.b32.xlu0 %v3050, 127
    %v3072 = vpop.permute.xlu0 %3071
    %3073 = vrot.lane.b32.xlu0 %v3051, 127
    %v3074 = vpop.permute.xlu0 %3073
    %3075 = vrot.lane.b32.xlu0 %v3052, 127
    %v3076 = vpop.permute.xlu0 %3075
    %3077 = vrot.lane.b32.xlu0 %v3053, 127
    %v3078 = vpop.permute.xlu0 %3077
    %3079 = vrot.lane.b32.xlu0 %v3054, 127
    %v3080 = vpop.permute.xlu0 %3079
    %3081 = vrot.lane.b32.xlu0 %v3055, 127
    %v3082 = vpop.permute.xlu0 %3081
    %3083 = vrot.lane.b32.xlu0 %v3056, 127
    %v3084 = vpop.permute.xlu0 %3083
    %3085 = vrot.lane.b32.xlu0 %v3057, 127
    %v3086 = vpop.permute.xlu0 %3085
    %3087 = vrot.lane.b32.xlu0 %v3058, 127
    %v3088 = vpop.permute.xlu0 %3087
    %v3089 = vsel %vm189, %v3070, %v3072
    %v3090 = vsel %vm189, %v3072, %v3074
    %v3091 = vsel %vm189, %v3074, %v3076
    %v3092 = vsel %vm189, %v3076, %v3078
    %v3093 = vsel %vm189, %v3080, %v3082
    %v3094 = vsel %vm189, %v3082, %v3084
    %v3095 = vsel %vm189, %v3084, %v3086
    %v3096 = vsel %vm189, %v3086, %v3088
    %v3107 = vadd.f32 %v3039, %v3089
    %v3108 = vadd.f32 %v3040, %v3090
    %v3109 = vadd.f32 %v3041, %v3091
    %v3110 = vadd.f32 %v3042, %v3092
    %v3111 = vadd.f32 %v3043, %v3078
    %v3112 = vadd.f32 %v3044, %v3093
    %v3113 = vadd.f32 %v3045, %v3094
    %v3114 = vadd.f32 %v3046, %v3095
    %v3115 = vadd.f32 %v3047, %v3096
    %v3116 = vadd.f32 %v3048, %v3088
    %v3117 = vmul.f32 %v220, %v3007
    %v3118 = vmul.f32 %v220, %v3011
    %v3119 = vmul.f32 %v220, %v3015
    %v3120 = vmul.f32 %v220, %v3019
    %v3121 = vmul.f32 %v220, %v3023
    %v3122 = vmul.f32 %v224, %v3007
    %v3123 = vmul.f32 %v224, %v3011
    %v3124 = vmul.f32 %v224, %v3015
    %v3125 = vmul.f32 %v224, %v3019
    %v3126 = vmul.f32 %v224, %v3023
    %3137 = vrot.lane.b32.xlu0 %v3117, 126
    %v3138 = vpop.permute.xlu0 %3137
    %3139 = vrot.lane.b32.xlu0 %v3118, 126
    %v3140 = vpop.permute.xlu0 %3139
    %3141 = vrot.lane.b32.xlu0 %v3119, 126
    %v3142 = vpop.permute.xlu0 %3141
    %3143 = vrot.lane.b32.xlu0 %v3120, 126
    %v3144 = vpop.permute.xlu0 %3143
    %3145 = vrot.lane.b32.xlu0 %v3121, 126
    %v3146 = vpop.permute.xlu0 %3145
    %3147 = vrot.lane.b32.xlu0 %v3122, 126
    %v3148 = vpop.permute.xlu0 %3147
    %3149 = vrot.lane.b32.xlu0 %v3123, 126
    %v3150 = vpop.permute.xlu0 %3149
    %3151 = vrot.lane.b32.xlu0 %v3124, 126
    %v3152 = vpop.permute.xlu0 %3151
    %3153 = vrot.lane.b32.xlu0 %v3125, 126
    %v3154 = vpop.permute.xlu0 %3153
    %3155 = vrot.lane.b32.xlu0 %v3126, 126
    %v3156 = vpop.permute.xlu0 %3155
    %v3157 = vsel %vm266, %v3138, %v3140
    %v3158 = vsel %vm266, %v3140, %v3142
    %v3159 = vsel %vm266, %v3142, %v3144
    %v3160 = vsel %vm266, %v3144, %v3146
    %v3161 = vsel %vm266, %v3148, %v3150
    %v3162 = vsel %vm266, %v3150, %v3152
    %v3163 = vsel %vm266, %v3152, %v3154
    %v3164 = vsel %vm266, %v3154, %v3156
    %v3175 = vadd.f32 %v3107, %v3157
    %v3176 = vadd.f32 %v3108, %v3158
    %v3177 = vadd.f32 %v3109, %v3159
    %v3178 = vadd.f32 %v3110, %v3160
    %v3179 = vadd.f32 %v3111, %v3146
    %v3180 = vadd.f32 %v3112, %v3161
    %v3181 = vadd.f32 %v3113, %v3162
    %v3182 = vadd.f32 %v3114, %v3163
    %v3183 = vadd.f32 %v3115, %v3164
    %v3184 = vadd.f32 %v3116, %v3156
    %v3185 = vmul.f32 %v297, %v3007
    %v3186 = vmul.f32 %v297, %v3011
    %v3187 = vmul.f32 %v297, %v3015
    %v3188 = vmul.f32 %v297, %v3019
    %v3189 = vmul.f32 %v297, %v3023
    %v3190 = vmul.f32 %v301, %v3007
    %v3191 = vmul.f32 %v301, %v3011
    %v3192 = vmul.f32 %v301, %v3015
    %v3193 = vmul.f32 %v301, %v3019
    %v3194 = vmul.f32 %v301, %v3023
    %3205 = vrot.lane.b32.xlu0 %v3185, 75
    %v3206 = vpop.permute.xlu0 %3205
    %3207 = vrot.lane.b32.xlu0 %v3186, 75
    %v3208 = vpop.permute.xlu0 %3207
    %3209 = vrot.lane.b32.xlu0 %v3187, 75
    %v3210 = vpop.permute.xlu0 %3209
    %3211 = vrot.lane.b32.xlu0 %v3188, 75
    %v3212 = vpop.permute.xlu0 %3211
    %3213 = vrot.lane.b32.xlu0 %v3189, 75
    %v3214 = vpop.permute.xlu0 %3213
    %3215 = vrot.lane.b32.xlu0 %v3190, 75
    %v3216 = vpop.permute.xlu0 %3215
    %3217 = vrot.lane.b32.xlu0 %v3191, 75
    %v3218 = vpop.permute.xlu0 %3217
    %3219 = vrot.lane.b32.xlu0 %v3192, 75
    %v3220 = vpop.permute.xlu0 %3219
    %3221 = vrot.lane.b32.xlu0 %v3193, 75
    %v3222 = vpop.permute.xlu0 %3221
    %3223 = vrot.lane.b32.xlu0 %v3194, 75
    %v3224 = vpop.permute.xlu0 %3223
    %v3225 = vsel %vm343, %v3206, %v3208
    %v3226 = vsel %vm343, %v3208, %v3210
    %v3227 = vsel %vm343, %v3210, %v3212
    %v3228 = vsel %vm343, %v3212, %v3214
    %v3229 = vsel %vm343, %v3216, %v3218
    %v3230 = vsel %vm343, %v3218, %v3220
    %v3231 = vsel %vm343, %v3220, %v3222
    %v3232 = vsel %vm343, %v3222, %v3224
    %v3243 = vadd.f32 %v3175, %v3225
    %v3244 = vadd.f32 %v3176, %v3226
    %v3245 = vadd.f32 %v3177, %v3227
    %v3246 = vadd.f32 %v3178, %v3228
    %v3247 = vadd.f32 %v3179, %v3214
    %v3248 = vadd.f32 %v3180, %v3229
    %v3249 = vadd.f32 %v3181, %v3230
    %v3250 = vadd.f32 %v3182, %v3231
    %v3251 = vadd.f32 %v3183, %v3232
    %v3252 = vadd.f32 %v3184, %v3224
    %v3253 = vmul.f32 %v374, %v3007
    %v3254 = vmul.f32 %v374, %v3011
    %v3255 = vmul.f32 %v374, %v3015
    %v3256 = vmul.f32 %v374, %v3019
    %v3257 = vmul.f32 %v374, %v3023
    %v3258 = vmul.f32 %v378, %v3007
    %v3259 = vmul.f32 %v378, %v3011
    %v3260 = vmul.f32 %v378, %v3015
    %v3261 = vmul.f32 %v378, %v3019
    %v3262 = vmul.f32 %v378, %v3023
    %3273 = vrot.lane.b32.xlu0 %v3253, 74
    %v3274 = vpop.permute.xlu0 %3273
    %3275 = vrot.lane.b32.xlu0 %v3254, 74
    %v3276 = vpop.permute.xlu0 %3275
    %3277 = vrot.lane.b32.xlu0 %v3255, 74
    %v3278 = vpop.permute.xlu0 %3277
    %3279 = vrot.lane.b32.xlu0 %v3256, 74
    %v3280 = vpop.permute.xlu0 %3279
    %3281 = vrot.lane.b32.xlu0 %v3257, 74
    %v3282 = vpop.permute.xlu0 %3281
    %3283 = vrot.lane.b32.xlu0 %v3258, 74
    %v3284 = vpop.permute.xlu0 %3283
    %3285 = vrot.lane.b32.xlu0 %v3259, 74
    %v3286 = vpop.permute.xlu0 %3285
    %3287 = vrot.lane.b32.xlu0 %v3260, 74
    %v3288 = vpop.permute.xlu0 %3287
    %3289 = vrot.lane.b32.xlu0 %v3261, 74
    %v3290 = vpop.permute.xlu0 %3289
    %3291 = vrot.lane.b32.xlu0 %v3262, 74
    %v3292 = vpop.permute.xlu0 %3291
    %v3293 = vsel %vm420, %v3274, %v3276
    %v3294 = vsel %vm420, %v3276, %v3278
    %v3295 = vsel %vm420, %v3278, %v3280
    %v3296 = vsel %vm420, %v3280, %v3282
    %v3297 = vsel %vm420, %v3284, %v3286
    %v3298 = vsel %vm420, %v3286, %v3288
    %v3299 = vsel %vm420, %v3288, %v3290
    %v3300 = vsel %vm420, %v3290, %v3292
    %v3311 = vadd.f32 %v3243, %v3293
    %v3312 = vadd.f32 %v3244, %v3294
    %v3313 = vadd.f32 %v3245, %v3295
    %v3314 = vadd.f32 %v3246, %v3296
    %v3315 = vadd.f32 %v3247, %v3282
    %v3316 = vadd.f32 %v3248, %v3297
    %v3317 = vadd.f32 %v3249, %v3298
    %v3318 = vadd.f32 %v3250, %v3299
    %v3319 = vadd.f32 %v3251, %v3300
    %v3320 = vadd.f32 %v3252, %v3292
    %v3321 = vmul.f32 %v451, %v3007
    %v3322 = vmul.f32 %v451, %v3011
    %v3323 = vmul.f32 %v451, %v3015
    %v3324 = vmul.f32 %v451, %v3019
    %v3325 = vmul.f32 %v451, %v3023
    %v3326 = vmul.f32 %v455, %v3007
    %v3327 = vmul.f32 %v455, %v3011
    %v3328 = vmul.f32 %v455, %v3015
    %v3329 = vmul.f32 %v455, %v3019
    %v3330 = vmul.f32 %v455, %v3023
    %3341 = vrot.lane.b32.xlu0 %v3321, 73
    %v3342 = vpop.permute.xlu0 %3341
    %3343 = vrot.lane.b32.xlu0 %v3322, 73
    %v3344 = vpop.permute.xlu0 %3343
    %3345 = vrot.lane.b32.xlu0 %v3323, 73
    %v3346 = vpop.permute.xlu0 %3345
    %3347 = vrot.lane.b32.xlu0 %v3324, 73
    %v3348 = vpop.permute.xlu0 %3347
    %3349 = vrot.lane.b32.xlu0 %v3325, 73
    %v3350 = vpop.permute.xlu0 %3349
    %3351 = vrot.lane.b32.xlu0 %v3326, 73
    %v3352 = vpop.permute.xlu0 %3351
    %3353 = vrot.lane.b32.xlu0 %v3327, 73
    %v3354 = vpop.permute.xlu0 %3353
    %3355 = vrot.lane.b32.xlu0 %v3328, 73
    %v3356 = vpop.permute.xlu0 %3355
    %3357 = vrot.lane.b32.xlu0 %v3329, 73
    %v3358 = vpop.permute.xlu0 %3357
    %3359 = vrot.lane.b32.xlu0 %v3330, 73
    %v3360 = vpop.permute.xlu0 %3359
    %v3361 = vsel %vm497, %v3342, %v3344
    %v3362 = vsel %vm497, %v3344, %v3346
    %v3363 = vsel %vm497, %v3346, %v3348
    %v3364 = vsel %vm497, %v3348, %v3350
    %v3365 = vsel %vm497, %v3352, %v3354
    %v3366 = vsel %vm497, %v3354, %v3356
    %v3367 = vsel %vm497, %v3356, %v3358
    %v3368 = vsel %vm497, %v3358, %v3360
    %v3379 = vadd.f32 %v3311, %v3361
    %v3380 = vadd.f32 %v3312, %v3362
    %v3381 = vadd.f32 %v3313, %v3363
    %v3382 = vadd.f32 %v3314, %v3364
    %v3383 = vadd.f32 %v3315, %v3350
    %v3384 = vadd.f32 %v3316, %v3365
    %v3385 = vadd.f32 %v3317, %v3366
    %v3386 = vadd.f32 %v3318, %v3367
    %v3387 = vadd.f32 %v3319, %v3368
    %v3388 = vadd.f32 %v3320, %v3360
    %v3389 = vmul.f32 %v528, %v3007
    %v3390 = vmul.f32 %v528, %v3011
    %v3391 = vmul.f32 %v528, %v3015
    %v3392 = vmul.f32 %v528, %v3019
    %v3393 = vmul.f32 %v528, %v3023
    %v3394 = vmul.f32 %v532, %v3007
    %v3395 = vmul.f32 %v532, %v3011
    %v3396 = vmul.f32 %v532, %v3015
    %v3397 = vmul.f32 %v532, %v3019
    %v3398 = vmul.f32 %v532, %v3023
    %3409 = vrot.lane.b32.xlu0 %v3389, 22
    %v3410 = vpop.permute.xlu0 %3409
    %3411 = vrot.lane.b32.xlu0 %v3390, 22
    %v3412 = vpop.permute.xlu0 %3411
    %3413 = vrot.lane.b32.xlu0 %v3391, 22
    %v3414 = vpop.permute.xlu0 %3413
    %3415 = vrot.lane.b32.xlu0 %v3392, 22
    %v3416 = vpop.permute.xlu0 %3415
    %3417 = vrot.lane.b32.xlu0 %v3393, 22
    %v3418 = vpop.permute.xlu0 %3417
    %3419 = vrot.lane.b32.xlu0 %v3394, 22
    %v3420 = vpop.permute.xlu0 %3419
    %3421 = vrot.lane.b32.xlu0 %v3395, 22
    %v3422 = vpop.permute.xlu0 %3421
    %3423 = vrot.lane.b32.xlu0 %v3396, 22
    %v3424 = vpop.permute.xlu0 %3423
    %3425 = vrot.lane.b32.xlu0 %v3397, 22
    %v3426 = vpop.permute.xlu0 %3425
    %3427 = vrot.lane.b32.xlu0 %v3398, 22
    %v3428 = vpop.permute.xlu0 %3427
    %v3429 = vsel %vm574, %v3410, %v3412
    %v3430 = vsel %vm574, %v3412, %v3414
    %v3431 = vsel %vm574, %v3414, %v3416
    %v3432 = vsel %vm574, %v3416, %v3418
    %v3433 = vsel %vm574, %v3420, %v3422
    %v3434 = vsel %vm574, %v3422, %v3424
    %v3435 = vsel %vm574, %v3424, %v3426
    %v3436 = vsel %vm574, %v3426, %v3428
    %v3447 = vadd.f32 %v3379, %v3429
    %v3448 = vadd.f32 %v3380, %v3430
    %v3449 = vadd.f32 %v3381, %v3431
    %v3450 = vadd.f32 %v3382, %v3432
    %v3451 = vadd.f32 %v3383, %v3418
    %v3452 = vadd.f32 %v3384, %v3433
    %v3453 = vadd.f32 %v3385, %v3434
    %v3454 = vadd.f32 %v3386, %v3435
    %v3455 = vadd.f32 %v3387, %v3436
    %v3456 = vadd.f32 %v3388, %v3428
    %v3457 = vmul.f32 %v605, %v3007
    %v3458 = vmul.f32 %v605, %v3011
    %v3459 = vmul.f32 %v605, %v3015
    %v3460 = vmul.f32 %v605, %v3019
    %v3461 = vmul.f32 %v605, %v3023
    %v3462 = vmul.f32 %v609, %v3007
    %v3463 = vmul.f32 %v609, %v3011
    %v3464 = vmul.f32 %v609, %v3015
    %v3465 = vmul.f32 %v609, %v3019
    %v3466 = vmul.f32 %v609, %v3023
    %3477 = vrot.lane.b32.xlu0 %v3457, 21
    %v3478 = vpop.permute.xlu0 %3477
    %3479 = vrot.lane.b32.xlu0 %v3458, 21
    %v3480 = vpop.permute.xlu0 %3479
    %3481 = vrot.lane.b32.xlu0 %v3459, 21
    %v3482 = vpop.permute.xlu0 %3481
    %3483 = vrot.lane.b32.xlu0 %v3460, 21
    %v3484 = vpop.permute.xlu0 %3483
    %3485 = vrot.lane.b32.xlu0 %v3461, 21
    %v3486 = vpop.permute.xlu0 %3485
    %3487 = vrot.lane.b32.xlu0 %v3462, 21
    %v3488 = vpop.permute.xlu0 %3487
    %3489 = vrot.lane.b32.xlu0 %v3463, 21
    %v3490 = vpop.permute.xlu0 %3489
    %3491 = vrot.lane.b32.xlu0 %v3464, 21
    %v3492 = vpop.permute.xlu0 %3491
    %3493 = vrot.lane.b32.xlu0 %v3465, 21
    %v3494 = vpop.permute.xlu0 %3493
    %3495 = vrot.lane.b32.xlu0 %v3466, 21
    %v3496 = vpop.permute.xlu0 %3495
    %v3497 = vsel %vm651, %v3478, %v3480
    %v3498 = vsel %vm651, %v3480, %v3482
    %v3499 = vsel %vm651, %v3482, %v3484
    %v3500 = vsel %vm651, %v3484, %v3486
    %v3501 = vsel %vm651, %v3488, %v3490
    %v3502 = vsel %vm651, %v3490, %v3492
    %v3503 = vsel %vm651, %v3492, %v3494
    %v3504 = vsel %vm651, %v3494, %v3496
    %v3515 = vadd.f32 %v3447, %v3497
    %v3516 = vadd.f32 %v3448, %v3498
    %v3517 = vadd.f32 %v3449, %v3499
    %v3518 = vadd.f32 %v3450, %v3500
    %v3519 = vadd.f32 %v3451, %v3486
    %v3520 = vadd.f32 %v3452, %v3501
    %v3521 = vadd.f32 %v3453, %v3502
    %v3522 = vadd.f32 %v3454, %v3503
    %v3523 = vadd.f32 %v3455, %v3504
    %v3524 = vadd.f32 %v3456, %v3496
    %v3525 = vmul.f32 %v682, %v3007
    %v3526 = vmul.f32 %v682, %v3011
    %v3527 = vmul.f32 %v682, %v3015
    %v3528 = vmul.f32 %v682, %v3019
    %v3529 = vmul.f32 %v682, %v3023
    %v3530 = vmul.f32 %v686, %v3007
    %v3531 = vmul.f32 %v686, %v3011
    %v3532 = vmul.f32 %v686, %v3015
    %v3533 = vmul.f32 %v686, %v3019
    %v3534 = vmul.f32 %v686, %v3023
    %3545 = vrot.lane.b32.xlu0 %v3525, 20
    %v3546 = vpop.permute.xlu0 %3545
    %3547 = vrot.lane.b32.xlu0 %v3526, 20
    %v3548 = vpop.permute.xlu0 %3547
    %3549 = vrot.lane.b32.xlu0 %v3527, 20
    %v3550 = vpop.permute.xlu0 %3549
    %3551 = vrot.lane.b32.xlu0 %v3528, 20
    %v3552 = vpop.permute.xlu0 %3551
    %3553 = vrot.lane.b32.xlu0 %v3529, 20
    %v3554 = vpop.permute.xlu0 %3553
    %3555 = vrot.lane.b32.xlu0 %v3530, 20
    %v3556 = vpop.permute.xlu0 %3555
    %3557 = vrot.lane.b32.xlu0 %v3531, 20
    %v3558 = vpop.permute.xlu0 %3557
    %3559 = vrot.lane.b32.xlu0 %v3532, 20
    %v3560 = vpop.permute.xlu0 %3559
    %3561 = vrot.lane.b32.xlu0 %v3533, 20
    %v3562 = vpop.permute.xlu0 %3561
    %3563 = vrot.lane.b32.xlu0 %v3534, 20
    %v3564 = vpop.permute.xlu0 %3563
    %v3565 = vsel %vm728, %v3546, %v3548
    %v3566 = vsel %vm728, %v3548, %v3550
    %v3567 = vsel %vm728, %v3550, %v3552
    %v3568 = vsel %vm728, %v3552, %v3554
    %v3569 = vsel %vm728, %v3556, %v3558
    %v3570 = vsel %vm728, %v3558, %v3560
    %v3571 = vsel %vm728, %v3560, %v3562
    %v3572 = vsel %vm728, %v3562, %v3564
    %v3583 = vadd.f32 %v3515, %v3565
    %v3584 = vadd.f32 %v3516, %v3566
    %v3585 = vadd.f32 %v3517, %v3567
    %v3586 = vadd.f32 %v3518, %v3568
    %v3587 = vadd.f32 %v3519, %v3554
    %v3588 = vadd.f32 %v3520, %v3569
    %v3589 = vadd.f32 %v3521, %v3570
    %v3590 = vadd.f32 %v3522, %v3571
    %v3591 = vadd.f32 %v3523, %v3572
    %v3592 = vadd.f32 %v3524, %v3564
    %v3593 = vadd.f32 %v3583, %v759
    %v3594 = vadd.f32 %v3584, %v759
    %v3595 = vadd.f32 %v3585, %v759
    %v3596 = vadd.f32 %v3586, %v759
    %v3597 = vadd.f32 %v3587, %v759
    %v3598 = vadd.f32 %v3588, %v763
    %v3599 = vadd.f32 %v3589, %v763
    %v3600 = vadd.f32 %v3590, %v763
    %v3601 = vadd.f32 %v3591, %v763
    %v3602 = vadd.f32 %v3592, %v763
    %3613 = vrot.lane.b32.xlu0 %v3593, 127
    %v3614 = vpop.permute.xlu0 %3613
    %3615 = vrot.lane.b32.xlu0 %v3594, 127
    %v3616 = vpop.permute.xlu0 %3615
    %3617 = vrot.lane.b32.xlu0 %v3595, 127
    %v3618 = vpop.permute.xlu0 %3617
    %3619 = vrot.lane.b32.xlu0 %v3596, 127
    %v3620 = vpop.permute.xlu0 %3619
    %3621 = vrot.lane.b32.xlu0 %v3597, 127
    %v3622 = vpop.permute.xlu0 %3621
    %3623 = vrot.lane.b32.xlu0 %v3598, 127
    %v3624 = vpop.permute.xlu0 %3623
    %3625 = vrot.lane.b32.xlu0 %v3599, 127
    %v3626 = vpop.permute.xlu0 %3625
    %3627 = vrot.lane.b32.xlu0 %v3600, 127
    %v3628 = vpop.permute.xlu0 %3627
    %3629 = vrot.lane.b32.xlu0 %v3601, 127
    %v3630 = vpop.permute.xlu0 %3629
    %3631 = vrot.lane.b32.xlu0 %v3602, 127
    %v3632 = vpop.permute.xlu0 %3631
    %v3633 = vsel %vm189, %v3614, %v3616
    %v3634 = vsel %vm189, %v3616, %v3618
    %v3635 = vsel %vm189, %v3618, %v3620
    %v3636 = vsel %vm189, %v3620, %v3622
    %v3637 = vsel %vm189, %v3624, %v3626
    %v3638 = vsel %vm189, %v3626, %v3628
    %v3639 = vsel %vm189, %v3628, %v3630
    %v3640 = vsel %vm189, %v3630, %v3632
    %v3649 = vmax.f32 %v3593, %v3633
    %v3650 = vmax.f32 %v3594, %v3634
    %v3651 = vmax.f32 %v3595, %v3635
    %v3652 = vmax.f32 %v3596, %v3636
    %v3653 = vmax.f32 %v3598, %v3637
    %v3654 = vmax.f32 %v3599, %v3638
    %v3655 = vmax.f32 %v3600, %v3639
    %v3656 = vmax.f32 %v3601, %v3640
    %3657 = vrot.lane.b32.xlu0 %v3593, 126
    %v3658 = vpop.permute.xlu0 %3657
    %3659 = vrot.lane.b32.xlu0 %v3594, 126
    %v3660 = vpop.permute.xlu0 %3659
    %3661 = vrot.lane.b32.xlu0 %v3595, 126
    %v3662 = vpop.permute.xlu0 %3661
    %3663 = vrot.lane.b32.xlu0 %v3596, 126
    %v3664 = vpop.permute.xlu0 %3663
    %3665 = vrot.lane.b32.xlu0 %v3597, 126
    %v3666 = vpop.permute.xlu0 %3665
    %3667 = vrot.lane.b32.xlu0 %v3598, 126
    %v3668 = vpop.permute.xlu0 %3667
    %3669 = vrot.lane.b32.xlu0 %v3599, 126
    %v3670 = vpop.permute.xlu0 %3669
    %3671 = vrot.lane.b32.xlu0 %v3600, 126
    %v3672 = vpop.permute.xlu0 %3671
    %3673 = vrot.lane.b32.xlu0 %v3601, 126
    %v3674 = vpop.permute.xlu0 %3673
    %3675 = vrot.lane.b32.xlu0 %v3602, 126
    %v3676 = vpop.permute.xlu0 %3675
    %v3677 = vsel %vm266, %v3658, %v3660
    %v3678 = vsel %vm266, %v3660, %v3662
    %v3679 = vsel %vm266, %v3662, %v3664
    %v3680 = vsel %vm266, %v3664, %v3666
    %v3681 = vsel %vm266, %v3668, %v3670
    %v3682 = vsel %vm266, %v3670, %v3672
    %v3683 = vsel %vm266, %v3672, %v3674
    %v3684 = vsel %vm266, %v3674, %v3676
    %v3693 = vmax.f32 %v3649, %v3677
    %v3694 = vmax.f32 %v3650, %v3678
    %v3695 = vmax.f32 %v3651, %v3679
    %v3696 = vmax.f32 %v3652, %v3680
    %v3697 = vmax.f32 %v3653, %v3681
    %v3698 = vmax.f32 %v3654, %v3682
    %v3699 = vmax.f32 %v3655, %v3683
    %v3700 = vmax.f32 %v3656, %v3684
    %3701 = vst [vmem:[#allocation2 + $0x80] sm:$0xff] %v3693
    %3702 = vst [vmem:[#allocation2 + $0x88] sm:$0xff] %v3694
    %3703 = vst [vmem:[#allocation2 + $0x90] sm:$0xff] %v3695
    %3704 = vst [vmem:[#allocation2 + $0x98] sm:$0xff] %v3696
    %3705 = vst [vmem:[#allocation2 + $0x130] sm:$0x1] %v3697
    %3706 = vst [vmem:[#allocation2 + $0x138] sm:$0x1] %v3698
    %3707 = vst [vmem:[#allocation2 + $0x140] sm:$0x1] %v3699
    %3708 = vst [vmem:[#allocation2 + $0x148] sm:$0x1] %v3700
    %v3709 = vld [vmem:[%s0 + $0x14] sm:$0x3]
    %v3711 = vlaneseq
    %v3712 = vshrl.u32 %v3711, 7
    %v3713 = vsub.s32 0, %v3712
    %v3714 = vrot.slane %v3709, %v3713
    %v3715 = vlaneseq
    %v3716 = vshrl.u32 %v3715, 7
    %v3717 = vsub.s32 1, %v3716
    %v3718 = vrot.slane %v3709, %v3717
    %v3721 = vmul.f32 %v88, %v3714
    %v3722 = vmul.f32 %v88, %v3718
    %v3723 = vmul.f32 %v93, %v3714
    %v3724 = vmul.f32 %v93, %v3718
    %v3725 = vadd.f32 %v3721, 0.0
    %v3726 = vadd.f32 %v3722, 0.0
    %v3727 = vadd.f32 %v3723, 0.0
    %v3728 = vadd.f32 %v3724, 0.0
    %v3729 = vmul.f32 %v143, %v3714
    %v3730 = vmul.f32 %v143, %v3718
    %v3731 = vmul.f32 %v147, %v3714
    %v3732 = vmul.f32 %v147, %v3718
    %3737 = vrot.lane.b32.xlu0 %v3729, 127
    %v3738 = vpop.permute.xlu0 %3737
    %3739 = vrot.lane.b32.xlu0 %v3730, 127
    %v3740 = vpop.permute.xlu0 %3739
    %3741 = vrot.lane.b32.xlu0 %v3731, 127
    %v3742 = vpop.permute.xlu0 %3741
    %3743 = vrot.lane.b32.xlu0 %v3732, 127
    %v3744 = vpop.permute.xlu0 %3743
    %v3745 = vsel %vm189, %v3738, %v3740
    %v3746 = vsel %vm189, %v3742, %v3744
    %v3751 = vadd.f32 %v3725, %v3745
    %v3752 = vadd.f32 %v3726, %v3740
    %v3753 = vadd.f32 %v3727, %v3746
    %v3754 = vadd.f32 %v3728, %v3744
    %v3755 = vmul.f32 %v220, %v3714
    %v3756 = vmul.f32 %v220, %v3718
    %v3757 = vmul.f32 %v224, %v3714
    %v3758 = vmul.f32 %v224, %v3718
    %3763 = vrot.lane.b32.xlu0 %v3755, 126
    %v3764 = vpop.permute.xlu0 %3763
    %3765 = vrot.lane.b32.xlu0 %v3756, 126
    %v3766 = vpop.permute.xlu0 %3765
    %3767 = vrot.lane.b32.xlu0 %v3757, 126
    %v3768 = vpop.permute.xlu0 %3767
    %3769 = vrot.lane.b32.xlu0 %v3758, 126
    %v3770 = vpop.permute.xlu0 %3769
    %v3771 = vsel %vm266, %v3764, %v3766
    %v3772 = vsel %vm266, %v3768, %v3770
    %v3777 = vadd.f32 %v3751, %v3771
    %v3778 = vadd.f32 %v3752, %v3766
    %v3779 = vadd.f32 %v3753, %v3772
    %v3780 = vadd.f32 %v3754, %v3770
    %v3781 = vmul.f32 %v297, %v3714
    %v3782 = vmul.f32 %v297, %v3718
    %v3783 = vmul.f32 %v301, %v3714
    %v3784 = vmul.f32 %v301, %v3718
    %3789 = vrot.lane.b32.xlu0 %v3781, 75
    %v3790 = vpop.permute.xlu0 %3789
    %3791 = vrot.lane.b32.xlu0 %v3782, 75
    %v3792 = vpop.permute.xlu0 %3791
    %3793 = vrot.lane.b32.xlu0 %v3783, 75
    %v3794 = vpop.permute.xlu0 %3793
    %3795 = vrot.lane.b32.xlu0 %v3784, 75
    %v3796 = vpop.permute.xlu0 %3795
    %v3797 = vsel %vm343, %v3790, %v3792
    %v3798 = vsel %vm343, %v3794, %v3796
    %v3803 = vadd.f32 %v3777, %v3797
    %v3804 = vadd.f32 %v3778, %v3792
    %v3805 = vadd.f32 %v3779, %v3798
    %v3806 = vadd.f32 %v3780, %v3796
    %v3807 = vmul.f32 %v374, %v3714
    %v3808 = vmul.f32 %v374, %v3718
    %v3809 = vmul.f32 %v378, %v3714
    %v3810 = vmul.f32 %v378, %v3718
    %3815 = vrot.lane.b32.xlu0 %v3807, 74
    %v3816 = vpop.permute.xlu0 %3815
    %3817 = vrot.lane.b32.xlu0 %v3808, 74
    %v3818 = vpop.permute.xlu0 %3817
    %3819 = vrot.lane.b32.xlu0 %v3809, 74
    %v3820 = vpop.permute.xlu0 %3819
    %3821 = vrot.lane.b32.xlu0 %v3810, 74
    %v3822 = vpop.permute.xlu0 %3821
    %v3823 = vsel %vm420, %v3816, %v3818
    %v3824 = vsel %vm420, %v3820, %v3822
    %v3829 = vadd.f32 %v3803, %v3823
    %v3830 = vadd.f32 %v3804, %v3818
    %v3831 = vadd.f32 %v3805, %v3824
    %v3832 = vadd.f32 %v3806, %v3822
    %v3833 = vmul.f32 %v451, %v3714
    %v3834 = vmul.f32 %v451, %v3718
    %v3835 = vmul.f32 %v455, %v3714
    %v3836 = vmul.f32 %v455, %v3718
    %3841 = vrot.lane.b32.xlu0 %v3833, 73
    %v3842 = vpop.permute.xlu0 %3841
    %3843 = vrot.lane.b32.xlu0 %v3834, 73
    %v3844 = vpop.permute.xlu0 %3843
    %3845 = vrot.lane.b32.xlu0 %v3835, 73
    %v3846 = vpop.permute.xlu0 %3845
    %3847 = vrot.lane.b32.xlu0 %v3836, 73
    %v3848 = vpop.permute.xlu0 %3847
    %v3849 = vsel %vm497, %v3842, %v3844
    %v3850 = vsel %vm497, %v3846, %v3848
    %v3855 = vadd.f32 %v3829, %v3849
    %v3856 = vadd.f32 %v3830, %v3844
    %v3857 = vadd.f32 %v3831, %v3850
    %v3858 = vadd.f32 %v3832, %v3848
    %v3859 = vmul.f32 %v528, %v3714
    %v3860 = vmul.f32 %v528, %v3718
    %v3861 = vmul.f32 %v532, %v3714
    %v3862 = vmul.f32 %v532, %v3718
    %3867 = vrot.lane.b32.xlu0 %v3859, 22
    %v3868 = vpop.permute.xlu0 %3867
    %3869 = vrot.lane.b32.xlu0 %v3860, 22
    %v3870 = vpop.permute.xlu0 %3869
    %3871 = vrot.lane.b32.xlu0 %v3861, 22
    %v3872 = vpop.permute.xlu0 %3871
    %3873 = vrot.lane.b32.xlu0 %v3862, 22
    %v3874 = vpop.permute.xlu0 %3873
    %v3875 = vsel %vm574, %v3868, %v3870
    %v3876 = vsel %vm574, %v3872, %v3874
    %v3881 = vadd.f32 %v3855, %v3875
    %v3882 = vadd.f32 %v3856, %v3870
    %v3883 = vadd.f32 %v3857, %v3876
    %v3884 = vadd.f32 %v3858, %v3874
    %v3885 = vmul.f32 %v605, %v3714
    %v3886 = vmul.f32 %v605, %v3718
    %v3887 = vmul.f32 %v609, %v3714
    %v3888 = vmul.f32 %v609, %v3718
    %3893 = vrot.lane.b32.xlu0 %v3885, 21
    %v3894 = vpop.permute.xlu0 %3893
    %3895 = vrot.lane.b32.xlu0 %v3886, 21
    %v3896 = vpop.permute.xlu0 %3895
    %3897 = vrot.lane.b32.xlu0 %v3887, 21
    %v3898 = vpop.permute.xlu0 %3897
    %3899 = vrot.lane.b32.xlu0 %v3888, 21
    %v3900 = vpop.permute.xlu0 %3899
    %v3901 = vsel %vm651, %v3894, %v3896
    %v3902 = vsel %vm651, %v3898, %v3900
    %v3907 = vadd.f32 %v3881, %v3901
    %v3908 = vadd.f32 %v3882, %v3896
    %v3909 = vadd.f32 %v3883, %v3902
    %v3910 = vadd.f32 %v3884, %v3900
    %v3911 = vmul.f32 %v682, %v3714
    %v3912 = vmul.f32 %v682, %v3718
    %v3913 = vmul.f32 %v686, %v3714
    %v3914 = vmul.f32 %v686, %v3718
    %3919 = vrot.lane.b32.xlu0 %v3911, 20
    %v3920 = vpop.permute.xlu0 %3919
    %3921 = vrot.lane.b32.xlu0 %v3912, 20
    %v3922 = vpop.permute.xlu0 %3921
    %3923 = vrot.lane.b32.xlu0 %v3913, 20
    %v3924 = vpop.permute.xlu0 %3923
    %3925 = vrot.lane.b32.xlu0 %v3914, 20
    %v3926 = vpop.permute.xlu0 %3925
    %v3927 = vsel %vm728, %v3920, %v3922
    %v3928 = vsel %vm728, %v3924, %v3926
    %v3933 = vadd.f32 %v3907, %v3927
    %v3934 = vadd.f32 %v3908, %v3922
    %v3935 = vadd.f32 %v3909, %v3928
    %v3936 = vadd.f32 %v3910, %v3926
    %v3937 = vadd.f32 %v3933, %v759
    %v3938 = vadd.f32 %v3934, %v759
    %v3939 = vadd.f32 %v3935, %v763
    %v3940 = vadd.f32 %v3936, %v763
    %3945 = vrot.lane.b32.xlu0 %v3937, 127
    %v3946 = vpop.permute.xlu0 %3945
    %3947 = vrot.lane.b32.xlu0 %v3938, 127
    %v3948 = vpop.permute.xlu0 %3947
    %3949 = vrot.lane.b32.xlu0 %v3939, 127
    %v3950 = vpop.permute.xlu0 %3949
    %3951 = vrot.lane.b32.xlu0 %v3940, 127
    %v3952 = vpop.permute.xlu0 %3951
    %v3953 = vsel %vm189, %v3946, %v3948
    %v3954 = vsel %vm189, %v3950, %v3952
    %v3959 = vmax.f32 %v3937, %v3953
    %v3960 = vmax.f32 %v3938, %v3948
    %v3961 = vmax.f32 %v3939, %v3954
    %v3962 = vmax.f32 %v3940, %v3952
    %3963 = vrot.lane.b32.xlu0 %v3937, 126
    %v3964 = vpop.permute.xlu0 %3963
    %3965 = vrot.lane.b32.xlu0 %v3938, 126
    %v3966 = vpop.permute.xlu0 %3965
    %3967 = vrot.lane.b32.xlu0 %v3939, 126
    %v3968 = vpop.permute.xlu0 %3967
    %3969 = vrot.lane.b32.xlu0 %v3940, 126
    %v3970 = vpop.permute.xlu0 %3969
    %v3971 = vsel %vm266, %v3964, %v3966
    %v3972 = vsel %vm266, %v3968, %v3970
    %v3977 = vmax.f32 %v3959, %v3971
    %v3978 = vmax.f32 %v3960, %v3966
    %v3979 = vmax.f32 %v3961, %v3972
    %v3980 = vmax.f32 %v3962, %v3970
    %3981 = vst [vmem:[#allocation2 + $0xa0] sm:$0xff] %v3977
    %vm3982 = vcmask 89088
    %3983 = vst.msk [vmem:[#allocation2 + $0xa8] sm:$0xff] %vm3982, %v3978
    %3984 = vst [vmem:[#allocation2 + $0x150] sm:$0x1] %v3979
    %vm3985 = vcmask 81920
    %3986 = vst.msk [vmem:[#allocation2 + $0x158] sm:$0x1] %vm3985, %v3980
    %v3987 = vlaneseq
    %v3988 = vshrl.u32 %v3987, 7
    %v3989 = vadd.s32 %v3988, 8
    %v3990 = vadd.s32 %v3988, 16
    %v3991 = vadd.s32 %v3988, 24
    %v3992 = vadd.s32 %v3988, 32
    %v3993 = vadd.s32 %v3988, 40
    %v3994 = vadd.s32 %v3988, 48
    %v3995 = vlaneseq
    %v3996 = vand.u32 %v3995, 127
    %v3997 = vmul.u32 %v3996, 3
    %vm3998 = vcmp.eq.s32.totalorder %v3988, %v3997
    %vm3999 = vcmp.eq.s32.totalorder %v3989, %v3997
    %vm4000 = vcmp.eq.s32.totalorder %v3990, %v3997
    %vm4001 = vcmp.eq.s32.totalorder %v3991, %v3997
    %vm4002 = vcmp.eq.s32.totalorder %v3992, %v3997
    %vm4003 = vcmp.eq.s32.totalorder %v3993, %v3997
    %vm4004 = vcmp.eq.s32.totalorder %v3994, %v3997
    %v4005 = vsel %vm3998, 1, 0
    %v4006 = vsel %vm3999, 1, 0
    %v4007 = vsel %vm4000, 1, 0
    %v4008 = vsel %vm4001, 1, 0
    %v4009 = vsel %vm4002, 1, 0
    %v4010 = vsel %vm4003, 1, 0
    %v4011 = vsel %vm4004, 1, 0
    %v4012 = vcvt.s32.f32 %v4005
    %v4013 = vcvt.s32.f32 %v4006
    %v4014 = vcvt.s32.f32 %v4007
    %v4015 = vcvt.s32.f32 %v4008
    %v4016 = vcvt.s32.f32 %v4009
    %v4017 = vcvt.s32.f32 %v4010
    %v4018 = vcvt.s32.f32 %v4011
    %v4019 = vld [vmem:[#allocation2] sm:$0xff]
    %v4020 = vld [vmem:[#allocation2 + $0xb0] sm:$0x1]
    %4023 = vrot.lane.b32.xlu0 %v4019, 75
    %v4024 = vpop.permute.xlu0 %4023
    %4025 = vrot.lane.b32.xlu0 %v4020, 75
    %v4026 = vpop.permute.xlu0 %4025
    %v4029 = vmax.f32 %v4019, %v4024
    %v4030 = vmax.f32 %v4020, %v4026
    %v4031 = vld [vmem:[#allocation2 + $0x8] sm:$0xff]
    %v4032 = vld [vmem:[#allocation2 + $0xb8] sm:$0x1]
    %4035 = vrot.lane.b32.xlu0 %v4019, 22
    %v4036 = vpop.permute.xlu0 %4035
    %4037 = vrot.lane.b32.xlu0 %v4031, 22
    %v4038 = vpop.permute.xlu0 %4037
    %4039 = vrot.lane.b32.xlu0 %v4020, 22
    %v4040 = vpop.permute.xlu0 %4039
    %4041 = vrot.lane.b32.xlu0 %v4032, 22
    %v4042 = vpop.permute.xlu0 %4041
    %v4043 = vsel %vm574, %v4036, %v4038
    %v4044 = vsel %vm574, %v4040, %v4042
    %v4047 = vmax.f32 %v4029, %v4043
    %v4048 = vmax.f32 %v4030, %v4044
    %vm4049 = vcmask 400384
    %v4051 = vsel %vm4049, %v4047, 0
    %v4054 = vsel %vm4049, %v4048, 0
    %vm4056 = vcmask 1040384
    %v4058 = vsel %vm4056, %v4018, 0
    %4060 = vmatprep.subr.mxu0 0.0
    %4061 = vmatpush1.msra.mxu0 0.0
    %4062 = vmatprep.subr.mxu0 0.0
    %4063 = vmatpush1.msra.mxu0 0.0
    %4064 = vmatprep.subr.mxu0 0.0
    %4065 = vmatpush1.msra.mxu0 0.0
    %4066 = vmatprep.subr.mxu0 0.0
    %4067 = vmatpush1.msra.mxu0 0.0
    %4068 = vmatprep.subr.mxu0 0.0
    %4069 = vmatpush1.msra.mxu0 0.0
    %4070 = vmatprep.subr.mxu0 0.0
    %4071 = vmatpush1.msra.mxu0 0.0
    %4072 = vmatprep.subr.mxu0 0.0
    %4073 = vmatpush1.msra.mxu0 0.0
    %4074 = vmatprep.subr.mxu0 0.0
    %4075 = vmatpush1.msra.mxu0 0.0
    %4076 = vmatprep.subr.mxu0 0.0
    %4077 = vmatpush1.msra.mxu0 0.0
    %4078 = vmatprep.subr.mxu0 0.0
    %4079 = vmatpush1.msra.mxu0 %v4058
    %4080 = vmatprep.subr.mxu0 0.0
    %4081 = vmatpush1.msra.mxu0 %v4017
    %4082 = vmatprep.subr.mxu0 0.0
    %4083 = vmatpush1.msra.mxu0 %v4016
    %4084 = vmatprep.subr.mxu0 0.0
    %4085 = vmatpush1.msra.mxu0 %v4015
    %4086 = vmatprep.subr.mxu0 0.0
    %4087 = vmatpush1.msra.mxu0 %v4014
    %4088 = vmatprep.subr.mxu0 0.0
    %4089 = vmatpush1.msra.mxu0 %v4013
    %4090 = vmatprep.subr.mxu0 0.0
    %4091 = vmatpush1.msra.mxu0 %v4012
    %4092 = vmatprep.subr.mxu0 0.0
    %4093 = vmatpush2.msra.mxu0 0.0
    %4094 = vmatprep.subr.mxu0 0.0
    %4095 = vmatpush2.msra.mxu0 0.0
    %4096 = vmatprep.subr.mxu0 0.0
    %4097 = vmatpush2.msra.mxu0 0.0
    %4098 = vmatprep.subr.mxu0 0.0
    %4099 = vmatpush2.msra.mxu0 0.0
    %4100 = vmatprep.subr.mxu0 0.0
    %4101 = vmatpush2.msra.mxu0 0.0
    %4102 = vmatprep.subr.mxu0 0.0
    %4103 = vmatpush2.msra.mxu0 0.0
    %4104 = vmatprep.subr.mxu0 0.0
    %4105 = vmatpush2.msra.mxu0 0.0
    %4106 = vmatprep.subr.mxu0 0.0
    %4107 = vmatpush2.msra.mxu0 0.0
    %4108 = vmatprep.subr.mxu0 0.0
    %4109 = vmatpush2.msra.mxu0 0.0
    %4110 = vmatprep.subr.mxu0 0.0
    %4111 = vmatpush2.msra.mxu0 0.0
    %4112 = vmatprep.subr.mxu0 0.0
    %4113 = vmatpush2.msra.mxu0 0.0
    %4114 = vmatprep.subr.mxu0 0.0
    %4115 = vmatpush2.msra.mxu0 0.0
    %4116 = vmatprep.subr.mxu0 0.0
    %4117 = vmatpush2.msra.mxu0 0.0
    %4118 = vmatprep.subr.mxu0 0.0
    %4119 = vmatpush2.msra.mxu0 0.0
    %4120 = vmatprep.subr.mxu0 0.0
    %4121 = vmatpush2.msra.mxu0 0.0
    %4122 = vmatprep.subr.mxu0 0.0
    %4123 = vmatpush2.msra.mxu0 0.0
    %4124 = vmatprep.mubr.f32.mxu0 0.0
    %4125 = vmatmul.mubr.f32.gmra.mxu0 %v4051
    %v4126 = vpop.f32.mrf.mxu0
    %v4127 = vadd.f32 0.0, %v4126
    %v4128 = vpop.f32.mrf.mxu0
    %4129 = vmatprep.mubr.f32.mxu0 0.0
    %4130 = vmatmul.mubr.f32.gmra.mxu0 %v4054
    %v4131 = vpop.f32.mrf.mxu0
    %v4132 = vadd.f32 0.0, %v4131
    %v4133 = vpop.f32.mrf.mxu0
    %4134 = vdwg.mxu0
    %vm4135 = vcmask 138240
    %4136 = vst.msk [vmem:[#allocation3] sm:$0xff] %vm4135, %v4127
    %vm4137 = vcmask 131072
    %4138 = vst.msk [vmem:[#allocation3 + $0x18] sm:$0x1] %vm4137, %v4132
    %v4139 = vld [vmem:[#allocation2 + $0x8] sm:$0xff]
    %v4140 = vld [vmem:[#allocation2 + $0xb8] sm:$0x1]
    %v4141 = vld [vmem:[#allocation2 + $0x10] sm:$0xff]
    %v4142 = vld [vmem:[#allocation2 + $0xc0] sm:$0x1]
    %4147 = vrot.lane.b32.xlu0 %v4139, 75
    %v4148 = vpop.permute.xlu0 %4147
    %4149 = vrot.lane.b32.xlu0 %v4141, 75
    %v4150 = vpop.permute.xlu0 %4149
    %4151 = vrot.lane.b32.xlu0 %v4140, 75
    %v4152 = vpop.permute.xlu0 %4151
    %4153 = vrot.lane.b32.xlu0 %v4142, 75
    %v4154 = vpop.permute.xlu0 %4153
    %v4155 = vsel %vm343, %v4148, %v4150
    %v4156 = vsel %vm343, %v4152, %v4154
    %v4159 = vmax.f32 %v4139, %v4155
    %v4160 = vmax.f32 %v4140, %v4156
    %4161 = vrot.lane.b32.xlu0 %v4141, 22
    %v4162 = vpop.permute.xlu0 %4161
    %4163 = vrot.lane.b32.xlu0 %v4142, 22
    %v4164 = vpop.permute.xlu0 %4163
    %v4167 = vmax.f32 %v4159, %v4162
    %v4168 = vmax.f32 %v4160, %v4164
    %4171 = vrot.lane.b32.xlu0 %v4167, 97
    %v4172 = vpop.permute.xlu0 %4171
    %4173 = vrot.lane.b32.xlu0 %v4168, 97
    %v4174 = vpop.permute.xlu0 %4173
    %v4175 = vsel %vm4049, %v4172, 0
    %v4177 = vsel %vm4049, %v4174, 0
    %4179 = vmatprep.subr.mxu0 0.0
    %4180 = vmatpush1.msra.mxu0 0.0
    %4181 = vmatprep.subr.mxu0 0.0
    %4182 = vmatpush1.msra.mxu0 0.0
    %4183 = vmatprep.subr.mxu0 0.0
    %4184 = vmatpush1.msra.mxu0 0.0
    %4185 = vmatprep.subr.mxu0 0.0
    %4186 = vmatpush1.msra.mxu0 0.0
    %4187 = vmatprep.subr.mxu0 0.0
    %4188 = vmatpush1.msra.mxu0 0.0
    %4189 = vmatprep.subr.mxu0 0.0
    %4190 = vmatpush1.msra.mxu0 0.0
    %4191 = vmatprep.subr.mxu0 0.0
    %4192 = vmatpush1.msra.mxu0 0.0
    %4193 = vmatprep.subr.mxu0 0.0
    %4194 = vmatpush1.msra.mxu0 0.0
    %4195 = vmatprep.subr.mxu0 0.0
    %4196 = vmatpush1.msra.mxu0 0.0
    %4197 = vmatprep.subr.mxu0 0.0
    %4198 = vmatpush1.msra.mxu0 %v4058
    %4199 = vmatprep.subr.mxu0 0.0
    %4200 = vmatpush1.msra.mxu0 %v4017
    %4201 = vmatprep.subr.mxu0 0.0
    %4202 = vmatpush1.msra.mxu0 %v4016
    %4203 = vmatprep.subr.mxu0 0.0
    %4204 = vmatpush1.msra.mxu0 %v4015
    %4205 = vmatprep.subr.mxu0 0.0
    %4206 = vmatpush1.msra.mxu0 %v4014
    %4207 = vmatprep.subr.mxu0 0.0
    %4208 = vmatpush1.msra.mxu0 %v4013
    %4209 = vmatprep.subr.mxu0 0.0
    %4210 = vmatpush1.msra.mxu0 %v4012
    %4211 = vmatprep.subr.mxu0 0.0
    %4212 = vmatpush2.msra.mxu0 0.0
    %4213 = vmatprep.subr.mxu0 0.0
    %4214 = vmatpush2.msra.mxu0 0.0
    %4215 = vmatprep.subr.mxu0 0.0
    %4216 = vmatpush2.msra.mxu0 0.0
    %4217 = vmatprep.subr.mxu0 0.0
    %4218 = vmatpush2.msra.mxu0 0.0
    %4219 = vmatprep.subr.mxu0 0.0
    %4220 = vmatpush2.msra.mxu0 0.0
    %4221 = vmatprep.subr.mxu0 0.0
    %4222 = vmatpush2.msra.mxu0 0.0
    %4223 = vmatprep.subr.mxu0 0.0
    %4224 = vmatpush2.msra.mxu0 0.0
    %4225 = vmatprep.subr.mxu0 0.0
    %4226 = vmatpush2.msra.mxu0 0.0
    %4227 = vmatprep.subr.mxu0 0.0
    %4228 = vmatpush2.msra.mxu0 0.0
    %4229 = vmatprep.subr.mxu0 0.0
    %4230 = vmatpush2.msra.mxu0 0.0
    %4231 = vmatprep.subr.mxu0 0.0
    %4232 = vmatpush2.msra.mxu0 0.0
    %4233 = vmatprep.subr.mxu0 0.0
    %4234 = vmatpush2.msra.mxu0 0.0
    %4235 = vmatprep.subr.mxu0 0.0
    %4236 = vmatpush2.msra.mxu0 0.0
    %4237 = vmatprep.subr.mxu0 0.0
    %4238 = vmatpush2.msra.mxu0 0.0
    %4239 = vmatprep.subr.mxu0 0.0
    %4240 = vmatpush2.msra.mxu0 0.0
    %4241 = vmatprep.subr.mxu0 0.0
    %4242 = vmatpush2.msra.mxu0 0.0
    %4243 = vmatprep.mubr.f32.mxu0 0.0
    %4244 = vmatmul.mubr.f32.gmra.mxu0 %v4175
    %v4245 = vpop.f32.mrf.mxu0
    %v4246 = vadd.f32 0.0, %v4245
    %v4247 = vpop.f32.mrf.mxu0
    %4248 = vmatprep.mubr.f32.mxu0 0.0
    %4249 = vmatmul.mubr.f32.gmra.mxu0 %v4177
    %v4250 = vpop.f32.mrf.mxu0
    %v4251 = vadd.f32 0.0, %v4250
    %v4252 = vpop.f32.mrf.mxu0
    %4253 = vdwg.mxu0
    %4256 = vrot.lane.b32.xlu0 %v4246, 17
    %v4257 = vpop.permute.xlu0 %4256
    %4258 = vrot.lane.b32.xlu0 %v4251, 17
    %v4259 = vpop.permute.xlu0 %4258
    %vm4262 = vcmask 277640
    %4263 = vst.msk [vmem:[#allocation3] sm:$0xff] %vm4262, %v4257
    %vm4264 = vcmask 270472
    %4265 = vst.msk [vmem:[#allocation3 + $0x18] sm:$0x1] %vm4264, %v4259
    %v4266 = vld [vmem:[#allocation2 + $0x10] sm:$0xff]
    %v4267 = vld [vmem:[#allocation2 + $0xc0] sm:$0x1]
    %v4268 = vld [vmem:[#allocation2 + $0x18] sm:$0xff]
    %v4269 = vld [vmem:[#allocation2 + $0xc8] sm:$0x1]
    %4274 = vrot.lane.b32.xlu0 %v4266, 75
    %v4275 = vpop.permute.xlu0 %4274
    %4276 = vrot.lane.b32.xlu0 %v4268, 75
    %v4277 = vpop.permute.xlu0 %4276
    %4278 = vrot.lane.b32.xlu0 %v4267, 75
    %v4279 = vpop.permute.xlu0 %4278
    %4280 = vrot.lane.b32.xlu0 %v4269, 75
    %v4281 = vpop.permute.xlu0 %4280
    %v4282 = vsel %vm343, %v4275, %v4277
    %v4283 = vsel %vm343, %v4279, %v4281
    %v4286 = vmax.f32 %v4266, %v4282
    %v4287 = vmax.f32 %v4267, %v4283
    %4288 = vrot.lane.b32.xlu0 %v4268, 22
    %v4289 = vpop.permute.xlu0 %4288
    %4290 = vrot.lane.b32.xlu0 %v4269, 22
    %v4291 = vpop.permute.xlu0 %4290
    %v4294 = vmax.f32 %v4286, %v4289
    %v4295 = vmax.f32 %v4287, %v4291
    %4298 = vrot.lane.b32.xlu0 %v4294, 66
    %v4299 = vpop.permute.xlu0 %4298
    %4300 = vrot.lane.b32.xlu0 %v4295, 66
    %v4301 = vpop.permute.xlu0 %4300
    %v4302 = vsel %vm4049, %v4299, 0
    %v4304 = vsel %vm4049, %v4301, 0
    %4306 = vmatprep.subr.mxu0 0.0
    %4307 = vmatpush1.msra.mxu0 0.0
    %4308 = vmatprep.subr.mxu0 0.0
    %4309 = vmatpush1.msra.mxu0 0.0
    %4310 = vmatprep.subr.mxu0 0.0
    %4311 = vmatpush1.msra.mxu0 0.0
    %4312 = vmatprep.subr.mxu0 0.0
    %4313 = vmatpush1.msra.mxu0 0.0
    %4314 = vmatprep.subr.mxu0 0.0
    %4315 = vmatpush1.msra.mxu0 0.0
    %4316 = vmatprep.subr.mxu0 0.0
    %4317 = vmatpush1.msra.mxu0 0.0
    %4318 = vmatprep.subr.mxu0 0.0
    %4319 = vmatpush1.msra.mxu0 0.0
    %4320 = vmatprep.subr.mxu0 0.0
    %4321 = vmatpush1.msra.mxu0 0.0
    %4322 = vmatprep.subr.mxu0 0.0
    %4323 = vmatpush1.msra.mxu0 0.0
    %4324 = vmatprep.subr.mxu0 0.0
    %4325 = vmatpush1.msra.mxu0 %v4058
    %4326 = vmatprep.subr.mxu0 0.0
    %4327 = vmatpush1.msra.mxu0 %v4017
    %4328 = vmatprep.subr.mxu0 0.0
    %4329 = vmatpush1.msra.mxu0 %v4016
    %4330 = vmatprep.subr.mxu0 0.0
    %4331 = vmatpush1.msra.mxu0 %v4015
    %4332 = vmatprep.subr.mxu0 0.0
    %4333 = vmatpush1.msra.mxu0 %v4014
    %4334 = vmatprep.subr.mxu0 0.0
    %4335 = vmatpush1.msra.mxu0 %v4013
    %4336 = vmatprep.subr.mxu0 0.0
    %4337 = vmatpush1.msra.mxu0 %v4012
    %4338 = vmatprep.subr.mxu0 0.0
    %4339 = vmatpush2.msra.mxu0 0.0
    %4340 = vmatprep.subr.mxu0 0.0
    %4341 = vmatpush2.msra.mxu0 0.0
    %4342 = vmatprep.subr.mxu0 0.0
    %4343 = vmatpush2.msra.mxu0 0.0
    %4344 = vmatprep.subr.mxu0 0.0
    %4345 = vmatpush2.msra.mxu0 0.0
    %4346 = vmatprep.subr.mxu0 0.0
    %4347 = vmatpush2.msra.mxu0 0.0
    %4348 = vmatprep.subr.mxu0 0.0
    %4349 = vmatpush2.msra.mxu0 0.0
    %4350 = vmatprep.subr.mxu0 0.0
    %4351 = vmatpush2.msra.mxu0 0.0
    %4352 = vmatprep.subr.mxu0 0.0
    %4353 = vmatpush2.msra.mxu0 0.0
    %4354 = vmatprep.subr.mxu0 0.0
    %4355 = vmatpush2.msra.mxu0 0.0
    %4356 = vmatprep.subr.mxu0 0.0
    %4357 = vmatpush2.msra.mxu0 0.0
    %4358 = vmatprep.subr.mxu0 0.0
    %4359 = vmatpush2.msra.mxu0 0.0
    %4360 = vmatprep.subr.mxu0 0.0
    %4361 = vmatpush2.msra.mxu0 0.0
    %4362 = vmatprep.subr.mxu0 0.0
    %4363 = vmatpush2.msra.mxu0 0.0
    %4364 = vmatprep.subr.mxu0 0.0
    %4365 = vmatpush2.msra.mxu0 0.0
    %4366 = vmatprep.subr.mxu0 0.0
    %4367 = vmatpush2.msra.mxu0 0.0
    %4368 = vmatprep.subr.mxu0 0.0
    %4369 = vmatpush2.msra.mxu0 0.0
    %4370 = vmatprep.mubr.f32.mxu0 0.0
    %4371 = vmatmul.mubr.f32.gmra.mxu0 %v4302
    %v4372 = vpop.f32.mrf.mxu0
    %v4373 = vadd.f32 0.0, %v4372
    %v4374 = vpop.f32.mrf.mxu0
    %4375 = vmatprep.mubr.f32.mxu0 0.0
    %4376 = vmatmul.mubr.f32.gmra.mxu0 %v4304
    %v4377 = vpop.f32.mrf.mxu0
    %v4378 = vadd.f32 0.0, %v4377
    %v4379 = vpop.f32.mrf.mxu0
    %4380 = vdwg.mxu0
    %4383 = vrot.lane.b32.xlu0 %v4373, 34
    %v4384 = vpop.permute.xlu0 %4383
    %4385 = vrot.lane.b32.xlu0 %v4378, 34
    %v4386 = vpop.permute.xlu0 %4385
    %vm4389 = vcmask 417040
    %4390 = vst.msk [vmem:[#allocation3] sm:$0xff] %vm4389, %v4384
    %vm4391 = vcmask 409872
    %4392 = vst.msk [vmem:[#allocation3 + $0x18] sm:$0x1] %vm4391, %v4386
    %v4393 = vld [vmem:[#allocation2 + $0x18] sm:$0xff]
    %v4394 = vld [vmem:[#allocation2 + $0x20] sm:$0xff]
    %v4395 = vld [vmem:[#allocation2 + $0xc8] sm:$0x1]
    %v4396 = vld [vmem:[#allocation2 + $0xd0] sm:$0x1]
    %4399 = vrot.lane.b32.xlu0 %v4394, 75
    %v4400 = vpop.permute.xlu0 %4399
    %4401 = vrot.lane.b32.xlu0 %v4396, 75
    %v4402 = vpop.permute.xlu0 %4401
    %v4405 = vmax.f32 %v4393, %v4400
    %v4406 = vmax.f32 %v4394, %v4400
    %v4407 = vmax.f32 %v4395, %v4402
    %v4408 = vmax.f32 %v4396, %v4402
    %4409 = vrot.lane.b32.xlu0 %v4394, 22
    %v4410 = vpop.permute.xlu0 %4409
    %4411 = vrot.lane.b32.xlu0 %v4396, 22
    %v4412 = vpop.permute.xlu0 %4411
    %v4415 = vmax.f32 %v4405, %v4410
    %v4416 = vmax.f32 %v4406, %v4410
    %v4417 = vmax.f32 %v4407, %v4412
    %v4418 = vmax.f32 %v4408, %v4412
    %4423 = vrot.lane.b32.xlu0 %v4415, 35
    %v4424 = vpop.permute.xlu0 %4423
    %4425 = vrot.lane.b32.xlu0 %v4416, 35
    %v4426 = vpop.permute.xlu0 %4425
    %4427 = vrot.lane.b32.xlu0 %v4417, 35
    %v4428 = vpop.permute.xlu0 %4427
    %4429 = vrot.lane.b32.xlu0 %v4418, 35
    %v4430 = vpop.permute.xlu0 %4429
    %vm4431 = vcmask 285696
    %v4432 = vsel %vm4431, %v4424, %v4426
    %v4433 = vsel %vm4431, %v4428, %v4430
    %v4434 = vsel %vm4049, %v4432, 0
    %v4436 = vsel %vm4049, %v4433, 0
    %4438 = vmatprep.subr.mxu0 0.0
    %4439 = vmatpush1.msra.mxu0 0.0
    %4440 = vmatprep.subr.mxu0 0.0
    %4441 = vmatpush1.msra.mxu0 0.0
    %4442 = vmatprep.subr.mxu0 0.0
    %4443 = vmatpush1.msra.mxu0 0.0
    %4444 = vmatprep.subr.mxu0 0.0
    %4445 = vmatpush1.msra.mxu0 0.0
    %4446 = vmatprep.subr.mxu0 0.0
    %4447 = vmatpush1.msra.mxu0 0.0
    %4448 = vmatprep.subr.mxu0 0.0
    %4449 = vmatpush1.msra.mxu0 0.0
    %4450 = vmatprep.subr.mxu0 0.0
    %4451 = vmatpush1.msra.mxu0 0.0
    %4452 = vmatprep.subr.mxu0 0.0
    %4453 = vmatpush1.msra.mxu0 0.0
    %4454 = vmatprep.subr.mxu0 0.0
    %4455 = vmatpush1.msra.mxu0 0.0
    %4456 = vmatprep.subr.mxu0 0.0
    %4457 = vmatpush1.msra.mxu0 %v4058
    %4458 = vmatprep.subr.mxu0 0.0
    %4459 = vmatpush1.msra.mxu0 %v4017
    %4460 = vmatprep.subr.mxu0 0.0
    %4461 = vmatpush1.msra.mxu0 %v4016
    %4462 = vmatprep.subr.mxu0 0.0
    %4463 = vmatpush1.msra.mxu0 %v4015
    %4464 = vmatprep.subr.mxu0 0.0
    %4465 = vmatpush1.msra.mxu0 %v4014
    %4466 = vmatprep.subr.mxu0 0.0
    %4467 = vmatpush1.msra.mxu0 %v4013
    %4468 = vmatprep.subr.mxu0 0.0
    %4469 = vmatpush1.msra.mxu0 %v4012
    %4470 = vmatprep.subr.mxu0 0.0
    %4471 = vmatpush2.msra.mxu0 0.0
    %4472 = vmatprep.subr.mxu0 0.0
    %4473 = vmatpush2.msra.mxu0 0.0
    %4474 = vmatprep.subr.mxu0 0.0
    %4475 = vmatpush2.msra.mxu0 0.0
    %4476 = vmatprep.subr.mxu0 0.0
    %4477 = vmatpush2.msra.mxu0 0.0
    %4478 = vmatprep.subr.mxu0 0.0
    %4479 = vmatpush2.msra.mxu0 0.0
    %4480 = vmatprep.subr.mxu0 0.0
    %4481 = vmatpush2.msra.mxu0 0.0
    %4482 = vmatprep.subr.mxu0 0.0
    %4483 = vmatpush2.msra.mxu0 0.0
    %4484 = vmatprep.subr.mxu0 0.0
    %4485 = vmatpush2.msra.mxu0 0.0
    %4486 = vmatprep.subr.mxu0 0.0
    %4487 = vmatpush2.msra.mxu0 0.0
    %4488 = vmatprep.subr.mxu0 0.0
    %4489 = vmatpush2.msra.mxu0 0.0
    %4490 = vmatprep.subr.mxu0 0.0
    %4491 = vmatpush2.msra.mxu0 0.0
    %4492 = vmatprep.subr.mxu0 0.0
    %4493 = vmatpush2.msra.mxu0 0.0
    %4494 = vmatprep.subr.mxu0 0.0
    %4495 = vmatpush2.msra.mxu0 0.0
    %4496 = vmatprep.subr.mxu0 0.0
    %4497 = vmatpush2.msra.mxu0 0.0
    %4498 = vmatprep.subr.mxu0 0.0
    %4499 = vmatpush2.msra.mxu0 0.0
    %4500 = vmatprep.subr.mxu0 0.0
    %4501 = vmatpush2.msra.mxu0 0.0
    %4502 = vmatprep.mubr.f32.mxu0 0.0
    %4503 = vmatmul.mubr.f32.gmra.mxu0 %v4434
    %v4504 = vpop.f32.mrf.mxu0
    %v4505 = vadd.f32 0.0, %v4504
    %v4506 = vpop.f32.mrf.mxu0
    %4507 = vmatprep.mubr.f32.mxu0 0.0
    %4508 = vmatmul.mubr.f32.gmra.mxu0 %v4436
    %v4509 = vpop.f32.mrf.mxu0
    %v4510 = vadd.f32 0.0, %v4509
    %v4511 = vpop.f32.mrf.mxu0
    %4512 = vdwg.mxu0
    %4515 = vrot.lane.b32.xlu0 %v4505, 51
    %v4516 = vpop.permute.xlu0 %4515
    %4517 = vrot.lane.b32.xlu0 %v4510, 51
    %v4518 = vpop.permute.xlu0 %4517
    %vm4521 = vcmask 556440
    %4522 = vst.msk [vmem:[#allocation3] sm:$0xff] %vm4521, %v4516
    %vm4523 = vcmask 549272
    %4524 = vst.msk [vmem:[#allocation3 + $0x18] sm:$0x1] %vm4523, %v4518
    %v4525 = vld [vmem:[#allocation2 + $0x20] sm:$0xff]
    %v4526 = vld [vmem:[#allocation2 + $0x28] sm:$0xff]
    %v4527 = vld [vmem:[#allocation2 + $0xd0] sm:$0x1]
    %v4528 = vld [vmem:[#allocation2 + $0xd8] sm:$0x1]
    %4531 = vrot.lane.b32.xlu0 %v4526, 75
    %v4532 = vpop.permute.xlu0 %4531
    %4533 = vrot.lane.b32.xlu0 %v4528, 75
    %v4534 = vpop.permute.xlu0 %4533
    %v4537 = vmax.f32 %v4525, %v4532
    %v4538 = vmax.f32 %v4526, %v4532
    %v4539 = vmax.f32 %v4527, %v4534
    %v4540 = vmax.f32 %v4528, %v4534
    %v4541 = vld [vmem:[#allocation2 + $0x30] sm:$0xff]
    %v4542 = vld [vmem:[#allocation2 + $0xe0] sm:$0x1]
    %4545 = vrot.lane.b32.xlu0 %v4526, 22
    %v4546 = vpop.permute.xlu0 %4545
    %4547 = vrot.lane.b32.xlu0 %v4541, 22
    %v4548 = vpop.permute.xlu0 %4547
    %4549 = vrot.lane.b32.xlu0 %v4528, 22
    %v4550 = vpop.permute.xlu0 %4549
    %4551 = vrot.lane.b32.xlu0 %v4542, 22
    %v4552 = vpop.permute.xlu0 %4551
    %v4553 = vsel %vm574, %v4546, %v4548
    %v4554 = vsel %vm574, %v4550, %v4552
    %v4559 = vmax.f32 %v4537, %v4546
    %v4560 = vmax.f32 %v4538, %v4553
    %v4561 = vmax.f32 %v4539, %v4550
    %v4562 = vmax.f32 %v4540, %v4554
    %4567 = vrot.lane.b32.xlu0 %v4559, 4
    %v4568 = vpop.permute.xlu0 %4567
    %4569 = vrot.lane.b32.xlu0 %v4560, 4
    %v4570 = vpop.permute.xlu0 %4569
    %4571 = vrot.lane.b32.xlu0 %v4561, 4
    %v4572 = vpop.permute.xlu0 %4571
    %4573 = vrot.lane.b32.xlu0 %v4562, 4
    %v4574 = vpop.permute.xlu0 %4573
    %vm4575 = vcmask 31744
    %v4576 = vsel %vm4575, %v4568, %v4570
    %v4577 = vsel %vm4575, %v4572, %v4574
    %v4578 = vsel %vm4049, %v4576, 0
    %v4580 = vsel %vm4049, %v4577, 0
    %4582 = vmatprep.subr.mxu0 0.0
    %4583 = vmatpush1.msra.mxu0 0.0
    %4584 = vmatprep.subr.mxu0 0.0
    %4585 = vmatpush1.msra.mxu0 0.0
    %4586 = vmatprep.subr.mxu0 0.0
    %4587 = vmatpush1.msra.mxu0 0.0
    %4588 = vmatprep.subr.mxu0 0.0
    %4589 = vmatpush1.msra.mxu0 0.0
    %4590 = vmatprep.subr.mxu0 0.0
    %4591 = vmatpush1.msra.mxu0 0.0
    %4592 = vmatprep.subr.mxu0 0.0
    %4593 = vmatpush1.msra.mxu0 0.0
    %4594 = vmatprep.subr.mxu0 0.0
    %4595 = vmatpush1.msra.mxu0 0.0
    %4596 = vmatprep.subr.mxu0 0.0
    %4597 = vmatpush1.msra.mxu0 0.0
    %4598 = vmatprep.subr.mxu0 0.0
    %4599 = vmatpush1.msra.mxu0 0.0
    %4600 = vmatprep.subr.mxu0 0.0
    %4601 = vmatpush1.msra.mxu0 %v4058
    %4602 = vmatprep.subr.mxu0 0.0
    %4603 = vmatpush1.msra.mxu0 %v4017
    %4604 = vmatprep.subr.mxu0 0.0
    %4605 = vmatpush1.msra.mxu0 %v4016
    %4606 = vmatprep.subr.mxu0 0.0
    %4607 = vmatpush1.msra.mxu0 %v4015
    %4608 = vmatprep.subr.mxu0 0.0
    %4609 = vmatpush1.msra.mxu0 %v4014
    %4610 = vmatprep.subr.mxu0 0.0
    %4611 = vmatpush1.msra.mxu0 %v4013
    %4612 = vmatprep.subr.mxu0 0.0
    %4613 = vmatpush1.msra.mxu0 %v4012
    %4614 = vmatprep.subr.mxu0 0.0
    %4615 = vmatpush2.msra.mxu0 0.0
    %4616 = vmatprep.subr.mxu0 0.0
    %4617 = vmatpush2.msra.mxu0 0.0
    %4618 = vmatprep.subr.mxu0 0.0
    %4619 = vmatpush2.msra.mxu0 0.0
    %4620 = vmatprep.subr.mxu0 0.0
    %4621 = vmatpush2.msra.mxu0 0.0
    %4622 = vmatprep.subr.mxu0 0.0
    %4623 = vmatpush2.msra.mxu0 0.0
    %4624 = vmatprep.subr.mxu0 0.0
    %4625 = vmatpush2.msra.mxu0 0.0
    %4626 = vmatprep.subr.mxu0 0.0
    %4627 = vmatpush2.msra.mxu0 0.0
    %4628 = vmatprep.subr.mxu0 0.0
    %4629 = vmatpush2.msra.mxu0 0.0
    %4630 = vmatprep.subr.mxu0 0.0
    %4631 = vmatpush2.msra.mxu0 0.0
    %4632 = vmatprep.subr.mxu0 0.0
    %4633 = vmatpush2.msra.mxu0 0.0
    %4634 = vmatprep.subr.mxu0 0.0
    %4635 = vmatpush2.msra.mxu0 0.0
    %4636 = vmatprep.subr.mxu0 0.0
    %4637 = vmatpush2.msra.mxu0 0.0
    %4638 = vmatprep.subr.mxu0 0.0
    %4639 = vmatpush2.msra.mxu0 0.0
    %4640 = vmatprep.subr.mxu0 0.0
    %4641 = vmatpush2.msra.mxu0 0.0
    %4642 = vmatprep.subr.mxu0 0.0
    %4643 = vmatpush2.msra.mxu0 0.0
    %4644 = vmatprep.subr.mxu0 0.0
    %4645 = vmatpush2.msra.mxu0 0.0
    %4646 = vmatprep.mubr.f32.mxu0 0.0
    %4647 = vmatmul.mubr.f32.gmra.mxu0 %v4578
    %v4648 = vpop.f32.mrf.mxu0
    %v4649 = vadd.f32 0.0, %v4648
    %v4650 = vpop.f32.mrf.mxu0
    %4651 = vmatprep.mubr.f32.mxu0 0.0
    %4652 = vmatmul.mubr.f32.gmra.mxu0 %v4580
    %v4653 = vpop.f32.mrf.mxu0
    %v4654 = vadd.f32 0.0, %v4653
    %v4655 = vpop.f32.mrf.mxu0
    %4656 = vdwg.mxu0
    %4659 = vrot.lane.b32.xlu0 %v4649, 68
    %v4660 = vpop.permute.xlu0 %4659
    %4661 = vrot.lane.b32.xlu0 %v4654, 68
    %v4662 = vpop.permute.xlu0 %4661
    %vm4665 = vcmask 695840
    %4666 = vst.msk [vmem:[#allocation3] sm:$0xff] %vm4665, %v4660
    %vm4667 = vcmask 688672
    %4668 = vst.msk [vmem:[#allocation3 + $0x18] sm:$0x1] %vm4667, %v4662
    %v4669 = vld [vmem:[#allocation2 + $0x30] sm:$0xff]
    %v4670 = vld [vmem:[#allocation2 + $0xe0] sm:$0x1]
    %v4671 = vld [vmem:[#allocation2 + $0x38] sm:$0xff]
    %v4672 = vld [vmem:[#allocation2 + $0xe8] sm:$0x1]
    %4677 = vrot.lane.b32.xlu0 %v4669, 75
    %v4678 = vpop.permute.xlu0 %4677
    %4679 = vrot.lane.b32.xlu0 %v4671, 75
    %v4680 = vpop.permute.xlu0 %4679
    %4681 = vrot.lane.b32.xlu0 %v4670, 75
    %v4682 = vpop.permute.xlu0 %4681
    %4683 = vrot.lane.b32.xlu0 %v4672, 75
    %v4684 = vpop.permute.xlu0 %4683
    %v4685 = vsel %vm343, %v4678, %v4680
    %v4686 = vsel %vm343, %v4682, %v4684
    %v4689 = vmax.f32 %v4669, %v4685
    %v4690 = vmax.f32 %v4670, %v4686
    %4691 = vrot.lane.b32.xlu0 %v4671, 22
    %v4692 = vpop.permute.xlu0 %4691
    %4693 = vrot.lane.b32.xlu0 %v4672, 22
    %v4694 = vpop.permute.xlu0 %4693
    %v4697 = vmax.f32 %v4689, %v4692
    %v4698 = vmax.f32 %v4690, %v4694
    %4701 = vrot.lane.b32.xlu0 %v4697, 101
    %v4702 = vpop.permute.xlu0 %4701
    %4703 = vrot.lane.b32.xlu0 %v4698, 101
    %v4704 = vpop.permute.xlu0 %4703
    %v4705 = vsel %vm4049, %v4702, 0
    %v4707 = vsel %vm4049, %v4704, 0
    %4709 = vmatprep.subr.mxu0 0.0
    %4710 = vmatpush1.msra.mxu0 0.0
    %4711 = vmatprep.subr.mxu0 0.0
    %4712 = vmatpush1.msra.mxu0 0.0
    %4713 = vmatprep.subr.mxu0 0.0
    %4714 = vmatpush1.msra.mxu0 0.0
    %4715 = vmatprep.subr.mxu0 0.0
    %4716 = vmatpush1.msra.mxu0 0.0
    %4717 = vmatprep.subr.mxu0 0.0
    %4718 = vmatpush1.msra.mxu0 0.0
    %4719 = vmatprep.subr.mxu0 0.0
    %4720 = vmatpush1.msra.mxu0 0.0
    %4721 = vmatprep.subr.mxu0 0.0
    %4722 = vmatpush1.msra.mxu0 0.0
    %4723 = vmatprep.subr.mxu0 0.0
    %4724 = vmatpush1.msra.mxu0 0.0
    %4725 = vmatprep.subr.mxu0 0.0
    %4726 = vmatpush1.msra.mxu0 0.0
    %4727 = vmatprep.subr.mxu0 0.0
    %4728 = vmatpush1.msra.mxu0 %v4058
    %4729 = vmatprep.subr.mxu0 0.0
    %4730 = vmatpush1.msra.mxu0 %v4017
    %4731 = vmatprep.subr.mxu0 0.0
    %4732 = vmatpush1.msra.mxu0 %v4016
    %4733 = vmatprep.subr.mxu0 0.0
    %4734 = vmatpush1.msra.mxu0 %v4015
    %4735 = vmatprep.subr.mxu0 0.0
    %4736 = vmatpush1.msra.mxu0 %v4014
    %4737 = vmatprep.subr.mxu0 0.0
    %4738 = vmatpush1.msra.mxu0 %v4013
    %4739 = vmatprep.subr.mxu0 0.0
    %4740 = vmatpush1.msra.mxu0 %v4012
    %4741 = vmatprep.subr.mxu0 0.0
    %4742 = vmatpush2.msra.mxu0 0.0
    %4743 = vmatprep.subr.mxu0 0.0
    %4744 = vmatpush2.msra.mxu0 0.0
    %4745 = vmatprep.subr.mxu0 0.0
    %4746 = vmatpush2.msra.mxu0 0.0
    %4747 = vmatprep.subr.mxu0 0.0
    %4748 = vmatpush2.msra.mxu0 0.0
    %4749 = vmatprep.subr.mxu0 0.0
    %4750 = vmatpush2.msra.mxu0 0.0
    %4751 = vmatprep.subr.mxu0 0.0
    %4752 = vmatpush2.msra.mxu0 0.0
    %4753 = vmatprep.subr.mxu0 0.0
    %4754 = vmatpush2.msra.mxu0 0.0
    %4755 = vmatprep.subr.mxu0 0.0
    %4756 = vmatpush2.msra.mxu0 0.0
    %4757 = vmatprep.subr.mxu0 0.0
    %4758 = vmatpush2.msra.mxu0 0.0
    %4759 = vmatprep.subr.mxu0 0.0
    %4760 = vmatpush2.msra.mxu0 0.0
    %4761 = vmatprep.subr.mxu0 0.0
    %4762 = vmatpush2.msra.mxu0 0.0
    %4763 = vmatprep.subr.mxu0 0.0
    %4764 = vmatpush2.msra.mxu0 0.0
    %4765 = vmatprep.subr.mxu0 0.0
    %4766 = vmatpush2.msra.mxu0 0.0
    %4767 = vmatprep.subr.mxu0 0.0
    %4768 = vmatpush2.msra.mxu0 0.0
    %4769 = vmatprep.subr.mxu0 0.0
    %4770 = vmatpush2.msra.mxu0 0.0
    %4771 = vmatprep.subr.mxu0 0.0
    %4772 = vmatpush2.msra.mxu0 0.0
    %4773 = vmatprep.mubr.f32.mxu0 0.0
    %4774 = vmatmul.mubr.f32.gmra.mxu0 %v4705
    %v4775 = vpop.f32.mrf.mxu0
    %v4776 = vadd.f32 0.0, %v4775
    %v4777 = vpop.f32.mrf.mxu0
    %4778 = vmatprep.mubr.f32.mxu0 0.0
    %4779 = vmatmul.mubr.f32.gmra.mxu0 %v4707
    %v4780 = vpop.f32.mrf.mxu0
    %v4781 = vadd.f32 0.0, %v4780
    %v4782 = vpop.f32.mrf.mxu0
    %4783 = vdwg.mxu0
    %4786 = vrot.lane.b32.xlu0 %v4776, 85
    %v4787 = vpop.permute.xlu0 %4786
    %4788 = vrot.lane.b32.xlu0 %v4781, 85
    %v4789 = vpop.permute.xlu0 %4788
    %vm4792 = vcmask 835240
    %4793 = vst.msk [vmem:[#allocation3] sm:$0xff] %vm4792, %v4787
    %vm4794 = vcmask 828072
    %4795 = vst.msk [vmem:[#allocation3 + $0x18] sm:$0x1] %vm4794, %v4789
    %v4796 = vld [vmem:[#allocation2 + $0x38] sm:$0xff]
    %v4797 = vld [vmem:[#allocation2 + $0xe8] sm:$0x1]
    %v4798 = vld [vmem:[#allocation2 + $0x40] sm:$0xff]
    %v4799 = vld [vmem:[#allocation2 + $0xf0] sm:$0x1]
    %4804 = vrot.lane.b32.xlu0 %v4796, 75
    %v4805 = vpop.permute.xlu0 %4804
    %4806 = vrot.lane.b32.xlu0 %v4798, 75
    %v4807 = vpop.permute.xlu0 %4806
    %4808 = vrot.lane.b32.xlu0 %v4797, 75
    %v4809 = vpop.permute.xlu0 %4808
    %4810 = vrot.lane.b32.xlu0 %v4799, 75
    %v4811 = vpop.permute.xlu0 %4810
    %v4812 = vsel %vm343, %v4805, %v4807
    %v4813 = vsel %vm343, %v4809, %v4811
    %v4816 = vmax.f32 %v4796, %v4812
    %v4817 = vmax.f32 %v4797, %v4813
    %4818 = vrot.lane.b32.xlu0 %v4798, 22
    %v4819 = vpop.permute.xlu0 %4818
    %4820 = vrot.lane.b32.xlu0 %v4799, 22
    %v4821 = vpop.permute.xlu0 %4820
    %v4824 = vmax.f32 %v4816, %v4819
    %v4825 = vmax.f32 %v4817, %v4821
    %4828 = vrot.lane.b32.xlu0 %v4824, 70
    %v4829 = vpop.permute.xlu0 %4828
    %4830 = vrot.lane.b32.xlu0 %v4825, 70
    %v4831 = vpop.permute.xlu0 %4830
    %v4832 = vsel %vm4049, %v4829, 0
    %v4834 = vsel %vm4049, %v4831, 0
    %4836 = vmatprep.subr.mxu0 0.0
    %4837 = vmatpush1.msra.mxu0 0.0
    %4838 = vmatprep.subr.mxu0 0.0
    %4839 = vmatpush1.msra.mxu0 0.0
    %4840 = vmatprep.subr.mxu0 0.0
    %4841 = vmatpush1.msra.mxu0 0.0
    %4842 = vmatprep.subr.mxu0 0.0
    %4843 = vmatpush1.msra.mxu0 0.0
    %4844 = vmatprep.subr.mxu0 0.0
    %4845 = vmatpush1.msra.mxu0 0.0
    %4846 = vmatprep.subr.mxu0 0.0
    %4847 = vmatpush1.msra.mxu0 0.0
    %4848 = vmatprep.subr.mxu0 0.0
    %4849 = vmatpush1.msra.mxu0 0.0
    %4850 = vmatprep.subr.mxu0 0.0
    %4851 = vmatpush1.msra.mxu0 0.0
    %4852 = vmatprep.subr.mxu0 0.0
    %4853 = vmatpush1.msra.mxu0 0.0
    %4854 = vmatprep.subr.mxu0 0.0
    %4855 = vmatpush1.msra.mxu0 %v4058
    %4856 = vmatprep.subr.mxu0 0.0
    %4857 = vmatpush1.msra.mxu0 %v4017
    %4858 = vmatprep.subr.mxu0 0.0
    %4859 = vmatpush1.msra.mxu0 %v4016
    %4860 = vmatprep.subr.mxu0 0.0
    %4861 = vmatpush1.msra.mxu0 %v4015
    %4862 = vmatprep.subr.mxu0 0.0
    %4863 = vmatpush1.msra.mxu0 %v4014
    %4864 = vmatprep.subr.mxu0 0.0
    %4865 = vmatpush1.msra.mxu0 %v4013
    %4866 = vmatprep.subr.mxu0 0.0
    %4867 = vmatpush1.msra.mxu0 %v4012
    %4868 = vmatprep.subr.mxu0 0.0
    %4869 = vmatpush2.msra.mxu0 0.0
    %4870 = vmatprep.subr.mxu0 0.0
    %4871 = vmatpush2.msra.mxu0 0.0
    %4872 = vmatprep.subr.mxu0 0.0
    %4873 = vmatpush2.msra.mxu0 0.0
    %4874 = vmatprep.subr.mxu0 0.0
    %4875 = vmatpush2.msra.mxu0 0.0
    %4876 = vmatprep.subr.mxu0 0.0
    %4877 = vmatpush2.msra.mxu0 0.0
    %4878 = vmatprep.subr.mxu0 0.0
    %4879 = vmatpush2.msra.mxu0 0.0
    %4880 = vmatprep.subr.mxu0 0.0
    %4881 = vmatpush2.msra.mxu0 0.0
    %4882 = vmatprep.subr.mxu0 0.0
    %4883 = vmatpush2.msra.mxu0 0.0
    %4884 = vmatprep.subr.mxu0 0.0
    %4885 = vmatpush2.msra.mxu0 0.0
    %4886 = vmatprep.subr.mxu0 0.0
    %4887 = vmatpush2.msra.mxu0 0.0
    %4888 = vmatprep.subr.mxu0 0.0
    %4889 = vmatpush2.msra.mxu0 0.0
    %4890 = vmatprep.subr.mxu0 0.0
    %4891 = vmatpush2.msra.mxu0 0.0
    %4892 = vmatprep.subr.mxu0 0.0
    %4893 = vmatpush2.msra.mxu0 0.0
    %4894 = vmatprep.subr.mxu0 0.0
    %4895 = vmatpush2.msra.mxu0 0.0
    %4896 = vmatprep.subr.mxu0 0.0
    %4897 = vmatpush2.msra.mxu0 0.0
    %4898 = vmatprep.subr.mxu0 0.0
    %4899 = vmatpush2.msra.mxu0 0.0
    %4900 = vmatprep.mubr.f32.mxu0 0.0
    %4901 = vmatmul.mubr.f32.gmra.mxu0 %v4832
    %v4902 = vpop.f32.mrf.mxu0
    %v4903 = vadd.f32 0.0, %v4902
    %v4904 = vpop.f32.mrf.mxu0
    %4905 = vmatprep.mubr.f32.mxu0 0.0
    %4906 = vmatmul.mubr.f32.gmra.mxu0 %v4834
    %v4907 = vpop.f32.mrf.mxu0
    %v4908 = vadd.f32 0.0, %v4907
    %v4909 = vpop.f32.mrf.mxu0
    %4910 = vdwg.mxu0
    %4913 = vrot.lane.b32.xlu0 %v4903, 102
    %v4914 = vpop.permute.xlu0 %4913
    %4915 = vrot.lane.b32.xlu0 %v4908, 102
    %v4916 = vpop.permute.xlu0 %4915
    %vm4919 = vcmask 974640
    %4920 = vst.msk [vmem:[#allocation3] sm:$0xff] %vm4919, %v4914
    %vm4921 = vcmask 967472
    %4922 = vst.msk [vmem:[#allocation3 + $0x18] sm:$0x1] %vm4921, %v4916
    %v4923 = vld [vmem:[#allocation2 + $0x40] sm:$0xff]
    %v4924 = vld [vmem:[#allocation2 + $0x48] sm:$0xff]
    %v4925 = vld [vmem:[#allocation2 + $0xf0] sm:$0x1]
    %v4926 = vld [vmem:[#allocation2 + $0xf8] sm:$0x1]
    %4929 = vrot.lane.b32.xlu0 %v4924, 75
    %v4930 = vpop.permute.xlu0 %4929
    %4931 = vrot.lane.b32.xlu0 %v4926, 75
    %v4932 = vpop.permute.xlu0 %4931
    %v4935 = vmax.f32 %v4923, %v4930
    %v4936 = vmax.f32 %v4924, %v4930
    %v4937 = vmax.f32 %v4925, %v4932
    %v4938 = vmax.f32 %v4926, %v4932
    %4939 = vrot.lane.b32.xlu0 %v4924, 22
    %v4940 = vpop.permute.xlu0 %4939
    %4941 = vrot.lane.b32.xlu0 %v4926, 22
    %v4942 = vpop.permute.xlu0 %4941
    %v4945 = vmax.f32 %v4935, %v4940
    %v4946 = vmax.f32 %v4936, %v4940
    %v4947 = vmax.f32 %v4937, %v4942
    %v4948 = vmax.f32 %v4938, %v4942
    %4953 = vrot.lane.b32.xlu0 %v4945, 39
    %v4954 = vpop.permute.xlu0 %4953
    %4955 = vrot.lane.b32.xlu0 %v4946, 39
    %v4956 = vpop.permute.xlu0 %4955
    %4957 = vrot.lane.b32.xlu0 %v4947, 39
    %v4958 = vpop.permute.xlu0 %4957
    %4959 = vrot.lane.b32.xlu0 %v4948, 39
    %v4960 = vpop.permute.xlu0 %4959
    %vm4961 = vcmask 318464
    %v4962 = vsel %vm4961, %v4954, %v4956
    %v4963 = vsel %vm4961, %v4958, %v4960
    %v4964 = vsel %vm4049, %v4962, 0
    %v4966 = vsel %vm4049, %v4963, 0
    %4968 = vmatprep.subr.mxu0 0.0
    %4969 = vmatpush1.msra.mxu0 0.0
    %4970 = vmatprep.subr.mxu0 0.0
    %4971 = vmatpush1.msra.mxu0 0.0
    %4972 = vmatprep.subr.mxu0 0.0
    %4973 = vmatpush1.msra.mxu0 0.0
    %4974 = vmatprep.subr.mxu0 0.0
    %4975 = vmatpush1.msra.mxu0 0.0
    %4976 = vmatprep.subr.mxu0 0.0
    %4977 = vmatpush1.msra.mxu0 0.0
    %4978 = vmatprep.subr.mxu0 0.0
    %4979 = vmatpush1.msra.mxu0 0.0
    %4980 = vmatprep.subr.mxu0 0.0
    %4981 = vmatpush1.msra.mxu0 0.0
    %4982 = vmatprep.subr.mxu0 0.0
    %4983 = vmatpush1.msra.mxu0 0.0
    %4984 = vmatprep.subr.mxu0 0.0
    %4985 = vmatpush1.msra.mxu0 0.0
    %4986 = vmatprep.subr.mxu0 0.0
    %4987 = vmatpush1.msra.mxu0 %v4058
    %4988 = vmatprep.subr.mxu0 0.0
    %4989 = vmatpush1.msra.mxu0 %v4017
    %4990 = vmatprep.subr.mxu0 0.0
    %4991 = vmatpush1.msra.mxu0 %v4016
    %4992 = vmatprep.subr.mxu0 0.0
    %4993 = vmatpush1.msra.mxu0 %v4015
    %4994 = vmatprep.subr.mxu0 0.0
    %4995 = vmatpush1.msra.mxu0 %v4014
    %4996 = vmatprep.subr.mxu0 0.0
    %4997 = vmatpush1.msra.mxu0 %v4013
    %4998 = vmatprep.subr.mxu0 0.0
    %4999 = vmatpush1.msra.mxu0 %v4012
    %5000 = vmatprep.subr.mxu0 0.0
    %5001 = vmatpush2.msra.mxu0 0.0
    %5002 = vmatprep.subr.mxu0 0.0
    %5003 = vmatpush2.msra.mxu0 0.0
    %5004 = vmatprep.subr.mxu0 0.0
    %5005 = vmatpush2.msra.mxu0 0.0
    %5006 = vmatprep.subr.mxu0 0.0
    %5007 = vmatpush2.msra.mxu0 0.0
    %5008 = vmatprep.subr.mxu0 0.0
    %5009 = vmatpush2.msra.mxu0 0.0
    %5010 = vmatprep.subr.mxu0 0.0
    %5011 = vmatpush2.msra.mxu0 0.0
    %5012 = vmatprep.subr.mxu0 0.0
    %5013 = vmatpush2.msra.mxu0 0.0
    %5014 = vmatprep.subr.mxu0 0.0
    %5015 = vmatpush2.msra.mxu0 0.0
    %5016 = vmatprep.subr.mxu0 0.0
    %5017 = vmatpush2.msra.mxu0 0.0
    %5018 = vmatprep.subr.mxu0 0.0
    %5019 = vmatpush2.msra.mxu0 0.0
    %5020 = vmatprep.subr.mxu0 0.0
    %5021 = vmatpush2.msra.mxu0 0.0
    %5022 = vmatprep.subr.mxu0 0.0
    %5023 = vmatpush2.msra.mxu0 0.0
    %5024 = vmatprep.subr.mxu0 0.0
    %5025 = vmatpush2.msra.mxu0 0.0
    %5026 = vmatprep.subr.mxu0 0.0
    %5027 = vmatpush2.msra.mxu0 0.0
    %5028 = vmatprep.subr.mxu0 0.0
    %5029 = vmatpush2.msra.mxu0 0.0
    %5030 = vmatprep.subr.mxu0 0.0
    %5031 = vmatpush2.msra.mxu0 0.0
    %5032 = vmatprep.mubr.f32.mxu0 0.0
    %5033 = vmatmul.mubr.f32.gmra.mxu0 %v4964
    %v5034 = vpop.f32.mrf.mxu0
    %v5035 = vadd.f32 0.0, %v5034
    %v5036 = vpop.f32.mrf.mxu0
    %5037 = vmatprep.mubr.f32.mxu0 0.0
    %5038 = vmatmul.mubr.f32.gmra.mxu0 %v4966
    %v5039 = vpop.f32.mrf.mxu0
    %v5040 = vadd.f32 0.0, %v5039
    %v5041 = vpop.f32.mrf.mxu0
    %5042 = vdwg.mxu0
    %5045 = vrot.lane.b32.xlu0 %v5035, 119
    %v5046 = vpop.permute.xlu0 %5045
    %5047 = vrot.lane.b32.xlu0 %v5040, 119
    %v5048 = vpop.permute.xlu0 %5047
    %vm5051 = vcmask 1048504
    %5052 = vst.msk [vmem:[#allocation3] sm:$0xff] %vm5051, %v5046
    %vm5053 = vcmask 64512
    %5054 = vst.msk [vmem:[#allocation3 + $0x8] sm:$0xff] %vm5053, %v5046
    %vm5055 = vcmask 1041336
    %5056 = vst.msk [vmem:[#allocation3 + $0x18] sm:$0x1] %vm5055, %v5048
    %vm5057 = vcmask 57344
    %5058 = vst.msk [vmem:[#allocation3 + $0x20] sm:$0x1] %vm5057, %v5048
    %v5059 = vld [vmem:[#allocation2 + $0x48] sm:$0xff]
    %v5060 = vld [vmem:[#allocation2 + $0x50] sm:$0xff]
    %v5061 = vld [vmem:[#allocation2 + $0xf8] sm:$0x1]
    %v5062 = vld [vmem:[#allocation2 + $0x100] sm:$0x1]
    %5065 = vrot.lane.b32.xlu0 %v5060, 75
    %v5066 = vpop.permute.xlu0 %5065
    %5067 = vrot.lane.b32.xlu0 %v5062, 75
    %v5068 = vpop.permute.xlu0 %5067
    %v5071 = vmax.f32 %v5059, %v5066
    %v5072 = vmax.f32 %v5060, %v5066
    %v5073 = vmax.f32 %v5061, %v5068
    %v5074 = vmax.f32 %v5062, %v5068
    %v5075 = vld [vmem:[#allocation2 + $0x58] sm:$0xff]
    %v5076 = vld [vmem:[#allocation2 + $0x108] sm:$0x1]
    %5079 = vrot.lane.b32.xlu0 %v5060, 22
    %v5080 = vpop.permute.xlu0 %5079
    %5081 = vrot.lane.b32.xlu0 %v5075, 22
    %v5082 = vpop.permute.xlu0 %5081
    %5083 = vrot.lane.b32.xlu0 %v5062, 22
    %v5084 = vpop.permute.xlu0 %5083
    %5085 = vrot.lane.b32.xlu0 %v5076, 22
    %v5086 = vpop.permute.xlu0 %5085
    %v5087 = vsel %vm574, %v5080, %v5082
    %v5088 = vsel %vm574, %v5084, %v5086
    %v5093 = vmax.f32 %v5071, %v5080
    %v5094 = vmax.f32 %v5072, %v5087
    %v5095 = vmax.f32 %v5073, %v5084
    %v5096 = vmax.f32 %v5074, %v5088
    %5101 = vrot.lane.b32.xlu0 %v5093, 8
    %v5102 = vpop.permute.xlu0 %5101
    %5103 = vrot.lane.b32.xlu0 %v5094, 8
    %v5104 = vpop.permute.xlu0 %5103
    %5105 = vrot.lane.b32.xlu0 %v5095, 8
    %v5106 = vpop.permute.xlu0 %5105
    %5107 = vrot.lane.b32.xlu0 %v5096, 8
    %v5108 = vpop.permute.xlu0 %5107
    %v5109 = vsel %vm5053, %v5102, %v5104
    %v5110 = vsel %vm5053, %v5106, %v5108
    %v5111 = vsel %vm4049, %v5109, 0
    %v5113 = vsel %vm4049, %v5110, 0
    %5115 = vmatprep.subr.mxu0 0.0
    %5116 = vmatpush1.msra.mxu0 0.0
    %5117 = vmatprep.subr.mxu0 0.0
    %5118 = vmatpush1.msra.mxu0 0.0
    %5119 = vmatprep.subr.mxu0 0.0
    %5120 = vmatpush1.msra.mxu0 0.0
    %5121 = vmatprep.subr.mxu0 0.0
    %5122 = vmatpush1.msra.mxu0 0.0
    %5123 = vmatprep.subr.mxu0 0.0
    %5124 = vmatpush1.msra.mxu0 0.0
    %5125 = vmatprep.subr.mxu0 0.0
    %5126 = vmatpush1.msra.mxu0 0.0
    %5127 = vmatprep.subr.mxu0 0.0
    %5128 = vmatpush1.msra.mxu0 0.0
    %5129 = vmatprep.subr.mxu0 0.0
    %5130 = vmatpush1.msra.mxu0 0.0
    %5131 = vmatprep.subr.mxu0 0.0
    %5132 = vmatpush1.msra.mxu0 0.0
    %5133 = vmatprep.subr.mxu0 0.0
    %5134 = vmatpush1.msra.mxu0 %v4058
    %5135 = vmatprep.subr.mxu0 0.0
    %5136 = vmatpush1.msra.mxu0 %v4017
    %5137 = vmatprep.subr.mxu0 0.0
    %5138 = vmatpush1.msra.mxu0 %v4016
    %5139 = vmatprep.subr.mxu0 0.0
    %5140 = vmatpush1.msra.mxu0 %v4015
    %5141 = vmatprep.subr.mxu0 0.0
    %5142 = vmatpush1.msra.mxu0 %v4014
    %5143 = vmatprep.subr.mxu0 0.0
    %5144 = vmatpush1.msra.mxu0 %v4013
    %5145 = vmatprep.subr.mxu0 0.0
    %5146 = vmatpush1.msra.mxu0 %v4012
    %5147 = vmatprep.subr.mxu0 0.0
    %5148 = vmatpush2.msra.mxu0 0.0
    %5149 = vmatprep.subr.mxu0 0.0
    %5150 = vmatpush2.msra.mxu0 0.0
    %5151 = vmatprep.subr.mxu0 0.0
    %5152 = vmatpush2.msra.mxu0 0.0
    %5153 = vmatprep.subr.mxu0 0.0
    %5154 = vmatpush2.msra.mxu0 0.0
    %5155 = vmatprep.subr.mxu0 0.0
    %5156 = vmatpush2.msra.mxu0 0.0
    %5157 = vmatprep.subr.mxu0 0.0
    %5158 = vmatpush2.msra.mxu0 0.0
    %5159 = vmatprep.subr.mxu0 0.0
    %5160 = vmatpush2.msra.mxu0 0.0
    %5161 = vmatprep.subr.mxu0 0.0
    %5162 = vmatpush2.msra.mxu0 0.0
    %5163 = vmatprep.subr.mxu0 0.0
    %5164 = vmatpush2.msra.mxu0 0.0
    %5165 = vmatprep.subr.mxu0 0.0
    %5166 = vmatpush2.msra.mxu0 0.0
    %5167 = vmatprep.subr.mxu0 0.0
    %5168 = vmatpush2.msra.mxu0 0.0
    %5169 = vmatprep.subr.mxu0 0.0
    %5170 = vmatpush2.msra.mxu0 0.0
    %5171 = vmatprep.subr.mxu0 0.0
    %5172 = vmatpush2.msra.mxu0 0.0
    %5173 = vmatprep.subr.mxu0 0.0
    %5174 = vmatpush2.msra.mxu0 0.0
    %5175 = vmatprep.subr.mxu0 0.0
    %5176 = vmatpush2.msra.mxu0 0.0
    %5177 = vmatprep.subr.mxu0 0.0
    %5178 = vmatpush2.msra.mxu0 0.0
    %5179 = vmatprep.mubr.f32.mxu0 0.0
    %5180 = vmatmul.mubr.f32.gmra.mxu0 %v5111
    %v5181 = vpop.f32.mrf.mxu0
    %v5182 = vadd.f32 0.0, %v5181
    %v5183 = vpop.f32.mrf.mxu0
    %5184 = vmatprep.mubr.f32.mxu0 0.0
    %5185 = vmatmul.mubr.f32.gmra.mxu0 %v5113
    %v5186 = vpop.f32.mrf.mxu0
    %v5187 = vadd.f32 0.0, %v5186
    %v5188 = vpop.f32.mrf.mxu0
    %5189 = vdwg.mxu0
    %5192 = vrot.lane.b32.xlu0 %v5182, 8
    %v5193 = vpop.permute.xlu0 %5192
    %5194 = vrot.lane.b32.xlu0 %v5187, 8
    %v5195 = vpop.permute.xlu0 %5194
    %vm5198 = vcmask 203840
    %5199 = vst.msk [vmem:[#allocation3 + $0x8] sm:$0xff] %vm5198, %v5193
    %vm5200 = vcmask 196672
    %5201 = vst.msk [vmem:[#allocation3 + $0x20] sm:$0x1] %vm5200, %v5195
    %v5202 = vld [vmem:[#allocation2 + $0x58] sm:$0xff]
    %v5203 = vld [vmem:[#allocation2 + $0x108] sm:$0x1]
    %5206 = vrot.lane.b32.xlu0 %v5202, 75
    %v5207 = vpop.permute.xlu0 %5206
    %5208 = vrot.lane.b32.xlu0 %v5203, 75
    %v5209 = vpop.permute.xlu0 %5208
    %v5212 = vmax.f32 %v5202, %v5207
    %v5213 = vmax.f32 %v5203, %v5209
    %v5214 = vld [vmem:[#allocation2 + $0x60] sm:$0xff]
    %v5215 = vld [vmem:[#allocation2 + $0x110] sm:$0x1]
    %5218 = vrot.lane.b32.xlu0 %v5214, 22
    %v5219 = vpop.permute.xlu0 %5218
    %5220 = vrot.lane.b32.xlu0 %v5215, 22
    %v5221 = vpop.permute.xlu0 %5220
    %v5224 = vmax.f32 %v5212, %v5219
    %v5225 = vmax.f32 %v5213, %v5221
    %5228 = vrot.lane.b32.xlu0 %v5224, 105
    %v5229 = vpop.permute.xlu0 %5228
    %5230 = vrot.lane.b32.xlu0 %v5225, 105
    %v5231 = vpop.permute.xlu0 %5230
    %v5232 = vsel %vm4049, %v5229, 0
    %v5234 = vsel %vm4049, %v5231, 0
    %5236 = vmatprep.subr.mxu0 0.0
    %5237 = vmatpush1.msra.mxu0 0.0
    %5238 = vmatprep.subr.mxu0 0.0
    %5239 = vmatpush1.msra.mxu0 0.0
    %5240 = vmatprep.subr.mxu0 0.0
    %5241 = vmatpush1.msra.mxu0 0.0
    %5242 = vmatprep.subr.mxu0 0.0
    %5243 = vmatpush1.msra.mxu0 0.0
    %5244 = vmatprep.subr.mxu0 0.0
    %5245 = vmatpush1.msra.mxu0 0.0
    %5246 = vmatprep.subr.mxu0 0.0
    %5247 = vmatpush1.msra.mxu0 0.0
    %5248 = vmatprep.subr.mxu0 0.0
    %5249 = vmatpush1.msra.mxu0 0.0
    %5250 = vmatprep.subr.mxu0 0.0
    %5251 = vmatpush1.msra.mxu0 0.0
    %5252 = vmatprep.subr.mxu0 0.0
    %5253 = vmatpush1.msra.mxu0 0.0
    %5254 = vmatprep.subr.mxu0 0.0
    %5255 = vmatpush1.msra.mxu0 %v4058
    %5256 = vmatprep.subr.mxu0 0.0
    %5257 = vmatpush1.msra.mxu0 %v4017
    %5258 = vmatprep.subr.mxu0 0.0
    %5259 = vmatpush1.msra.mxu0 %v4016
    %5260 = vmatprep.subr.mxu0 0.0
    %5261 = vmatpush1.msra.mxu0 %v4015
    %5262 = vmatprep.subr.mxu0 0.0
    %5263 = vmatpush1.msra.mxu0 %v4014
    %5264 = vmatprep.subr.mxu0 0.0
    %5265 = vmatpush1.msra.mxu0 %v4013
    %5266 = vmatprep.subr.mxu0 0.0
    %5267 = vmatpush1.msra.mxu0 %v4012
    %5268 = vmatprep.subr.mxu0 0.0
    %5269 = vmatpush2.msra.mxu0 0.0
    %5270 = vmatprep.subr.mxu0 0.0
    %5271 = vmatpush2.msra.mxu0 0.0
    %5272 = vmatprep.subr.mxu0 0.0
    %5273 = vmatpush2.msra.mxu0 0.0
    %5274 = vmatprep.subr.mxu0 0.0
    %5275 = vmatpush2.msra.mxu0 0.0
    %5276 = vmatprep.subr.mxu0 0.0
    %5277 = vmatpush2.msra.mxu0 0.0
    %5278 = vmatprep.subr.mxu0 0.0
    %5279 = vmatpush2.msra.mxu0 0.0
    %5280 = vmatprep.subr.mxu0 0.0
    %5281 = vmatpush2.msra.mxu0 0.0
    %5282 = vmatprep.subr.mxu0 0.0
    %5283 = vmatpush2.msra.mxu0 0.0
    %5284 = vmatprep.subr.mxu0 0.0
    %5285 = vmatpush2.msra.mxu0 0.0
    %5286 = vmatprep.subr.mxu0 0.0
    %5287 = vmatpush2.msra.mxu0 0.0
    %5288 = vmatprep.subr.mxu0 0.0
    %5289 = vmatpush2.msra.mxu0 0.0
    %5290 = vmatprep.subr.mxu0 0.0
    %5291 = vmatpush2.msra.mxu0 0.0
    %5292 = vmatprep.subr.mxu0 0.0
    %5293 = vmatpush2.msra.mxu0 0.0
    %5294 = vmatprep.subr.mxu0 0.0
    %5295 = vmatpush2.msra.mxu0 0.0
    %5296 = vmatprep.subr.mxu0 0.0
    %5297 = vmatpush2.msra.mxu0 0.0
    %5298 = vmatprep.subr.mxu0 0.0
    %5299 = vmatpush2.msra.mxu0 0.0
    %5300 = vmatprep.mubr.f32.mxu0 0.0
    %5301 = vmatmul.mubr.f32.gmra.mxu0 %v5232
    %v5302 = vpop.f32.mrf.mxu0
    %v5303 = vadd.f32 0.0, %v5302
    %v5304 = vpop.f32.mrf.mxu0
    %5305 = vmatprep.mubr.f32.mxu0 0.0
    %5306 = vmatmul.mubr.f32.gmra.mxu0 %v5234
    %v5307 = vpop.f32.mrf.mxu0
    %v5308 = vadd.f32 0.0, %v5307
    %v5309 = vpop.f32.mrf.mxu0
    %5310 = vdwg.mxu0
    %5313 = vrot.lane.b32.xlu0 %v5303, 25
    %v5314 = vpop.permute.xlu0 %5313
    %5315 = vrot.lane.b32.xlu0 %v5308, 25
    %v5316 = vpop.permute.xlu0 %5315
    %vm5319 = vcmask 343240
    %5320 = vst.msk [vmem:[#allocation3 + $0x8] sm:$0xff] %vm5319, %v5314
    %vm5321 = vcmask 336072
    %5322 = vst.msk [vmem:[#allocation3 + $0x20] sm:$0x1] %vm5321, %v5316
    %v5323 = vld [vmem:[#allocation2 + $0x60] sm:$0xff]
    %v5324 = vld [vmem:[#allocation2 + $0x110] sm:$0x1]
    %v5325 = vld [vmem:[#allocation2 + $0x68] sm:$0xff]
    %v5326 = vld [vmem:[#allocation2 + $0x118] sm:$0x1]
    %5331 = vrot.lane.b32.xlu0 %v5323, 75
    %v5332 = vpop.permute.xlu0 %5331
    %5333 = vrot.lane.b32.xlu0 %v5325, 75
    %v5334 = vpop.permute.xlu0 %5333
    %5335 = vrot.lane.b32.xlu0 %v5324, 75
    %v5336 = vpop.permute.xlu0 %5335
    %5337 = vrot.lane.b32.xlu0 %v5326, 75
    %v5338 = vpop.permute.xlu0 %5337
    %v5339 = vsel %vm343, %v5332, %v5334
    %v5340 = vsel %vm343, %v5336, %v5338
    %v5343 = vmax.f32 %v5323, %v5339
    %v5344 = vmax.f32 %v5324, %v5340
    %5345 = vrot.lane.b32.xlu0 %v5325, 22
    %v5346 = vpop.permute.xlu0 %5345
    %5347 = vrot.lane.b32.xlu0 %v5326, 22
    %v5348 = vpop.permute.xlu0 %5347
    %v5351 = vmax.f32 %v5343, %v5346
    %v5352 = vmax.f32 %v5344, %v5348
    %5355 = vrot.lane.b32.xlu0 %v5351, 74
    %v5356 = vpop.permute.xlu0 %5355
    %5357 = vrot.lane.b32.xlu0 %v5352, 74
    %v5358 = vpop.permute.xlu0 %5357
    %v5359 = vsel %vm4049, %v5356, 0
    %v5361 = vsel %vm4049, %v5358, 0
    %5363 = vmatprep.subr.mxu0 0.0
    %5364 = vmatpush1.msra.mxu0 0.0
    %5365 = vmatprep.subr.mxu0 0.0
    %5366 = vmatpush1.msra.mxu0 0.0
    %5367 = vmatprep.subr.mxu0 0.0
    %5368 = vmatpush1.msra.mxu0 0.0
    %5369 = vmatprep.subr.mxu0 0.0
    %5370 = vmatpush1.msra.mxu0 0.0
    %5371 = vmatprep.subr.mxu0 0.0
    %5372 = vmatpush1.msra.mxu0 0.0
    %5373 = vmatprep.subr.mxu0 0.0
    %5374 = vmatpush1.msra.mxu0 0.0
    %5375 = vmatprep.subr.mxu0 0.0
    %5376 = vmatpush1.msra.mxu0 0.0
    %5377 = vmatprep.subr.mxu0 0.0
    %5378 = vmatpush1.msra.mxu0 0.0
    %5379 = vmatprep.subr.mxu0 0.0
    %5380 = vmatpush1.msra.mxu0 0.0
    %5381 = vmatprep.subr.mxu0 0.0
    %5382 = vmatpush1.msra.mxu0 %v4058
    %5383 = vmatprep.subr.mxu0 0.0
    %5384 = vmatpush1.msra.mxu0 %v4017
    %5385 = vmatprep.subr.mxu0 0.0
    %5386 = vmatpush1.msra.mxu0 %v4016
    %5387 = vmatprep.subr.mxu0 0.0
    %5388 = vmatpush1.msra.mxu0 %v4015
    %5389 = vmatprep.subr.mxu0 0.0
    %5390 = vmatpush1.msra.mxu0 %v4014
    %5391 = vmatprep.subr.mxu0 0.0
    %5392 = vmatpush1.msra.mxu0 %v4013
    %5393 = vmatprep.subr.mxu0 0.0
    %5394 = vmatpush1.msra.mxu0 %v4012
    %5395 = vmatprep.subr.mxu0 0.0
    %5396 = vmatpush2.msra.mxu0 0.0
    %5397 = vmatprep.subr.mxu0 0.0
    %5398 = vmatpush2.msra.mxu0 0.0
    %5399 = vmatprep.subr.mxu0 0.0
    %5400 = vmatpush2.msra.mxu0 0.0
    %5401 = vmatprep.subr.mxu0 0.0
    %5402 = vmatpush2.msra.mxu0 0.0
    %5403 = vmatprep.subr.mxu0 0.0
    %5404 = vmatpush2.msra.mxu0 0.0
    %5405 = vmatprep.subr.mxu0 0.0
    %5406 = vmatpush2.msra.mxu0 0.0
    %5407 = vmatprep.subr.mxu0 0.0
    %5408 = vmatpush2.msra.mxu0 0.0
    %5409 = vmatprep.subr.mxu0 0.0
    %5410 = vmatpush2.msra.mxu0 0.0
    %5411 = vmatprep.subr.mxu0 0.0
    %5412 = vmatpush2.msra.mxu0 0.0
    %5413 = vmatprep.subr.mxu0 0.0
    %5414 = vmatpush2.msra.mxu0 0.0
    %5415 = vmatprep.subr.mxu0 0.0
    %5416 = vmatpush2.msra.mxu0 0.0
    %5417 = vmatprep.subr.mxu0 0.0
    %5418 = vmatpush2.msra.mxu0 0.0
    %5419 = vmatprep.subr.mxu0 0.0
    %5420 = vmatpush2.msra.mxu0 0.0
    %5421 = vmatprep.subr.mxu0 0.0
    %5422 = vmatpush2.msra.mxu0 0.0
    %5423 = vmatprep.subr.mxu0 0.0
    %5424 = vmatpush2.msra.mxu0 0.0
    %5425 = vmatprep.subr.mxu0 0.0
    %5426 = vmatpush2.msra.mxu0 0.0
    %5427 = vmatprep.mubr.f32.mxu0 0.0
    %5428 = vmatmul.mubr.f32.gmra.mxu0 %v5359
    %v5429 = vpop.f32.mrf.mxu0
    %v5430 = vadd.f32 0.0, %v5429
    %v5431 = vpop.f32.mrf.mxu0
    %5432 = vmatprep.mubr.f32.mxu0 0.0
    %5433 = vmatmul.mubr.f32.gmra.mxu0 %v5361
    %v5434 = vpop.f32.mrf.mxu0
    %v5435 = vadd.f32 0.0, %v5434
    %v5436 = vpop.f32.mrf.mxu0
    %5437 = vdwg.mxu0
    %5440 = vrot.lane.b32.xlu0 %v5430, 42
    %v5441 = vpop.permute.xlu0 %5440
    %5442 = vrot.lane.b32.xlu0 %v5435, 42
    %v5443 = vpop.permute.xlu0 %5442
    %vm5446 = vcmask 482640
    %5447 = vst.msk [vmem:[#allocation3 + $0x8] sm:$0xff] %vm5446, %v5441
    %vm5448 = vcmask 475472
    %5449 = vst.msk [vmem:[#allocation3 + $0x20] sm:$0x1] %vm5448, %v5443
    %v5450 = vld [vmem:[#allocation2 + $0x68] sm:$0xff]
    %v5451 = vld [vmem:[#allocation2 + $0x70] sm:$0xff]
    %v5452 = vld [vmem:[#allocation2 + $0x118] sm:$0x1]
    %v5453 = vld [vmem:[#allocation2 + $0x120] sm:$0x1]
    %5456 = vrot.lane.b32.xlu0 %v5451, 75
    %v5457 = vpop.permute.xlu0 %5456
    %5458 = vrot.lane.b32.xlu0 %v5453, 75
    %v5459 = vpop.permute.xlu0 %5458
    %v5462 = vmax.f32 %v5450, %v5457
    %v5463 = vmax.f32 %v5451, %v5457
    %v5464 = vmax.f32 %v5452, %v5459
    %v5465 = vmax.f32 %v5453, %v5459
    %5466 = vrot.lane.b32.xlu0 %v5451, 22
    %v5467 = vpop.permute.xlu0 %5466
    %5468 = vrot.lane.b32.xlu0 %v5453, 22
    %v5469 = vpop.permute.xlu0 %5468
    %v5472 = vmax.f32 %v5462, %v5467
    %v5473 = vmax.f32 %v5463, %v5467
    %v5474 = vmax.f32 %v5464, %v5469
    %v5475 = vmax.f32 %v5465, %v5469
    %5480 = vrot.lane.b32.xlu0 %v5472, 43
    %v5481 = vpop.permute.xlu0 %5480
    %5482 = vrot.lane.b32.xlu0 %v5473, 43
    %v5483 = vpop.permute.xlu0 %5482
    %5484 = vrot.lane.b32.xlu0 %v5474, 43
    %v5485 = vpop.permute.xlu0 %5484
    %5486 = vrot.lane.b32.xlu0 %v5475, 43
    %v5487 = vpop.permute.xlu0 %5486
    %vm5488 = vcmask 351232
    %v5489 = vsel %vm5488, %v5481, %v5483
    %v5490 = vsel %vm5488, %v5485, %v5487
    %v5491 = vsel %vm4049, %v5489, 0
    %v5493 = vsel %vm4049, %v5490, 0
    %5495 = vmatprep.subr.mxu0 0.0
    %5496 = vmatpush1.msra.mxu0 0.0
    %5497 = vmatprep.subr.mxu0 0.0
    %5498 = vmatpush1.msra.mxu0 0.0
    %5499 = vmatprep.subr.mxu0 0.0
    %5500 = vmatpush1.msra.mxu0 0.0
    %5501 = vmatprep.subr.mxu0 0.0
    %5502 = vmatpush1.msra.mxu0 0.0
    %5503 = vmatprep.subr.mxu0 0.0
    %5504 = vmatpush1.msra.mxu0 0.0
    %5505 = vmatprep.subr.mxu0 0.0
    %5506 = vmatpush1.msra.mxu0 0.0
    %5507 = vmatprep.subr.mxu0 0.0
    %5508 = vmatpush1.msra.mxu0 0.0
    %5509 = vmatprep.subr.mxu0 0.0
    %5510 = vmatpush1.msra.mxu0 0.0
    %5511 = vmatprep.subr.mxu0 0.0
    %5512 = vmatpush1.msra.mxu0 0.0
    %5513 = vmatprep.subr.mxu0 0.0
    %5514 = vmatpush1.msra.mxu0 %v4058
    %5515 = vmatprep.subr.mxu0 0.0
    %5516 = vmatpush1.msra.mxu0 %v4017
    %5517 = vmatprep.subr.mxu0 0.0
    %5518 = vmatpush1.msra.mxu0 %v4016
    %5519 = vmatprep.subr.mxu0 0.0
    %5520 = vmatpush1.msra.mxu0 %v4015
    %5521 = vmatprep.subr.mxu0 0.0
    %5522 = vmatpush1.msra.mxu0 %v4014
    %5523 = vmatprep.subr.mxu0 0.0
    %5524 = vmatpush1.msra.mxu0 %v4013
    %5525 = vmatprep.subr.mxu0 0.0
    %5526 = vmatpush1.msra.mxu0 %v4012
    %5527 = vmatprep.subr.mxu0 0.0
    %5528 = vmatpush2.msra.mxu0 0.0
    %5529 = vmatprep.subr.mxu0 0.0
    %5530 = vmatpush2.msra.mxu0 0.0
    %5531 = vmatprep.subr.mxu0 0.0
    %5532 = vmatpush2.msra.mxu0 0.0
    %5533 = vmatprep.subr.mxu0 0.0
    %5534 = vmatpush2.msra.mxu0 0.0
    %5535 = vmatprep.subr.mxu0 0.0
    %5536 = vmatpush2.msra.mxu0 0.0
    %5537 = vmatprep.subr.mxu0 0.0
    %5538 = vmatpush2.msra.mxu0 0.0
    %5539 = vmatprep.subr.mxu0 0.0
    %5540 = vmatpush2.msra.mxu0 0.0
    %5541 = vmatprep.subr.mxu0 0.0
    %5542 = vmatpush2.msra.mxu0 0.0
    %5543 = vmatprep.subr.mxu0 0.0
    %5544 = vmatpush2.msra.mxu0 0.0
    %5545 = vmatprep.subr.mxu0 0.0
    %5546 = vmatpush2.msra.mxu0 0.0
    %5547 = vmatprep.subr.mxu0 0.0
    %5548 = vmatpush2.msra.mxu0 0.0
    %5549 = vmatprep.subr.mxu0 0.0
    %5550 = vmatpush2.msra.mxu0 0.0
    %5551 = vmatprep.subr.mxu0 0.0
    %5552 = vmatpush2.msra.mxu0 0.0
    %5553 = vmatprep.subr.mxu0 0.0
    %5554 = vmatpush2.msra.mxu0 0.0
    %5555 = vmatprep.subr.mxu0 0.0
    %5556 = vmatpush2.msra.mxu0 0.0
    %5557 = vmatprep.subr.mxu0 0.0
    %5558 = vmatpush2.msra.mxu0 0.0
    %5559 = vmatprep.mubr.f32.mxu0 0.0
    %5560 = vmatmul.mubr.f32.gmra.mxu0 %v5491
    %v5561 = vpop.f32.mrf.mxu0
    %v5562 = vadd.f32 0.0, %v5561
    %v5563 = vpop.f32.mrf.mxu0
    %5564 = vmatprep.mubr.f32.mxu0 0.0
    %5565 = vmatmul.mubr.f32.gmra.mxu0 %v5493
    %v5566 = vpop.f32.mrf.mxu0
    %v5567 = vadd.f32 0.0, %v5566
    %v5568 = vpop.f32.mrf.mxu0
    %5569 = vdwg.mxu0
    %5572 = vrot.lane.b32.xlu0 %v5562, 59
    %v5573 = vpop.permute.xlu0 %5572
    %5574 = vrot.lane.b32.xlu0 %v5567, 59
    %v5575 = vpop.permute.xlu0 %5574
    %vm5578 = vcmask 622040
    %5579 = vst.msk [vmem:[#allocation3 + $0x8] sm:$0xff] %vm5578, %v5573
    %vm5580 = vcmask 614872
    %5581 = vst.msk [vmem:[#allocation3 + $0x20] sm:$0x1] %vm5580, %v5575
    %v5582 = vld [vmem:[#allocation2 + $0x70] sm:$0xff]
    %v5583 = vld [vmem:[#allocation2 + $0x78] sm:$0xff]
    %v5584 = vld [vmem:[#allocation2 + $0x120] sm:$0x1]
    %v5585 = vld [vmem:[#allocation2 + $0x128] sm:$0x1]
    %5588 = vrot.lane.b32.xlu0 %v5583, 75
    %v5589 = vpop.permute.xlu0 %5588
    %5590 = vrot.lane.b32.xlu0 %v5585, 75
    %v5591 = vpop.permute.xlu0 %5590
    %v5594 = vmax.f32 %v5582, %v5589
    %v5595 = vmax.f32 %v5583, %v5589
    %v5596 = vmax.f32 %v5584, %v5591
    %v5597 = vmax.f32 %v5585, %v5591
    %v5598 = vld [vmem:[#allocation2 + $0x80] sm:$0xff]
    %v5599 = vld [vmem:[#allocation2 + $0x130] sm:$0x1]
    %5602 = vrot.lane.b32.xlu0 %v5583, 22
    %v5603 = vpop.permute.xlu0 %5602
    %5604 = vrot.lane.b32.xlu0 %v5598, 22
    %v5605 = vpop.permute.xlu0 %5604
    %5606 = vrot.lane.b32.xlu0 %v5585, 22
    %v5607 = vpop.permute.xlu0 %5606
    %5608 = vrot.lane.b32.xlu0 %v5599, 22
    %v5609 = vpop.permute.xlu0 %5608
    %v5610 = vsel %vm574, %v5603, %v5605
    %v5611 = vsel %vm574, %v5607, %v5609
    %v5616 = vmax.f32 %v5594, %v5603
    %v5617 = vmax.f32 %v5595, %v5610
    %v5618 = vmax.f32 %v5596, %v5607
    %v5619 = vmax.f32 %v5597, %v5611
    %5624 = vrot.lane.b32.xlu0 %v5616, 12
    %v5625 = vpop.permute.xlu0 %5624
    %5626 = vrot.lane.b32.xlu0 %v5617, 12
    %v5627 = vpop.permute.xlu0 %5626
    %5628 = vrot.lane.b32.xlu0 %v5618, 12
    %v5629 = vpop.permute.xlu0 %5628
    %5630 = vrot.lane.b32.xlu0 %v5619, 12
    %v5631 = vpop.permute.xlu0 %5630
    %vm5632 = vcmask 97280
    %v5633 = vsel %vm5632, %v5625, %v5627
    %v5634 = vsel %vm5632, %v5629, %v5631
    %v5635 = vsel %vm4049, %v5633, 0
    %v5637 = vsel %vm4049, %v5634, 0
    %5639 = vmatprep.subr.mxu0 0.0
    %5640 = vmatpush1.msra.mxu0 0.0
    %5641 = vmatprep.subr.mxu0 0.0
    %5642 = vmatpush1.msra.mxu0 0.0
    %5643 = vmatprep.subr.mxu0 0.0
    %5644 = vmatpush1.msra.mxu0 0.0
    %5645 = vmatprep.subr.mxu0 0.0
    %5646 = vmatpush1.msra.mxu0 0.0
    %5647 = vmatprep.subr.mxu0 0.0
    %5648 = vmatpush1.msra.mxu0 0.0
    %5649 = vmatprep.subr.mxu0 0.0
    %5650 = vmatpush1.msra.mxu0 0.0
    %5651 = vmatprep.subr.mxu0 0.0
    %5652 = vmatpush1.msra.mxu0 0.0
    %5653 = vmatprep.subr.mxu0 0.0
    %5654 = vmatpush1.msra.mxu0 0.0
    %5655 = vmatprep.subr.mxu0 0.0
    %5656 = vmatpush1.msra.mxu0 0.0
    %5657 = vmatprep.subr.mxu0 0.0
    %5658 = vmatpush1.msra.mxu0 %v4058
    %5659 = vmatprep.subr.mxu0 0.0
    %5660 = vmatpush1.msra.mxu0 %v4017
    %5661 = vmatprep.subr.mxu0 0.0
    %5662 = vmatpush1.msra.mxu0 %v4016
    %5663 = vmatprep.subr.mxu0 0.0
    %5664 = vmatpush1.msra.mxu0 %v4015
    %5665 = vmatprep.subr.mxu0 0.0
    %5666 = vmatpush1.msra.mxu0 %v4014
    %5667 = vmatprep.subr.mxu0 0.0
    %5668 = vmatpush1.msra.mxu0 %v4013
    %5669 = vmatprep.subr.mxu0 0.0
    %5670 = vmatpush1.msra.mxu0 %v4012
    %5671 = vmatprep.subr.mxu0 0.0
    %5672 = vmatpush2.msra.mxu0 0.0
    %5673 = vmatprep.subr.mxu0 0.0
    %5674 = vmatpush2.msra.mxu0 0.0
    %5675 = vmatprep.subr.mxu0 0.0
    %5676 = vmatpush2.msra.mxu0 0.0
    %5677 = vmatprep.subr.mxu0 0.0
    %5678 = vmatpush2.msra.mxu0 0.0
    %5679 = vmatprep.subr.mxu0 0.0
    %5680 = vmatpush2.msra.mxu0 0.0
    %5681 = vmatprep.subr.mxu0 0.0
    %5682 = vmatpush2.msra.mxu0 0.0
    %5683 = vmatprep.subr.mxu0 0.0
    %5684 = vmatpush2.msra.mxu0 0.0
    %5685 = vmatprep.subr.mxu0 0.0
    %5686 = vmatpush2.msra.mxu0 0.0
    %5687 = vmatprep.subr.mxu0 0.0
    %5688 = vmatpush2.msra.mxu0 0.0
    %5689 = vmatprep.subr.mxu0 0.0
    %5690 = vmatpush2.msra.mxu0 0.0
    %5691 = vmatprep.subr.mxu0 0.0
    %5692 = vmatpush2.msra.mxu0 0.0
    %5693 = vmatprep.subr.mxu0 0.0
    %5694 = vmatpush2.msra.mxu0 0.0
    %5695 = vmatprep.subr.mxu0 0.0
    %5696 = vmatpush2.msra.mxu0 0.0
    %5697 = vmatprep.subr.mxu0 0.0
    %5698 = vmatpush2.msra.mxu0 0.0
    %5699 = vmatprep.subr.mxu0 0.0
    %5700 = vmatpush2.msra.mxu0 0.0
    %5701 = vmatprep.subr.mxu0 0.0
    %5702 = vmatpush2.msra.mxu0 0.0
    %5703 = vmatprep.mubr.f32.mxu0 0.0
    %5704 = vmatmul.mubr.f32.gmra.mxu0 %v5635
    %v5705 = vpop.f32.mrf.mxu0
    %v5706 = vadd.f32 0.0, %v5705
    %v5707 = vpop.f32.mrf.mxu0
    %5708 = vmatprep.mubr.f32.mxu0 0.0
    %5709 = vmatmul.mubr.f32.gmra.mxu0 %v5637
    %v5710 = vpop.f32.mrf.mxu0
    %v5711 = vadd.f32 0.0, %v5710
    %v5712 = vpop.f32.mrf.mxu0
    %5713 = vdwg.mxu0
    %5716 = vrot.lane.b32.xlu0 %v5706, 76
    %v5717 = vpop.permute.xlu0 %5716
    %5718 = vrot.lane.b32.xlu0 %v5711, 76
    %v5719 = vpop.permute.xlu0 %5718
    %vm5722 = vcmask 761440
    %5723 = vst.msk [vmem:[#allocation3 + $0x8] sm:$0xff] %vm5722, %v5717
    %vm5724 = vcmask 754272
    %5725 = vst.msk [vmem:[#allocation3 + $0x20] sm:$0x1] %vm5724, %v5719
    %v5726 = vld [vmem:[#allocation2 + $0x80] sm:$0xff]
    %v5727 = vld [vmem:[#allocation2 + $0x130] sm:$0x1]
    %5730 = vrot.lane.b32.xlu0 %v5726, 75
    %v5731 = vpop.permute.xlu0 %5730
    %5732 = vrot.lane.b32.xlu0 %v5727, 75
    %v5733 = vpop.permute.xlu0 %5732
    %v5736 = vmax.f32 %v5726, %v5731
    %v5737 = vmax.f32 %v5727, %v5733
    %v5738 = vld [vmem:[#allocation2 + $0x88] sm:$0xff]
    %v5739 = vld [vmem:[#allocation2 + $0x138] sm:$0x1]
    %5742 = vrot.lane.b32.xlu0 %v5726, 22
    %v5743 = vpop.permute.xlu0 %5742
    %5744 = vrot.lane.b32.xlu0 %v5738, 22
    %v5745 = vpop.permute.xlu0 %5744
    %5746 = vrot.lane.b32.xlu0 %v5727, 22
    %v5747 = vpop.permute.xlu0 %5746
    %5748 = vrot.lane.b32.xlu0 %v5739, 22
    %v5749 = vpop.permute.xlu0 %5748
    %v5750 = vsel %vm574, %v5743, %v5745
    %v5751 = vsel %vm574, %v5747, %v5749
    %v5754 = vmax.f32 %v5736, %v5750
    %v5755 = vmax.f32 %v5737, %v5751
    %5758 = vrot.lane.b32.xlu0 %v5754, 109
    %v5759 = vpop.permute.xlu0 %5758
    %5760 = vrot.lane.b32.xlu0 %v5755, 109
    %v5761 = vpop.permute.xlu0 %5760
    %v5762 = vsel %vm4049, %v5759, 0
    %v5764 = vsel %vm4049, %v5761, 0
    %5766 = vmatprep.subr.mxu0 0.0
    %5767 = vmatpush1.msra.mxu0 0.0
    %5768 = vmatprep.subr.mxu0 0.0
    %5769 = vmatpush1.msra.mxu0 0.0
    %5770 = vmatprep.subr.mxu0 0.0
    %5771 = vmatpush1.msra.mxu0 0.0
    %5772 = vmatprep.subr.mxu0 0.0
    %5773 = vmatpush1.msra.mxu0 0.0
    %5774 = vmatprep.subr.mxu0 0.0
    %5775 = vmatpush1.msra.mxu0 0.0
    %5776 = vmatprep.subr.mxu0 0.0
    %5777 = vmatpush1.msra.mxu0 0.0
    %5778 = vmatprep.subr.mxu0 0.0
    %5779 = vmatpush1.msra.mxu0 0.0
    %5780 = vmatprep.subr.mxu0 0.0
    %5781 = vmatpush1.msra.mxu0 0.0
    %5782 = vmatprep.subr.mxu0 0.0
    %5783 = vmatpush1.msra.mxu0 0.0
    %5784 = vmatprep.subr.mxu0 0.0
    %5785 = vmatpush1.msra.mxu0 %v4058
    %5786 = vmatprep.subr.mxu0 0.0
    %5787 = vmatpush1.msra.mxu0 %v4017
    %5788 = vmatprep.subr.mxu0 0.0
    %5789 = vmatpush1.msra.mxu0 %v4016
    %5790 = vmatprep.subr.mxu0 0.0
    %5791 = vmatpush1.msra.mxu0 %v4015
    %5792 = vmatprep.subr.mxu0 0.0
    %5793 = vmatpush1.msra.mxu0 %v4014
    %5794 = vmatprep.subr.mxu0 0.0
    %5795 = vmatpush1.msra.mxu0 %v4013
    %5796 = vmatprep.subr.mxu0 0.0
    %5797 = vmatpush1.msra.mxu0 %v4012
    %5798 = vmatprep.subr.mxu0 0.0
    %5799 = vmatpush2.msra.mxu0 0.0
    %5800 = vmatprep.subr.mxu0 0.0
    %5801 = vmatpush2.msra.mxu0 0.0
    %5802 = vmatprep.subr.mxu0 0.0
    %5803 = vmatpush2.msra.mxu0 0.0
    %5804 = vmatprep.subr.mxu0 0.0
    %5805 = vmatpush2.msra.mxu0 0.0
    %5806 = vmatprep.subr.mxu0 0.0
    %5807 = vmatpush2.msra.mxu0 0.0
    %5808 = vmatprep.subr.mxu0 0.0
    %5809 = vmatpush2.msra.mxu0 0.0
    %5810 = vmatprep.subr.mxu0 0.0
    %5811 = vmatpush2.msra.mxu0 0.0
    %5812 = vmatprep.subr.mxu0 0.0
    %5813 = vmatpush2.msra.mxu0 0.0
    %5814 = vmatprep.subr.mxu0 0.0
    %5815 = vmatpush2.msra.mxu0 0.0
    %5816 = vmatprep.subr.mxu0 0.0
    %5817 = vmatpush2.msra.mxu0 0.0
    %5818 = vmatprep.subr.mxu0 0.0
    %5819 = vmatpush2.msra.mxu0 0.0
    %5820 = vmatprep.subr.mxu0 0.0
    %5821 = vmatpush2.msra.mxu0 0.0
    %5822 = vmatprep.subr.mxu0 0.0
    %5823 = vmatpush2.msra.mxu0 0.0
    %5824 = vmatprep.subr.mxu0 0.0
    %5825 = vmatpush2.msra.mxu0 0.0
    %5826 = vmatprep.subr.mxu0 0.0
    %5827 = vmatpush2.msra.mxu0 0.0
    %5828 = vmatprep.subr.mxu0 0.0
    %5829 = vmatpush2.msra.mxu0 0.0
    %5830 = vmatprep.mubr.f32.mxu0 0.0
    %5831 = vmatmul.mubr.f32.gmra.mxu0 %v5762
    %v5832 = vpop.f32.mrf.mxu0
    %v5833 = vadd.f32 0.0, %v5832
    %v5834 = vpop.f32.mrf.mxu0
    %5835 = vmatprep.mubr.f32.mxu0 0.0
    %5836 = vmatmul.mubr.f32.gmra.mxu0 %v5764
    %v5837 = vpop.f32.mrf.mxu0
    %v5838 = vadd.f32 0.0, %v5837
    %v5839 = vpop.f32.mrf.mxu0
    %5840 = vdwg.mxu0
    %5843 = vrot.lane.b32.xlu0 %v5833, 93
    %v5844 = vpop.permute.xlu0 %5843
    %5845 = vrot.lane.b32.xlu0 %v5838, 93
    %v5846 = vpop.permute.xlu0 %5845
    %vm5849 = vcmask 900840
    %5850 = vst.msk [vmem:[#allocation3 + $0x8] sm:$0xff] %vm5849, %v5844
    %vm5851 = vcmask 893672
    %5852 = vst.msk [vmem:[#allocation3 + $0x20] sm:$0x1] %vm5851, %v5846
    %v5853 = vld [vmem:[#allocation2 + $0x88] sm:$0xff]
    %v5854 = vld [vmem:[#allocation2 + $0x138] sm:$0x1]
    %v5855 = vld [vmem:[#allocation2 + $0x90] sm:$0xff]
    %v5856 = vld [vmem:[#allocation2 + $0x140] sm:$0x1]
    %5861 = vrot.lane.b32.xlu0 %v5853, 75
    %v5862 = vpop.permute.xlu0 %5861
    %5863 = vrot.lane.b32.xlu0 %v5855, 75
    %v5864 = vpop.permute.xlu0 %5863
    %5865 = vrot.lane.b32.xlu0 %v5854, 75
    %v5866 = vpop.permute.xlu0 %5865
    %5867 = vrot.lane.b32.xlu0 %v5856, 75
    %v5868 = vpop.permute.xlu0 %5867
    %v5869 = vsel %vm343, %v5862, %v5864
    %v5870 = vsel %vm343, %v5866, %v5868
    %v5873 = vmax.f32 %v5853, %v5869
    %v5874 = vmax.f32 %v5854, %v5870
    %5875 = vrot.lane.b32.xlu0 %v5855, 22
    %v5876 = vpop.permute.xlu0 %5875
    %5877 = vrot.lane.b32.xlu0 %v5856, 22
    %v5878 = vpop.permute.xlu0 %5877
    %v5881 = vmax.f32 %v5873, %v5876
    %v5882 = vmax.f32 %v5874, %v5878
    %5885 = vrot.lane.b32.xlu0 %v5881, 78
    %v5886 = vpop.permute.xlu0 %5885
    %5887 = vrot.lane.b32.xlu0 %v5882, 78
    %v5888 = vpop.permute.xlu0 %5887
    %v5889 = vsel %vm4049, %v5886, 0
    %v5891 = vsel %vm4049, %v5888, 0
    %5893 = vmatprep.subr.mxu0 0.0
    %5894 = vmatpush1.msra.mxu0 0.0
    %5895 = vmatprep.subr.mxu0 0.0
    %5896 = vmatpush1.msra.mxu0 0.0
    %5897 = vmatprep.subr.mxu0 0.0
    %5898 = vmatpush1.msra.mxu0 0.0
    %5899 = vmatprep.subr.mxu0 0.0
    %5900 = vmatpush1.msra.mxu0 0.0
    %5901 = vmatprep.subr.mxu0 0.0
    %5902 = vmatpush1.msra.mxu0 0.0
    %5903 = vmatprep.subr.mxu0 0.0
    %5904 = vmatpush1.msra.mxu0 0.0
    %5905 = vmatprep.subr.mxu0 0.0
    %5906 = vmatpush1.msra.mxu0 0.0
    %5907 = vmatprep.subr.mxu0 0.0
    %5908 = vmatpush1.msra.mxu0 0.0
    %5909 = vmatprep.subr.mxu0 0.0
    %5910 = vmatpush1.msra.mxu0 0.0
    %5911 = vmatprep.subr.mxu0 0.0
    %5912 = vmatpush1.msra.mxu0 %v4058
    %5913 = vmatprep.subr.mxu0 0.0
    %5914 = vmatpush1.msra.mxu0 %v4017
    %5915 = vmatprep.subr.mxu0 0.0
    %5916 = vmatpush1.msra.mxu0 %v4016
    %5917 = vmatprep.subr.mxu0 0.0
    %5918 = vmatpush1.msra.mxu0 %v4015
    %5919 = vmatprep.subr.mxu0 0.0
    %5920 = vmatpush1.msra.mxu0 %v4014
    %5921 = vmatprep.subr.mxu0 0.0
    %5922 = vmatpush1.msra.mxu0 %v4013
    %5923 = vmatprep.subr.mxu0 0.0
    %5924 = vmatpush1.msra.mxu0 %v4012
    %5925 = vmatprep.subr.mxu0 0.0
    %5926 = vmatpush2.msra.mxu0 0.0
    %5927 = vmatprep.subr.mxu0 0.0
    %5928 = vmatpush2.msra.mxu0 0.0
    %5929 = vmatprep.subr.mxu0 0.0
    %5930 = vmatpush2.msra.mxu0 0.0
    %5931 = vmatprep.subr.mxu0 0.0
    %5932 = vmatpush2.msra.mxu0 0.0
    %5933 = vmatprep.subr.mxu0 0.0
    %5934 = vmatpush2.msra.mxu0 0.0
    %5935 = vmatprep.subr.mxu0 0.0
    %5936 = vmatpush2.msra.mxu0 0.0
    %5937 = vmatprep.subr.mxu0 0.0
    %5938 = vmatpush2.msra.mxu0 0.0
    %5939 = vmatprep.subr.mxu0 0.0
    %5940 = vmatpush2.msra.mxu0 0.0
    %5941 = vmatprep.subr.mxu0 0.0
    %5942 = vmatpush2.msra.mxu0 0.0
    %5943 = vmatprep.subr.mxu0 0.0
    %5944 = vmatpush2.msra.mxu0 0.0
    %5945 = vmatprep.subr.mxu0 0.0
    %5946 = vmatpush2.msra.mxu0 0.0
    %5947 = vmatprep.subr.mxu0 0.0
    %5948 = vmatpush2.msra.mxu0 0.0
    %5949 = vmatprep.subr.mxu0 0.0
    %5950 = vmatpush2.msra.mxu0 0.0
    %5951 = vmatprep.subr.mxu0 0.0
    %5952 = vmatpush2.msra.mxu0 0.0
    %5953 = vmatprep.subr.mxu0 0.0
    %5954 = vmatpush2.msra.mxu0 0.0
    %5955 = vmatprep.subr.mxu0 0.0
    %5956 = vmatpush2.msra.mxu0 0.0
    %5957 = vmatprep.mubr.f32.mxu0 0.0
    %5958 = vmatmul.mubr.f32.gmra.mxu0 %v5889
    %v5959 = vpop.f32.mrf.mxu0
    %v5960 = vadd.f32 0.0, %v5959
    %v5961 = vpop.f32.mrf.mxu0
    %5962 = vmatprep.mubr.f32.mxu0 0.0
    %5963 = vmatmul.mubr.f32.gmra.mxu0 %v5891
    %v5964 = vpop.f32.mrf.mxu0
    %v5965 = vadd.f32 0.0, %v5964
    %v5966 = vpop.f32.mrf.mxu0
    %5967 = vdwg.mxu0
    %5970 = vrot.lane.b32.xlu0 %v5960, 110
    %v5971 = vpop.permute.xlu0 %5970
    %5972 = vrot.lane.b32.xlu0 %v5965, 110
    %v5973 = vpop.permute.xlu0 %5972
    %vm5976 = vcmask 1040240
    %5977 = vst.msk [vmem:[#allocation3 + $0x8] sm:$0xff] %vm5976, %v5971
    %vm5978 = vcmask 1033072
    %5979 = vst.msk [vmem:[#allocation3 + $0x20] sm:$0x1] %vm5978, %v5973
    %v5980 = vld [vmem:[#allocation2 + $0x90] sm:$0xff]
    %v5981 = vld [vmem:[#allocation2 + $0x98] sm:$0xff]
    %v5982 = vld [vmem:[#allocation2 + $0x140] sm:$0x1]
    %v5983 = vld [vmem:[#allocation2 + $0x148] sm:$0x1]
    %5986 = vrot.lane.b32.xlu0 %v5981, 75
    %v5987 = vpop.permute.xlu0 %5986
    %5988 = vrot.lane.b32.xlu0 %v5983, 75
    %v5989 = vpop.permute.xlu0 %5988
    %v5992 = vmax.f32 %v5980, %v5987
    %v5993 = vmax.f32 %v5981, %v5987
    %v5994 = vmax.f32 %v5982, %v5989
    %v5995 = vmax.f32 %v5983, %v5989
    %5996 = vrot.lane.b32.xlu0 %v5981, 22
    %v5997 = vpop.permute.xlu0 %5996
    %5998 = vrot.lane.b32.xlu0 %v5983, 22
    %v5999 = vpop.permute.xlu0 %5998
    %v6002 = vmax.f32 %v5992, %v5997
    %v6003 = vmax.f32 %v5993, %v5997
    %v6004 = vmax.f32 %v5994, %v5999
    %v6005 = vmax.f32 %v5995, %v5999
    %6010 = vrot.lane.b32.xlu0 %v6002, 47
    %v6011 = vpop.permute.xlu0 %6010
    %6012 = vrot.lane.b32.xlu0 %v6003, 47
    %v6013 = vpop.permute.xlu0 %6012
    %6014 = vrot.lane.b32.xlu0 %v6004, 47
    %v6015 = vpop.permute.xlu0 %6014
    %6016 = vrot.lane.b32.xlu0 %v6005, 47
    %v6017 = vpop.permute.xlu0 %6016
    %vm6018 = vcmask 384000
    %v6019 = vsel %vm6018, %v6011, %v6013
    %v6020 = vsel %vm6018, %v6015, %v6017
    %v6021 = vsel %vm4049, %v6019, 0
    %v6023 = vsel %vm4049, %v6020, 0
    %6025 = vmatprep.subr.mxu0 0.0
    %6026 = vmatpush1.msra.mxu0 0.0
    %6027 = vmatprep.subr.mxu0 0.0
    %6028 = vmatpush1.msra.mxu0 0.0
    %6029 = vmatprep.subr.mxu0 0.0
    %6030 = vmatpush1.msra.mxu0 0.0
    %6031 = vmatprep.subr.mxu0 0.0
    %6032 = vmatpush1.msra.mxu0 0.0
    %6033 = vmatprep.subr.mxu0 0.0
    %6034 = vmatpush1.msra.mxu0 0.0
    %6035 = vmatprep.subr.mxu0 0.0
    %6036 = vmatpush1.msra.mxu0 0.0
    %6037 = vmatprep.subr.mxu0 0.0
    %6038 = vmatpush1.msra.mxu0 0.0
    %6039 = vmatprep.subr.mxu0 0.0
    %6040 = vmatpush1.msra.mxu0 0.0
    %6041 = vmatprep.subr.mxu0 0.0
    %6042 = vmatpush1.msra.mxu0 0.0
    %6043 = vmatprep.subr.mxu0 0.0
    %6044 = vmatpush1.msra.mxu0 %v4058
    %6045 = vmatprep.subr.mxu0 0.0
    %6046 = vmatpush1.msra.mxu0 %v4017
    %6047 = vmatprep.subr.mxu0 0.0
    %6048 = vmatpush1.msra.mxu0 %v4016
    %6049 = vmatprep.subr.mxu0 0.0
    %6050 = vmatpush1.msra.mxu0 %v4015
    %6051 = vmatprep.subr.mxu0 0.0
    %6052 = vmatpush1.msra.mxu0 %v4014
    %6053 = vmatprep.subr.mxu0 0.0
    %6054 = vmatpush1.msra.mxu0 %v4013
    %6055 = vmatprep.subr.mxu0 0.0
    %6056 = vmatpush1.msra.mxu0 %v4012
    %6057 = vmatprep.subr.mxu0 0.0
    %6058 = vmatpush2.msra.mxu0 0.0
    %6059 = vmatprep.subr.mxu0 0.0
    %6060 = vmatpush2.msra.mxu0 0.0
    %6061 = vmatprep.subr.mxu0 0.0
    %6062 = vmatpush2.msra.mxu0 0.0
    %6063 = vmatprep.subr.mxu0 0.0
    %6064 = vmatpush2.msra.mxu0 0.0
    %6065 = vmatprep.subr.mxu0 0.0
    %6066 = vmatpush2.msra.mxu0 0.0
    %6067 = vmatprep.subr.mxu0 0.0
    %6068 = vmatpush2.msra.mxu0 0.0
    %6069 = vmatprep.subr.mxu0 0.0
    %6070 = vmatpush2.msra.mxu0 0.0
    %6071 = vmatprep.subr.mxu0 0.0
    %6072 = vmatpush2.msra.mxu0 0.0
    %6073 = vmatprep.subr.mxu0 0.0
    %6074 = vmatpush2.msra.mxu0 0.0
    %6075 = vmatprep.subr.mxu0 0.0
    %6076 = vmatpush2.msra.mxu0 0.0
    %6077 = vmatprep.subr.mxu0 0.0
    %6078 = vmatpush2.msra.mxu0 0.0
    %6079 = vmatprep.subr.mxu0 0.0
    %6080 = vmatpush2.msra.mxu0 0.0
    %6081 = vmatprep.subr.mxu0 0.0
    %6082 = vmatpush2.msra.mxu0 0.0
    %6083 = vmatprep.subr.mxu0 0.0
    %6084 = vmatpush2.msra.mxu0 0.0
    %6085 = vmatprep.subr.mxu0 0.0
    %6086 = vmatpush2.msra.mxu0 0.0
    %6087 = vmatprep.subr.mxu0 0.0
    %6088 = vmatpush2.msra.mxu0 0.0
    %6089 = vmatprep.mubr.f32.mxu0 0.0
    %6090 = vmatmul.mubr.f32.gmra.mxu0 %v6021
    %v6091 = vpop.f32.mrf.mxu0
    %v6092 = vadd.f32 0.0, %v6091
    %v6093 = vpop.f32.mrf.mxu0
    %6094 = vmatprep.mubr.f32.mxu0 0.0
    %6095 = vmatmul.mubr.f32.gmra.mxu0 %v6023
    %v6096 = vpop.f32.mrf.mxu0
    %v6097 = vadd.f32 0.0, %v6096
    %v6098 = vpop.f32.mrf.mxu0
    %6099 = vdwg.mxu0
    %6102 = vrot.lane.b32.xlu0 %v6092, 127
    %v6103 = vpop.permute.xlu0 %6102
    %6104 = vrot.lane.b32.xlu0 %v6097, 127
    %v6105 = vpop.permute.xlu0 %6104
    %vm6108 = vcmask 1048568
    %6109 = vst.msk [vmem:[#allocation3 + $0x8] sm:$0xff] %vm6108, %v6103
    %vm6110 = vcmask 130048
    %6111 = vst.msk [vmem:[#allocation3 + $0x10] sm:$0xff] %vm6110, %v6103
    %vm6112 = vcmask 1041400
    %6113 = vst.msk [vmem:[#allocation3 + $0x20] sm:$0x1] %vm6112, %v6105
    %vm6114 = vcmask 122880
    %6115 = vst.msk [vmem:[#allocation3 + $0x28] sm:$0x1] %vm6114, %v6105
    %v6116 = vld [vmem:[#allocation2 + $0x98] sm:$0xff]
    %v6117 = vld [vmem:[#allocation2 + $0xa0] sm:$0xff]
    %v6118 = vld [vmem:[#allocation2 + $0x148] sm:$0x1]
    %v6119 = vld [vmem:[#allocation2 + $0x150] sm:$0x1]
    %6122 = vrot.lane.b32.xlu0 %v6117, 75
    %v6123 = vpop.permute.xlu0 %6122
    %6124 = vrot.lane.b32.xlu0 %v6119, 75
    %v6125 = vpop.permute.xlu0 %6124
    %v6128 = vmax.f32 %v6116, %v6123
    %v6129 = vmax.f32 %v6117, %v6123
    %v6130 = vmax.f32 %v6118, %v6125
    %v6131 = vmax.f32 %v6119, %v6125
    %v6132 = vld [vmem:[#allocation2 + $0xa8] sm:$0xff]
    %v6133 = vld [vmem:[#allocation2 + $0x158] sm:$0x1]
    %6136 = vrot.lane.b32.xlu0 %v6117, 22
    %v6137 = vpop.permute.xlu0 %6136
    %6138 = vrot.lane.b32.xlu0 %v6132, 22
    %v6139 = vpop.permute.xlu0 %6138
    %6140 = vrot.lane.b32.xlu0 %v6119, 22
    %v6141 = vpop.permute.xlu0 %6140
    %6142 = vrot.lane.b32.xlu0 %v6133, 22
    %v6143 = vpop.permute.xlu0 %6142
    %v6144 = vsel %vm574, %v6137, %v6139
    %v6145 = vsel %vm574, %v6141, %v6143
    %v6150 = vmax.f32 %v6128, %v6137
    %v6151 = vmax.f32 %v6129, %v6144
    %v6152 = vmax.f32 %v6130, %v6141
    %v6153 = vmax.f32 %v6131, %v6145
    %6158 = vrot.lane.b32.xlu0 %v6150, 16
    %v6159 = vpop.permute.xlu0 %6158
    %6160 = vrot.lane.b32.xlu0 %v6151, 16
    %v6161 = vpop.permute.xlu0 %6160
    %6162 = vrot.lane.b32.xlu0 %v6152, 16
    %v6163 = vpop.permute.xlu0 %6162
    %6164 = vrot.lane.b32.xlu0 %v6153, 16
    %v6165 = vpop.permute.xlu0 %6164
    %v6166 = vsel %vm6110, %v6159, %v6161
    %v6167 = vsel %vm6110, %v6163, %v6165
    %v6168 = vsel %vm4049, %v6166, 0
    %v6170 = vsel %vm4049, %v6167, 0
    %6172 = vmatprep.subr.mxu0 0.0
    %6173 = vmatpush1.msra.mxu0 0.0
    %6174 = vmatprep.subr.mxu0 0.0
    %6175 = vmatpush1.msra.mxu0 0.0
    %6176 = vmatprep.subr.mxu0 0.0
    %6177 = vmatpush1.msra.mxu0 0.0
    %6178 = vmatprep.subr.mxu0 0.0
    %6179 = vmatpush1.msra.mxu0 0.0
    %6180 = vmatprep.subr.mxu0 0.0
    %6181 = vmatpush1.msra.mxu0 0.0
    %6182 = vmatprep.subr.mxu0 0.0
    %6183 = vmatpush1.msra.mxu0 0.0
    %6184 = vmatprep.subr.mxu0 0.0
    %6185 = vmatpush1.msra.mxu0 0.0
    %6186 = vmatprep.subr.mxu0 0.0
    %6187 = vmatpush1.msra.mxu0 0.0
    %6188 = vmatprep.subr.mxu0 0.0
    %6189 = vmatpush1.msra.mxu0 0.0
    %6190 = vmatprep.subr.mxu0 0.0
    %6191 = vmatpush1.msra.mxu0 %v4058
    %6192 = vmatprep.subr.mxu0 0.0
    %6193 = vmatpush1.msra.mxu0 %v4017
    %6194 = vmatprep.subr.mxu0 0.0
    %6195 = vmatpush1.msra.mxu0 %v4016
    %6196 = vmatprep.subr.mxu0 0.0
    %6197 = vmatpush1.msra.mxu0 %v4015
    %6198 = vmatprep.subr.mxu0 0.0
    %6199 = vmatpush1.msra.mxu0 %v4014
    %6200 = vmatprep.subr.mxu0 0.0
    %6201 = vmatpush1.msra.mxu0 %v4013
    %6202 = vmatprep.subr.mxu0 0.0
    %6203 = vmatpush1.msra.mxu0 %v4012
    %6204 = vmatprep.subr.mxu0 0.0
    %6205 = vmatpush2.msra.mxu0 0.0
    %6206 = vmatprep.subr.mxu0 0.0
    %6207 = vmatpush2.msra.mxu0 0.0
    %6208 = vmatprep.subr.mxu0 0.0
    %6209 = vmatpush2.msra.mxu0 0.0
    %6210 = vmatprep.subr.mxu0 0.0
    %6211 = vmatpush2.msra.mxu0 0.0
    %6212 = vmatprep.subr.mxu0 0.0
    %6213 = vmatpush2.msra.mxu0 0.0
    %6214 = vmatprep.subr.mxu0 0.0
    %6215 = vmatpush2.msra.mxu0 0.0
    %6216 = vmatprep.subr.mxu0 0.0
    %6217 = vmatpush2.msra.mxu0 0.0
    %6218 = vmatprep.subr.mxu0 0.0
    %6219 = vmatpush2.msra.mxu0 0.0
    %6220 = vmatprep.subr.mxu0 0.0
    %6221 = vmatpush2.msra.mxu0 0.0
    %6222 = vmatprep.subr.mxu0 0.0
    %6223 = vmatpush2.msra.mxu0 0.0
    %6224 = vmatprep.subr.mxu0 0.0
    %6225 = vmatpush2.msra.mxu0 0.0
    %6226 = vmatprep.subr.mxu0 0.0
    %6227 = vmatpush2.msra.mxu0 0.0
    %6228 = vmatprep.subr.mxu0 0.0
    %6229 = vmatpush2.msra.mxu0 0.0
    %6230 = vmatprep.subr.mxu0 0.0
    %6231 = vmatpush2.msra.mxu0 0.0
    %6232 = vmatprep.subr.mxu0 0.0
    %6233 = vmatpush2.msra.mxu0 0.0
    %6234 = vmatprep.subr.mxu0 0.0
    %6235 = vmatpush2.msra.mxu0 0.0
    %6236 = vmatprep.mubr.f32.mxu0 0.0
    %6237 = vmatmul.mubr.f32.gmra.mxu0 %v6168
    %v6238 = vpop.f32.mrf.mxu0
    %v6239 = vadd.f32 0.0, %v6238
    %v6240 = vpop.f32.mrf.mxu0
    %6241 = vmatprep.mubr.f32.mxu0 0.0
    %6242 = vmatmul.mubr.f32.gmra.mxu0 %v6170
    %v6243 = vpop.f32.mrf.mxu0
    %v6244 = vadd.f32 0.0, %v6243
    %v6245 = vpop.f32.mrf.mxu0
    %6246 = vdwg.mxu0
    %6249 = vrot.lane.b32.xlu0 %v6239, 16
    %v6250 = vpop.permute.xlu0 %6249
    %6251 = vrot.lane.b32.xlu0 %v6244, 16
    %v6252 = vpop.permute.xlu0 %6251
    %vm6255 = vcmask 269440
    %6256 = vst.msk [vmem:[#allocation3 + $0x10] sm:$0xff] %vm6255, %v6250
    %vm6257 = vcmask 262272
    %6258 = vst.msk [vmem:[#allocation3 + $0x28] sm:$0x1] %vm6257, %v6252
    %v6259 = vld [vmem:[#allocation3] sm:$0xff]
    %v6260 = vld [vmem:[#allocation3 + $0x8] sm:$0xff]
    %v6261 = vld [vmem:[#allocation3 + $0x18] sm:$0x1]
    %v6262 = vld [vmem:[#allocation3 + $0x20] sm:$0x1]
    %6263 = vst [vmem:[#allocation4] sm:$0xff] %v6259
    %6264 = vst.msk [vmem:[#allocation4 + $0x8] sm:$0xff] %vm27, %v6260
    %6265 = vst [vmem:[#allocation4 + $0x10] sm:$0x1] %v6261
    %vm6266 = vcmask 1015808
    %6267 = vst.msk [vmem:[#allocation4 + $0x18] sm:$0x1] %vm6266, %v6262
    %v6268 = vld [vmem:[#allocation3] sm:$0xff]
    %v6269 = vld [vmem:[#allocation3 + $0x8] sm:$0xff]
    %v6270 = vld [vmem:[#allocation3 + $0x18] sm:$0x1]
    %v6271 = vld [vmem:[#allocation3 + $0x20] sm:$0x1]
    %6276 = vrot.lane.b32.xlu0 %v6268, 127
    %v6277 = vpop.permute.xlu0 %6276
    %6278 = vrot.lane.b32.xlu0 %v6269, 127
    %v6279 = vpop.permute.xlu0 %6278
    %6280 = vrot.lane.b32.xlu0 %v6270, 127
    %v6281 = vpop.permute.xlu0 %6280
    %6282 = vrot.lane.b32.xlu0 %v6271, 127
    %v6283 = vpop.permute.xlu0 %6282
    %v6284 = vsel %vm189, %v6277, %v6279
    %v6285 = vsel %vm189, %v6281, %v6283
    %6290 = vst [vmem:[#allocation4 + $0x20] sm:$0xff] %v6284
    %6291 = vst.msk [vmem:[#allocation4 + $0x28] sm:$0xff] %vm27, %v6279
    %6292 = vst [vmem:[#allocation4 + $0x30] sm:$0x1] %v6285
    %6293 = vst.msk [vmem:[#allocation4 + $0x38] sm:$0x1] %vm6266, %v6283
    %v6294 = vld [vmem:[#allocation3] sm:$0xff]
    %v6295 = vld [vmem:[#allocation3 + $0x8] sm:$0xff]
    %v6296 = vld [vmem:[#allocation3 + $0x18] sm:$0x1]
    %v6297 = vld [vmem:[#allocation3 + $0x20] sm:$0x1]
    %6302 = vrot.lane.b32.xlu0 %v6294, 126
    %v6303 = vpop.permute.xlu0 %6302
    %6304 = vrot.lane.b32.xlu0 %v6295, 126
    %v6305 = vpop.permute.xlu0 %6304
    %6306 = vrot.lane.b32.xlu0 %v6296, 126
    %v6307 = vpop.permute.xlu0 %6306
    %6308 = vrot.lane.b32.xlu0 %v6297, 126
    %v6309 = vpop.permute.xlu0 %6308
    %v6310 = vsel %vm266, %v6303, %v6305
    %v6311 = vsel %vm266, %v6307, %v6309
    %6316 = vst [vmem:[#allocation4 + $0x40] sm:$0xff] %v6310
    %6317 = vst.msk [vmem:[#allocation4 + $0x48] sm:$0xff] %vm27, %v6305
    %6318 = vst [vmem:[#allocation4 + $0x50] sm:$0x1] %v6311
    %6319 = vst.msk [vmem:[#allocation4 + $0x58] sm:$0x1] %vm6266, %v6309
    %v6320 = vld [vmem:[#allocation3] sm:$0xff]
    %v6321 = vld [vmem:[#allocation3 + $0x8] sm:$0xff]
    %v6322 = vld [vmem:[#allocation3 + $0x10] sm:$0xff]
    %v6323 = vld [vmem:[#allocation3 + $0x18] sm:$0x1]
    %v6324 = vld [vmem:[#allocation3 + $0x20] sm:$0x1]
    %v6325 = vld [vmem:[#allocation3 + $0x28] sm:$0x1]
    %6332 = vrot.lane.b32.xlu0 %v6320, 111
    %v6333 = vpop.permute.xlu0 %6332
    %6334 = vrot.lane.b32.xlu0 %v6321, 111
    %v6335 = vpop.permute.xlu0 %6334
    %6336 = vrot.lane.b32.xlu0 %v6322, 111
    %v6337 = vpop.permute.xlu0 %6336
    %6338 = vrot.lane.b32.xlu0 %v6323, 111
    %v6339 = vpop.permute.xlu0 %6338
    %6340 = vrot.lane.b32.xlu0 %v6324, 111
    %v6341 = vpop.permute.xlu0 %6340
    %6342 = vrot.lane.b32.xlu0 %v6325, 111
    %v6343 = vpop.permute.xlu0 %6342
    %vm6344 = vcmask 908288
    %v6345 = vsel %vm6344, %v6333, %v6335
    %v6346 = vsel %vm6344, %v6335, %v6337
    %v6347 = vsel %vm6344, %v6339, %v6341
    %v6348 = vsel %vm6344, %v6341, %v6343
    %6353 = vst [vmem:[#allocation4 + $0x60] sm:$0xff] %v6345
    %6354 = vst.msk [vmem:[#allocation4 + $0x68] sm:$0xff] %vm27, %v6346
    %6355 = vst [vmem:[#allocation4 + $0x70] sm:$0x1] %v6347
    %6356 = vst.msk [vmem:[#allocation4 + $0x78] sm:$0x1] %vm6266, %v6348
    %v6357 = vld [vmem:[#allocation3] sm:$0xff]
    %v6358 = vld [vmem:[#allocation3 + $0x8] sm:$0xff]
    %v6359 = vld [vmem:[#allocation3 + $0x10] sm:$0xff]
    %v6360 = vld [vmem:[#allocation3 + $0x18] sm:$0x1]
    %v6361 = vld [vmem:[#allocation3 + $0x20] sm:$0x1]
    %v6362 = vld [vmem:[#allocation3 + $0x28] sm:$0x1]
    %6369 = vrot.lane.b32.xlu0 %v6357, 110
    %v6370 = vpop.permute.xlu0 %6369
    %6371 = vrot.lane.b32.xlu0 %v6358, 110
    %v6372 = vpop.permute.xlu0 %6371
    %6373 = vrot.lane.b32.xlu0 %v6359, 110
    %v6374 = vpop.permute.xlu0 %6373
    %6375 = vrot.lane.b32.xlu0 %v6360, 110
    %v6376 = vpop.permute.xlu0 %6375
    %6377 = vrot.lane.b32.xlu0 %v6361, 110
    %v6378 = vpop.permute.xlu0 %6377
    %6379 = vrot.lane.b32.xlu0 %v6362, 110
    %v6380 = vpop.permute.xlu0 %6379
    %vm6381 = vcmask 900096
    %v6382 = vsel %vm6381, %v6370, %v6372
    %v6383 = vsel %vm6381, %v6372, %v6374
    %v6384 = vsel %vm6381, %v6376, %v6378
    %v6385 = vsel %vm6381, %v6378, %v6380
    %6390 = vst [vmem:[#allocation4 + $0x80] sm:$0xff] %v6382
    %6391 = vst.msk [vmem:[#allocation4 + $0x88] sm:$0xff] %vm27, %v6383
    %6392 = vst [vmem:[#allocation4 + $0x90] sm:$0x1] %v6384
    %6393 = vst.msk [vmem:[#allocation4 + $0x98] sm:$0x1] %vm6266, %v6385
    %v6394 = vld [vmem:[#allocation3] sm:$0xff]
    %v6395 = vld [vmem:[#allocation3 + $0x8] sm:$0xff]
    %v6396 = vld [vmem:[#allocation3 + $0x10] sm:$0xff]
    %v6397 = vld [vmem:[#allocation3 + $0x18] sm:$0x1]
    %v6398 = vld [vmem:[#allocation3 + $0x20] sm:$0x1]
    %v6399 = vld [vmem:[#allocation3 + $0x28] sm:$0x1]
    %6406 = vrot.lane.b32.xlu0 %v6394, 109
    %v6407 = vpop.permute.xlu0 %6406
    %6408 = vrot.lane.b32.xlu0 %v6395, 109
    %v6409 = vpop.permute.xlu0 %6408
    %6410 = vrot.lane.b32.xlu0 %v6396, 109
    %v6411 = vpop.permute.xlu0 %6410
    %6412 = vrot.lane.b32.xlu0 %v6397, 109
    %v6413 = vpop.permute.xlu0 %6412
    %6414 = vrot.lane.b32.xlu0 %v6398, 109
    %v6415 = vpop.permute.xlu0 %6414
    %6416 = vrot.lane.b32.xlu0 %v6399, 109
    %v6417 = vpop.permute.xlu0 %6416
    %vm6418 = vcmask 891904
    %v6419 = vsel %vm6418, %v6407, %v6409
    %v6420 = vsel %vm6418, %v6409, %v6411
    %v6421 = vsel %vm6418, %v6413, %v6415
    %v6422 = vsel %vm6418, %v6415, %v6417
    %6427 = vst [vmem:[#allocation4 + $0xa0] sm:$0xff] %v6419
    %6428 = vst.msk [vmem:[#allocation4 + $0xa8] sm:$0xff] %vm27, %v6420
    %6429 = vst [vmem:[#allocation4 + $0xb0] sm:$0x1] %v6421
    %6430 = vst.msk [vmem:[#allocation4 + $0xb8] sm:$0x1] %vm6266, %v6422
    %v6431 = vld [vmem:[#allocation3] sm:$0xff]
    %v6432 = vld [vmem:[#allocation3 + $0x8] sm:$0xff]
    %v6433 = vld [vmem:[#allocation3 + $0x10] sm:$0xff]
    %v6434 = vld [vmem:[#allocation3 + $0x18] sm:$0x1]
    %v6435 = vld [vmem:[#allocation3 + $0x20] sm:$0x1]
    %v6436 = vld [vmem:[#allocation3 + $0x28] sm:$0x1]
    %6443 = vrot.lane.b32.xlu0 %v6431, 94
    %v6444 = vpop.permute.xlu0 %6443
    %6445 = vrot.lane.b32.xlu0 %v6432, 94
    %v6446 = vpop.permute.xlu0 %6445
    %6447 = vrot.lane.b32.xlu0 %v6433, 94
    %v6448 = vpop.permute.xlu0 %6447
    %6449 = vrot.lane.b32.xlu0 %v6434, 94
    %v6450 = vpop.permute.xlu0 %6449
    %6451 = vrot.lane.b32.xlu0 %v6435, 94
    %v6452 = vpop.permute.xlu0 %6451
    %6453 = vrot.lane.b32.xlu0 %v6436, 94
    %v6454 = vpop.permute.xlu0 %6453
    %vm6455 = vcmask 769024
    %v6456 = vsel %vm6455, %v6444, %v6446
    %v6457 = vsel %vm6455, %v6446, %v6448
    %v6458 = vsel %vm6455, %v6450, %v6452
    %v6459 = vsel %vm6455, %v6452, %v6454
    %6464 = vst [vmem:[#allocation4 + $0xc0] sm:$0xff] %v6456
    %6465 = vst.msk [vmem:[#allocation4 + $0xc8] sm:$0xff] %vm27, %v6457
    %6466 = vst [vmem:[#allocation4 + $0xd0] sm:$0x1] %v6458
    %6467 = vst.msk [vmem:[#allocation4 + $0xd8] sm:$0x1] %vm6266, %v6459
    %v6468 = vld [vmem:[#allocation3] sm:$0xff]
    %v6469 = vld [vmem:[#allocation3 + $0x8] sm:$0xff]
    %v6470 = vld [vmem:[#allocation3 + $0x10] sm:$0xff]
    %v6471 = vld [vmem:[#allocation3 + $0x18] sm:$0x1]
    %v6472 = vld [vmem:[#allocation3 + $0x20] sm:$0x1]
    %v6473 = vld [vmem:[#allocation3 + $0x28] sm:$0x1]
    %6480 = vrot.lane.b32.xlu0 %v6468, 93
    %v6481 = vpop.permute.xlu0 %6480
    %6482 = vrot.lane.b32.xlu0 %v6469, 93
    %v6483 = vpop.permute.xlu0 %6482
    %6484 = vrot.lane.b32.xlu0 %v6470, 93
    %v6485 = vpop.permute.xlu0 %6484
    %6486 = vrot.lane.b32.xlu0 %v6471, 93
    %v6487 = vpop.permute.xlu0 %6486
    %6488 = vrot.lane.b32.xlu0 %v6472, 93
    %v6489 = vpop.permute.xlu0 %6488
    %6490 = vrot.lane.b32.xlu0 %v6473, 93
    %v6491 = vpop.permute.xlu0 %6490
    %vm6492 = vcmask 760832
    %v6493 = vsel %vm6492, %v6481, %v6483
    %v6494 = vsel %vm6492, %v6483, %v6485
    %v6495 = vsel %vm6492, %v6487, %v6489
    %v6496 = vsel %vm6492, %v6489, %v6491
    %6501 = vst [vmem:[#allocation4 + $0xe0] sm:$0xff] %v6493
    %6502 = vst.msk [vmem:[#allocation4 + $0xe8] sm:$0xff] %vm27, %v6494
    %6503 = vst [vmem:[#allocation4 + $0xf0] sm:$0x1] %v6495
    %6504 = vst.msk [vmem:[#allocation4 + $0xf8] sm:$0x1] %vm6266, %v6496
    %v6505 = vld [vmem:[#allocation3] sm:$0xff]
    %v6506 = vld [vmem:[#allocation3 + $0x8] sm:$0xff]
    %v6507 = vld [vmem:[#allocation3 + $0x10] sm:$0xff]
    %v6508 = vld [vmem:[#allocation3 + $0x18] sm:$0x1]
    %v6509 = vld [vmem:[#allocation3 + $0x20] sm:$0x1]
    %v6510 = vld [vmem:[#allocation3 + $0x28] sm:$0x1]
    %6517 = vrot.lane.b32.xlu0 %v6505, 92
    %v6518 = vpop.permute.xlu0 %6517
    %6519 = vrot.lane.b32.xlu0 %v6506, 92
    %v6520 = vpop.permute.xlu0 %6519
    %6521 = vrot.lane.b32.xlu0 %v6507, 92
    %v6522 = vpop.permute.xlu0 %6521
    %6523 = vrot.lane.b32.xlu0 %v6508, 92
    %v6524 = vpop.permute.xlu0 %6523
    %6525 = vrot.lane.b32.xlu0 %v6509, 92
    %v6526 = vpop.permute.xlu0 %6525
    %6527 = vrot.lane.b32.xlu0 %v6510, 92
    %v6528 = vpop.permute.xlu0 %6527
    %vm6529 = vcmask 752640
    %v6530 = vsel %vm6529, %v6518, %v6520
    %v6531 = vsel %vm6529, %v6520, %v6522
    %v6532 = vsel %vm6529, %v6524, %v6526
    %v6533 = vsel %vm6529, %v6526, %v6528
    %6538 = vst [vmem:[#allocation4 + $0x100] sm:$0xff] %v6530
    %6539 = vst.msk [vmem:[#allocation4 + $0x108] sm:$0xff] %vm27, %v6531
    %6540 = vst [vmem:[#allocation4 + $0x110] sm:$0x1] %v6532
    %6541 = vst.msk [vmem:[#allocation4 + $0x118] sm:$0x1] %vm6266, %v6533
    %v6542 = vld [vmem:[#allocation7 + $0x8] sm:$0xff]
    %v6543 = vld [vmem:[#allocation7 + $0x10] sm:$0xff]
    %v6544 = vld [vmem:[#allocation7 + $0x38] sm:$0x7f]
    %v6545 = vld [vmem:[#allocation7 + $0x40] sm:$0x7f]
    %v6546 = vld [vmem:[#allocation4] sm:$0xff]
    %v6547 = vld [vmem:[#allocation4 + $0x8] sm:$0xff]
    %v6548 = vld [vmem:[#allocation4 + $0x10] sm:$0xff]
    %v6549 = vld [vmem:[#allocation4 + $0x18] sm:$0xff]
    %v6550 = vld [vmem:[#allocation4 + $0x20] sm:$0xff]
    %v6551 = vld [vmem:[#allocation4 + $0x28] sm:$0xff]
    %v6552 = vld [vmem:[#allocation4 + $0x30] sm:$0xff]
    %v6553 = vld [vmem:[#allocation4 + $0x38] sm:$0xff]
    %v6554 = vld [vmem:[#allocation4 + $0x40] sm:$0xff]
    %v6555 = vld [vmem:[#allocation4 + $0x48] sm:$0xff]
    %v6556 = vld [vmem:[#allocation4 + $0x50] sm:$0xff]
    %v6557 = vld [vmem:[#allocation4 + $0x58] sm:$0xff]
    %v6558 = vld [vmem:[#allocation4 + $0x60] sm:$0xff]
    %v6559 = vld [vmem:[#allocation4 + $0x68] sm:$0xff]
    %v6560 = vld [vmem:[#allocation4 + $0x70] sm:$0xff]
    %v6561 = vld [vmem:[#allocation4 + $0x78] sm:$0xff]
    %v6562 = vld [vmem:[#allocation4 + $0x80] sm:$0xff]
    %v6563 = vld [vmem:[#allocation4 + $0x88] sm:$0xff]
    %v6564 = vld [vmem:[#allocation4 + $0x90] sm:$0xff]
    %v6565 = vld [vmem:[#allocation4 + $0x98] sm:$0xff]
    %v6566 = vld [vmem:[#allocation4 + $0xa0] sm:$0xff]
    %v6567 = vld [vmem:[#allocation4 + $0xa8] sm:$0xff]
    %v6568 = vld [vmem:[#allocation4 + $0xb0] sm:$0xff]
    %v6569 = vld [vmem:[#allocation4 + $0xb8] sm:$0xff]
    %v6570 = vld [vmem:[#allocation4 + $0xc0] sm:$0xff]
    %v6571 = vld [vmem:[#allocation4 + $0xc8] sm:$0xff]
    %v6572 = vld [vmem:[#allocation4 + $0xd0] sm:$0xff]
    %v6573 = vld [vmem:[#allocation4 + $0xd8] sm:$0xff]
    %v6574 = vld [vmem:[#allocation4 + $0xe0] sm:$0xff]
    %v6575 = vld [vmem:[#allocation4 + $0xe8] sm:$0xff]
    %v6576 = vld [vmem:[#allocation4 + $0xf0] sm:$0xff]
    %v6577 = vld [vmem:[#allocation4 + $0xf8] sm:$0xff]
    %v6578 = vld [vmem:[#allocation4 + $0x100] sm:$0xff]
    %v6579 = vld [vmem:[#allocation4 + $0x108] sm:$0xff]
    %v6580 = vld [vmem:[#allocation4 + $0x110] sm:$0xff]
    %v6581 = vld [vmem:[#allocation4 + $0x118] sm:$0xff]
    %6583 = vset.pattern.permute.xlu0 16
    %6584 = vperm.xlu0 %6583, %v6543
    %v6585 = vpop.permute.xlu0 %6584
    %6588 = vset.pattern.permute.xlu0 16
    %6589 = vperm.xlu0 %6588, %v6545
    %v6590 = vpop.permute.xlu0 %6589
    %v6592 = vsel %vm6110, %v6543, 0
    %v6594 = vsel %vm6110, %v6545, 0
    %6596 = vmatprep.subr.mxu0 %v6577
    %6597 = vmatpush1.msra.mxu0 %v6576
    %6598 = vmatprep.subr.mxu0 %v6575
    %6599 = vmatpush1.msra.mxu0 %v6574
    %6600 = vmatprep.subr.mxu0 %v6573
    %6601 = vmatpush1.msra.mxu0 %v6572
    %6602 = vmatprep.subr.mxu0 %v6571
    %6603 = vmatpush1.msra.mxu0 %v6570
    %6604 = vmatprep.subr.mxu0 %v6569
    %6605 = vmatpush1.msra.mxu0 %v6568
    %6606 = vmatprep.subr.mxu0 %v6567
    %6607 = vmatpush1.msra.mxu0 %v6566
    %6608 = vmatprep.subr.mxu0 %v6565
    %6609 = vmatpush1.msra.mxu0 %v6564
    %6610 = vmatprep.subr.mxu0 %v6563
    %6611 = vmatpush1.msra.mxu0 %v6562
    %6612 = vmatprep.subr.mxu0 %v6561
    %6613 = vmatpush1.msra.mxu0 %v6560
    %6614 = vmatprep.subr.mxu0 %v6559
    %6615 = vmatpush1.msra.mxu0 %v6558
    %6616 = vmatprep.subr.mxu0 %v6557
    %6617 = vmatpush1.msra.mxu0 %v6556
    %6618 = vmatprep.subr.mxu0 %v6555
    %6619 = vmatpush1.msra.mxu0 %v6554
    %6620 = vmatprep.subr.mxu0 %v6553
    %6621 = vmatpush1.msra.mxu0 %v6552
    %6622 = vmatprep.subr.mxu0 %v6551
    %6623 = vmatpush1.msra.mxu0 %v6550
    %6624 = vmatprep.subr.mxu0 %v6549
    %6625 = vmatpush1.msra.mxu0 %v6548
    %6626 = vmatprep.subr.mxu0 %v6547
    %6627 = vmatpush1.msra.mxu0 %v6546
    %6628 = vmatprep.subr.mxu0 0.0
    %6629 = vmatpush2.msra.mxu0 0.0
    %6630 = vmatprep.subr.mxu0 0.0
    %6631 = vmatpush2.msra.mxu0 0.0
    %6632 = vmatprep.subr.mxu0 0.0
    %6633 = vmatpush2.msra.mxu0 0.0
    %6634 = vmatprep.subr.mxu0 0.0
    %6635 = vmatpush2.msra.mxu0 0.0
    %6636 = vmatprep.subr.mxu0 0.0
    %6637 = vmatpush2.msra.mxu0 0.0
    %6638 = vmatprep.subr.mxu0 0.0
    %6639 = vmatpush2.msra.mxu0 0.0
    %6640 = vmatprep.subr.mxu0 0.0
    %6641 = vmatpush2.msra.mxu0 0.0
    %6642 = vmatprep.subr.mxu0 0.0
    %6643 = vmatpush2.msra.mxu0 0.0
    %6644 = vmatprep.subr.mxu0 0.0
    %6645 = vmatpush2.msra.mxu0 0.0
    %6646 = vmatprep.subr.mxu0 0.0
    %6647 = vmatpush2.msra.mxu0 0.0
    %6648 = vmatprep.subr.mxu0 0.0
    %6649 = vmatpush2.msra.mxu0 0.0
    %6650 = vmatprep.subr.mxu0 0.0
    %6651 = vmatpush2.msra.mxu0 0.0
    %6652 = vmatprep.subr.mxu0 0.0
    %6653 = vmatpush2.msra.mxu0 0.0
    %6654 = vmatprep.subr.mxu0 0.0
    %6655 = vmatpush2.msra.mxu0 0.0
    %6656 = vmatprep.subr.mxu0 %v6581
    %6657 = vmatpush2.msra.mxu0 %v6580
    %6658 = vmatprep.subr.mxu0 %v6579
    %6659 = vmatpush2.msra.mxu0 %v6578
    %6660 = vmatprep.mubr.f32.mxu0 %v6592
    %6661 = vmatmul.mubr.f32.gmra.mxu0 %v6542
    %v6662 = vpop.f32.mrf.mxu0
    %v6663 = vadd.f32 %v6585, %v6662
    %v6664 = vpop.f32.mrf.mxu0
    %v6665 = vadd.f32 %v6585, %v6664
    %6666 = vmatprep.mubr.f32.mxu0 %v6594
    %6667 = vmatmul.mubr.f32.gmra.mxu0 %v6544
    %v6668 = vpop.f32.mrf.mxu0
    %v6669 = vadd.f32 %v6590, %v6668
    %v6670 = vpop.f32.mrf.mxu0
    %v6671 = vadd.f32 %v6590, %v6670
    %6672 = vdwg.mxu0
    %6677 = vrot.lane.b32.xlu0 %v6663, 127
    %v6678 = vpop.permute.xlu0 %6677
    %6679 = vrot.lane.b32.xlu0 %v6665, 127
    %v6680 = vpop.permute.xlu0 %6679
    %6681 = vrot.lane.b32.xlu0 %v6669, 127
    %v6682 = vpop.permute.xlu0 %6681
    %6683 = vrot.lane.b32.xlu0 %v6671, 127
    %v6684 = vpop.permute.xlu0 %6683
    %v6685 = vsel %vm189, %v6678, %v6680
    %v6686 = vsel %vm189, %v6682, %v6684
    %v6691 = vmax.f32 %v6663, %v6685
    %v6692 = vmax.f32 %v6665, %v6680
    %v6693 = vmax.f32 %v6669, %v6686
    %v6694 = vmax.f32 %v6671, %v6684
    %6695 = vrot.lane.b32.xlu0 %v6663, 126
    %v6696 = vpop.permute.xlu0 %6695
    %6697 = vrot.lane.b32.xlu0 %v6665, 126
    %v6698 = vpop.permute.xlu0 %6697
    %6699 = vrot.lane.b32.xlu0 %v6669, 126
    %v6700 = vpop.permute.xlu0 %6699
    %6701 = vrot.lane.b32.xlu0 %v6671, 126
    %v6702 = vpop.permute.xlu0 %6701
    %v6703 = vsel %vm266, %v6696, %v6698
    %v6704 = vsel %vm266, %v6700, %v6702
    %v6709 = vmax.f32 %v6691, %v6703
    %v6710 = vmax.f32 %v6692, %v6698
    %v6711 = vmax.f32 %v6693, %v6704
    %v6712 = vmax.f32 %v6694, %v6702
    %6715 = vrot.lane.b32.xlu0 %v6709, 111
    %v6716 = vpop.permute.xlu0 %6715
    %6717 = vrot.lane.b32.xlu0 %v6711, 111
    %v6718 = vpop.permute.xlu0 %6717
    %v6721 = vmax.f32 %v6709, %v6716
    %v6722 = vmax.f32 %v6711, %v6718
    %6723 = vrot.lane.b32.xlu0 %v6709, 94
    %v6724 = vpop.permute.xlu0 %6723
    %6725 = vrot.lane.b32.xlu0 %v6711, 94
    %v6726 = vpop.permute.xlu0 %6725
    %v6729 = vmax.f32 %v6721, %v6724
    %v6730 = vmax.f32 %v6722, %v6726
    %v6732 = vsel %vm63, %v6729, 0
    %v6735 = vsel %vm63, %v6730, 0
    %vm6737 = vcmask 1044480
    %v6739 = vsel %vm6737, %v4013, 0
    %6741 = vmatprep.subr.mxu0 0.0
    %6742 = vmatpush1.msra.mxu0 0.0
    %6743 = vmatprep.subr.mxu0 0.0
    %6744 = vmatpush1.msra.mxu0 0.0
    %6745 = vmatprep.subr.mxu0 0.0
    %6746 = vmatpush1.msra.mxu0 0.0
    %6747 = vmatprep.subr.mxu0 0.0
    %6748 = vmatpush1.msra.mxu0 0.0
    %6749 = vmatprep.subr.mxu0 0.0
    %6750 = vmatpush1.msra.mxu0 0.0
    %6751 = vmatprep.subr.mxu0 0.0
    %6752 = vmatpush1.msra.mxu0 0.0
    %6753 = vmatprep.subr.mxu0 0.0
    %6754 = vmatpush1.msra.mxu0 0.0
    %6755 = vmatprep.subr.mxu0 0.0
    %6756 = vmatpush1.msra.mxu0 0.0
    %6757 = vmatprep.subr.mxu0 0.0
    %6758 = vmatpush1.msra.mxu0 0.0
    %6759 = vmatprep.subr.mxu0 0.0
    %6760 = vmatpush1.msra.mxu0 0.0
    %6761 = vmatprep.subr.mxu0 0.0
    %6762 = vmatpush1.msra.mxu0 0.0
    %6763 = vmatprep.subr.mxu0 0.0
    %6764 = vmatpush1.msra.mxu0 0.0
    %6765 = vmatprep.subr.mxu0 0.0
    %6766 = vmatpush1.msra.mxu0 0.0
    %6767 = vmatprep.subr.mxu0 0.0
    %6768 = vmatpush1.msra.mxu0 0.0
    %6769 = vmatprep.subr.mxu0 0.0
    %6770 = vmatpush1.msra.mxu0 %v6739
    %6771 = vmatprep.subr.mxu0 0.0
    %6772 = vmatpush1.msra.mxu0 %v4012
    %6773 = vmatprep.subr.mxu0 0.0
    %6774 = vmatpush2.msra.mxu0 0.0
    %6775 = vmatprep.subr.mxu0 0.0
    %6776 = vmatpush2.msra.mxu0 0.0
    %6777 = vmatprep.subr.mxu0 0.0
    %6778 = vmatpush2.msra.mxu0 0.0
    %6779 = vmatprep.subr.mxu0 0.0
    %6780 = vmatpush2.msra.mxu0 0.0
    %6781 = vmatprep.subr.mxu0 0.0
    %6782 = vmatpush2.msra.mxu0 0.0
    %6783 = vmatprep.subr.mxu0 0.0
    %6784 = vmatpush2.msra.mxu0 0.0
    %6785 = vmatprep.subr.mxu0 0.0
    %6786 = vmatpush2.msra.mxu0 0.0
    %6787 = vmatprep.subr.mxu0 0.0
    %6788 = vmatpush2.msra.mxu0 0.0
    %6789 = vmatprep.subr.mxu0 0.0
    %6790 = vmatpush2.msra.mxu0 0.0
    %6791 = vmatprep.subr.mxu0 0.0
    %6792 = vmatpush2.msra.mxu0 0.0
    %6793 = vmatprep.subr.mxu0 0.0
    %6794 = vmatpush2.msra.mxu0 0.0
    %6795 = vmatprep.subr.mxu0 0.0
    %6796 = vmatpush2.msra.mxu0 0.0
    %6797 = vmatprep.subr.mxu0 0.0
    %6798 = vmatpush2.msra.mxu0 0.0
    %6799 = vmatprep.subr.mxu0 0.0
    %6800 = vmatpush2.msra.mxu0 0.0
    %6801 = vmatprep.subr.mxu0 0.0
    %6802 = vmatpush2.msra.mxu0 0.0
    %6803 = vmatprep.subr.mxu0 0.0
    %6804 = vmatpush2.msra.mxu0 0.0
    %6805 = vmatprep.mubr.f32.mxu0 0.0
    %6806 = vmatmul.mubr.f32.gmra.mxu0 %v6732
    %v6807 = vpop.f32.mrf.mxu0
    %v6808 = vadd.f32 0.0, %v6807
    %v6809 = vpop.f32.mrf.mxu0
    %6810 = vmatprep.mubr.f32.mxu0 0.0
    %6811 = vmatmul.mubr.f32.gmra.mxu0 %v6735
    %v6812 = vpop.f32.mrf.mxu0
    %v6813 = vadd.f32 0.0, %v6812
    %v6814 = vpop.f32.mrf.mxu0
    %6815 = vdwg.mxu0
    %vm6816 = vcmask 39936
    %6817 = vst.msk [vmem:[#allocation5] sm:$0xff] %vm6816, %v6808
    %vm6818 = vcmask 38912
    %6819 = vst.msk [vmem:[#allocation5 + $0x8] sm:$0x7f] %vm6818, %v6813
    %6820 = vrot.lane.b32.xlu0 %v6729, 77
    %v6821 = vpop.permute.xlu0 %6820
    %6822 = vrot.lane.b32.xlu0 %v6730, 77
    %v6823 = vpop.permute.xlu0 %6822
    %v6824 = vsel %vm63, %v6821, 0
    %v6826 = vsel %vm63, %v6823, 0
    %6828 = vmatprep.subr.mxu0 0.0
    %6829 = vmatpush1.msra.mxu0 0.0
    %6830 = vmatprep.subr.mxu0 0.0
    %6831 = vmatpush1.msra.mxu0 0.0
    %6832 = vmatprep.subr.mxu0 0.0
    %6833 = vmatpush1.msra.mxu0 0.0
    %6834 = vmatprep.subr.mxu0 0.0
    %6835 = vmatpush1.msra.mxu0 0.0
    %6836 = vmatprep.subr.mxu0 0.0
    %6837 = vmatpush1.msra.mxu0 0.0
    %6838 = vmatprep.subr.mxu0 0.0
    %6839 = vmatpush1.msra.mxu0 0.0
    %6840 = vmatprep.subr.mxu0 0.0
    %6841 = vmatpush1.msra.mxu0 0.0
    %6842 = vmatprep.subr.mxu0 0.0
    %6843 = vmatpush1.msra.mxu0 0.0
    %6844 = vmatprep.subr.mxu0 0.0
    %6845 = vmatpush1.msra.mxu0 0.0
    %6846 = vmatprep.subr.mxu0 0.0
    %6847 = vmatpush1.msra.mxu0 0.0
    %6848 = vmatprep.subr.mxu0 0.0
    %6849 = vmatpush1.msra.mxu0 0.0
    %6850 = vmatprep.subr.mxu0 0.0
    %6851 = vmatpush1.msra.mxu0 0.0
    %6852 = vmatprep.subr.mxu0 0.0
    %6853 = vmatpush1.msra.mxu0 0.0
    %6854 = vmatprep.subr.mxu0 0.0
    %6855 = vmatpush1.msra.mxu0 0.0
    %6856 = vmatprep.subr.mxu0 0.0
    %6857 = vmatpush1.msra.mxu0 %v6739
    %6858 = vmatprep.subr.mxu0 0.0
    %6859 = vmatpush1.msra.mxu0 %v4012
    %6860 = vmatprep.subr.mxu0 0.0
    %6861 = vmatpush2.msra.mxu0 0.0
    %6862 = vmatprep.subr.mxu0 0.0
    %6863 = vmatpush2.msra.mxu0 0.0
    %6864 = vmatprep.subr.mxu0 0.0
    %6865 = vmatpush2.msra.mxu0 0.0
    %6866 = vmatprep.subr.mxu0 0.0
    %6867 = vmatpush2.msra.mxu0 0.0
    %6868 = vmatprep.subr.mxu0 0.0
    %6869 = vmatpush2.msra.mxu0 0.0
    %6870 = vmatprep.subr.mxu0 0.0
    %6871 = vmatpush2.msra.mxu0 0.0
    %6872 = vmatprep.subr.mxu0 0.0
    %6873 = vmatpush2.msra.mxu0 0.0
    %6874 = vmatprep.subr.mxu0 0.0
    %6875 = vmatpush2.msra.mxu0 0.0
    %6876 = vmatprep.subr.mxu0 0.0
    %6877 = vmatpush2.msra.mxu0 0.0
    %6878 = vmatprep.subr.mxu0 0.0
    %6879 = vmatpush2.msra.mxu0 0.0
    %6880 = vmatprep.subr.mxu0 0.0
    %6881 = vmatpush2.msra.mxu0 0.0
    %6882 = vmatprep.subr.mxu0 0.0
    %6883 = vmatpush2.msra.mxu0 0.0
    %6884 = vmatprep.subr.mxu0 0.0
    %6885 = vmatpush2.msra.mxu0 0.0
    %6886 = vmatprep.subr.mxu0 0.0
    %6887 = vmatpush2.msra.mxu0 0.0
    %6888 = vmatprep.subr.mxu0 0.0
    %6889 = vmatpush2.msra.mxu0 0.0
    %6890 = vmatprep.subr.mxu0 0.0
    %6891 = vmatpush2.msra.mxu0 0.0
    %6892 = vmatprep.mubr.f32.mxu0 0.0
    %6893 = vmatmul.mubr.f32.gmra.mxu0 %v6824
    %v6894 = vpop.f32.mrf.mxu0
    %v6895 = vadd.f32 0.0, %v6894
    %v6896 = vpop.f32.mrf.mxu0
    %6897 = vmatprep.mubr.f32.mxu0 0.0
    %6898 = vmatmul.mubr.f32.gmra.mxu0 %v6826
    %v6899 = vpop.f32.mrf.mxu0
    %v6900 = vadd.f32 0.0, %v6899
    %v6901 = vpop.f32.mrf.mxu0
    %6902 = vdwg.mxu0
    %6905 = vrot.lane.b32.xlu0 %v6895, 5
    %v6906 = vpop.permute.xlu0 %6905
    %6907 = vrot.lane.b32.xlu0 %v6900, 5
    %v6908 = vpop.permute.xlu0 %6907
    %vm6911 = vcmask 80936
    %6912 = vst.msk [vmem:[#allocation5] sm:$0xff] %vm6911, %v6906
    %vm6913 = vcmask 79912
    %6914 = vst.msk [vmem:[#allocation5 + $0x8] sm:$0x7f] %vm6913, %v6908
    %6917 = vrot.lane.b32.xlu0 %v6710, 111
    %v6918 = vpop.permute.xlu0 %6917
    %6919 = vrot.lane.b32.xlu0 %v6712, 111
    %v6920 = vpop.permute.xlu0 %6919
    %v6921 = vsel %vm6344, %v6716, %v6918
    %v6922 = vsel %vm6344, %v6718, %v6920
    %v6925 = vmax.f32 %v6709, %v6921
    %v6926 = vmax.f32 %v6711, %v6922
    %6927 = vrot.lane.b32.xlu0 %v6710, 94
    %v6928 = vpop.permute.xlu0 %6927
    %6929 = vrot.lane.b32.xlu0 %v6712, 94
    %v6930 = vpop.permute.xlu0 %6929
    %v6933 = vmax.f32 %v6925, %v6928
    %v6934 = vmax.f32 %v6926, %v6930
    %6937 = vrot.lane.b32.xlu0 %v6933, 26
    %v6938 = vpop.permute.xlu0 %6937
    %6939 = vrot.lane.b32.xlu0 %v6934, 26
    %v6940 = vpop.permute.xlu0 %6939
    %v6941 = vsel %vm63, %v6938, 0
    %v6943 = vsel %vm63, %v6940, 0
    %6945 = vmatprep.subr.mxu0 0.0
    %6946 = vmatpush1.msra.mxu0 0.0
    %6947 = vmatprep.subr.mxu0 0.0
    %6948 = vmatpush1.msra.mxu0 0.0
    %6949 = vmatprep.subr.mxu0 0.0
    %6950 = vmatpush1.msra.mxu0 0.0
    %6951 = vmatprep.subr.mxu0 0.0
    %6952 = vmatpush1.msra.mxu0 0.0
    %6953 = vmatprep.subr.mxu0 0.0
    %6954 = vmatpush1.msra.mxu0 0.0
    %6955 = vmatprep.subr.mxu0 0.0
    %6956 = vmatpush1.msra.mxu0 0.0
    %6957 = vmatprep.subr.mxu0 0.0
    %6958 = vmatpush1.msra.mxu0 0.0
    %6959 = vmatprep.subr.mxu0 0.0
    %6960 = vmatpush1.msra.mxu0 0.0
    %6961 = vmatprep.subr.mxu0 0.0
    %6962 = vmatpush1.msra.mxu0 0.0
    %6963 = vmatprep.subr.mxu0 0.0
    %6964 = vmatpush1.msra.mxu0 0.0
    %6965 = vmatprep.subr.mxu0 0.0
    %6966 = vmatpush1.msra.mxu0 0.0
    %6967 = vmatprep.subr.mxu0 0.0
    %6968 = vmatpush1.msra.mxu0 0.0
    %6969 = vmatprep.subr.mxu0 0.0
    %6970 = vmatpush1.msra.mxu0 0.0
    %6971 = vmatprep.subr.mxu0 0.0
    %6972 = vmatpush1.msra.mxu0 0.0
    %6973 = vmatprep.subr.mxu0 0.0
    %6974 = vmatpush1.msra.mxu0 %v6739
    %6975 = vmatprep.subr.mxu0 0.0
    %6976 = vmatpush1.msra.mxu0 %v4012
    %6977 = vmatprep.subr.mxu0 0.0
    %6978 = vmatpush2.msra.mxu0 0.0
    %6979 = vmatprep.subr.mxu0 0.0
    %6980 = vmatpush2.msra.mxu0 0.0
    %6981 = vmatprep.subr.mxu0 0.0
    %6982 = vmatpush2.msra.mxu0 0.0
    %6983 = vmatprep.subr.mxu0 0.0
    %6984 = vmatpush2.msra.mxu0 0.0
    %6985 = vmatprep.subr.mxu0 0.0
    %6986 = vmatpush2.msra.mxu0 0.0
    %6987 = vmatprep.subr.mxu0 0.0
    %6988 = vmatpush2.msra.mxu0 0.0
    %6989 = vmatprep.subr.mxu0 0.0
    %6990 = vmatpush2.msra.mxu0 0.0
    %6991 = vmatprep.subr.mxu0 0.0
    %6992 = vmatpush2.msra.mxu0 0.0
    %6993 = vmatprep.subr.mxu0 0.0
    %6994 = vmatpush2.msra.mxu0 0.0
    %6995 = vmatprep.subr.mxu0 0.0
    %6996 = vmatpush2.msra.mxu0 0.0
    %6997 = vmatprep.subr.mxu0 0.0
    %6998 = vmatpush2.msra.mxu0 0.0
    %6999 = vmatprep.subr.mxu0 0.0
    %7000 = vmatpush2.msra.mxu0 0.0
    %7001 = vmatprep.subr.mxu0 0.0
    %7002 = vmatpush2.msra.mxu0 0.0
    %7003 = vmatprep.subr.mxu0 0.0
    %7004 = vmatpush2.msra.mxu0 0.0
    %7005 = vmatprep.subr.mxu0 0.0
    %7006 = vmatpush2.msra.mxu0 0.0
    %7007 = vmatprep.subr.mxu0 0.0
    %7008 = vmatpush2.msra.mxu0 0.0
    %7009 = vmatprep.mubr.f32.mxu0 0.0
    %7010 = vmatmul.mubr.f32.gmra.mxu0 %v6941
    %v7011 = vpop.f32.mrf.mxu0
    %v7012 = vadd.f32 0.0, %v7011
    %v7013 = vpop.f32.mrf.mxu0
    %7014 = vmatprep.mubr.f32.mxu0 0.0
    %7015 = vmatmul.mubr.f32.gmra.mxu0 %v6943
    %v7016 = vpop.f32.mrf.mxu0
    %v7017 = vadd.f32 0.0, %v7016
    %v7018 = vpop.f32.mrf.mxu0
    %7019 = vdwg.mxu0
    %7022 = vrot.lane.b32.xlu0 %v7012, 10
    %v7023 = vpop.permute.xlu0 %7022
    %7024 = vrot.lane.b32.xlu0 %v7017, 10
    %v7025 = vpop.permute.xlu0 %7024
    %vm7028 = vcmask 121936
    %7029 = vst.msk [vmem:[#allocation5] sm:$0xff] %vm7028, %v7023
    %vm7030 = vcmask 120912
    %7031 = vst.msk [vmem:[#allocation5 + $0x8] sm:$0x7f] %vm7030, %v7025
    %v7034 = vmax.f32 %v6710, %v6918
    %v7035 = vmax.f32 %v6712, %v6920
    %v7036 = vmax.f32 %v7034, %v6928
    %v7037 = vmax.f32 %v7035, %v6930
    %7040 = vrot.lane.b32.xlu0 %v7036, 103
    %v7041 = vpop.permute.xlu0 %7040
    %7042 = vrot.lane.b32.xlu0 %v7037, 103
    %v7043 = vpop.permute.xlu0 %7042
    %v7044 = vsel %vm63, %v7041, 0
    %v7046 = vsel %vm63, %v7043, 0
    %7048 = vmatprep.subr.mxu0 0.0
    %7049 = vmatpush1.msra.mxu0 0.0
    %7050 = vmatprep.subr.mxu0 0.0
    %7051 = vmatpush1.msra.mxu0 0.0
    %7052 = vmatprep.subr.mxu0 0.0
    %7053 = vmatpush1.msra.mxu0 0.0
    %7054 = vmatprep.subr.mxu0 0.0
    %7055 = vmatpush1.msra.mxu0 0.0
    %7056 = vmatprep.subr.mxu0 0.0
    %7057 = vmatpush1.msra.mxu0 0.0
    %7058 = vmatprep.subr.mxu0 0.0
    %7059 = vmatpush1.msra.mxu0 0.0
    %7060 = vmatprep.subr.mxu0 0.0
    %7061 = vmatpush1.msra.mxu0 0.0
    %7062 = vmatprep.subr.mxu0 0.0
    %7063 = vmatpush1.msra.mxu0 0.0
    %7064 = vmatprep.subr.mxu0 0.0
    %7065 = vmatpush1.msra.mxu0 0.0
    %7066 = vmatprep.subr.mxu0 0.0
    %7067 = vmatpush1.msra.mxu0 0.0
    %7068 = vmatprep.subr.mxu0 0.0
    %7069 = vmatpush1.msra.mxu0 0.0
    %7070 = vmatprep.subr.mxu0 0.0
    %7071 = vmatpush1.msra.mxu0 0.0
    %7072 = vmatprep.subr.mxu0 0.0
    %7073 = vmatpush1.msra.mxu0 0.0
    %7074 = vmatprep.subr.mxu0 0.0
    %7075 = vmatpush1.msra.mxu0 0.0
    %7076 = vmatprep.subr.mxu0 0.0
    %7077 = vmatpush1.msra.mxu0 %v6739
    %7078 = vmatprep.subr.mxu0 0.0
    %7079 = vmatpush1.msra.mxu0 %v4012
    %7080 = vmatprep.subr.mxu0 0.0
    %7081 = vmatpush2.msra.mxu0 0.0
    %7082 = vmatprep.subr.mxu0 0.0
    %7083 = vmatpush2.msra.mxu0 0.0
    %7084 = vmatprep.subr.mxu0 0.0
    %7085 = vmatpush2.msra.mxu0 0.0
    %7086 = vmatprep.subr.mxu0 0.0
    %7087 = vmatpush2.msra.mxu0 0.0
    %7088 = vmatprep.subr.mxu0 0.0
    %7089 = vmatpush2.msra.mxu0 0.0
    %7090 = vmatprep.subr.mxu0 0.0
    %7091 = vmatpush2.msra.mxu0 0.0
    %7092 = vmatprep.subr.mxu0 0.0
    %7093 = vmatpush2.msra.mxu0 0.0
    %7094 = vmatprep.subr.mxu0 0.0
    %7095 = vmatpush2.msra.mxu0 0.0
    %7096 = vmatprep.subr.mxu0 0.0
    %7097 = vmatpush2.msra.mxu0 0.0
    %7098 = vmatprep.subr.mxu0 0.0
    %7099 = vmatpush2.msra.mxu0 0.0
    %7100 = vmatprep.subr.mxu0 0.0
    %7101 = vmatpush2.msra.mxu0 0.0
    %7102 = vmatprep.subr.mxu0 0.0
    %7103 = vmatpush2.msra.mxu0 0.0
    %7104 = vmatprep.subr.mxu0 0.0
    %7105 = vmatpush2.msra.mxu0 0.0
    %7106 = vmatprep.subr.mxu0 0.0
    %7107 = vmatpush2.msra.mxu0 0.0
    %7108 = vmatprep.subr.mxu0 0.0
    %7109 = vmatpush2.msra.mxu0 0.0
    %7110 = vmatprep.subr.mxu0 0.0
    %7111 = vmatpush2.msra.mxu0 0.0
    %7112 = vmatprep.mubr.f32.mxu0 0.0
    %7113 = vmatmul.mubr.f32.gmra.mxu0 %v7044
    %v7114 = vpop.f32.mrf.mxu0
    %v7115 = vadd.f32 0.0, %v7114
    %v7116 = vpop.f32.mrf.mxu0
    %7117 = vmatprep.mubr.f32.mxu0 0.0
    %7118 = vmatmul.mubr.f32.gmra.mxu0 %v7046
    %v7119 = vpop.f32.mrf.mxu0
    %v7120 = vadd.f32 0.0, %v7119
    %v7121 = vpop.f32.mrf.mxu0
    %7122 = vdwg.mxu0
    %7125 = vrot.lane.b32.xlu0 %v7115, 15
    %v7126 = vpop.permute.xlu0 %7125
    %7127 = vrot.lane.b32.xlu0 %v7120, 15
    %v7128 = vpop.permute.xlu0 %7127
    %vm7131 = vcmask 162936
    %7132 = vst.msk [vmem:[#allocation5] sm:$0xff] %vm7131, %v7126
    %vm7133 = vcmask 161912
    %7134 = vst.msk [vmem:[#allocation5 + $0x8] sm:$0x7f] %vm7133, %v7128
    %7135 = vrot.lane.b32.xlu0 %v7036, 52
    %v7136 = vpop.permute.xlu0 %7135
    %7137 = vrot.lane.b32.xlu0 %v7037, 52
    %v7138 = vpop.permute.xlu0 %7137
    %v7139 = vsel %vm63, %v7136, 0
    %v7141 = vsel %vm63, %v7138, 0
    %7143 = vmatprep.subr.mxu0 0.0
    %7144 = vmatpush1.msra.mxu0 0.0
    %7145 = vmatprep.subr.mxu0 0.0
    %7146 = vmatpush1.msra.mxu0 0.0
    %7147 = vmatprep.subr.mxu0 0.0
    %7148 = vmatpush1.msra.mxu0 0.0
    %7149 = vmatprep.subr.mxu0 0.0
    %7150 = vmatpush1.msra.mxu0 0.0
    %7151 = vmatprep.subr.mxu0 0.0
    %7152 = vmatpush1.msra.mxu0 0.0
    %7153 = vmatprep.subr.mxu0 0.0
    %7154 = vmatpush1.msra.mxu0 0.0
    %7155 = vmatprep.subr.mxu0 0.0
    %7156 = vmatpush1.msra.mxu0 0.0
    %7157 = vmatprep.subr.mxu0 0.0
    %7158 = vmatpush1.msra.mxu0 0.0
    %7159 = vmatprep.subr.mxu0 0.0
    %7160 = vmatpush1.msra.mxu0 0.0
    %7161 = vmatprep.subr.mxu0 0.0
    %7162 = vmatpush1.msra.mxu0 0.0
    %7163 = vmatprep.subr.mxu0 0.0
    %7164 = vmatpush1.msra.mxu0 0.0
    %7165 = vmatprep.subr.mxu0 0.0
    %7166 = vmatpush1.msra.mxu0 0.0
    %7167 = vmatprep.subr.mxu0 0.0
    %7168 = vmatpush1.msra.mxu0 0.0
    %7169 = vmatprep.subr.mxu0 0.0
    %7170 = vmatpush1.msra.mxu0 0.0
    %7171 = vmatprep.subr.mxu0 0.0
    %7172 = vmatpush1.msra.mxu0 %v6739
    %7173 = vmatprep.subr.mxu0 0.0
    %7174 = vmatpush1.msra.mxu0 %v4012
    %7175 = vmatprep.subr.mxu0 0.0
    %7176 = vmatpush2.msra.mxu0 0.0
    %7177 = vmatprep.subr.mxu0 0.0
    %7178 = vmatpush2.msra.mxu0 0.0
    %7179 = vmatprep.subr.mxu0 0.0
    %7180 = vmatpush2.msra.mxu0 0.0
    %7181 = vmatprep.subr.mxu0 0.0
    %7182 = vmatpush2.msra.mxu0 0.0
    %7183 = vmatprep.subr.mxu0 0.0
    %7184 = vmatpush2.msra.mxu0 0.0
    %7185 = vmatprep.subr.mxu0 0.0
    %7186 = vmatpush2.msra.mxu0 0.0
    %7187 = vmatprep.subr.mxu0 0.0
    %7188 = vmatpush2.msra.mxu0 0.0
    %7189 = vmatprep.subr.mxu0 0.0
    %7190 = vmatpush2.msra.mxu0 0.0
    %7191 = vmatprep.subr.mxu0 0.0
    %7192 = vmatpush2.msra.mxu0 0.0
    %7193 = vmatprep.subr.mxu0 0.0
    %7194 = vmatpush2.msra.mxu0 0.0
    %7195 = vmatprep.subr.mxu0 0.0
    %7196 = vmatpush2.msra.mxu0 0.0
    %7197 = vmatprep.subr.mxu0 0.0
    %7198 = vmatpush2.msra.mxu0 0.0
    %7199 = vmatprep.subr.mxu0 0.0
    %7200 = vmatpush2.msra.mxu0 0.0
    %7201 = vmatprep.subr.mxu0 0.0
    %7202 = vmatpush2.msra.mxu0 0.0
    %7203 = vmatprep.subr.mxu0 0.0
    %7204 = vmatpush2.msra.mxu0 0.0
    %7205 = vmatprep.subr.mxu0 0.0
    %7206 = vmatpush2.msra.mxu0 0.0
    %7207 = vmatprep.mubr.f32.mxu0 0.0
    %7208 = vmatmul.mubr.f32.gmra.mxu0 %v7139
    %v7209 = vpop.f32.mrf.mxu0
    %v7210 = vadd.f32 0.0, %v7209
    %v7211 = vpop.f32.mrf.mxu0
    %7212 = vmatprep.mubr.f32.mxu0 0.0
    %7213 = vmatmul.mubr.f32.gmra.mxu0 %v7141
    %v7214 = vpop.f32.mrf.mxu0
    %v7215 = vadd.f32 0.0, %v7214
    %v7216 = vpop.f32.mrf.mxu0
    %7217 = vdwg.mxu0
    %7220 = vrot.lane.b32.xlu0 %v7210, 20
    %v7221 = vpop.permute.xlu0 %7220
    %7222 = vrot.lane.b32.xlu0 %v7215, 20
    %v7223 = vpop.permute.xlu0 %7222
    %vm7226 = vcmask 203936
    %7227 = vst.msk [vmem:[#allocation5] sm:$0xff] %vm7226, %v7221
    %vm7228 = vcmask 202912
    %7229 = vst.msk [vmem:[#allocation5 + $0x8] sm:$0x7f] %vm7228, %v7223
    %v7230 = vld [vmem:[#allocation5] sm:$0xff]
    %v7231 = vld [vmem:[#allocation5 + $0x8] sm:$0x7f]
    %7232 = vst.msk [vmem:[#allocation6] sm:$0xff] %vm63, %v7230
    %vm7233 = vcmask 104448
    %7234 = vst.msk [vmem:[#allocation6 + $0x8] sm:$0x7f] %vm7233, %v7231
    %v7235 = vld [vmem:[#allocation5] sm:$0xff]
    %v7236 = vld [vmem:[#allocation5 + $0x8] sm:$0x7f]
    %7239 = vrot.lane.b32.xlu0 %v7235, 127
    %v7240 = vpop.permute.xlu0 %7239
    %7241 = vrot.lane.b32.xlu0 %v7236, 127
    %v7242 = vpop.permute.xlu0 %7241
    %7245 = vst.msk [vmem:[#allocation6 + $0x10] sm:$0xff] %vm63, %v7240
    %7246 = vst.msk [vmem:[#allocation6 + $0x18] sm:$0x7f] %vm7233, %v7242
    %v7247 = vld [vmem:[#allocation5] sm:$0xff]
    %v7248 = vld [vmem:[#allocation5 + $0x8] sm:$0x7f]
    %7251 = vrot.lane.b32.xlu0 %v7247, 126
    %v7252 = vpop.permute.xlu0 %7251
    %7253 = vrot.lane.b32.xlu0 %v7248, 126
    %v7254 = vpop.permute.xlu0 %7253
    %7257 = vst.msk [vmem:[#allocation6 + $0x20] sm:$0xff] %vm63, %v7252
    %7258 = vst.msk [vmem:[#allocation6 + $0x28] sm:$0x7f] %vm7233, %v7254
    %v7259 = vld [vmem:[#allocation5] sm:$0xff]
    %v7260 = vld [vmem:[#allocation5 + $0x8] sm:$0x7f]
    %7263 = vrot.lane.b32.xlu0 %v7259, 123
    %v7264 = vpop.permute.xlu0 %7263
    %7265 = vrot.lane.b32.xlu0 %v7260, 123
    %v7266 = vpop.permute.xlu0 %7265
    %7269 = vst.msk [vmem:[#allocation6 + $0x30] sm:$0xff] %vm63, %v7264
    %7270 = vst.msk [vmem:[#allocation6 + $0x38] sm:$0x7f] %vm7233, %v7266
    %v7271 = vld [vmem:[#allocation5] sm:$0xff]
    %v7272 = vld [vmem:[#allocation5 + $0x8] sm:$0x7f]
    %7275 = vrot.lane.b32.xlu0 %v7271, 122
    %v7276 = vpop.permute.xlu0 %7275
    %7277 = vrot.lane.b32.xlu0 %v7272, 122
    %v7278 = vpop.permute.xlu0 %7277
    %7281 = vst.msk [vmem:[#allocation6 + $0x40] sm:$0xff] %vm63, %v7276
    %7282 = vst.msk [vmem:[#allocation6 + $0x48] sm:$0x7f] %vm7233, %v7278
    %v7283 = vld [vmem:[#allocation5] sm:$0xff]
    %v7284 = vld [vmem:[#allocation5 + $0x8] sm:$0x7f]
    %7287 = vrot.lane.b32.xlu0 %v7283, 121
    %v7288 = vpop.permute.xlu0 %7287
    %7289 = vrot.lane.b32.xlu0 %v7284, 121
    %v7290 = vpop.permute.xlu0 %7289
    %7293 = vst.msk [vmem:[#allocation6 + $0x50] sm:$0xff] %vm63, %v7288
    %7294 = vst.msk [vmem:[#allocation6 + $0x58] sm:$0x7f] %vm7233, %v7290
    %v7295 = vld [vmem:[#allocation5] sm:$0xff]
    %v7296 = vld [vmem:[#allocation5 + $0x8] sm:$0x7f]
    %7299 = vrot.lane.b32.xlu0 %v7295, 118
    %v7300 = vpop.permute.xlu0 %7299
    %7301 = vrot.lane.b32.xlu0 %v7296, 118
    %v7302 = vpop.permute.xlu0 %7301
    %7305 = vst.msk [vmem:[#allocation6 + $0x60] sm:$0xff] %vm63, %v7300
    %7306 = vst.msk [vmem:[#allocation6 + $0x68] sm:$0x7f] %vm7233, %v7302
    %v7307 = vld [vmem:[#allocation5] sm:$0xff]
    %v7308 = vld [vmem:[#allocation5 + $0x8] sm:$0x7f]
    %7311 = vrot.lane.b32.xlu0 %v7307, 117
    %v7312 = vpop.permute.xlu0 %7311
    %7313 = vrot.lane.b32.xlu0 %v7308, 117
    %v7314 = vpop.permute.xlu0 %7313
    %7317 = vst.msk [vmem:[#allocation6 + $0x70] sm:$0xff] %vm63, %v7312
    %7318 = vst.msk [vmem:[#allocation6 + $0x78] sm:$0x7f] %vm7233, %v7314
    %v7319 = vld [vmem:[#allocation5] sm:$0xff]
    %v7320 = vld [vmem:[#allocation5 + $0x8] sm:$0x7f]
    %7323 = vrot.lane.b32.xlu0 %v7319, 116
    %v7324 = vpop.permute.xlu0 %7323
    %7325 = vrot.lane.b32.xlu0 %v7320, 116
    %v7326 = vpop.permute.xlu0 %7325
    %7329 = vst.msk [vmem:[#allocation6 + $0x80] sm:$0xff] %vm63, %v7324
    %7330 = vst.msk [vmem:[#allocation6 + $0x88] sm:$0x7f] %vm7233, %v7326
    %v7331 = vld [vmem:[#allocation7 + $0x18] sm:$0xff]
    %v7332 = vld [vmem:[#allocation7 + $0x20] sm:$0xff]
    %v7333 = vld [vmem:[#allocation7 + $0x48] sm:$0xff]
    %v7334 = vld [vmem:[#allocation7 + $0x50] sm:$0xff]
    %v7335 = vld [vmem:[#allocation7 + $0x78] sm:$0xff]
    %v7336 = vld [vmem:[#allocation7 + $0x80] sm:$0xff]
    %v7337 = vld [vmem:[#allocation7 + $0xa8] sm:$0xff]
    %v7338 = vld [vmem:[#allocation7 + $0xb0] sm:$0xff]
    %v7339 = vld [vmem:[#allocation6] sm:$0xff]
    %v7340 = vld [vmem:[#allocation6 + $0x8] sm:$0xff]
    %v7341 = vld [vmem:[#allocation6 + $0x10] sm:$0xff]
    %v7342 = vld [vmem:[#allocation6 + $0x18] sm:$0xff]
    %v7343 = vld [vmem:[#allocation6 + $0x20] sm:$0xff]
    %v7344 = vld [vmem:[#allocation6 + $0x28] sm:$0xff]
    %v7345 = vld [vmem:[#allocation6 + $0x30] sm:$0xff]
    %v7346 = vld [vmem:[#allocation6 + $0x38] sm:$0xff]
    %v7347 = vld [vmem:[#allocation6 + $0x40] sm:$0xff]
    %v7348 = vld [vmem:[#allocation6 + $0x48] sm:$0xff]
    %v7349 = vld [vmem:[#allocation6 + $0x50] sm:$0xff]
    %v7350 = vld [vmem:[#allocation6 + $0x58] sm:$0xff]
    %v7351 = vld [vmem:[#allocation6 + $0x60] sm:$0xff]
    %v7352 = vld [vmem:[#allocation6 + $0x68] sm:$0xff]
    %v7353 = vld [vmem:[#allocation6 + $0x70] sm:$0xff]
    %v7354 = vld [vmem:[#allocation6 + $0x78] sm:$0xff]
    %v7355 = vld [vmem:[#allocation6 + $0x80] sm:$0xff]
    %v7356 = vld [vmem:[#allocation6 + $0x88] sm:$0xff]
    %7358 = vset.pattern.permute.xlu0 16
    %7359 = vperm.xlu0 %7358, %v7332
    %v7360 = vpop.permute.xlu0 %7359
    %7363 = vset.pattern.permute.xlu0 16
    %7364 = vperm.xlu0 %7363, %v7334
    %v7365 = vpop.permute.xlu0 %7364
    %7368 = vset.pattern.permute.xlu0 16
    %7369 = vperm.xlu0 %7368, %v7336
    %v7370 = vpop.permute.xlu0 %7369
    %7373 = vset.pattern.permute.xlu0 16
    %7374 = vperm.xlu0 %7373, %v7338
    %v7375 = vpop.permute.xlu0 %7374
    %v7377 = vsel %vm6110, %v7332, 0
    %v7379 = vsel %vm6110, %v7334, 0
    %v7381 = vsel %vm6110, %v7336, 0
    %v7383 = vsel %vm6110, %v7338, 0
    %7385 = vmatprep.subr.mxu0 0.0
    %7386 = vmatpush1.msra.mxu0 %v7354
    %7387 = vmatprep.subr.mxu0 0.0
    %7388 = vmatpush1.msra.mxu0 %v7353
    %7389 = vmatprep.subr.mxu0 0.0
    %7390 = vmatpush1.msra.mxu0 %v7352
    %7391 = vmatprep.subr.mxu0 0.0
    %7392 = vmatpush1.msra.mxu0 %v7351
    %7393 = vmatprep.subr.mxu0 0.0
    %7394 = vmatpush1.msra.mxu0 %v7350
    %7395 = vmatprep.subr.mxu0 0.0
    %7396 = vmatpush1.msra.mxu0 %v7349
    %7397 = vmatprep.subr.mxu0 0.0
    %7398 = vmatpush1.msra.mxu0 %v7348
    %7399 = vmatprep.subr.mxu0 0.0
    %7400 = vmatpush1.msra.mxu0 %v7347
    %7401 = vmatprep.subr.mxu0 0.0
    %7402 = vmatpush1.msra.mxu0 %v7346
    %7403 = vmatprep.subr.mxu0 0.0
    %7404 = vmatpush1.msra.mxu0 %v7345
    %7405 = vmatprep.subr.mxu0 0.0
    %7406 = vmatpush1.msra.mxu0 %v7344
    %7407 = vmatprep.subr.mxu0 0.0
    %7408 = vmatpush1.msra.mxu0 %v7343
    %7409 = vmatprep.subr.mxu0 0.0
    %7410 = vmatpush1.msra.mxu0 %v7342
    %7411 = vmatprep.subr.mxu0 0.0
    %7412 = vmatpush1.msra.mxu0 %v7341
    %7413 = vmatprep.subr.mxu0 0.0
    %7414 = vmatpush1.msra.mxu0 %v7340
    %7415 = vmatprep.subr.mxu0 0.0
    %7416 = vmatpush1.msra.mxu0 %v7339
    %7417 = vmatprep.subr.mxu0 0.0
    %7418 = vmatpush2.msra.mxu0 0.0
    %7419 = vmatprep.subr.mxu0 0.0
    %7420 = vmatpush2.msra.mxu0 0.0
    %7421 = vmatprep.subr.mxu0 0.0
    %7422 = vmatpush2.msra.mxu0 0.0
    %7423 = vmatprep.subr.mxu0 0.0
    %7424 = vmatpush2.msra.mxu0 0.0
    %7425 = vmatprep.subr.mxu0 0.0
    %7426 = vmatpush2.msra.mxu0 0.0
    %7427 = vmatprep.subr.mxu0 0.0
    %7428 = vmatpush2.msra.mxu0 0.0
    %7429 = vmatprep.subr.mxu0 0.0
    %7430 = vmatpush2.msra.mxu0 0.0
    %7431 = vmatprep.subr.mxu0 0.0
    %7432 = vmatpush2.msra.mxu0 0.0
    %7433 = vmatprep.subr.mxu0 0.0
    %7434 = vmatpush2.msra.mxu0 0.0
    %7435 = vmatprep.subr.mxu0 0.0
    %7436 = vmatpush2.msra.mxu0 0.0
    %7437 = vmatprep.subr.mxu0 0.0
    %7438 = vmatpush2.msra.mxu0 0.0
    %7439 = vmatprep.subr.mxu0 0.0
    %7440 = vmatpush2.msra.mxu0 0.0
    %7441 = vmatprep.subr.mxu0 0.0
    %7442 = vmatpush2.msra.mxu0 0.0
    %7443 = vmatprep.subr.mxu0 0.0
    %7444 = vmatpush2.msra.mxu0 0.0
    %7445 = vmatprep.subr.mxu0 0.0
    %7446 = vmatpush2.msra.mxu0 %v7356
    %7447 = vmatprep.subr.mxu0 0.0
    %7448 = vmatpush2.msra.mxu0 %v7355
    %7449 = vmatprep.mubr.f32.mxu0 %v7377
    %7450 = vmatmul.mubr.f32.gmra.mxu0 %v7331
    %v7451 = vpop.f32.mrf.mxu0
    %v7452 = vadd.f32 %v7360, %v7451
    %v7453 = vpop.f32.mrf.mxu0
    %7454 = vmatprep.mubr.f32.mxu0 %v7379
    %7455 = vmatmul.mubr.f32.gmra.mxu0 %v7333
    %v7456 = vpop.f32.mrf.mxu0
    %v7457 = vadd.f32 %v7365, %v7456
    %v7458 = vpop.f32.mrf.mxu0
    %7459 = vmatprep.mubr.f32.mxu0 %v7381
    %7460 = vmatmul.mubr.f32.gmra.mxu0 %v7335
    %v7461 = vpop.f32.mrf.mxu0
    %v7462 = vadd.f32 %v7370, %v7461
    %v7463 = vpop.f32.mrf.mxu0
    %7464 = vmatprep.mubr.f32.mxu0 %v7383
    %7465 = vmatmul.mubr.f32.gmra.mxu0 %v7337
    %v7466 = vpop.f32.mrf.mxu0
    %v7467 = vadd.f32 %v7375, %v7466
    %v7468 = vpop.f32.mrf.mxu0
    %7469 = vdwg.mxu0
    %7474 = vrot.lane.b32.xlu0 %v7452, 127
    %v7475 = vpop.permute.xlu0 %7474
    %7476 = vrot.lane.b32.xlu0 %v7457, 127
    %v7477 = vpop.permute.xlu0 %7476
    %7478 = vrot.lane.b32.xlu0 %v7462, 127
    %v7479 = vpop.permute.xlu0 %7478
    %7480 = vrot.lane.b32.xlu0 %v7467, 127
    %v7481 = vpop.permute.xlu0 %7480
    %v7486 = vmax.f32 %v7452, %v7475
    %v7487 = vmax.f32 %v7457, %v7477
    %v7488 = vmax.f32 %v7462, %v7479
    %v7489 = vmax.f32 %v7467, %v7481
    %7490 = vrot.lane.b32.xlu0 %v7452, 126
    %v7491 = vpop.permute.xlu0 %7490
    %7492 = vrot.lane.b32.xlu0 %v7457, 126
    %v7493 = vpop.permute.xlu0 %7492
    %7494 = vrot.lane.b32.xlu0 %v7462, 126
    %v7495 = vpop.permute.xlu0 %7494
    %7496 = vrot.lane.b32.xlu0 %v7467, 126
    %v7497 = vpop.permute.xlu0 %7496
    %v7502 = vmax.f32 %v7486, %v7491
    %v7503 = vmax.f32 %v7487, %v7493
    %v7504 = vmax.f32 %v7488, %v7495
    %v7505 = vmax.f32 %v7489, %v7497
    %7506 = vrot.lane.b32.xlu0 %v7452, 123
    %v7507 = vpop.permute.xlu0 %7506
    %7508 = vrot.lane.b32.xlu0 %v7457, 123
    %v7509 = vpop.permute.xlu0 %7508
    %7510 = vrot.lane.b32.xlu0 %v7462, 123
    %v7511 = vpop.permute.xlu0 %7510
    %7512 = vrot.lane.b32.xlu0 %v7467, 123
    %v7513 = vpop.permute.xlu0 %7512
    %v7518 = vmax.f32 %v7502, %v7507
    %v7519 = vmax.f32 %v7503, %v7509
    %v7520 = vmax.f32 %v7504, %v7511
    %v7521 = vmax.f32 %v7505, %v7513
    %7522 = vrot.lane.b32.xlu0 %v7452, 122
    %v7523 = vpop.permute.xlu0 %7522
    %7524 = vrot.lane.b32.xlu0 %v7457, 122
    %v7525 = vpop.permute.xlu0 %7524
    %7526 = vrot.lane.b32.xlu0 %v7462, 122
    %v7527 = vpop.permute.xlu0 %7526
    %7528 = vrot.lane.b32.xlu0 %v7467, 122
    %v7529 = vpop.permute.xlu0 %7528
    %v7534 = vmax.f32 %v7518, %v7523
    %v7535 = vmax.f32 %v7519, %v7525
    %v7536 = vmax.f32 %v7520, %v7527
    %v7537 = vmax.f32 %v7521, %v7529
    %7538 = vrot.lane.b32.xlu0 %v7452, 121
    %v7539 = vpop.permute.xlu0 %7538
    %7540 = vrot.lane.b32.xlu0 %v7457, 121
    %v7541 = vpop.permute.xlu0 %7540
    %7542 = vrot.lane.b32.xlu0 %v7462, 121
    %v7543 = vpop.permute.xlu0 %7542
    %7544 = vrot.lane.b32.xlu0 %v7467, 121
    %v7545 = vpop.permute.xlu0 %7544
    %v7550 = vmax.f32 %v7534, %v7539
    %v7551 = vmax.f32 %v7535, %v7541
    %v7552 = vmax.f32 %v7536, %v7543
    %v7553 = vmax.f32 %v7537, %v7545
    %7554 = vrot.lane.b32.xlu0 %v7452, 118
    %v7555 = vpop.permute.xlu0 %7554
    %7556 = vrot.lane.b32.xlu0 %v7457, 118
    %v7557 = vpop.permute.xlu0 %7556
    %7558 = vrot.lane.b32.xlu0 %v7462, 118
    %v7559 = vpop.permute.xlu0 %7558
    %7560 = vrot.lane.b32.xlu0 %v7467, 118
    %v7561 = vpop.permute.xlu0 %7560
    %v7566 = vmax.f32 %v7550, %v7555
    %v7567 = vmax.f32 %v7551, %v7557
    %v7568 = vmax.f32 %v7552, %v7559
    %v7569 = vmax.f32 %v7553, %v7561
    %7570 = vrot.lane.b32.xlu0 %v7452, 117
    %v7571 = vpop.permute.xlu0 %7570
    %7572 = vrot.lane.b32.xlu0 %v7457, 117
    %v7573 = vpop.permute.xlu0 %7572
    %7574 = vrot.lane.b32.xlu0 %v7462, 117
    %v7575 = vpop.permute.xlu0 %7574
    %7576 = vrot.lane.b32.xlu0 %v7467, 117
    %v7577 = vpop.permute.xlu0 %7576
    %v7582 = vmax.f32 %v7566, %v7571
    %v7583 = vmax.f32 %v7567, %v7573
    %v7584 = vmax.f32 %v7568, %v7575
    %v7585 = vmax.f32 %v7569, %v7577
    %7586 = vrot.lane.b32.xlu0 %v7452, 116
    %v7587 = vpop.permute.xlu0 %7586
    %7588 = vrot.lane.b32.xlu0 %v7457, 116
    %v7589 = vpop.permute.xlu0 %7588
    %7590 = vrot.lane.b32.xlu0 %v7462, 116
    %v7591 = vpop.permute.xlu0 %7590
    %7592 = vrot.lane.b32.xlu0 %v7467, 116
    %v7593 = vpop.permute.xlu0 %7592
    %v7598 = vmax.f32 %v7582, %v7587
    %v7599 = vmax.f32 %v7583, %v7589
    %v7600 = vmax.f32 %v7584, %v7591
    %v7601 = vmax.f32 %v7585, %v7593
    %v7602 = vld [vmem:[#allocation7 + $0x28] sm:$0xff]
    %v7603 = vld [vmem:[#allocation7 + $0x58] sm:$0xff]
    %v7604 = vld [vmem:[#allocation7 + $0x88] sm:$0xff]
    %v7605 = vld [vmem:[#allocation7 + $0xb8] sm:$0xff]
    %7610 = vrot.lane.b32.xlu0 %v7602, 96
    %v7611 = vpop.permute.xlu0 %7610
    %7612 = vrot.lane.b32.xlu0 %v7603, 96
    %v7613 = vpop.permute.xlu0 %7612
    %7614 = vrot.lane.b32.xlu0 %v7604, 96
    %v7615 = vpop.permute.xlu0 %7614
    %7616 = vrot.lane.b32.xlu0 %v7605, 96
    %v7617 = vpop.permute.xlu0 %7616
    %vm7622 = vcmask 261120
    %v7623 = vsel %vm7622, %v7602, 0
    %v7625 = vsel %vm7622, %v7603, 0
    %v7627 = vsel %vm7622, %v7604, 0
    %v7629 = vsel %vm7622, %v7605, 0
    %7631 = vmatprep.subr.mxu0 0.0
    %7632 = vmatpush1.msra.mxu0 0.0
    %7633 = vmatprep.subr.mxu0 0.0
    %7634 = vmatpush1.msra.mxu0 0.0
    %7635 = vmatprep.subr.mxu0 0.0
    %7636 = vmatpush1.msra.mxu0 0.0
    %7637 = vmatprep.subr.mxu0 0.0
    %7638 = vmatpush1.msra.mxu0 0.0
    %7639 = vmatprep.subr.mxu0 0.0
    %7640 = vmatpush1.msra.mxu0 0.0
    %7641 = vmatprep.subr.mxu0 0.0
    %7642 = vmatpush1.msra.mxu0 0.0
    %7643 = vmatprep.subr.mxu0 0.0
    %7644 = vmatpush1.msra.mxu0 0.0
    %7645 = vmatprep.subr.mxu0 0.0
    %7646 = vmatpush1.msra.mxu0 0.0
    %7647 = vmatprep.subr.mxu0 0.0
    %7648 = vmatpush1.msra.mxu0 0.0
    %7649 = vmatprep.subr.mxu0 0.0
    %7650 = vmatpush1.msra.mxu0 0.0
    %7651 = vmatprep.subr.mxu0 0.0
    %7652 = vmatpush1.msra.mxu0 0.0
    %7653 = vmatprep.subr.mxu0 0.0
    %7654 = vmatpush1.msra.mxu0 0.0
    %7655 = vmatprep.subr.mxu0 0.0
    %7656 = vmatpush1.msra.mxu0 %v7601
    %7657 = vmatprep.subr.mxu0 0.0
    %7658 = vmatpush1.msra.mxu0 %v7600
    %7659 = vmatprep.subr.mxu0 0.0
    %7660 = vmatpush1.msra.mxu0 %v7599
    %7661 = vmatprep.subr.mxu0 0.0
    %7662 = vmatpush1.msra.mxu0 %v7598
    %7663 = vmatprep.subr.mxu0 0.0
    %7664 = vmatpush2.msra.mxu0 0.0
    %7665 = vmatprep.subr.mxu0 0.0
    %7666 = vmatpush2.msra.mxu0 0.0
    %7667 = vmatprep.subr.mxu0 0.0
    %7668 = vmatpush2.msra.mxu0 0.0
    %7669 = vmatprep.subr.mxu0 0.0
    %7670 = vmatpush2.msra.mxu0 0.0
    %7671 = vmatprep.subr.mxu0 0.0
    %7672 = vmatpush2.msra.mxu0 0.0
    %7673 = vmatprep.subr.mxu0 0.0
    %7674 = vmatpush2.msra.mxu0 0.0
    %7675 = vmatprep.subr.mxu0 0.0
    %7676 = vmatpush2.msra.mxu0 0.0
    %7677 = vmatprep.subr.mxu0 0.0
    %7678 = vmatpush2.msra.mxu0 0.0
    %7679 = vmatprep.subr.mxu0 0.0
    %7680 = vmatpush2.msra.mxu0 0.0
    %7681 = vmatprep.subr.mxu0 0.0
    %7682 = vmatpush2.msra.mxu0 0.0
    %7683 = vmatprep.subr.mxu0 0.0
    %7684 = vmatpush2.msra.mxu0 0.0
    %7685 = vmatprep.subr.mxu0 0.0
    %7686 = vmatpush2.msra.mxu0 0.0
    %7687 = vmatprep.subr.mxu0 0.0
    %7688 = vmatpush2.msra.mxu0 0.0
    %7689 = vmatprep.subr.mxu0 0.0
    %7690 = vmatpush2.msra.mxu0 0.0
    %7691 = vmatprep.subr.mxu0 0.0
    %7692 = vmatpush2.msra.mxu0 0.0
    %7693 = vmatprep.subr.mxu0 0.0
    %7694 = vmatpush2.msra.mxu0 0.0
    %7695 = vmatprep.mubr.f32.mxu0 0.0
    %7696 = vmatmul.mubr.f32.gmra.mxu0 %v7623
    %v7697 = vpop.f32.mrf.mxu0
    %v7698 = vadd.f32 %v7611, %v7697
    %v7699 = vpop.f32.mrf.mxu0
    %7700 = vmatprep.mubr.f32.mxu0 0.0
    %7701 = vmatmul.mubr.f32.gmra.mxu0 %v7625
    %v7702 = vpop.f32.mrf.mxu0
    %v7703 = vadd.f32 %v7613, %v7702
    %v7704 = vpop.f32.mrf.mxu0
    %7705 = vmatprep.mubr.f32.mxu0 0.0
    %7706 = vmatmul.mubr.f32.gmra.mxu0 %v7627
    %v7707 = vpop.f32.mrf.mxu0
    %v7708 = vadd.f32 %v7615, %v7707
    %v7709 = vpop.f32.mrf.mxu0
    %7710 = vmatprep.mubr.f32.mxu0 0.0
    %7711 = vmatmul.mubr.f32.gmra.mxu0 %v7629
    %v7712 = vpop.f32.mrf.mxu0
    %v7713 = vadd.f32 %v7617, %v7712
    %v7714 = vpop.f32.mrf.mxu0
    %7715 = vdwg.mxu0
    %v7716 = vmax.f32 %v7698, 0.0
    %v7717 = vmax.f32 %v7703, 0.0
    %v7718 = vmax.f32 %v7708, 0.0
    %v7719 = vmax.f32 %v7713, 0.0
    %v7720 = vld [vmem:[#allocation7 + $0x28] ss:$0 sm:$0xff]
    %7722 = vrot.lane.b32.xlu0 %v7720, 64
    %v7723 = vpop.permute.xlu0 %7722
    %7724 = vrot.lane.b32.xlu0 %v7720, 32
    %v7725 = vpop.permute.xlu0 %7724
    %v7727 = vsel %vm7622, %v7723, 0
    %7729 = vmatprep.subr.mxu0 0.0
    %7730 = vmatpush1.msra.mxu0 0.0
    %7731 = vmatprep.subr.mxu0 0.0
    %7732 = vmatpush1.msra.mxu0 0.0
    %7733 = vmatprep.subr.mxu0 0.0
    %7734 = vmatpush1.msra.mxu0 0.0
    %7735 = vmatprep.subr.mxu0 0.0
    %7736 = vmatpush1.msra.mxu0 0.0
    %7737 = vmatprep.subr.mxu0 0.0
    %7738 = vmatpush1.msra.mxu0 0.0
    %7739 = vmatprep.subr.mxu0 0.0
    %7740 = vmatpush1.msra.mxu0 0.0
    %7741 = vmatprep.subr.mxu0 0.0
    %7742 = vmatpush1.msra.mxu0 0.0
    %7743 = vmatprep.subr.mxu0 0.0
    %7744 = vmatpush1.msra.mxu0 0.0
    %7745 = vmatprep.subr.mxu0 0.0
    %7746 = vmatpush1.msra.mxu0 0.0
    %7747 = vmatprep.subr.mxu0 0.0
    %7748 = vmatpush1.msra.mxu0 0.0
    %7749 = vmatprep.subr.mxu0 0.0
    %7750 = vmatpush1.msra.mxu0 0.0
    %7751 = vmatprep.subr.mxu0 0.0
    %7752 = vmatpush1.msra.mxu0 0.0
    %7753 = vmatprep.subr.mxu0 0.0
    %7754 = vmatpush1.msra.mxu0 %v7719
    %7755 = vmatprep.subr.mxu0 0.0
    %7756 = vmatpush1.msra.mxu0 %v7718
    %7757 = vmatprep.subr.mxu0 0.0
    %7758 = vmatpush1.msra.mxu0 %v7717
    %7759 = vmatprep.subr.mxu0 0.0
    %7760 = vmatpush1.msra.mxu0 %v7716
    %7761 = vmatprep.subr.mxu0 0.0
    %7762 = vmatpush2.msra.mxu0 0.0
    %7763 = vmatprep.subr.mxu0 0.0
    %7764 = vmatpush2.msra.mxu0 0.0
    %7765 = vmatprep.subr.mxu0 0.0
    %7766 = vmatpush2.msra.mxu0 0.0
    %7767 = vmatprep.subr.mxu0 0.0
    %7768 = vmatpush2.msra.mxu0 0.0
    %7769 = vmatprep.subr.mxu0 0.0
    %7770 = vmatpush2.msra.mxu0 0.0
    %7771 = vmatprep.subr.mxu0 0.0
    %7772 = vmatpush2.msra.mxu0 0.0
    %7773 = vmatprep.subr.mxu0 0.0
    %7774 = vmatpush2.msra.mxu0 0.0
    %7775 = vmatprep.subr.mxu0 0.0
    %7776 = vmatpush2.msra.mxu0 0.0
    %7777 = vmatprep.subr.mxu0 0.0
    %7778 = vmatpush2.msra.mxu0 0.0
    %7779 = vmatprep.subr.mxu0 0.0
    %7780 = vmatpush2.msra.mxu0 0.0
    %7781 = vmatprep.subr.mxu0 0.0
    %7782 = vmatpush2.msra.mxu0 0.0
    %7783 = vmatprep.subr.mxu0 0.0
    %7784 = vmatpush2.msra.mxu0 0.0
    %7785 = vmatprep.subr.mxu0 0.0
    %7786 = vmatpush2.msra.mxu0 0.0
    %7787 = vmatprep.subr.mxu0 0.0
    %7788 = vmatpush2.msra.mxu0 0.0
    %7789 = vmatprep.subr.mxu0 0.0
    %7790 = vmatpush2.msra.mxu0 0.0
    %7791 = vmatprep.subr.mxu0 0.0
    %7792 = vmatpush2.msra.mxu0 0.0
    %7793 = vmatprep.mubr.f32.mxu0 0.0
    %7794 = vmatmul.mubr.f32.gmra.mxu0 %v7727
    %v7795 = vpop.f32.mrf.mxu0
    %v7796 = vadd.f32 %v7725, %v7795
    %v7797 = vpop.f32.mrf.mxu0
    %7798 = vdwg.mxu0
    %v7799 = vmax.f32 %v7796, 0.0
    %vm7800 = vcmask 0
    %7801 = vst.msk [vmem:[#allocation10] sm:$0x1] %vm7800, %v7799
    // Predicated region
    $region14: #{forward.1} parent=1 // pred_check
      _
    $region15: #{forward.1} parent=1 // pred_check_branch
      %7803 = sbr.rel (0) target = $region17
    $region16: #{forward.1} parent=1 // pred_region
      %s7805 = ssub.s32 16, 16
      %7806 = vsyncadd [#allocation9], %s7805
      %s7808 = sshll.u32 [#allocation10], 4
      %s7809 = int_to_ptr.vmem [resolvable:$true] %s7808
      %7811 = dma.vmem_to_hbm [thread:$0]  %s7809, 16, %s2, [#allocation9]
    $region17: #{forward.1} parent=1 // pred_fallthru
      _
    // Predicated region
    $region18: #{forward.1} parent=1 // pred_check
      _
    $region19: #{forward.1} parent=1 // pred_check_branch
      %7813 = sbr.rel (0) target = $region21
    $region20: #{forward.1} parent=1 // pred_region
      %7814 = dma.done [#allocation9], 16
    $region21: #{forward.1} parent=1 // pred_fallthru
      _
    %7815 = vsyncpa [#allocation8], 1
    %7816 = vsyncpa [#allocation9], 1

</llo_original>
